<compile_context>
chip_gen: v7x
topology: tpu7x:2x2x1
jax: 0.10.0
libtpu: 0.0.40
codegen_flags: <defaults>
</compile_context>

<pallas_src>
import jax
import jax.numpy as jnp
from jax import lax
from jax.experimental import pallas as pl
from jax.experimental.pallas import tpu as pltpu

_VMEM_LIMIT = 32 * 1024 * 1024   # well under v7x's 64 MiB physical VMEM


# ----------------------------------------------------------------------------
# Fused Conv2d(3x3, valid) + MaxPool2d(3) + ReLU   (one image per grid step)
# ----------------------------------------------------------------------------
def _make_conv_pool_relu_kernel(Hp, Wp, Cin, Cout, mode):
    """mode:
        "pre"    - input already im2col'ed: x_ref is (3*Hp, 3*Wp, 9*Cin)
        "im2col" - build the (Wc, 9*Cin) im2col row in-kernel (lane-aligned
                   when Cin % 128 == 0) -> one K = 9*Cin matmul per conv row
        "taps"   - 9 accumulated matmuls with K = Cin per conv row
    """
    Wc = 3 * Wp   # conv columns actually consumed by the floor-mode pool

    def conv_row(x_ref, w_ref, h):
        # Conv output row h (only the Wc columns the pool needs), f32 (Wc, Cout)
        if mode == "pre":
            return jnp.dot(x_ref[h], w_ref[...],
                           preferred_element_type=jnp.float32)
        rows = [x_ref[h + ky] for ky in range(3)]             # each (W_in, Cin)
        if mode == "im2col":
            lhs = jnp.concatenate(
                [rows[ky][kx:kx + Wc, :] for ky in range(3) for kx in range(3)],
                axis=-1)                                      # (Wc, 9*Cin)
            return jnp.dot(lhs, w_ref[...],
                           preferred_element_type=jnp.float32)
        # mode == "taps"
        acc = jnp.zeros((Wc, Cout), jnp.float32)
        for ky in range(3):
            for kx in range(3):
                t = ky * 3 + kx
                acc = acc + jnp.dot(rows[ky][kx:kx + Wc, :],
                                    w_ref[t * Cin:(t + 1) * Cin, :],
                                    preferred_element_type=jnp.float32)
        return acc

    def kernel(x_ref, w_ref, b_ref, o_ref, m_scr):
        # x_ref: input image block, w_ref: (9*Cin, Cout), b_ref: (1, Cout)
        # o_ref: (Hp, Wp, Cout) pooled+ReLU'ed output, m_scr: (Wc, Cout) VMEM.
        def body(ph, carry):
            h0 = 3 * ph
            # three conv rows of this pool window, max-reduced over rows
            c = jnp.maximum(jnp.maximum(conv_row(x_ref, w_ref, h0),
                                        conv_row(x_ref, w_ref, h0 + 1)),
                            conv_row(x_ref, w_ref, h0 + 2))    # (Wc, Cout)
            # max over width (stride-3 windows) via strided VMEM reads
            m_scr[...] = c
            p = jnp.maximum(jnp.maximum(m_scr[pl.ds(0, Wp, stride=3), :],
                                        m_scr[pl.ds(1, Wp, stride=3), :]),
                            m_scr[pl.ds(2, Wp, stride=3), :])  # (Wp, Cout)
            # per-channel bias commutes with the max; ReLU last (as in torch)
            o_ref[ph] = jnp.maximum(p + b_ref[...], 0.0)
            return carry

        lax.fori_loop(0, Hp, body, 0)

    return kernel


def conv_pool_relu(x, w_mat, b, mode):
    # x: (B, H, W, C) f32,  w_mat: (9*Cin, Cout),  b: (1, Cout)
    B, H, W_, C = x.shape
    Cout = w_mat.shape[1]
    if mode == "pre":
        Hp, Wp = H // 3, W_ // 3
        Cin = w_mat.shape[0] // 9
    else:
        Hp, Wp = (H - 2) // 3, (W_ - 2) // 3
        Cin = C
    Wc = 3 * Wp
    kernel = _make_conv_pool_relu_kernel(Hp, Wp, Cin, Cout, mode)
    return pl.pallas_call(
        kernel,
        out_shape=jax.ShapeDtypeStruct((B, Hp, Wp, Cout), jnp.float32),
        grid=(B,),
        in_specs=[
            pl.BlockSpec((None, H, W_, C), lambda bb: (bb, 0, 0, 0)),
            pl.BlockSpec(w_mat.shape, lambda bb: (0, 0)),
            pl.BlockSpec(b.shape, lambda bb: (0, 0)),
        ],
        out_specs=pl.BlockSpec((None, Hp, Wp, Cout), lambda bb: (bb, 0, 0, 0)),
        scratch_shapes=[pltpu.VMEM((Wc, Cout), jnp.float32)],
        compiler_params=pltpu.CompilerParams(
            dimension_semantics=("parallel",),   # one image per TC on v7x
            vmem_limit_bytes=_VMEM_LIMIT),
    )(x, w_mat, b)


def _im2col_3x3(x, Hp, Wp):
    # JAX-side im2col for the FIRST conv only (Cin=3 is too lane-sparse for an
    # efficient in-kernel gather).  Output (B, 3*Hp, 3*Wp, 9*Cin); feature
    # ordering (ky, kx, cin) matches the packed weight matrix.
    Hc, Wc = 3 * Hp, 3 * Wp
    taps = [x[:, ky:ky + Hc, kx:kx + Wc, :] for ky in range(3) for kx in range(3)]
    return jnp.concatenate(taps, axis=-1)


# ----------------------------------------------------------------------------
# MLP head:  Linear(288,64) -> ReLU -> Linear(64,2)   (single fused kernel)
# ----------------------------------------------------------------------------
def _mlp_kernel(x_ref, w1_ref, b1_ref, w2_ref, b2_ref, o_ref):
    h = jnp.dot(x_ref[...], w1_ref[...],
                preferred_element_type=jnp.float32) + b1_ref[...]
    h = jnp.maximum(h, 0.0)
    o_ref[...] = jnp.dot(h, w2_ref[...],
                         preferred_element_type=jnp.float32) + b2_ref[...]


def mlp(x, w1, b1, w2, b2):
    B = x.shape[0]
    vmem = pl.BlockSpec(memory_space=pltpu.MemorySpace.VMEM)
    return pl.pallas_call(
        _mlp_kernel,
        out_shape=jax.ShapeDtypeStruct((B, w2.shape[1]), jnp.float32),
        in_specs=[vmem] * 5,
        out_specs=vmem,
    )(x, w1, b1, w2, b2)


# ----------------------------------------------------------------------------
# Full forward pass (matches torch Net.forward semantics)
# ----------------------------------------------------------------------------
def net_forward(x_nchw, params):
    x = jnp.transpose(x_nchw, (0, 2, 3, 1))                    # NCHW -> NHWC
    (w1c, b1c), (w2c, b2c), (w3c, b3c) = params["convs"]
    B, H, W_, _ = x.shape
    Hp, Wp = (H - 2) // 3, (W_ - 2) // 3
    x = conv_pool_relu(_im2col_3x3(x, Hp, Wp), w1c, b1c, mode="pre")    # (B,36,36,128)
    x = conv_pool_relu(x, w2c, b2c, mode="im2col")                      # (B,11,11,64)
    x = conv_pool_relu(x, w3c, b3c, mode="taps")                        # (B,3,3,32)
    x = jnp.transpose(x, (0, 3, 1, 2)).reshape(B, -1)          # Flatten, (C,H,W) order
    w1, b1, w2, b2 = params["mlp"]
    return mlp(x, w1, b1, w2, b2)


# ----------------------------------------------------------------------------
# Deterministic synthetic parameters (PyTorch shapes, re-packed for kernels)
# ----------------------------------------------------------------------------
def init_params(key):
    ks = jax.random.split(key, 10)

    def conv_param(kw, kb, cin, cout):
        w = 0.05 * jax.random.normal(kw, (cout, cin, 3, 3), jnp.float32)  # torch (O,I,kH,kW)
        b = 0.02 * jax.random.normal(kb, (cout,), jnp.float32)
        # (ky*3+kx)*Cin + c  ->  Cout
        w_mat = jnp.transpose(w, (2, 3, 1, 0)).reshape(9 * cin, cout)
        return w_mat, b.reshape(1, cout)

    convs = [conv_param(ks[0], ks[1], 3, 128),
             conv_param(ks[2], ks[3], 128, 64),
             conv_param(ks[4], ks[5], 64, 32)]
    w1 = 0.05 * jax.random.normal(ks[6], (64, 288), jnp.float32)          # torch (out, in)
    b1 = 0.02 * jax.random.normal(ks[7], (64,), jnp.float32)
    w2 = 0.05 * jax.random.normal(ks[8], (2, 64), jnp.float32)
    b2 = 0.02 * jax.random.normal(ks[9], (2,), jnp.float32)
    mlp_params = (w1.T, b1.reshape(1, 64), w2.T, b2.reshape(1, 2))
    return {"convs": convs, "mlp": mlp_params}


# ----------------------------------------------------------------------------
# Pure-JAX reference (XLA conv / reduce_window) for correctness check
# ----------------------------------------------------------------------------
def reference_forward(x_nchw, params):
    x = jnp.transpose(x_nchw, (0, 2, 3, 1))
    for (w, b) in params["convs"]:
        cin, cout = w.shape[0] // 9, w.shape[1]
        w4 = w.reshape(3, 3, cin, cout)                        # HWIO
        x = lax.conv_general_dilated(
            x, w4, (1, 1), "VALID",
            dimension_numbers=("NHWC", "HWIO", "NHWC")) + b.reshape(1, 1, 1, cout)
        x = lax.reduce_window(x, -jnp.inf, lax.max,
                              (1, 3, 3, 1), (1, 3, 3, 1), "VALID")
        x = jnp.maximum(x, 0.0)
    B = x.shape[0]
    x = jnp.transpose(x, (0, 3, 1, 2)).reshape(B, -1)
    w1, b1, w2, b2 = params["mlp"]
    x = jnp.maximum(x @ w1 + b1, 0.0)
    return x @ w2 + b2


if __name__ == "__main__":
    key = jax.random.PRNGKey(0)
    pkey, xkey = jax.random.split(key)
    params = init_params(pkey)

    # Spatial size 112 is required by the module: after 3x(conv3 + pool3)
    # the feature map must be 3x3 so that Flatten yields 32*3*3 = 288 features.
    x = jax.random.normal(xkey, (2, 3, 112, 112), dtype=jnp.float32)  # NCHW

    out = jax.jit(net_forward)(x, params)
    out = jax.block_until_ready(out)

    ref = reference_forward(x, params)
    assert out.shape == (2, 2), out.shape
    assert jnp.allclose(out, ref, atol=2e-3, rtol=2e-3), (out, ref)
    print("KERNEL_OK")
</pallas_src>

<mosaic_0001>
module attributes {stable_mosaic.version = 11 : i64} {
  func.func @kernel(%arg0: i32, %arg1: memref<1x108x108x27xf32, #tpu.memory_space<vmem>>, %arg2: memref<27x128xf32, #tpu.memory_space<vmem>>, %arg3: memref<1x128xf32, #tpu.memory_space<vmem>>, %arg4: memref<1x36x36x128xf32, #tpu.memory_space<vmem>>, %arg5: memref<108x128xf32, #tpu.memory_space<vmem>>) attributes {dimension_semantics = [#tpu.dimension_semantics<parallel>], iteration_bounds = array<i64: 2>, scalar_prefetch = 0 : i64, scratch_operands = 1 : i64, tpu.core_type = #tpu.core_type<tc>, window_params = [{transform_indices = @transform_0, window_bounds = array<i64: 1, 108, 108, 27>}, {pipeline_mode = #tpu.pipeline_mode<synchronous>, transform_indices = @transform_1, window_bounds = array<i64: 27, 128>}, {pipeline_mode = #tpu.pipeline_mode<synchronous>, transform_indices = @transform_2, window_bounds = array<i64: 1, 128>}, {transform_indices = @transform_3, window_bounds = array<i64: 1, 36, 36, 128>}]} {
    %c0_i32 = arith.constant 0 : i32
    %c36_i32 = arith.constant 36 : i32
    %0 = arith.addi %c0_i32, %c36_i32 : i32
    %c1_i32 = arith.constant 1 : i32
    scf.for %arg6 = %c0_i32 to %0 step %c1_i32  : i32 {
      %c3_i32 = arith.constant 3 : i32
      %1 = arith.muli %c3_i32, %arg6 : i32
      %c0 = arith.constant 0 : index
      %2 = arith.index_cast %1 : i32 to index
      %c0_1 = arith.constant 0 : index
      %c0_2 = arith.constant 0 : index
      %3 = vector.load %arg1[%c0, %2, %c0_1, %c0_2] : memref<1x108x108x27xf32, #tpu.memory_space<vmem>>, vector<1x1x108x27xf32>
      %4 = vector.shape_cast %3 : vector<1x1x108x27xf32> to vector<108x27xf32>
      %c0_3 = arith.constant 0 : index
      %c0_4 = arith.constant 0 : index
      %5 = vector.load %arg2[%c0_3, %c0_4] : memref<27x128xf32, #tpu.memory_space<vmem>>, vector<27x128xf32>
      %cst = arith.constant dense<0.000000e+00> : vector<108x128xf32>
      %6 = tpu.matmul %4, %5, %cst {dimension_numbers = #tpu.dot_dimension_numbers<[1], [0], [0], [1], [0, 0, 1, 1], [], []>} : vector<108x27xf32>, vector<27x128xf32>, vector<108x128xf32> -> vector<108x128xf32>
      %c1_i32_5 = arith.constant 1 : i32
      %7 = arith.addi %1, %c1_i32_5 : i32
      %c0_6 = arith.constant 0 : index
      %8 = arith.index_cast %7 : i32 to index
      %c0_7 = arith.constant 0 : index
      %c0_8 = arith.constant 0 : index
      %9 = vector.load %arg1[%c0_6, %8, %c0_7, %c0_8] : memref<1x108x108x27xf32, #tpu.memory_space<vmem>>, vector<1x1x108x27xf32>
      %10 = vector.shape_cast %9 : vector<1x1x108x27xf32> to vector<108x27xf32>
      %c0_9 = arith.constant 0 : index
      %c0_10 = arith.constant 0 : index
      %11 = vector.load %arg2[%c0_9, %c0_10] : memref<27x128xf32, #tpu.memory_space<vmem>>, vector<27x128xf32>
      %cst_11 = arith.constant dense<0.000000e+00> : vector<108x128xf32>
      %12 = tpu.matmul %10, %11, %cst_11 {dimension_numbers = #tpu.dot_dimension_numbers<[1], [0], [0], [1], [0, 0, 1, 1], [], []>} : vector<108x27xf32>, vector<27x128xf32>, vector<108x128xf32> -> vector<108x128xf32>
      %13 = arith.maximumf %6, %12 : vector<108x128xf32>
      %c2_i32 = arith.constant 2 : i32
      %14 = arith.addi %1, %c2_i32 : i32
      %c0_12 = arith.constant 0 : index
      %15 = arith.index_cast %14 : i32 to index
      %c0_13 = arith.constant 0 : index
      %c0_14 = arith.constant 0 : index
      %16 = vector.load %arg1[%c0_12, %15, %c0_13, %c0_14] : memref<1x108x108x27xf32, #tpu.memory_space<vmem>>, vector<1x1x108x27xf32>
      %17 = vector.shape_cast %16 : vector<1x1x108x27xf32> to vector<108x27xf32>
      %c0_15 = arith.constant 0 : index
      %c0_16 = arith.constant 0 : index
      %18 = vector.load %arg2[%c0_15, %c0_16] : memref<27x128xf32, #tpu.memory_space<vmem>>, vector<27x128xf32>
      %cst_17 = arith.constant dense<0.000000e+00> : vector<108x128xf32>
      %19 = tpu.matmul %17, %18, %cst_17 {dimension_numbers = #tpu.dot_dimension_numbers<[1], [0], [0], [1], [0, 0, 1, 1], [], []>} : vector<108x27xf32>, vector<27x128xf32>, vector<108x128xf32> -> vector<108x128xf32>
      %20 = arith.maximumf %13, %19 : vector<108x128xf32>
      %c0_18 = arith.constant 0 : index
      %c0_19 = arith.constant 0 : index
      %21 = vector.load %arg5[%c0_18, %c0_19] : memref<108x128xf32, #tpu.memory_space<vmem>>, vector<108x128xf32>
      tpu.vector_store %arg5[%c0_18, %c0_19], %20 {strides = array<i32>} : memref<108x128xf32, #tpu.memory_space<vmem>>, vector<108x128xf32>,
      %c0_20 = arith.constant 0 : index
      %c0_21 = arith.constant 0 : index
      %22 = tpu.strided_load %arg5[%c0_20, %c0_21] {strides = array<i32: 3, 1>} : memref<108x128xf32, #tpu.memory_space<vmem>>, vector<36x128xf32>
      %c1 = arith.constant 1 : index
      %c0_22 = arith.constant 0 : index
      %23 = tpu.strided_load %arg5[%c1, %c0_22] {strides = array<i32: 3, 1>} : memref<108x128xf32, #tpu.memory_space<vmem>>, vector<36x128xf32>
      %24 = arith.maximumf %22, %23 : vector<36x128xf32>
      %c2 = arith.constant 2 : index
      %c0_23 = arith.constant 0 : index
      %25 = tpu.strided_load %arg5[%c2, %c0_23] {strides = array<i32: 3, 1>} : memref<108x128xf32, #tpu.memory_space<vmem>>, vector<36x128xf32>
      %26 = arith.maximumf %24, %25 : vector<36x128xf32>
      %c0_24 = arith.constant 0 : index
      %c0_25 = arith.constant 0 : index
      %27 = vector.load %arg3[%c0_24, %c0_25] : memref<1x128xf32, #tpu.memory_space<vmem>>, vector<1x128xf32>
      %28 = vector.broadcast %27 : vector<1x128xf32> to vector<36x128xf32>
      %29 = arith.addf %26, %28 : vector<36x128xf32>
      %cst_26 = arith.constant 0.000000e+00 : f32
      %30 = vector.broadcast %cst_26 : f32 to vector<36x128xf32>
      %31 = arith.maximumf %29, %30 : vector<36x128xf32>
      %c0_27 = arith.constant 0 : index
      %32 = arith.index_cast %arg6 : i32 to index
      %c0_28 = arith.constant 0 : index
      %c0_29 = arith.constant 0 : index
      %33 = vector.load %arg4[%c0_27, %32, %c0_28, %c0_29] : memref<1x36x36x128xf32, #tpu.memory_space<vmem>>, vector<1x1x36x128xf32>
      %34 = vector.shape_cast %33 : vector<1x1x36x128xf32> to vector<36x128xf32>
      %35 = vector.shape_cast %31 : vector<36x128xf32> to vector<1x1x36x128xf32>
      tpu.vector_store %arg4[%c0_27, %32, %c0_28, %c0_29], %35 {strides = array<i32>} : memref<1x36x36x128xf32, #tpu.memory_space<vmem>>, vector<1x1x36x128xf32>,
    }
    %c36_i32_0 = arith.constant 36 : i32
    return
  }
  func.func @transform_0(%arg0: i32) -> (i32, i32, i32, i32) {
    %c0_i32 = arith.constant 0 : i32
    %c0_i32_0 = arith.constant 0 : i32
    %c0_i32_1 = arith.constant 0 : i32
    %c0_i32_2 = arith.constant 0 : i32
    return %arg0, %c0_i32, %c0_i32_0, %c0_i32_1 : i32, i32, i32, i32
  }
  func.func @transform_1(%arg0: i32) -> (i32, i32) {
    %c0_i32 = arith.constant 0 : i32
    %c0_i32_0 = arith.constant 0 : i32
    %c0_i32_1 = arith.constant 0 : i32
    return %c0_i32, %c0_i32_0 : i32, i32
  }
  func.func @transform_2(%arg0: i32) -> (i32, i32) {
    %c0_i32 = arith.constant 0 : i32
    %c0_i32_0 = arith.constant 0 : i32
    %c0_i32_1 = arith.constant 0 : i32
    return %c0_i32, %c0_i32_0 : i32, i32
  }
  func.func @transform_3(%arg0: i32) -> (i32, i32, i32, i32) {
    %c0_i32 = arith.constant 0 : i32
    %c0_i32_0 = arith.constant 0 : i32
    %c0_i32_1 = arith.constant 0 : i32
    %c0_i32_2 = arith.constant 0 : i32
    return %arg0, %c0_i32, %c0_i32_0, %c0_i32_1 : i32, i32, i32, i32
  }
}

module attributes {stable_mosaic.version = 11 : i64} {
  func.func @kernel(%arg0: i32, %arg1: memref<1x36x36x128xf32, #tpu.memory_space<vmem>>, %arg2: memref<1152x64xf32, #tpu.memory_space<vmem>>, %arg3: memref<1x64xf32, #tpu.memory_space<vmem>>, %arg4: memref<1x11x11x64xf32, #tpu.memory_space<vmem>>, %arg5: memref<33x64xf32, #tpu.memory_space<vmem>>) attributes {dimension_semantics = [#tpu.dimension_semantics<parallel>], iteration_bounds = array<i64: 2>, scalar_prefetch = 0 : i64, scratch_operands = 1 : i64, tpu.core_type = #tpu.core_type<tc>, window_params = [{transform_indices = @transform_0, window_bounds = array<i64: 1, 36, 36, 128>}, {pipeline_mode = #tpu.pipeline_mode<synchronous>, transform_indices = @transform_1, window_bounds = array<i64: 1152, 64>}, {pipeline_mode = #tpu.pipeline_mode<synchronous>, transform_indices = @transform_2, window_bounds = array<i64: 1, 64>}, {transform_indices = @transform_3, window_bounds = array<i64: 1, 11, 11, 64>}]} {
    %c0_i32 = arith.constant 0 : i32
    %c11_i32 = arith.constant 11 : i32
    %0 = arith.addi %c0_i32, %c11_i32 : i32
    %c1_i32 = arith.constant 1 : i32
    scf.for %arg6 = %c0_i32 to %0 step %c1_i32  : i32 {
      %c3_i32 = arith.constant 3 : i32
      %1 = arith.muli %c3_i32, %arg6 : i32
      %c0_i32_1 = arith.constant 0 : i32
      %2 = arith.addi %1, %c0_i32_1 : i32
      %c0 = arith.constant 0 : index
      %3 = arith.index_cast %2 : i32 to index
      %c0_2 = arith.constant 0 : index
      %c0_3 = arith.constant 0 : index
      %4 = vector.load %arg1[%c0, %3, %c0_2, %c0_3] : memref<1x36x36x128xf32, #tpu.memory_space<vmem>>, vector<1x1x36x128xf32>
      %5 = vector.shape_cast %4 : vector<1x1x36x128xf32> to vector<36x128xf32>
      %c1_i32_4 = arith.constant 1 : i32
      %6 = arith.addi %1, %c1_i32_4 : i32
      %c0_5 = arith.constant 0 : index
      %7 = arith.index_cast %6 : i32 to index
      %c0_6 = arith.constant 0 : index
      %c0_7 = arith.constant 0 : index
      %8 = vector.load %arg1[%c0_5, %7, %c0_6, %c0_7] : memref<1x36x36x128xf32, #tpu.memory_space<vmem>>, vector<1x1x36x128xf32>
      %9 = vector.shape_cast %8 : vector<1x1x36x128xf32> to vector<36x128xf32>
      %c2_i32 = arith.constant 2 : i32
      %10 = arith.addi %1, %c2_i32 : i32
      %c0_8 = arith.constant 0 : index
      %11 = arith.index_cast %10 : i32 to index
      %c0_9 = arith.constant 0 : index
      %c0_10 = arith.constant 0 : index
      %12 = vector.load %arg1[%c0_8, %11, %c0_9, %c0_10] : memref<1x36x36x128xf32, #tpu.memory_space<vmem>>, vector<1x1x36x128xf32>
      %13 = vector.shape_cast %12 : vector<1x1x36x128xf32> to vector<36x128xf32>
      %14 = vector.extract_strided_slice %5 {offsets = [0, 0], sizes = [33, 128], strides = [1, 1]} : vector<36x128xf32> to vector<33x128xf32>
      %15 = vector.extract_strided_slice %5 {offsets = [1, 0], sizes = [33, 128], strides = [1, 1]} : vector<36x128xf32> to vector<33x128xf32>
      %16 = vector.extract_strided_slice %5 {offsets = [2, 0], sizes = [33, 128], strides = [1, 1]} : vector<36x128xf32> to vector<33x128xf32>
      %17 = vector.extract_strided_slice %9 {offsets = [0, 0], sizes = [33, 128], strides = [1, 1]} : vector<36x128xf32> to vector<33x128xf32>
      %18 = vector.extract_strided_slice %9 {offsets = [1, 0], sizes = [33, 128], strides = [1, 1]} : vector<36x128xf32> to vector<33x128xf32>
      %19 = vector.extract_strided_slice %9 {offsets = [2, 0], sizes = [33, 128], strides = [1, 1]} : vector<36x128xf32> to vector<33x128xf32>
      %20 = vector.extract_strided_slice %13 {offsets = [0, 0], sizes = [33, 128], strides = [1, 1]} : vector<36x128xf32> to vector<33x128xf32>
      %21 = vector.extract_strided_slice %13 {offsets = [1, 0], sizes = [33, 128], strides = [1, 1]} : vector<36x128xf32> to vector<33x128xf32>
      %22 = vector.extract_strided_slice %13 {offsets = [2, 0], sizes = [33, 128], strides = [1, 1]} : vector<36x128xf32> to vector<33x128xf32>
      %23 = tpu.concatenate %14, %15, %16, %17, %18, %19, %20, %21, %22 in 1 : vector<33x128xf32>, vector<33x128xf32>, vector<33x128xf32>, vector<33x128xf32>, vector<33x128xf32>, vector<33x128xf32>, vector<33x128xf32>, vector<33x128xf32>, vector<33x128xf32> -> vector<33x1152xf32>
      %c0_11 = arith.constant 0 : index
      %c0_12 = arith.constant 0 : index
      %24 = vector.load %arg2[%c0_11, %c0_12] : memref<1152x64xf32, #tpu.memory_space<vmem>>, vector<1152x64xf32>
      %cst = arith.constant dense<0.000000e+00> : vector<33x64xf32>
      %25 = tpu.matmul %23, %24, %cst {dimension_numbers = #tpu.dot_dimension_numbers<[1], [0], [0], [1], [0, 0, 1, 1], [], []>} : vector<33x1152xf32>, vector<1152x64xf32>, vector<33x64xf32> -> vector<33x64xf32>
      %c1_i32_13 = arith.constant 1 : i32
      %26 = arith.addi %1, %c1_i32_13 : i32
      %c0_i32_14 = arith.constant 0 : i32
      %27 = arith.addi %26, %c0_i32_14 : i32
      %c0_15 = arith.constant 0 : index
      %28 = arith.index_cast %27 : i32 to index
      %c0_16 = arith.constant 0 : index
      %c0_17 = arith.constant 0 : index
      %29 = vector.load %arg1[%c0_15, %28, %c0_16, %c0_17] : memref<1x36x36x128xf32, #tpu.memory_space<vmem>>, vector<1x1x36x128xf32>
      %30 = vector.shape_cast %29 : vector<1x1x36x128xf32> to vector<36x128xf32>
      %c1_i32_18 = arith.constant 1 : i32
      %31 = arith.addi %26, %c1_i32_18 : i32
      %c0_19 = arith.constant 0 : index
      %32 = arith.index_cast %31 : i32 to index
      %c0_20 = arith.constant 0 : index
      %c0_21 = arith.constant 0 : index
      %33 = vector.load %arg1[%c0_19, %32, %c0_20, %c0_21] : memref<1x36x36x128xf32, #tpu.memory_space<vmem>>, vector<1x1x36x128xf32>
      %34 = vector.shape_cast %33 : vector<1x1x36x128xf32> to vector<36x128xf32>
      %c2_i32_22 = arith.constant 2 : i32
      %35 = arith.addi %26, %c2_i32_22 : i32
      %c0_23 = arith.constant 0 : index
      %36 = arith.index_cast %35 : i32 to index
      %c0_24 = arith.constant 0 : index
      %c0_25 = arith.constant 0 : index
      %37 = vector.load %arg1[%c0_23, %36, %c0_24, %c0_25] : memref<1x36x36x128xf32, #tpu.memory_space<vmem>>, vector<1x1x36x128xf32>
      %38 = vector.shape_cast %37 : vector<1x1x36x128xf32> to vector<36x128xf32>
      %39 = vector.extract_strided_slice %30 {offsets = [0, 0], sizes = [33, 128], strides = [1, 1]} : vector<36x128xf32> to vector<33x128xf32>
      %40 = vector.extract_strided_slice %30 {offsets = [1, 0], sizes = [33, 128], strides = [1, 1]} : vector<36x128xf32> to vector<33x128xf32>
      %41 = vector.extract_strided_slice %30 {offsets = [2, 0], sizes = [33, 128], strides = [1, 1]} : vector<36x128xf32> to vector<33x128xf32>
      %42 = vector.extract_strided_slice %34 {offsets = [0, 0], sizes = [33, 128], strides = [1, 1]} : vector<36x128xf32> to vector<33x128xf32>
      %43 = vector.extract_strided_slice %34 {offsets = [1, 0], sizes = [33, 128], strides = [1, 1]} : vector<36x128xf32> to vector<33x128xf32>
      %44 = vector.extract_strided_slice %34 {offsets = [2, 0], sizes = [33, 128], strides = [1, 1]} : vector<36x128xf32> to vector<33x128xf32>
      %45 = vector.extract_strided_slice %38 {offsets = [0, 0], sizes = [33, 128], strides = [1, 1]} : vector<36x128xf32> to vector<33x128xf32>
      %46 = vector.extract_strided_slice %38 {offsets = [1, 0], sizes = [33, 128], strides = [1, 1]} : vector<36x128xf32> to vector<33x128xf32>
      %47 = vector.extract_strided_slice %38 {offsets = [2, 0], sizes = [33, 128], strides = [1, 1]} : vector<36x128xf32> to vector<33x128xf32>
      %48 = tpu.concatenate %39, %40, %41, %42, %43, %44, %45, %46, %47 in 1 : vector<33x128xf32>, vector<33x128xf32>, vector<33x128xf32>, vector<33x128xf32>, vector<33x128xf32>, vector<33x128xf32>, vector<33x128xf32>, vector<33x128xf32>, vector<33x128xf32> -> vector<33x1152xf32>
      %c0_26 = arith.constant 0 : index
      %c0_27 = arith.constant 0 : index
      %49 = vector.load %arg2[%c0_26, %c0_27] : memref<1152x64xf32, #tpu.memory_space<vmem>>, vector<1152x64xf32>
      %cst_28 = arith.constant dense<0.000000e+00> : vector<33x64xf32>
      %50 = tpu.matmul %48, %49, %cst_28 {dimension_numbers = #tpu.dot_dimension_numbers<[1], [0], [0], [1], [0, 0, 1, 1], [], []>} : vector<33x1152xf32>, vector<1152x64xf32>, vector<33x64xf32> -> vector<33x64xf32>
      %51 = arith.maximumf %25, %50 : vector<33x64xf32>
      %c2_i32_29 = arith.constant 2 : i32
      %52 = arith.addi %1, %c2_i32_29 : i32
      %c0_i32_30 = arith.constant 0 : i32
      %53 = arith.addi %52, %c0_i32_30 : i32
      %c0_31 = arith.constant 0 : index
      %54 = arith.index_cast %53 : i32 to index
      %c0_32 = arith.constant 0 : index
      %c0_33 = arith.constant 0 : index
      %55 = vector.load %arg1[%c0_31, %54, %c0_32, %c0_33] : memref<1x36x36x128xf32, #tpu.memory_space<vmem>>, vector<1x1x36x128xf32>
      %56 = vector.shape_cast %55 : vector<1x1x36x128xf32> to vector<36x128xf32>
      %c1_i32_34 = arith.constant 1 : i32
      %57 = arith.addi %52, %c1_i32_34 : i32
      %c0_35 = arith.constant 0 : index
      %58 = arith.index_cast %57 : i32 to index
      %c0_36 = arith.constant 0 : index
      %c0_37 = arith.constant 0 : index
      %59 = vector.load %arg1[%c0_35, %58, %c0_36, %c0_37] : memref<1x36x36x128xf32, #tpu.memory_space<vmem>>, vector<1x1x36x128xf32>
      %60 = vector.shape_cast %59 : vector<1x1x36x128xf32> to vector<36x128xf32>
      %c2_i32_38 = arith.constant 2 : i32
      %61 = arith.addi %52, %c2_i32_38 : i32
      %c0_39 = arith.constant 0 : index
      %62 = arith.index_cast %61 : i32 to index
      %c0_40 = arith.constant 0 : index
      %c0_41 = arith.constant 0 : index
      %63 = vector.load %arg1[%c0_39, %62, %c0_40, %c0_41] : memref<1x36x36x128xf32, #tpu.memory_space<vmem>>, vector<1x1x36x128xf32>
      %64 = vector.shape_cast %63 : vector<1x1x36x128xf32> to vector<36x128xf32>
      %65 = vector.extract_strided_slice %56 {offsets = [0, 0], sizes = [33, 128], strides = [1, 1]} : vector<36x128xf32> to vector<33x128xf32>
      %66 = vector.extract_strided_slice %56 {offsets = [1, 0], sizes = [33, 128], strides = [1, 1]} : vector<36x128xf32> to vector<33x128xf32>
      %67 = vector.extract_strided_slice %56 {offsets = [2, 0], sizes = [33, 128], strides = [1, 1]} : vector<36x128xf32> to vector<33x128xf32>
      %68 = vector.extract_strided_slice %60 {offsets = [0, 0], sizes = [33, 128], strides = [1, 1]} : vector<36x128xf32> to vector<33x128xf32>
      %69 = vector.extract_strided_slice %60 {offsets = [1, 0], sizes = [33, 128], strides = [1, 1]} : vector<36x128xf32> to vector<33x128xf32>
      %70 = vector.extract_strided_slice %60 {offsets = [2, 0], sizes = [33, 128], strides = [1, 1]} : vector<36x128xf32> to vector<33x128xf32>
      %71 = vector.extract_strided_slice %64 {offsets = [0, 0], sizes = [33, 128], strides = [1, 1]} : vector<36x128xf32> to vector<33x128xf32>
      %72 = vector.extract_strided_slice %64 {offsets = [1, 0], sizes = [33, 128], strides = [1, 1]} : vector<36x128xf32> to vector<33x128xf32>
      %73 = vector.extract_strided_slice %64 {offsets = [2, 0], sizes = [33, 128], strides = [1, 1]} : vector<36x128xf32> to vector<33x128xf32>
      %74 = tpu.concatenate %65, %66, %67, %68, %69, %70, %71, %72, %73 in 1 : vector<33x128xf32>, vector<33x128xf32>, vector<33x128xf32>, vector<33x128xf32>, vector<33x128xf32>, vector<33x128xf32>, vector<33x128xf32>, vector<33x128xf32>, vector<33x128xf32> -> vector<33x1152xf32>
      %c0_42 = arith.constant 0 : index
      %c0_43 = arith.constant 0 : index
      %75 = vector.load %arg2[%c0_42, %c0_43] : memref<1152x64xf32, #tpu.memory_space<vmem>>, vector<1152x64xf32>
      %cst_44 = arith.constant dense<0.000000e+00> : vector<33x64xf32>
      %76 = tpu.matmul %74, %75, %cst_44 {dimension_numbers = #tpu.dot_dimension_numbers<[1], [0], [0], [1], [0, 0, 1, 1], [], []>} : vector<33x1152xf32>, vector<1152x64xf32>, vector<33x64xf32> -> vector<33x64xf32>
      %77 = arith.maximumf %51, %76 : vector<33x64xf32>
      %c0_45 = arith.constant 0 : index
      %c0_46 = arith.constant 0 : index
      %78 = vector.load %arg5[%c0_45, %c0_46] : memref<33x64xf32, #tpu.memory_space<vmem>>, vector<33x64xf32>
      tpu.vector_store %arg5[%c0_45, %c0_46], %77 {strides = array<i32>} : memref<33x64xf32, #tpu.memory_space<vmem>>, vector<33x64xf32>,
      %c0_47 = arith.constant 0 : index
      %c0_48 = arith.constant 0 : index
      %79 = tpu.strided_load %arg5[%c0_47, %c0_48] {strides = array<i32: 3, 1>} : memref<33x64xf32, #tpu.memory_space<vmem>>, vector<11x64xf32>
      %c1 = arith.constant 1 : index
      %c0_49 = arith.constant 0 : index
      %80 = tpu.strided_load %arg5[%c1, %c0_49] {strides = array<i32: 3, 1>} : memref<33x64xf32, #tpu.memory_space<vmem>>, vector<11x64xf32>
      %81 = arith.maximumf %79, %80 : vector<11x64xf32>
      %c2 = arith.constant 2 : index
      %c0_50 = arith.constant 0 : index
      %82 = tpu.strided_load %arg5[%c2, %c0_50] {strides = array<i32: 3, 1>} : memref<33x64xf32, #tpu.memory_space<vmem>>, vector<11x64xf32>
      %83 = arith.maximumf %81, %82 : vector<11x64xf32>
      %c0_51 = arith.constant 0 : index
      %c0_52 = arith.constant 0 : index
      %84 = vector.load %arg3[%c0_51, %c0_52] : memref<1x64xf32, #tpu.memory_space<vmem>>, vector<1x64xf32>
      %85 = vector.broadcast %84 : vector<1x64xf32> to vector<11x64xf32>
      %86 = arith.addf %83, %85 : vector<11x64xf32>
      %cst_53 = arith.constant 0.000000e+00 : f32
      %87 = vector.broadcast %cst_53 : f32 to vector<11x64xf32>
      %88 = arith.maximumf %86, %87 : vector<11x64xf32>
      %c0_54 = arith.constant 0 : index
      %89 = arith.index_cast %arg6 : i32 to index
      %c0_55 = arith.constant 0 : index
      %c0_56 = arith.constant 0 : index
      %90 = vector.load %arg4[%c0_54, %89, %c0_55, %c0_56] : memref<1x11x11x64xf32, #tpu.memory_space<vmem>>, vector<1x1x11x64xf32>
      %91 = vector.shape_cast %90 : vector<1x1x11x64xf32> to vector<11x64xf32>
      %92 = vector.shape_cast %88 : vector<11x64xf32> to vector<1x1x11x64xf32>
      tpu.vector_store %arg4[%c0_54, %89, %c0_55, %c0_56], %92 {strides = array<i32>} : memref<1x11x11x64xf32, #tpu.memory_space<vmem>>, vector<1x1x11x64xf32>,
    }
    %c11_i32_0 = arith.constant 11 : i32
    return
  }
  func.func @transform_0(%arg0: i32) -> (i32, i32, i32, i32) {
    %c0_i32 = arith.constant 0 : i32
    %c0_i32_0 = arith.constant 0 : i32
    %c0_i32_1 = arith.constant 0 : i32
    %c0_i32_2 = arith.constant 0 : i32
    return %arg0, %c0_i32, %c0_i32_0, %c0_i32_1 : i32, i32, i32, i32
  }
  func.func @transform_1(%arg0: i32) -> (i32, i32) {
    %c0_i32 = arith.constant 0 : i32
    %c0_i32_0 = arith.constant 0 : i32
    %c0_i32_1 = arith.constant 0 : i32
    return %c0_i32, %c0_i32_0 : i32, i32
  }
  func.func @transform_2(%arg0: i32) -> (i32, i32) {
    %c0_i32 = arith.constant 0 : i32
    %c0_i32_0 = arith.constant 0 : i32
    %c0_i32_1 = arith.constant 0 : i32
    return %c0_i32, %c0_i32_0 : i32, i32
  }
  func.func @transform_3(%arg0: i32) -> (i32, i32, i32, i32) {
    %c0_i32 = arith.constant 0 : i32
    %c0_i32_0 = arith.constant 0 : i32
    %c0_i32_1 = arith.constant 0 : i32
    %c0_i32_2 = arith.constant 0 : i32
    return %arg0, %c0_i32, %c0_i32_0, %c0_i32_1 : i32, i32, i32, i32
  }
}

module attributes {stable_mosaic.version = 11 : i64} {
  func.func @kernel(%arg0: i32, %arg1: memref<1x11x11x64xf32, #tpu.memory_space<vmem>>, %arg2: memref<576x32xf32, #tpu.memory_space<vmem>>, %arg3: memref<1x32xf32, #tpu.memory_space<vmem>>, %arg4: memref<1x3x3x32xf32, #tpu.memory_space<vmem>>, %arg5: memref<9x32xf32, #tpu.memory_space<vmem>>) attributes {dimension_semantics = [#tpu.dimension_semantics<parallel>], iteration_bounds = array<i64: 2>, scalar_prefetch = 0 : i64, scratch_operands = 1 : i64, tpu.core_type = #tpu.core_type<tc>, window_params = [{transform_indices = @transform_0, window_bounds = array<i64: 1, 11, 11, 64>}, {pipeline_mode = #tpu.pipeline_mode<synchronous>, transform_indices = @transform_1, window_bounds = array<i64: 576, 32>}, {pipeline_mode = #tpu.pipeline_mode<synchronous>, transform_indices = @transform_2, window_bounds = array<i64: 1, 32>}, {transform_indices = @transform_3, window_bounds = array<i64: 1, 3, 3, 32>}]} {
    %c0_i32 = arith.constant 0 : i32
    %c3_i32 = arith.constant 3 : i32
    %0 = arith.addi %c0_i32, %c3_i32 : i32
    %c1_i32 = arith.constant 1 : i32
    scf.for %arg6 = %c0_i32 to %0 step %c1_i32  : i32 {
      %c3_i32_1 = arith.constant 3 : i32
      %1 = arith.muli %c3_i32_1, %arg6 : i32
      %c0_i32_2 = arith.constant 0 : i32
      %2 = arith.addi %1, %c0_i32_2 : i32
      %c0 = arith.constant 0 : index
      %3 = arith.index_cast %2 : i32 to index
      %c0_3 = arith.constant 0 : index
      %c0_4 = arith.constant 0 : index
      %4 = vector.load %arg1[%c0, %3, %c0_3, %c0_4] : memref<1x11x11x64xf32, #tpu.memory_space<vmem>>, vector<1x1x11x64xf32>
      %5 = vector.shape_cast %4 : vector<1x1x11x64xf32> to vector<11x64xf32>
      %c1_i32_5 = arith.constant 1 : i32
      %6 = arith.addi %1, %c1_i32_5 : i32
      %c0_6 = arith.constant 0 : index
      %7 = arith.index_cast %6 : i32 to index
      %c0_7 = arith.constant 0 : index
      %c0_8 = arith.constant 0 : index
      %8 = vector.load %arg1[%c0_6, %7, %c0_7, %c0_8] : memref<1x11x11x64xf32, #tpu.memory_space<vmem>>, vector<1x1x11x64xf32>
      %9 = vector.shape_cast %8 : vector<1x1x11x64xf32> to vector<11x64xf32>
      %c2_i32 = arith.constant 2 : i32
      %10 = arith.addi %1, %c2_i32 : i32
      %c0_9 = arith.constant 0 : index
      %11 = arith.index_cast %10 : i32 to index
      %c0_10 = arith.constant 0 : index
      %c0_11 = arith.constant 0 : index
      %12 = vector.load %arg1[%c0_9, %11, %c0_10, %c0_11] : memref<1x11x11x64xf32, #tpu.memory_space<vmem>>, vector<1x1x11x64xf32>
      %13 = vector.shape_cast %12 : vector<1x1x11x64xf32> to vector<11x64xf32>
      %cst = arith.constant 0.000000e+00 : f32
      %14 = vector.broadcast %cst : f32 to vector<9x32xf32>
      %15 = vector.extract_strided_slice %5 {offsets = [0, 0], sizes = [9, 64], strides = [1, 1]} : vector<11x64xf32> to vector<9x64xf32>
      %c0_12 = arith.constant 0 : index
      %c0_13 = arith.constant 0 : index
      %16 = vector.load %arg2[%c0_12, %c0_13] : memref<576x32xf32, #tpu.memory_space<vmem>>, vector<64x32xf32>
      %cst_14 = arith.constant dense<0.000000e+00> : vector<9x32xf32>
      %17 = tpu.matmul %15, %16, %cst_14 {dimension_numbers = #tpu.dot_dimension_numbers<[1], [0], [0], [1], [0, 0, 1, 1], [], []>} : vector<9x64xf32>, vector<64x32xf32>, vector<9x32xf32> -> vector<9x32xf32>
      %18 = arith.addf %14, %17 : vector<9x32xf32>
      %19 = vector.extract_strided_slice %5 {offsets = [1, 0], sizes = [9, 64], strides = [1, 1]} : vector<11x64xf32> to vector<9x64xf32>
      %c64 = arith.constant 64 : index
      %c0_15 = arith.constant 0 : index
      %20 = vector.load %arg2[%c64, %c0_15] : memref<576x32xf32, #tpu.memory_space<vmem>>, vector<64x32xf32>
      %cst_16 = arith.constant dense<0.000000e+00> : vector<9x32xf32>
      %21 = tpu.matmul %19, %20, %cst_16 {dimension_numbers = #tpu.dot_dimension_numbers<[1], [0], [0], [1], [0, 0, 1, 1], [], []>} : vector<9x64xf32>, vector<64x32xf32>, vector<9x32xf32> -> vector<9x32xf32>
      %22 = arith.addf %18, %21 : vector<9x32xf32>
      %23 = vector.extract_strided_slice %5 {offsets = [2, 0], sizes = [9, 64], strides = [1, 1]} : vector<11x64xf32> to vector<9x64xf32>
      %c128 = arith.constant 128 : index
      %c0_17 = arith.constant 0 : index
      %24 = vector.load %arg2[%c128, %c0_17] : memref<576x32xf32, #tpu.memory_space<vmem>>, vector<64x32xf32>
      %cst_18 = arith.constant dense<0.000000e+00> : vector<9x32xf32>
      %25 = tpu.matmul %23, %24, %cst_18 {dimension_numbers = #tpu.dot_dimension_numbers<[1], [0], [0], [1], [0, 0, 1, 1], [], []>} : vector<9x64xf32>, vector<64x32xf32>, vector<9x32xf32> -> vector<9x32xf32>
      %26 = arith.addf %22, %25 : vector<9x32xf32>
      %27 = vector.extract_strided_slice %9 {offsets = [0, 0], sizes = [9, 64], strides = [1, 1]} : vector<11x64xf32> to vector<9x64xf32>
      %c192 = arith.constant 192 : index
      %c0_19 = arith.constant 0 : index
      %28 = vector.load %arg2[%c192, %c0_19] : memref<576x32xf32, #tpu.memory_space<vmem>>, vector<64x32xf32>
      %cst_20 = arith.constant dense<0.000000e+00> : vector<9x32xf32>
      %29 = tpu.matmul %27, %28, %cst_20 {dimension_numbers = #tpu.dot_dimension_numbers<[1], [0], [0], [1], [0, 0, 1, 1], [], []>} : vector<9x64xf32>, vector<64x32xf32>, vector<9x32xf32> -> vector<9x32xf32>
      %30 = arith.addf %26, %29 : vector<9x32xf32>
      %31 = vector.extract_strided_slice %9 {offsets = [1, 0], sizes = [9, 64], strides = [1, 1]} : vector<11x64xf32> to vector<9x64xf32>
      %c256 = arith.constant 256 : index
      %c0_21 = arith.constant 0 : index
      %32 = vector.load %arg2[%c256, %c0_21] : memref<576x32xf32, #tpu.memory_space<vmem>>, vector<64x32xf32>
      %cst_22 = arith.constant dense<0.000000e+00> : vector<9x32xf32>
      %33 = tpu.matmul %31, %32, %cst_22 {dimension_numbers = #tpu.dot_dimension_numbers<[1], [0], [0], [1], [0, 0, 1, 1], [], []>} : vector<9x64xf32>, vector<64x32xf32>, vector<9x32xf32> -> vector<9x32xf32>
      %34 = arith.addf %30, %33 : vector<9x32xf32>
      %35 = vector.extract_strided_slice %9 {offsets = [2, 0], sizes = [9, 64], strides = [1, 1]} : vector<11x64xf32> to vector<9x64xf32>
      %c320 = arith.constant 320 : index
      %c0_23 = arith.constant 0 : index
      %36 = vector.load %arg2[%c320, %c0_23] : memref<576x32xf32, #tpu.memory_space<vmem>>, vector<64x32xf32>
      %cst_24 = arith.constant dense<0.000000e+00> : vector<9x32xf32>
      %37 = tpu.matmul %35, %36, %cst_24 {dimension_numbers = #tpu.dot_dimension_numbers<[1], [0], [0], [1], [0, 0, 1, 1], [], []>} : vector<9x64xf32>, vector<64x32xf32>, vector<9x32xf32> -> vector<9x32xf32>
      %38 = arith.addf %34, %37 : vector<9x32xf32>
      %39 = vector.extract_strided_slice %13 {offsets = [0, 0], sizes = [9, 64], strides = [1, 1]} : vector<11x64xf32> to vector<9x64xf32>
      %c384 = arith.constant 384 : index
      %c0_25 = arith.constant 0 : index
      %40 = vector.load %arg2[%c384, %c0_25] : memref<576x32xf32, #tpu.memory_space<vmem>>, vector<64x32xf32>
      %cst_26 = arith.constant dense<0.000000e+00> : vector<9x32xf32>
      %41 = tpu.matmul %39, %40, %cst_26 {dimension_numbers = #tpu.dot_dimension_numbers<[1], [0], [0], [1], [0, 0, 1, 1], [], []>} : vector<9x64xf32>, vector<64x32xf32>, vector<9x32xf32> -> vector<9x32xf32>
      %42 = arith.addf %38, %41 : vector<9x32xf32>
      %43 = vector.extract_strided_slice %13 {offsets = [1, 0], sizes = [9, 64], strides = [1, 1]} : vector<11x64xf32> to vector<9x64xf32>
      %c448 = arith.constant 448 : index
      %c0_27 = arith.constant 0 : index
      %44 = vector.load %arg2[%c448, %c0_27] : memref<576x32xf32, #tpu.memory_space<vmem>>, vector<64x32xf32>
      %cst_28 = arith.constant dense<0.000000e+00> : vector<9x32xf32>
      %45 = tpu.matmul %43, %44, %cst_28 {dimension_numbers = #tpu.dot_dimension_numbers<[1], [0], [0], [1], [0, 0, 1, 1], [], []>} : vector<9x64xf32>, vector<64x32xf32>, vector<9x32xf32> -> vector<9x32xf32>
      %46 = arith.addf %42, %45 : vector<9x32xf32>
      %47 = vector.extract_strided_slice %13 {offsets = [2, 0], sizes = [9, 64], strides = [1, 1]} : vector<11x64xf32> to vector<9x64xf32>
      %c512 = arith.constant 512 : index
      %c0_29 = arith.constant 0 : index
      %48 = vector.load %arg2[%c512, %c0_29] : memref<576x32xf32, #tpu.memory_space<vmem>>, vector<64x32xf32>
      %cst_30 = arith.constant dense<0.000000e+00> : vector<9x32xf32>
      %49 = tpu.matmul %47, %48, %cst_30 {dimension_numbers = #tpu.dot_dimension_numbers<[1], [0], [0], [1], [0, 0, 1, 1], [], []>} : vector<9x64xf32>, vector<64x32xf32>, vector<9x32xf32> -> vector<9x32xf32>
      %50 = arith.addf %46, %49 : vector<9x32xf32>
      %c1_i32_31 = arith.constant 1 : i32
      %51 = arith.addi %1, %c1_i32_31 : i32
      %c0_i32_32 = arith.constant 0 : i32
      %52 = arith.addi %51, %c0_i32_32 : i32
      %c0_33 = arith.constant 0 : index
      %53 = arith.index_cast %52 : i32 to index
      %c0_34 = arith.constant 0 : index
      %c0_35 = arith.constant 0 : index
      %54 = vector.load %arg1[%c0_33, %53, %c0_34, %c0_35] : memref<1x11x11x64xf32, #tpu.memory_space<vmem>>, vector<1x1x11x64xf32>
      %55 = vector.shape_cast %54 : vector<1x1x11x64xf32> to vector<11x64xf32>
      %c1_i32_36 = arith.constant 1 : i32
      %56 = arith.addi %51, %c1_i32_36 : i32
      %c0_37 = arith.constant 0 : index
      %57 = arith.index_cast %56 : i32 to index
      %c0_38 = arith.constant 0 : index
      %c0_39 = arith.constant 0 : index
      %58 = vector.load %arg1[%c0_37, %57, %c0_38, %c0_39] : memref<1x11x11x64xf32, #tpu.memory_space<vmem>>, vector<1x1x11x64xf32>
      %59 = vector.shape_cast %58 : vector<1x1x11x64xf32> to vector<11x64xf32>
      %c2_i32_40 = arith.constant 2 : i32
      %60 = arith.addi %51, %c2_i32_40 : i32
      %c0_41 = arith.constant 0 : index
      %61 = arith.index_cast %60 : i32 to index
      %c0_42 = arith.constant 0 : index
      %c0_43 = arith.constant 0 : index
      %62 = vector.load %arg1[%c0_41, %61, %c0_42, %c0_43] : memref<1x11x11x64xf32, #tpu.memory_space<vmem>>, vector<1x1x11x64xf32>
      %63 = vector.shape_cast %62 : vector<1x1x11x64xf32> to vector<11x64xf32>
      %cst_44 = arith.constant 0.000000e+00 : f32
      %64 = vector.broadcast %cst_44 : f32 to vector<9x32xf32>
      %65 = vector.extract_strided_slice %55 {offsets = [0, 0], sizes = [9, 64], strides = [1, 1]} : vector<11x64xf32> to vector<9x64xf32>
      %c0_45 = arith.constant 0 : index
      %c0_46 = arith.constant 0 : index
      %66 = vector.load %arg2[%c0_45, %c0_46] : memref<576x32xf32, #tpu.memory_space<vmem>>, vector<64x32xf32>
      %cst_47 = arith.constant dense<0.000000e+00> : vector<9x32xf32>
      %67 = tpu.matmul %65, %66, %cst_47 {dimension_numbers = #tpu.dot_dimension_numbers<[1], [0], [0], [1], [0, 0, 1, 1], [], []>} : vector<9x64xf32>, vector<64x32xf32>, vector<9x32xf32> -> vector<9x32xf32>
      %68 = arith.addf %64, %67 : vector<9x32xf32>
      %69 = vector.extract_strided_slice %55 {offsets = [1, 0], sizes = [9, 64], strides = [1, 1]} : vector<11x64xf32> to vector<9x64xf32>
      %c64_48 = arith.constant 64 : index
      %c0_49 = arith.constant 0 : index
      %70 = vector.load %arg2[%c64_48, %c0_49] : memref<576x32xf32, #tpu.memory_space<vmem>>, vector<64x32xf32>
      %cst_50 = arith.constant dense<0.000000e+00> : vector<9x32xf32>
      %71 = tpu.matmul %69, %70, %cst_50 {dimension_numbers = #tpu.dot_dimension_numbers<[1], [0], [0], [1], [0, 0, 1, 1], [], []>} : vector<9x64xf32>, vector<64x32xf32>, vector<9x32xf32> -> vector<9x32xf32>
      %72 = arith.addf %68, %71 : vector<9x32xf32>
      %73 = vector.extract_strided_slice %55 {offsets = [2, 0], sizes = [9, 64], strides = [1, 1]} : vector<11x64xf32> to vector<9x64xf32>
      %c128_51 = arith.constant 128 : index
      %c0_52 = arith.constant 0 : index
      %74 = vector.load %arg2[%c128_51, %c0_52] : memref<576x32xf32, #tpu.memory_space<vmem>>, vector<64x32xf32>
      %cst_53 = arith.constant dense<0.000000e+00> : vector<9x32xf32>
      %75 = tpu.matmul %73, %74, %cst_53 {dimension_numbers = #tpu.dot_dimension_numbers<[1], [0], [0], [1], [0, 0, 1, 1], [], []>} : vector<9x64xf32>, vector<64x32xf32>, vector<9x32xf32> -> vector<9x32xf32>
      %76 = arith.addf %72, %75 : vector<9x32xf32>
      %77 = vector.extract_strided_slice %59 {offsets = [0, 0], sizes = [9, 64], strides = [1, 1]} : vector<11x64xf32> to vector<9x64xf32>
      %c192_54 = arith.constant 192 : index
      %c0_55 = arith.constant 0 : index
      %78 = vector.load %arg2[%c192_54, %c0_55] : memref<576x32xf32, #tpu.memory_space<vmem>>, vector<64x32xf32>
      %cst_56 = arith.constant dense<0.000000e+00> : vector<9x32xf32>
      %79 = tpu.matmul %77, %78, %cst_56 {dimension_numbers = #tpu.dot_dimension_numbers<[1], [0], [0], [1], [0, 0, 1, 1], [], []>} : vector<9x64xf32>, vector<64x32xf32>, vector<9x32xf32> -> vector<9x32xf32>
      %80 = arith.addf %76, %79 : vector<9x32xf32>
      %81 = vector.extract_strided_slice %59 {offsets = [1, 0], sizes = [9, 64], strides = [1, 1]} : vector<11x64xf32> to vector<9x64xf32>
      %c256_57 = arith.constant 256 : index
      %c0_58 = arith.constant 0 : index
      %82 = vector.load %arg2[%c256_57, %c0_58] : memref<576x32xf32, #tpu.memory_space<vmem>>, vector<64x32xf32>
      %cst_59 = arith.constant dense<0.000000e+00> : vector<9x32xf32>
      %83 = tpu.matmul %81, %82, %cst_59 {dimension_numbers = #tpu.dot_dimension_numbers<[1], [0], [0], [1], [0, 0, 1, 1], [], []>} : vector<9x64xf32>, vector<64x32xf32>, vector<9x32xf32> -> vector<9x32xf32>
      %84 = arith.addf %80, %83 : vector<9x32xf32>
      %85 = vector.extract_strided_slice %59 {offsets = [2, 0], sizes = [9, 64], strides = [1, 1]} : vector<11x64xf32> to vector<9x64xf32>
      %c320_60 = arith.constant 320 : index
      %c0_61 = arith.constant 0 : index
      %86 = vector.load %arg2[%c320_60, %c0_61] : memref<576x32xf32, #tpu.memory_space<vmem>>, vector<64x32xf32>
      %cst_62 = arith.constant dense<0.000000e+00> : vector<9x32xf32>
      %87 = tpu.matmul %85, %86, %cst_62 {dimension_numbers = #tpu.dot_dimension_numbers<[1], [0], [0], [1], [0, 0, 1, 1], [], []>} : vector<9x64xf32>, vector<64x32xf32>, vector<9x32xf32> -> vector<9x32xf32>
      %88 = arith.addf %84, %87 : vector<9x32xf32>
      %89 = vector.extract_strided_slice %63 {offsets = [0, 0], sizes = [9, 64], strides = [1, 1]} : vector<11x64xf32> to vector<9x64xf32>
      %c384_63 = arith.constant 384 : index
      %c0_64 = arith.constant 0 : index
      %90 = vector.load %arg2[%c384_63, %c0_64] : memref<576x32xf32, #tpu.memory_space<vmem>>, vector<64x32xf32>
      %cst_65 = arith.constant dense<0.000000e+00> : vector<9x32xf32>
      %91 = tpu.matmul %89, %90, %cst_65 {dimension_numbers = #tpu.dot_dimension_numbers<[1], [0], [0], [1], [0, 0, 1, 1], [], []>} : vector<9x64xf32>, vector<64x32xf32>, vector<9x32xf32> -> vector<9x32xf32>
      %92 = arith.addf %88, %91 : vector<9x32xf32>
      %93 = vector.extract_strided_slice %63 {offsets = [1, 0], sizes = [9, 64], strides = [1, 1]} : vector<11x64xf32> to vector<9x64xf32>
      %c448_66 = arith.constant 448 : index
      %c0_67 = arith.constant 0 : index
      %94 = vector.load %arg2[%c448_66, %c0_67] : memref<576x32xf32, #tpu.memory_space<vmem>>, vector<64x32xf32>
      %cst_68 = arith.constant dense<0.000000e+00> : vector<9x32xf32>
      %95 = tpu.matmul %93, %94, %cst_68 {dimension_numbers = #tpu.dot_dimension_numbers<[1], [0], [0], [1], [0, 0, 1, 1], [], []>} : vector<9x64xf32>, vector<64x32xf32>, vector<9x32xf32> -> vector<9x32xf32>
      %96 = arith.addf %92, %95 : vector<9x32xf32>
      %97 = vector.extract_strided_slice %63 {offsets = [2, 0], sizes = [9, 64], strides = [1, 1]} : vector<11x64xf32> to vector<9x64xf32>
      %c512_69 = arith.constant 512 : index
      %c0_70 = arith.constant 0 : index
      %98 = vector.load %arg2[%c512_69, %c0_70] : memref<576x32xf32, #tpu.memory_space<vmem>>, vector<64x32xf32>
      %cst_71 = arith.constant dense<0.000000e+00> : vector<9x32xf32>
      %99 = tpu.matmul %97, %98, %cst_71 {dimension_numbers = #tpu.dot_dimension_numbers<[1], [0], [0], [1], [0, 0, 1, 1], [], []>} : vector<9x64xf32>, vector<64x32xf32>, vector<9x32xf32> -> vector<9x32xf32>
      %100 = arith.addf %96, %99 : vector<9x32xf32>
      %101 = arith.maximumf %50, %100 : vector<9x32xf32>
      %c2_i32_72 = arith.constant 2 : i32
      %102 = arith.addi %1, %c2_i32_72 : i32
      %c0_i32_73 = arith.constant 0 : i32
      %103 = arith.addi %102, %c0_i32_73 : i32
      %c0_74 = arith.constant 0 : index
      %104 = arith.index_cast %103 : i32 to index
      %c0_75 = arith.constant 0 : index
      %c0_76 = arith.constant 0 : index
      %105 = vector.load %arg1[%c0_74, %104, %c0_75, %c0_76] : memref<1x11x11x64xf32, #tpu.memory_space<vmem>>, vector<1x1x11x64xf32>
      %106 = vector.shape_cast %105 : vector<1x1x11x64xf32> to vector<11x64xf32>
      %c1_i32_77 = arith.constant 1 : i32
      %107 = arith.addi %102, %c1_i32_77 : i32
      %c0_78 = arith.constant 0 : index
      %108 = arith.index_cast %107 : i32 to index
      %c0_79 = arith.constant 0 : index
      %c0_80 = arith.constant 0 : index
      %109 = vector.load %arg1[%c0_78, %108, %c0_79, %c0_80] : memref<1x11x11x64xf32, #tpu.memory_space<vmem>>, vector<1x1x11x64xf32>
      %110 = vector.shape_cast %109 : vector<1x1x11x64xf32> to vector<11x64xf32>
      %c2_i32_81 = arith.constant 2 : i32
      %111 = arith.addi %102, %c2_i32_81 : i32
      %c0_82 = arith.constant 0 : index
      %112 = arith.index_cast %111 : i32 to index
      %c0_83 = arith.constant 0 : index
      %c0_84 = arith.constant 0 : index
      %113 = vector.load %arg1[%c0_82, %112, %c0_83, %c0_84] : memref<1x11x11x64xf32, #tpu.memory_space<vmem>>, vector<1x1x11x64xf32>
      %114 = vector.shape_cast %113 : vector<1x1x11x64xf32> to vector<11x64xf32>
      %cst_85 = arith.constant 0.000000e+00 : f32
      %115 = vector.broadcast %cst_85 : f32 to vector<9x32xf32>
      %116 = vector.extract_strided_slice %106 {offsets = [0, 0], sizes = [9, 64], strides = [1, 1]} : vector<11x64xf32> to vector<9x64xf32>
      %c0_86 = arith.constant 0 : index
      %c0_87 = arith.constant 0 : index
      %117 = vector.load %arg2[%c0_86, %c0_87] : memref<576x32xf32, #tpu.memory_space<vmem>>, vector<64x32xf32>
      %cst_88 = arith.constant dense<0.000000e+00> : vector<9x32xf32>
      %118 = tpu.matmul %116, %117, %cst_88 {dimension_numbers = #tpu.dot_dimension_numbers<[1], [0], [0], [1], [0, 0, 1, 1], [], []>} : vector<9x64xf32>, vector<64x32xf32>, vector<9x32xf32> -> vector<9x32xf32>
      %119 = arith.addf %115, %118 : vector<9x32xf32>
      %120 = vector.extract_strided_slice %106 {offsets = [1, 0], sizes = [9, 64], strides = [1, 1]} : vector<11x64xf32> to vector<9x64xf32>
      %c64_89 = arith.constant 64 : index
      %c0_90 = arith.constant 0 : index
      %121 = vector.load %arg2[%c64_89, %c0_90] : memref<576x32xf32, #tpu.memory_space<vmem>>, vector<64x32xf32>
      %cst_91 = arith.constant dense<0.000000e+00> : vector<9x32xf32>
      %122 = tpu.matmul %120, %121, %cst_91 {dimension_numbers = #tpu.dot_dimension_numbers<[1], [0], [0], [1], [0, 0, 1, 1], [], []>} : vector<9x64xf32>, vector<64x32xf32>, vector<9x32xf32> -> vector<9x32xf32>
      %123 = arith.addf %119, %122 : vector<9x32xf32>
      %124 = vector.extract_strided_slice %106 {offsets = [2, 0], sizes = [9, 64], strides = [1, 1]} : vector<11x64xf32> to vector<9x64xf32>
      %c128_92 = arith.constant 128 : index
      %c0_93 = arith.constant 0 : index
      %125 = vector.load %arg2[%c128_92, %c0_93] : memref<576x32xf32, #tpu.memory_space<vmem>>, vector<64x32xf32>
      %cst_94 = arith.constant dense<0.000000e+00> : vector<9x32xf32>
      %126 = tpu.matmul %124, %125, %cst_94 {dimension_numbers = #tpu.dot_dimension_numbers<[1], [0], [0], [1], [0, 0, 1, 1], [], []>} : vector<9x64xf32>, vector<64x32xf32>, vector<9x32xf32> -> vector<9x32xf32>
      %127 = arith.addf %123, %126 : vector<9x32xf32>
      %128 = vector.extract_strided_slice %110 {offsets = [0, 0], sizes = [9, 64], strides = [1, 1]} : vector<11x64xf32> to vector<9x64xf32>
      %c192_95 = arith.constant 192 : index
      %c0_96 = arith.constant 0 : index
      %129 = vector.load %arg2[%c192_95, %c0_96] : memref<576x32xf32, #tpu.memory_space<vmem>>, vector<64x32xf32>
      %cst_97 = arith.constant dense<0.000000e+00> : vector<9x32xf32>
      %130 = tpu.matmul %128, %129, %cst_97 {dimension_numbers = #tpu.dot_dimension_numbers<[1], [0], [0], [1], [0, 0, 1, 1], [], []>} : vector<9x64xf32>, vector<64x32xf32>, vector<9x32xf32> -> vector<9x32xf32>
      %131 = arith.addf %127, %130 : vector<9x32xf32>
      %132 = vector.extract_strided_slice %110 {offsets = [1, 0], sizes = [9, 64], strides = [1, 1]} : vector<11x64xf32> to vector<9x64xf32>
      %c256_98 = arith.constant 256 : index
      %c0_99 = arith.constant 0 : index
      %133 = vector.load %arg2[%c256_98, %c0_99] : memref<576x32xf32, #tpu.memory_space<vmem>>, vector<64x32xf32>
      %cst_100 = arith.constant dense<0.000000e+00> : vector<9x32xf32>
      %134 = tpu.matmul %132, %133, %cst_100 {dimension_numbers = #tpu.dot_dimension_numbers<[1], [0], [0], [1], [0, 0, 1, 1], [], []>} : vector<9x64xf32>, vector<64x32xf32>, vector<9x32xf32> -> vector<9x32xf32>
      %135 = arith.addf %131, %134 : vector<9x32xf32>
      %136 = vector.extract_strided_slice %110 {offsets = [2, 0], sizes = [9, 64], strides = [1, 1]} : vector<11x64xf32> to vector<9x64xf32>
      %c320_101 = arith.constant 320 : index
      %c0_102 = arith.constant 0 : index
      %137 = vector.load %arg2[%c320_101, %c0_102] : memref<576x32xf32, #tpu.memory_space<vmem>>, vector<64x32xf32>
      %cst_103 = arith.constant dense<0.000000e+00> : vector<9x32xf32>
      %138 = tpu.matmul %136, %137, %cst_103 {dimension_numbers = #tpu.dot_dimension_numbers<[1], [0], [0], [1], [0, 0, 1, 1], [], []>} : vector<9x64xf32>, vector<64x32xf32>, vector<9x32xf32> -> vector<9x32xf32>
      %139 = arith.addf %135, %138 : vector<9x32xf32>
      %140 = vector.extract_strided_slice %114 {offsets = [0, 0], sizes = [9, 64], strides = [1, 1]} : vector<11x64xf32> to vector<9x64xf32>
      %c384_104 = arith.constant 384 : index
      %c0_105 = arith.constant 0 : index
      %141 = vector.load %arg2[%c384_104, %c0_105] : memref<576x32xf32, #tpu.memory_space<vmem>>, vector<64x32xf32>
      %cst_106 = arith.constant dense<0.000000e+00> : vector<9x32xf32>
      %142 = tpu.matmul %140, %141, %cst_106 {dimension_numbers = #tpu.dot_dimension_numbers<[1], [0], [0], [1], [0, 0, 1, 1], [], []>} : vector<9x64xf32>, vector<64x32xf32>, vector<9x32xf32> -> vector<9x32xf32>
      %143 = arith.addf %139, %142 : vector<9x32xf32>
      %144 = vector.extract_strided_slice %114 {offsets = [1, 0], sizes = [9, 64], strides = [1, 1]} : vector<11x64xf32> to vector<9x64xf32>
      %c448_107 = arith.constant 448 : index
      %c0_108 = arith.constant 0 : index
      %145 = vector.load %arg2[%c448_107, %c0_108] : memref<576x32xf32, #tpu.memory_space<vmem>>, vector<64x32xf32>
      %cst_109 = arith.constant dense<0.000000e+00> : vector<9x32xf32>
      %146 = tpu.matmul %144, %145, %cst_109 {dimension_numbers = #tpu.dot_dimension_numbers<[1], [0], [0], [1], [0, 0, 1, 1], [], []>} : vector<9x64xf32>, vector<64x32xf32>, vector<9x32xf32> -> vector<9x32xf32>
      %147 = arith.addf %143, %146 : vector<9x32xf32>
      %148 = vector.extract_strided_slice %114 {offsets = [2, 0], sizes = [9, 64], strides = [1, 1]} : vector<11x64xf32> to vector<9x64xf32>
      %c512_110 = arith.constant 512 : index
      %c0_111 = arith.constant 0 : index
      %149 = vector.load %arg2[%c512_110, %c0_111] : memref<576x32xf32, #tpu.memory_space<vmem>>, vector<64x32xf32>
      %cst_112 = arith.constant dense<0.000000e+00> : vector<9x32xf32>
      %150 = tpu.matmul %148, %149, %cst_112 {dimension_numbers = #tpu.dot_dimension_numbers<[1], [0], [0], [1], [0, 0, 1, 1], [], []>} : vector<9x64xf32>, vector<64x32xf32>, vector<9x32xf32> -> vector<9x32xf32>
      %151 = arith.addf %147, %150 : vector<9x32xf32>
      %152 = arith.maximumf %101, %151 : vector<9x32xf32>
      %c0_113 = arith.constant 0 : index
      %c0_114 = arith.constant 0 : index
      %153 = vector.load %arg5[%c0_113, %c0_114] : memref<9x32xf32, #tpu.memory_space<vmem>>, vector<9x32xf32>
      tpu.vector_store %arg5[%c0_113, %c0_114], %152 {strides = array<i32>} : memref<9x32xf32, #tpu.memory_space<vmem>>, vector<9x32xf32>,
      %c0_115 = arith.constant 0 : index
      %c0_116 = arith.constant 0 : index
      %154 = tpu.strided_load %arg5[%c0_115, %c0_116] {strides = array<i32: 3, 1>} : memref<9x32xf32, #tpu.memory_space<vmem>>, vector<3x32xf32>
      %c1 = arith.constant 1 : index
      %c0_117 = arith.constant 0 : index
      %155 = tpu.strided_load %arg5[%c1, %c0_117] {strides = array<i32: 3, 1>} : memref<9x32xf32, #tpu.memory_space<vmem>>, vector<3x32xf32>
      %156 = arith.maximumf %154, %155 : vector<3x32xf32>
      %c2 = arith.constant 2 : index
      %c0_118 = arith.constant 0 : index
      %157 = tpu.strided_load %arg5[%c2, %c0_118] {strides = array<i32: 3, 1>} : memref<9x32xf32, #tpu.memory_space<vmem>>, vector<3x32xf32>
      %158 = arith.maximumf %156, %157 : vector<3x32xf32>
      %c0_119 = arith.constant 0 : index
      %c0_120 = arith.constant 0 : index
      %159 = vector.load %arg3[%c0_119, %c0_120] : memref<1x32xf32, #tpu.memory_space<vmem>>, vector<1x32xf32>
      %160 = vector.broadcast %159 : vector<1x32xf32> to vector<3x32xf32>
      %161 = arith.addf %158, %160 : vector<3x32xf32>
      %cst_121 = arith.constant 0.000000e+00 : f32
      %162 = vector.broadcast %cst_121 : f32 to vector<3x32xf32>
      %163 = arith.maximumf %161, %162 : vector<3x32xf32>
      %c0_122 = arith.constant 0 : index
      %164 = arith.index_cast %arg6 : i32 to index
      %c0_123 = arith.constant 0 : index
      %c0_124 = arith.constant 0 : index
      %165 = vector.load %arg4[%c0_122, %164, %c0_123, %c0_124] : memref<1x3x3x32xf32, #tpu.memory_space<vmem>>, vector<1x1x3x32xf32>
      %166 = vector.shape_cast %165 : vector<1x1x3x32xf32> to vector<3x32xf32>
      %167 = vector.shape_cast %163 : vector<3x32xf32> to vector<1x1x3x32xf32>
      tpu.vector_store %arg4[%c0_122, %164, %c0_123, %c0_124], %167 {strides = array<i32>} : memref<1x3x3x32xf32, #tpu.memory_space<vmem>>, vector<1x1x3x32xf32>,
    }
    %c3_i32_0 = arith.constant 3 : i32
    return
  }
  func.func @transform_0(%arg0: i32) -> (i32, i32, i32, i32) {
    %c0_i32 = arith.constant 0 : i32
    %c0_i32_0 = arith.constant 0 : i32
    %c0_i32_1 = arith.constant 0 : i32
    %c0_i32_2 = arith.constant 0 : i32
    return %arg0, %c0_i32, %c0_i32_0, %c0_i32_1 : i32, i32, i32, i32
  }
  func.func @transform_1(%arg0: i32) -> (i32, i32) {
    %c0_i32 = arith.constant 0 : i32
    %c0_i32_0 = arith.constant 0 : i32
    %c0_i32_1 = arith.constant 0 : i32
    return %c0_i32, %c0_i32_0 : i32, i32
  }
  func.func @transform_2(%arg0: i32) -> (i32, i32) {
    %c0_i32 = arith.constant 0 : i32
    %c0_i32_0 = arith.constant 0 : i32
    %c0_i32_1 = arith.constant 0 : i32
    return %c0_i32, %c0_i32_0 : i32, i32
  }
  func.func @transform_3(%arg0: i32) -> (i32, i32, i32, i32) {
    %c0_i32 = arith.constant 0 : i32
    %c0_i32_0 = arith.constant 0 : i32
    %c0_i32_1 = arith.constant 0 : i32
    %c0_i32_2 = arith.constant 0 : i32
    return %arg0, %c0_i32, %c0_i32_0, %c0_i32_1 : i32, i32, i32, i32
  }
}

module attributes {stable_mosaic.version = 11 : i64} {
  func.func @_mlp_kernel(%arg0: memref<2x288xf32, #tpu.memory_space<vmem>>, %arg1: memref<288x64xf32, #tpu.memory_space<vmem>>, %arg2: memref<1x64xf32, #tpu.memory_space<vmem>>, %arg3: memref<64x2xf32, #tpu.memory_space<vmem>>, %arg4: memref<1x2xf32, #tpu.memory_space<vmem>>, %arg5: memref<2x2xf32, #tpu.memory_space<vmem>>) attributes {dimension_semantics = [], scalar_prefetch = 0 : i64, scratch_operands = 0 : i64, tpu.core_type = #tpu.core_type<tc>} {
    %c0 = arith.constant 0 : index
    %c0_0 = arith.constant 0 : index
    %0 = vector.load %arg0[%c0, %c0_0] : memref<2x288xf32, #tpu.memory_space<vmem>>, vector<2x288xf32>
    %c0_1 = arith.constant 0 : index
    %c0_2 = arith.constant 0 : index
    %1 = vector.load %arg1[%c0_1, %c0_2] : memref<288x64xf32, #tpu.memory_space<vmem>>, vector<288x64xf32>
    %cst = arith.constant dense<0.000000e+00> : vector<2x64xf32>
    %2 = tpu.matmul %0, %1, %cst {dimension_numbers = #tpu.dot_dimension_numbers<[1], [0], [0], [1], [0, 0, 1, 1], [], []>} : vector<2x288xf32>, vector<288x64xf32>, vector<2x64xf32> -> vector<2x64xf32>
    %c0_3 = arith.constant 0 : index
    %c0_4 = arith.constant 0 : index
    %3 = vector.load %arg2[%c0_3, %c0_4] : memref<1x64xf32, #tpu.memory_space<vmem>>, vector<1x64xf32>
    %4 = vector.broadcast %3 : vector<1x64xf32> to vector<2x64xf32>
    %5 = arith.addf %2, %4 : vector<2x64xf32>
    %cst_5 = arith.constant 0.000000e+00 : f32
    %6 = vector.broadcast %cst_5 : f32 to vector<2x64xf32>
    %7 = arith.maximumf %5, %6 : vector<2x64xf32>
    %c0_6 = arith.constant 0 : index
    %c0_7 = arith.constant 0 : index
    %8 = vector.load %arg3[%c0_6, %c0_7] : memref<64x2xf32, #tpu.memory_space<vmem>>, vector<64x2xf32>
    %cst_8 = arith.constant dense<0.000000e+00> : vector<2x2xf32>
    %9 = tpu.matmul %7, %8, %cst_8 {dimension_numbers = #tpu.dot_dimension_numbers<[1], [0], [0], [1], [0, 0, 1, 1], [], []>} : vector<2x64xf32>, vector<64x2xf32>, vector<2x2xf32> -> vector<2x2xf32>
    %c0_9 = arith.constant 0 : index
    %c0_10 = arith.constant 0 : index
    %10 = vector.load %arg4[%c0_9, %c0_10] : memref<1x2xf32, #tpu.memory_space<vmem>>, vector<1x2xf32>
    %11 = vector.broadcast %10 : vector<1x2xf32> to vector<2x2xf32>
    %12 = arith.addf %9, %11 : vector<2x2xf32>
    %c0_11 = arith.constant 0 : index
    %c0_12 = arith.constant 0 : index
    %13 = vector.load %arg5[%c0_11, %c0_12] : memref<2x2xf32, #tpu.memory_space<vmem>>, vector<2x2xf32>
    tpu.vector_store %arg5[%c0_11, %c0_12], %12 {strides = array<i32>} : memref<2x2xf32, #tpu.memory_space<vmem>>, vector<2x2xf32>,
    return
  }
}

</mosaic_0001>

<llo_original>
// kernel: net_forward.4
$region0: #{net_forward.4}
  #allocation0 [shape = 'u32[]', space=smem, size = 0x4, offset = 0x4, fixed_abs, tag = 'smem constant byte address 0x4 - core index']
  #allocation1 [shape = 'u32[144,128]{1,0:T(1,128)}', space=vmem, size = 0x12000, scoped, tag = 'internal scratch']
  #allocation2 [shape = 'f32[108,128]{1,0:T(8,128)}', space=vmem, size = 0xe000, scoped, tag = 'scratch operand']
  %s0 = inlined_call_operand.vmem [shape: f32[2,108,108,27], index: 0, kind: input, shape index: {}]
  %s1 = inlined_call_operand.vmem [shape: f32[27,128], index: 1, kind: input, shape index: {}]
  %s2 = inlined_call_operand.vmem [shape: f32[1,128], index: 2, kind: input, shape index: {}]
  %s3 = inlined_call_operand.vmem [shape: f32[2,36,36,128], index: 3, kind: output, shape index: {}]
  %s4 = sld [smem:[#allocation0]]
  $region52: #{net_forward.4} parent=0
    _
  %s6 = ssub.s32 1, %s4
  %s7 = scalar_select 0, %s6, %s4
  loop: start=0, step=1, limit=4
  $region2: #{net_forward.4} parent=0 // loop_pre_header
    _
  $region3: #{net_forward.4} parent=0 // loop_header
    %s9 = sphi 0, %s13
    %p10 = scmp.ge.s32.totalorder %s9, 4
    %s19 = sphi 0, %s21
    %s22 = sphi 0, %s19
    %s23 = sphi 0, %s22
    %s39 = sphi 0, %s23
    %s43 = sphi 0, %s43
    %s45 = sphi 0, %s43
    %s46 = sphi 0, %s45
    %s60 = sphi 0, %s46
    %s64 = sphi 0, %s64
    %s66 = sphi 0, %s64
    %s67 = sphi 0, %s66
    %s81 = sphi 0, %s67
    %s87 = sphi 0, %s89
    %s90 = sphi 0, %s87
    %s91 = sphi 0, %s90
    %s107 = sphi 0, %s91
  $region4: #{net_forward.4} parent=0 // loop_header_branch
    %12 = sbr.rel (%p10) target = $region8
  $region5: #{net_forward.4} parent=0 // loop_body
    %s14 = ssub.s32 %s9, 1
    %s15 = ssub.s32 %s9, 2
    %s16 = sadd.s32 %s9, 1
    %s17 = ssub.s32 %s9, %s16
    %p18 = scmp.eq.s32.totalorder %s17, 0
    %s20 = sadd.s32 %s19, 1
    %s21 = scalar_select %p18, %s19, %s20
    %p24 = pneg %p18
    %p25 = scmp.eq.s32.totalorder %s9, 1
    %p26 = por %p24, %p25
    %p27 = scmp.ne.s32.totalorder %s19, %s22
    %p28 = scmp.eq.s32.totalorder %s9, 0
    %p29 = por %p27, %p28
    %p30 = scmp.ne.s32.totalorder %s19, %s22
    %p31 = scmp.eq.s32.totalorder %s14, 1
    %p32 = por %p30, %p31
    %p33 = scmp.ne.s32.totalorder %s22, %s23
    %p34 = scmp.eq.s32.totalorder %s14, 0
    %p35 = por %p33, %p34
    %p36 = scmp.ne.s32.totalorder %s22, %s23
    %p37 = scmp.eq.s32.totalorder %s15, 1
    %p38 = por %p36, %p37
    %p40 = scmp.ne.s32.totalorder %s23, %s39
    %p41 = scmp.eq.s32.totalorder %s15, 0
    %p42 = por %p40, %p41
    %s44 = sadd.s32 %s43, 1
    %p47 = scmp.eq.s32.totalorder %s9, 1
    %p48 = scmp.ne.s32.totalorder %s43, %s45
    %p49 = scmp.eq.s32.totalorder %s9, 0
    %p50 = por %p48, %p49
    %p51 = scmp.ne.s32.totalorder %s43, %s45
    %p52 = scmp.eq.s32.totalorder %s14, 1
    %p53 = por %p51, %p52
    %p54 = scmp.ne.s32.totalorder %s45, %s46
    %p55 = scmp.eq.s32.totalorder %s14, 0
    %p56 = por %p54, %p55
    %p57 = scmp.ne.s32.totalorder %s45, %s46
    %p58 = scmp.eq.s32.totalorder %s15, 1
    %p59 = por %p57, %p58
    %p61 = scmp.ne.s32.totalorder %s46, %s60
    %p62 = scmp.eq.s32.totalorder %s15, 0
    %p63 = por %p61, %p62
    %s65 = sadd.s32 %s64, 1
    %p68 = scmp.eq.s32.totalorder %s9, 1
    %p69 = scmp.ne.s32.totalorder %s64, %s66
    %p70 = scmp.eq.s32.totalorder %s9, 0
    %p71 = por %p69, %p70
    %p72 = scmp.ne.s32.totalorder %s64, %s66
    %p73 = scmp.eq.s32.totalorder %s14, 1
    %p74 = por %p72, %p73
    %p75 = scmp.ne.s32.totalorder %s66, %s67
    %p76 = scmp.eq.s32.totalorder %s14, 0
    %p77 = por %p75, %p76
    %p78 = scmp.ne.s32.totalorder %s66, %s67
    %p79 = scmp.eq.s32.totalorder %s15, 1
    %p80 = por %p78, %p79
    %p82 = scmp.ne.s32.totalorder %s67, %s81
    %p83 = scmp.eq.s32.totalorder %s15, 0
    %p84 = por %p82, %p83
    %s85 = ssub.s32 %s9, %s16
    %p86 = scmp.eq.s32.totalorder %s85, 0
    %s88 = sadd.s32 %s87, 1
    %s89 = scalar_select %p86, %s87, %s88
    %p92 = pneg %p86
    %p93 = scmp.eq.s32.totalorder %s9, 1
    %p94 = por %p92, %p93
    %p95 = scmp.ne.s32.totalorder %s87, %s90
    %p96 = scmp.eq.s32.totalorder %s9, 0
    %p97 = por %p95, %p96
    %p98 = scmp.ne.s32.totalorder %s87, %s90
    %p99 = scmp.eq.s32.totalorder %s14, 1
    %p100 = por %p98, %p99
    %p101 = scmp.ne.s32.totalorder %s90, %s91
    %p102 = scmp.eq.s32.totalorder %s14, 0
    %p103 = por %p101, %p102
    %p104 = scmp.ne.s32.totalorder %s90, %s91
    %p105 = scmp.eq.s32.totalorder %s15, 1
    %p106 = por %p104, %p105
    %p108 = scmp.ne.s32.totalorder %s91, %s107
    %p109 = scmp.eq.s32.totalorder %s15, 0
    %p110 = por %p108, %p109
    %p111 = scmp.le.s32.totalorder 1, %s9
    %p112 = scmp.lt.s32.totalorder %s9, 3
    %p113 = pnand %p111, %p112
    %p114 = pneg %p113
    // Predicated region
    $region9: #{net_forward.4} parent=5 // pred_check
      _
    $region10: #{net_forward.4} parent=5 // pred_check_branch
      %116 = sbr.rel (%p113) target = $region12
    $region11: #{net_forward.4} parent=5 // pred_region
      %s117 = ssub.s32 %s9, 1
      // Predicated region
      $region13: #{net_forward.4} parent=11 // pred_check
        %p118 = pneg %p56
      $region14: #{net_forward.4} parent=11 // pred_check_branch
        %120 = sbr.rel (%p118) target = $region16
      $region15: #{net_forward.4} parent=11 // pred_region
        _
      $region16: #{net_forward.4} parent=11 // pred_fallthru
        _
      // Predicated region
      $region17: #{net_forward.4} parent=11 // pred_check
        %p121 = pneg %p77
      $region18: #{net_forward.4} parent=11 // pred_check_branch
        %123 = sbr.rel (%p121) target = $region20
      $region19: #{net_forward.4} parent=11 // pred_region
        _
      $region20: #{net_forward.4} parent=11 // pred_fallthru
        _
    $region12: #{net_forward.4} parent=5 // pred_fallthru
      _
    %p124 = scmp.lt.s32.totalorder %s9, 2
    // Predicated region
    $region21: #{net_forward.4} parent=5 // pred_check
      %p125 = pneg %p124
    $region22: #{net_forward.4} parent=5 // pred_check_branch
      %127 = sbr.rel (%p125) target = $region24
    $region23: #{net_forward.4} parent=5 // pred_region
      // Predicated region
      $region25: #{net_forward.4} parent=23 // pred_check
        %p128 = pneg %p29
      $region26: #{net_forward.4} parent=23 // pred_check_branch
        %130 = sbr.rel (%p128) target = $region28
      $region27: #{net_forward.4} parent=23 // pred_region
        %p131 = scmp.lt.s32.totalorder %s9, 1
        %s132 = scalar_select %p131, %s9, 1
        %s133 = smul.addr %s132, 1512
        %s134 = smul.addr %s133, 8
        %s135 = scalar_lea.vmem %s0, %s134
      $region28: #{net_forward.4} parent=23 // pred_fallthru
        _
    $region24: #{net_forward.4} parent=5 // pred_fallthru
      _
    %p136 = scmp.le.s32.totalorder 1, %s9
    %p137 = scmp.lt.s32.totalorder %s9, 3
    %p138 = pnand %p136, %p137
    %p139 = pneg %p138
    // Predicated region
    $region29: #{net_forward.4} parent=5 // pred_check
      _
    $region30: #{net_forward.4} parent=5 // pred_check_branch
      %141 = sbr.rel (%p138) target = $region32
    $region31: #{net_forward.4} parent=5 // pred_region
      %s142 = ssub.s32 %s9, 1
      %p143 = scmp.lt.s32.totalorder %s14, 1
      %s144 = scalar_select %p143, %s14, 1
      %s145 = smul.addr %s144, 1512
      %s146 = smul.addr %s145, 8
      %s147 = scalar_lea.vmem %s0, %s146
      %p148 = pneg %p35
      %p149 = pneg %p32
      %p150 = pneg %p56
      %p151 = pneg %p53
      %p152 = pneg %p77
      %p153 = pneg %p74
      %p154 = pneg %p103
      %p155 = pneg %p100
      %p156 = scmp.lt.s32.totalorder %s14, 1
      %s157 = scalar_select %p156, %s14, 1
      %s158 = smul.addr %s157, 180
      %s159 = smul.addr %s158, 8
      %s160 = scalar_lea.vmem %s3, %s159
      %p161 = scmp.lt.s32.totalorder %s14, 1
      %s162 = scalar_select %p161, %s14, 1
      %s163 = smul.addr %s162, 1512
      %s164 = smul.addr %s163, 8
      %s165 = scalar_lea.vmem %s0, %s164
      %p166 = scmp.lt.s32.totalorder %s14, 1
      %s167 = scalar_select %p166, %s14, 1
      %s168 = smul.addr %s167, 180
      %s169 = smul.addr %s168, 8
      %s170 = scalar_lea.vmem %s3, %s169
      loop: start=0, step=1, limit=36
      $region33: #{net_forward.4} parent=31 // loop_pre_header
        _
      $region34: #{net_forward.4} parent=31 // loop_header
        %s172 = sphi 0, %s176
        %p173 = scmp.ge.s32.totalorder %s172, 36
      $region35: #{net_forward.4} parent=31 // loop_header_branch
        %175 = sbr.rel (%p173) target = $region39
      $region36: #{net_forward.4} parent=31 // loop_body
        %s177 = smul.u32 %s172, 3
        %s178 = smul.u32 %s177, 112
        %s179 = scalar_lea.vmem %s165, %s178
        %v180 = vld [vmem:[%s179] sm:$0xff]
        %v181 = vld [vmem:[%s179 + $0x8] sm:$0xff]
        %v182 = vld [vmem:[%s179 + $0x10] sm:$0xff]
        %v183 = vld [vmem:[%s179 + $0x18] sm:$0xff]
        %v184 = vld [vmem:[%s179 + $0x20] sm:$0xff]
        %v185 = vld [vmem:[%s179 + $0x28] sm:$0xff]
        %v186 = vld [vmem:[%s179 + $0x30] sm:$0xff]
        %v187 = vld [vmem:[%s179 + $0x38] sm:$0xff]
        %v188 = vld [vmem:[%s179 + $0x40] sm:$0xff]
        %v189 = vld [vmem:[%s179 + $0x48] sm:$0xff]
        %v190 = vld [vmem:[%s179 + $0x50] sm:$0xff]
        %v191 = vld [vmem:[%s179 + $0x58] sm:$0xff]
        %v192 = vld [vmem:[%s179 + $0x60] sm:$0xff]
        %v193 = vld [vmem:[%s179 + $0x68] sm:$0xf]
        %v194 = vld [vmem:[%s1] sm:$0xff]
        %v195 = vld [vmem:[%s1 + $0x8] sm:$0xff]
        %v196 = vld [vmem:[%s1 + $0x10] sm:$0xff]
        %v197 = vld [vmem:[%s1 + $0x18] sm:$0x7]
        %vm198 = vcmask 220160
        %v200 = vsel %vm198, %v180, 0
        %v203 = vsel %vm198, %v181, 0
        %v206 = vsel %vm198, %v182, 0
        %v209 = vsel %vm198, %v183, 0
        %v212 = vsel %vm198, %v184, 0
        %v215 = vsel %vm198, %v185, 0
        %v218 = vsel %vm198, %v186, 0
        %v221 = vsel %vm198, %v187, 0
        %v224 = vsel %vm198, %v188, 0
        %v227 = vsel %vm198, %v189, 0
        %v230 = vsel %vm198, %v190, 0
        %v233 = vsel %vm198, %v191, 0
        %v236 = vsel %vm198, %v192, 0
        %v239 = vsel %vm198, %v193, 0
        %vm241 = vcmask 1042432
        %v243 = vsel %vm241, %v197, 0
        %245 = vmatprep.subr.mxu0 0.0
        %246 = vmatpush1.msra.mxu0 %v194
        %247 = vmatprep.subr.mxu0 0.0
        %248 = vmatpush1.msra.mxu0 %v195
        %249 = vmatprep.subr.mxu0 0.0
        %250 = vmatpush1.msra.mxu0 %v196
        %251 = vmatprep.subr.mxu0 0.0
        %252 = vmatpush1.msra.mxu0 %v243
        %253 = vmatprep.subr.mxu0 0.0
        %254 = vmatpush1.msra.mxu0 0.0
        %255 = vmatprep.subr.mxu0 0.0
        %256 = vmatpush1.msra.mxu0 0.0
        %257 = vmatprep.subr.mxu0 0.0
        %258 = vmatpush1.msra.mxu0 0.0
        %259 = vmatprep.subr.mxu0 0.0
        %260 = vmatpush1.msra.mxu0 0.0
        %261 = vmatprep.subr.mxu0 0.0
        %262 = vmatpush1.msra.mxu0 0.0
        %263 = vmatprep.subr.mxu0 0.0
        %264 = vmatpush1.msra.mxu0 0.0
        %265 = vmatprep.subr.mxu0 0.0
        %266 = vmatpush1.msra.mxu0 0.0
        %267 = vmatprep.subr.mxu0 0.0
        %268 = vmatpush1.msra.mxu0 0.0
        %269 = vmatprep.subr.mxu0 0.0
        %270 = vmatpush1.msra.mxu0 0.0
        %271 = vmatprep.subr.mxu0 0.0
        %272 = vmatpush1.msra.mxu0 0.0
        %273 = vmatprep.subr.mxu0 0.0
        %274 = vmatpush1.msra.mxu0 0.0
        %275 = vmatprep.subr.mxu0 0.0
        %276 = vmatpush1.msra.mxu0 0.0
        %277 = vmatprep.subr.mxu0 0.0
        %278 = vmatpush1.msra.mxu0 0.0
        %279 = vmatprep.subr.mxu0 0.0
        %280 = vmatpush1.msra.mxu0 0.0
        %281 = vmatprep.subr.mxu0 0.0
        %282 = vmatpush1.msra.mxu0 0.0
        %283 = vmatprep.subr.mxu0 0.0
        %284 = vmatpush1.msra.mxu0 0.0
        %285 = vmatprep.subr.mxu0 0.0
        %286 = vmatpush1.msra.mxu0 0.0
        %287 = vmatprep.subr.mxu0 0.0
        %288 = vmatpush1.msra.mxu0 0.0
        %289 = vmatprep.subr.mxu0 0.0
        %290 = vmatpush1.msra.mxu0 0.0
        %291 = vmatprep.subr.mxu0 0.0
        %292 = vmatpush1.msra.mxu0 0.0
        %293 = vmatprep.subr.mxu0 0.0
        %294 = vmatpush1.msra.mxu0 0.0
        %295 = vmatprep.subr.mxu0 0.0
        %296 = vmatpush1.msra.mxu0 0.0
        %297 = vmatprep.subr.mxu0 0.0
        %298 = vmatpush1.msra.mxu0 0.0
        %299 = vmatprep.subr.mxu0 0.0
        %300 = vmatpush1.msra.mxu0 0.0
        %301 = vmatprep.subr.mxu0 0.0
        %302 = vmatpush1.msra.mxu0 0.0
        %303 = vmatprep.subr.mxu0 0.0
        %304 = vmatpush1.msra.mxu0 0.0
        %305 = vmatprep.subr.mxu0 0.0
        %306 = vmatpush1.msra.mxu0 0.0
        %307 = vmatprep.subr.mxu0 0.0
        %308 = vmatpush1.msra.mxu0 0.0
        %309 = vmatprep.mubr.f32.mxu0 0.0
        %310 = vmatmul.mubr.f32.gmra.mrb[0].mxu0 %v200
        %v311 = vpop.f32.mrb[0].mxu0
        %v312 = vadd.f32 0.0, %v311
        %v313 = vpop.f32.mrb[0].mxu0
        %314 = vmatprep.mubr.f32.mxu0 0.0
        %315 = vmatmul.mubr.f32.gmra.mrb[0].mxu0 %v203
        %v316 = vpop.f32.mrb[0].mxu0
        %v317 = vadd.f32 0.0, %v316
        %v318 = vpop.f32.mrb[0].mxu0
        %319 = vmatprep.mubr.f32.mxu0 0.0
        %320 = vmatmul.mubr.f32.gmra.mrb[0].mxu0 %v206
        %v321 = vpop.f32.mrb[0].mxu0
        %v322 = vadd.f32 0.0, %v321
        %v323 = vpop.f32.mrb[0].mxu0
        %324 = vmatprep.mubr.f32.mxu0 0.0
        %325 = vmatmul.mubr.f32.gmra.mrb[0].mxu0 %v209
        %v326 = vpop.f32.mrb[0].mxu0
        %v327 = vadd.f32 0.0, %v326
        %v328 = vpop.f32.mrb[0].mxu0
        %329 = vmatprep.mubr.f32.mxu0 0.0
        %330 = vmatmul.mubr.f32.gmra.mrb[0].mxu0 %v212
        %v331 = vpop.f32.mrb[0].mxu0
        %v332 = vadd.f32 0.0, %v331
        %v333 = vpop.f32.mrb[0].mxu0
        %334 = vmatprep.mubr.f32.mxu0 0.0
        %335 = vmatmul.mubr.f32.gmra.mrb[0].mxu0 %v215
        %v336 = vpop.f32.mrb[0].mxu0
        %v337 = vadd.f32 0.0, %v336
        %v338 = vpop.f32.mrb[0].mxu0
        %339 = vmatprep.mubr.f32.mxu0 0.0
        %340 = vmatmul.mubr.f32.gmra.mrb[0].mxu0 %v218
        %v341 = vpop.f32.mrb[0].mxu0
        %v342 = vadd.f32 0.0, %v341
        %v343 = vpop.f32.mrb[0].mxu0
        %344 = vmatprep.mubr.f32.mxu0 0.0
        %345 = vmatmul.mubr.f32.gmra.mrb[0].mxu0 %v221
        %v346 = vpop.f32.mrb[0].mxu0
        %v347 = vadd.f32 0.0, %v346
        %v348 = vpop.f32.mrb[0].mxu0
        %349 = vmatprep.mubr.f32.mxu0 0.0
        %350 = vmatmul.mubr.f32.gmra.mrb[0].mxu0 %v224
        %v351 = vpop.f32.mrb[0].mxu0
        %v352 = vadd.f32 0.0, %v351
        %v353 = vpop.f32.mrb[0].mxu0
        %354 = vmatprep.mubr.f32.mxu0 0.0
        %355 = vmatmul.mubr.f32.gmra.mrb[0].mxu0 %v227
        %v356 = vpop.f32.mrb[0].mxu0
        %v357 = vadd.f32 0.0, %v356
        %v358 = vpop.f32.mrb[0].mxu0
        %359 = vmatprep.mubr.f32.mxu0 0.0
        %360 = vmatmul.mubr.f32.gmra.mrb[0].mxu0 %v230
        %v361 = vpop.f32.mrb[0].mxu0
        %v362 = vadd.f32 0.0, %v361
        %v363 = vpop.f32.mrb[0].mxu0
        %364 = vmatprep.mubr.f32.mxu0 0.0
        %365 = vmatmul.mubr.f32.gmra.mrb[0].mxu0 %v233
        %v366 = vpop.f32.mrb[0].mxu0
        %v367 = vadd.f32 0.0, %v366
        %v368 = vpop.f32.mrb[0].mxu0
        %369 = vmatprep.mubr.f32.mxu0 0.0
        %370 = vmatmul.mubr.f32.gmra.mrb[0].mxu0 %v236
        %v371 = vpop.f32.mrb[0].mxu0
        %v372 = vadd.f32 0.0, %v371
        %v373 = vpop.f32.mrb[0].mxu0
        %374 = vmatprep.mubr.f32.mxu0 0.0
        %375 = vmatmul.mubr.f32.gmra.mrb[0].mxu0 %v239
        %v376 = vpop.f32.mrb[0].mxu0
        %v377 = vadd.f32 0.0, %v376
        %v378 = vpop.f32.mrb[0].mxu0
        %379 = vdwg.mxu0
        %s380 = sadd.s32 %s177, 1
        %s381 = smul.u32 %s380, 112
        %s382 = scalar_lea.vmem %s165, %s381
        %v383 = vld [vmem:[%s382] sm:$0xff]
        %v384 = vld [vmem:[%s382 + $0x8] sm:$0xff]
        %v385 = vld [vmem:[%s382 + $0x10] sm:$0xff]
        %v386 = vld [vmem:[%s382 + $0x18] sm:$0xff]
        %v387 = vld [vmem:[%s382 + $0x20] sm:$0xff]
        %v388 = vld [vmem:[%s382 + $0x28] sm:$0xff]
        %v389 = vld [vmem:[%s382 + $0x30] sm:$0xff]
        %v390 = vld [vmem:[%s382 + $0x38] sm:$0xff]
        %v391 = vld [vmem:[%s382 + $0x40] sm:$0xff]
        %v392 = vld [vmem:[%s382 + $0x48] sm:$0xff]
        %v393 = vld [vmem:[%s382 + $0x50] sm:$0xff]
        %v394 = vld [vmem:[%s382 + $0x58] sm:$0xff]
        %v395 = vld [vmem:[%s382 + $0x60] sm:$0xff]
        %v396 = vld [vmem:[%s382 + $0x68] sm:$0xf]
        %v398 = vsel %vm198, %v383, 0
        %v401 = vsel %vm198, %v384, 0
        %v404 = vsel %vm198, %v385, 0
        %v407 = vsel %vm198, %v386, 0
        %v410 = vsel %vm198, %v387, 0
        %v413 = vsel %vm198, %v388, 0
        %v416 = vsel %vm198, %v389, 0
        %v419 = vsel %vm198, %v390, 0
        %v422 = vsel %vm198, %v391, 0
        %v425 = vsel %vm198, %v392, 0
        %v428 = vsel %vm198, %v393, 0
        %v431 = vsel %vm198, %v394, 0
        %v434 = vsel %vm198, %v395, 0
        %v437 = vsel %vm198, %v396, 0
        %439 = vmatprep.subr.mxu0 0.0
        %440 = vmatpush1.msra.mxu0 %v194
        %441 = vmatprep.subr.mxu0 0.0
        %442 = vmatpush1.msra.mxu0 %v195
        %443 = vmatprep.subr.mxu0 0.0
        %444 = vmatpush1.msra.mxu0 %v196
        %445 = vmatprep.subr.mxu0 0.0
        %446 = vmatpush1.msra.mxu0 %v243
        %447 = vmatprep.subr.mxu0 0.0
        %448 = vmatpush1.msra.mxu0 0.0
        %449 = vmatprep.subr.mxu0 0.0
        %450 = vmatpush1.msra.mxu0 0.0
        %451 = vmatprep.subr.mxu0 0.0
        %452 = vmatpush1.msra.mxu0 0.0
        %453 = vmatprep.subr.mxu0 0.0
        %454 = vmatpush1.msra.mxu0 0.0
        %455 = vmatprep.subr.mxu0 0.0
        %456 = vmatpush1.msra.mxu0 0.0
        %457 = vmatprep.subr.mxu0 0.0
        %458 = vmatpush1.msra.mxu0 0.0
        %459 = vmatprep.subr.mxu0 0.0
        %460 = vmatpush1.msra.mxu0 0.0
        %461 = vmatprep.subr.mxu0 0.0
        %462 = vmatpush1.msra.mxu0 0.0
        %463 = vmatprep.subr.mxu0 0.0
        %464 = vmatpush1.msra.mxu0 0.0
        %465 = vmatprep.subr.mxu0 0.0
        %466 = vmatpush1.msra.mxu0 0.0
        %467 = vmatprep.subr.mxu0 0.0
        %468 = vmatpush1.msra.mxu0 0.0
        %469 = vmatprep.subr.mxu0 0.0
        %470 = vmatpush1.msra.mxu0 0.0
        %471 = vmatprep.subr.mxu0 0.0
        %472 = vmatpush1.msra.mxu0 0.0
        %473 = vmatprep.subr.mxu0 0.0
        %474 = vmatpush1.msra.mxu0 0.0
        %475 = vmatprep.subr.mxu0 0.0
        %476 = vmatpush1.msra.mxu0 0.0
        %477 = vmatprep.subr.mxu0 0.0
        %478 = vmatpush1.msra.mxu0 0.0
        %479 = vmatprep.subr.mxu0 0.0
        %480 = vmatpush1.msra.mxu0 0.0
        %481 = vmatprep.subr.mxu0 0.0
        %482 = vmatpush1.msra.mxu0 0.0
        %483 = vmatprep.subr.mxu0 0.0
        %484 = vmatpush1.msra.mxu0 0.0
        %485 = vmatprep.subr.mxu0 0.0
        %486 = vmatpush1.msra.mxu0 0.0
        %487 = vmatprep.subr.mxu0 0.0
        %488 = vmatpush1.msra.mxu0 0.0
        %489 = vmatprep.subr.mxu0 0.0
        %490 = vmatpush1.msra.mxu0 0.0
        %491 = vmatprep.subr.mxu0 0.0
        %492 = vmatpush1.msra.mxu0 0.0
        %493 = vmatprep.subr.mxu0 0.0
        %494 = vmatpush1.msra.mxu0 0.0
        %495 = vmatprep.subr.mxu0 0.0
        %496 = vmatpush1.msra.mxu0 0.0
        %497 = vmatprep.subr.mxu0 0.0
        %498 = vmatpush1.msra.mxu0 0.0
        %499 = vmatprep.subr.mxu0 0.0
        %500 = vmatpush1.msra.mxu0 0.0
        %501 = vmatprep.subr.mxu0 0.0
        %502 = vmatpush1.msra.mxu0 0.0
        %503 = vmatprep.mubr.f32.mxu0 0.0
        %504 = vmatmul.mubr.f32.gmra.mrb[0].mxu0 %v398
        %v505 = vpop.f32.mrb[0].mxu0
        %v506 = vadd.f32 0.0, %v505
        %v507 = vpop.f32.mrb[0].mxu0
        %508 = vmatprep.mubr.f32.mxu0 0.0
        %509 = vmatmul.mubr.f32.gmra.mrb[0].mxu0 %v401
        %v510 = vpop.f32.mrb[0].mxu0
        %v511 = vadd.f32 0.0, %v510
        %v512 = vpop.f32.mrb[0].mxu0
        %513 = vmatprep.mubr.f32.mxu0 0.0
        %514 = vmatmul.mubr.f32.gmra.mrb[0].mxu0 %v404
        %v515 = vpop.f32.mrb[0].mxu0
        %v516 = vadd.f32 0.0, %v515
        %v517 = vpop.f32.mrb[0].mxu0
        %518 = vmatprep.mubr.f32.mxu0 0.0
        %519 = vmatmul.mubr.f32.gmra.mrb[0].mxu0 %v407
        %v520 = vpop.f32.mrb[0].mxu0
        %v521 = vadd.f32 0.0, %v520
        %v522 = vpop.f32.mrb[0].mxu0
        %523 = vmatprep.mubr.f32.mxu0 0.0
        %524 = vmatmul.mubr.f32.gmra.mrb[0].mxu0 %v410
        %v525 = vpop.f32.mrb[0].mxu0
        %v526 = vadd.f32 0.0, %v525
        %v527 = vpop.f32.mrb[0].mxu0
        %528 = vmatprep.mubr.f32.mxu0 0.0
        %529 = vmatmul.mubr.f32.gmra.mrb[0].mxu0 %v413
        %v530 = vpop.f32.mrb[0].mxu0
        %v531 = vadd.f32 0.0, %v530
        %v532 = vpop.f32.mrb[0].mxu0
        %533 = vmatprep.mubr.f32.mxu0 0.0
        %534 = vmatmul.mubr.f32.gmra.mrb[0].mxu0 %v416
        %v535 = vpop.f32.mrb[0].mxu0
        %v536 = vadd.f32 0.0, %v535
        %v537 = vpop.f32.mrb[0].mxu0
        %538 = vmatprep.mubr.f32.mxu0 0.0
        %539 = vmatmul.mubr.f32.gmra.mrb[0].mxu0 %v419
        %v540 = vpop.f32.mrb[0].mxu0
        %v541 = vadd.f32 0.0, %v540
        %v542 = vpop.f32.mrb[0].mxu0
        %543 = vmatprep.mubr.f32.mxu0 0.0
        %544 = vmatmul.mubr.f32.gmra.mrb[0].mxu0 %v422
        %v545 = vpop.f32.mrb[0].mxu0
        %v546 = vadd.f32 0.0, %v545
        %v547 = vpop.f32.mrb[0].mxu0
        %548 = vmatprep.mubr.f32.mxu0 0.0
        %549 = vmatmul.mubr.f32.gmra.mrb[0].mxu0 %v425
        %v550 = vpop.f32.mrb[0].mxu0
        %v551 = vadd.f32 0.0, %v550
        %v552 = vpop.f32.mrb[0].mxu0
        %553 = vmatprep.mubr.f32.mxu0 0.0
        %554 = vmatmul.mubr.f32.gmra.mrb[0].mxu0 %v428
        %v555 = vpop.f32.mrb[0].mxu0
        %v556 = vadd.f32 0.0, %v555
        %v557 = vpop.f32.mrb[0].mxu0
        %558 = vmatprep.mubr.f32.mxu0 0.0
        %559 = vmatmul.mubr.f32.gmra.mrb[0].mxu0 %v431
        %v560 = vpop.f32.mrb[0].mxu0
        %v561 = vadd.f32 0.0, %v560
        %v562 = vpop.f32.mrb[0].mxu0
        %563 = vmatprep.mubr.f32.mxu0 0.0
        %564 = vmatmul.mubr.f32.gmra.mrb[0].mxu0 %v434
        %v565 = vpop.f32.mrb[0].mxu0
        %v566 = vadd.f32 0.0, %v565
        %v567 = vpop.f32.mrb[0].mxu0
        %568 = vmatprep.mubr.f32.mxu0 0.0
        %569 = vmatmul.mubr.f32.gmra.mrb[0].mxu0 %v437
        %v570 = vpop.f32.mrb[0].mxu0
        %v571 = vadd.f32 0.0, %v570
        %v572 = vpop.f32.mrb[0].mxu0
        %573 = vdwg.mxu0
        %v574 = vmax.f32 %v312, %v506
        %v575 = vmax.f32 %v317, %v511
        %v576 = vmax.f32 %v322, %v516
        %v577 = vmax.f32 %v327, %v521
        %v578 = vmax.f32 %v332, %v526
        %v579 = vmax.f32 %v337, %v531
        %v580 = vmax.f32 %v342, %v536
        %v581 = vmax.f32 %v347, %v541
        %v582 = vmax.f32 %v352, %v546
        %v583 = vmax.f32 %v357, %v551
        %v584 = vmax.f32 %v362, %v556
        %v585 = vmax.f32 %v367, %v561
        %v586 = vmax.f32 %v372, %v566
        %v587 = vmax.f32 %v377, %v571
        %s588 = sadd.s32 %s177, 2
        %s589 = smul.u32 %s588, 112
        %s590 = scalar_lea.vmem %s165, %s589
        %v591 = vld [vmem:[%s590] sm:$0xff]
        %v592 = vld [vmem:[%s590 + $0x8] sm:$0xff]
        %v593 = vld [vmem:[%s590 + $0x10] sm:$0xff]
        %v594 = vld [vmem:[%s590 + $0x18] sm:$0xff]
        %v595 = vld [vmem:[%s590 + $0x20] sm:$0xff]
        %v596 = vld [vmem:[%s590 + $0x28] sm:$0xff]
        %v597 = vld [vmem:[%s590 + $0x30] sm:$0xff]
        %v598 = vld [vmem:[%s590 + $0x38] sm:$0xff]
        %v599 = vld [vmem:[%s590 + $0x40] sm:$0xff]
        %v600 = vld [vmem:[%s590 + $0x48] sm:$0xff]
        %v601 = vld [vmem:[%s590 + $0x50] sm:$0xff]
        %v602 = vld [vmem:[%s590 + $0x58] sm:$0xff]
        %v603 = vld [vmem:[%s590 + $0x60] sm:$0xff]
        %v604 = vld [vmem:[%s590 + $0x68] sm:$0xf]
        %v606 = vsel %vm198, %v591, 0
        %v609 = vsel %vm198, %v592, 0
        %v612 = vsel %vm198, %v593, 0
        %v615 = vsel %vm198, %v594, 0
        %v618 = vsel %vm198, %v595, 0
        %v621 = vsel %vm198, %v596, 0
        %v624 = vsel %vm198, %v597, 0
        %v627 = vsel %vm198, %v598, 0
        %v630 = vsel %vm198, %v599, 0
        %v633 = vsel %vm198, %v600, 0
        %v636 = vsel %vm198, %v601, 0
        %v639 = vsel %vm198, %v602, 0
        %v642 = vsel %vm198, %v603, 0
        %v645 = vsel %vm198, %v604, 0
        %647 = vmatprep.subr.mxu0 0.0
        %648 = vmatpush1.msra.mxu0 %v194
        %649 = vmatprep.subr.mxu0 0.0
        %650 = vmatpush1.msra.mxu0 %v195
        %651 = vmatprep.subr.mxu0 0.0
        %652 = vmatpush1.msra.mxu0 %v196
        %653 = vmatprep.subr.mxu0 0.0
        %654 = vmatpush1.msra.mxu0 %v243
        %655 = vmatprep.subr.mxu0 0.0
        %656 = vmatpush1.msra.mxu0 0.0
        %657 = vmatprep.subr.mxu0 0.0
        %658 = vmatpush1.msra.mxu0 0.0
        %659 = vmatprep.subr.mxu0 0.0
        %660 = vmatpush1.msra.mxu0 0.0
        %661 = vmatprep.subr.mxu0 0.0
        %662 = vmatpush1.msra.mxu0 0.0
        %663 = vmatprep.subr.mxu0 0.0
        %664 = vmatpush1.msra.mxu0 0.0
        %665 = vmatprep.subr.mxu0 0.0
        %666 = vmatpush1.msra.mxu0 0.0
        %667 = vmatprep.subr.mxu0 0.0
        %668 = vmatpush1.msra.mxu0 0.0
        %669 = vmatprep.subr.mxu0 0.0
        %670 = vmatpush1.msra.mxu0 0.0
        %671 = vmatprep.subr.mxu0 0.0
        %672 = vmatpush1.msra.mxu0 0.0
        %673 = vmatprep.subr.mxu0 0.0
        %674 = vmatpush1.msra.mxu0 0.0
        %675 = vmatprep.subr.mxu0 0.0
        %676 = vmatpush1.msra.mxu0 0.0
        %677 = vmatprep.subr.mxu0 0.0
        %678 = vmatpush1.msra.mxu0 0.0
        %679 = vmatprep.subr.mxu0 0.0
        %680 = vmatpush1.msra.mxu0 0.0
        %681 = vmatprep.subr.mxu0 0.0
        %682 = vmatpush1.msra.mxu0 0.0
        %683 = vmatprep.subr.mxu0 0.0
        %684 = vmatpush1.msra.mxu0 0.0
        %685 = vmatprep.subr.mxu0 0.0
        %686 = vmatpush1.msra.mxu0 0.0
        %687 = vmatprep.subr.mxu0 0.0
        %688 = vmatpush1.msra.mxu0 0.0
        %689 = vmatprep.subr.mxu0 0.0
        %690 = vmatpush1.msra.mxu0 0.0
        %691 = vmatprep.subr.mxu0 0.0
        %692 = vmatpush1.msra.mxu0 0.0
        %693 = vmatprep.subr.mxu0 0.0
        %694 = vmatpush1.msra.mxu0 0.0
        %695 = vmatprep.subr.mxu0 0.0
        %696 = vmatpush1.msra.mxu0 0.0
        %697 = vmatprep.subr.mxu0 0.0
        %698 = vmatpush1.msra.mxu0 0.0
        %699 = vmatprep.subr.mxu0 0.0
        %700 = vmatpush1.msra.mxu0 0.0
        %701 = vmatprep.subr.mxu0 0.0
        %702 = vmatpush1.msra.mxu0 0.0
        %703 = vmatprep.subr.mxu0 0.0
        %704 = vmatpush1.msra.mxu0 0.0
        %705 = vmatprep.subr.mxu0 0.0
        %706 = vmatpush1.msra.mxu0 0.0
        %707 = vmatprep.subr.mxu0 0.0
        %708 = vmatpush1.msra.mxu0 0.0
        %709 = vmatprep.subr.mxu0 0.0
        %710 = vmatpush1.msra.mxu0 0.0
        %711 = vmatprep.mubr.f32.mxu0 0.0
        %712 = vmatmul.mubr.f32.gmra.mrb[0].mxu0 %v606
        %v713 = vpop.f32.mrb[0].mxu0
        %v714 = vadd.f32 0.0, %v713
        %v715 = vpop.f32.mrb[0].mxu0
        %716 = vmatprep.mubr.f32.mxu0 0.0
        %717 = vmatmul.mubr.f32.gmra.mrb[0].mxu0 %v609
        %v718 = vpop.f32.mrb[0].mxu0
        %v719 = vadd.f32 0.0, %v718
        %v720 = vpop.f32.mrb[0].mxu0
        %721 = vmatprep.mubr.f32.mxu0 0.0
        %722 = vmatmul.mubr.f32.gmra.mrb[0].mxu0 %v612
        %v723 = vpop.f32.mrb[0].mxu0
        %v724 = vadd.f32 0.0, %v723
        %v725 = vpop.f32.mrb[0].mxu0
        %726 = vmatprep.mubr.f32.mxu0 0.0
        %727 = vmatmul.mubr.f32.gmra.mrb[0].mxu0 %v615
        %v728 = vpop.f32.mrb[0].mxu0
        %v729 = vadd.f32 0.0, %v728
        %v730 = vpop.f32.mrb[0].mxu0
        %731 = vmatprep.mubr.f32.mxu0 0.0
        %732 = vmatmul.mubr.f32.gmra.mrb[0].mxu0 %v618
        %v733 = vpop.f32.mrb[0].mxu0
        %v734 = vadd.f32 0.0, %v733
        %v735 = vpop.f32.mrb[0].mxu0
        %736 = vmatprep.mubr.f32.mxu0 0.0
        %737 = vmatmul.mubr.f32.gmra.mrb[0].mxu0 %v621
        %v738 = vpop.f32.mrb[0].mxu0
        %v739 = vadd.f32 0.0, %v738
        %v740 = vpop.f32.mrb[0].mxu0
        %741 = vmatprep.mubr.f32.mxu0 0.0
        %742 = vmatmul.mubr.f32.gmra.mrb[0].mxu0 %v624
        %v743 = vpop.f32.mrb[0].mxu0
        %v744 = vadd.f32 0.0, %v743
        %v745 = vpop.f32.mrb[0].mxu0
        %746 = vmatprep.mubr.f32.mxu0 0.0
        %747 = vmatmul.mubr.f32.gmra.mrb[0].mxu0 %v627
        %v748 = vpop.f32.mrb[0].mxu0
        %v749 = vadd.f32 0.0, %v748
        %v750 = vpop.f32.mrb[0].mxu0
        %751 = vmatprep.mubr.f32.mxu0 0.0
        %752 = vmatmul.mubr.f32.gmra.mrb[0].mxu0 %v630
        %v753 = vpop.f32.mrb[0].mxu0
        %v754 = vadd.f32 0.0, %v753
        %v755 = vpop.f32.mrb[0].mxu0
        %756 = vmatprep.mubr.f32.mxu0 0.0
        %757 = vmatmul.mubr.f32.gmra.mrb[0].mxu0 %v633
        %v758 = vpop.f32.mrb[0].mxu0
        %v759 = vadd.f32 0.0, %v758
        %v760 = vpop.f32.mrb[0].mxu0
        %761 = vmatprep.mubr.f32.mxu0 0.0
        %762 = vmatmul.mubr.f32.gmra.mrb[0].mxu0 %v636
        %v763 = vpop.f32.mrb[0].mxu0
        %v764 = vadd.f32 0.0, %v763
        %v765 = vpop.f32.mrb[0].mxu0
        %766 = vmatprep.mubr.f32.mxu0 0.0
        %767 = vmatmul.mubr.f32.gmra.mrb[0].mxu0 %v639
        %v768 = vpop.f32.mrb[0].mxu0
        %v769 = vadd.f32 0.0, %v768
        %v770 = vpop.f32.mrb[0].mxu0
        %771 = vmatprep.mubr.f32.mxu0 0.0
        %772 = vmatmul.mubr.f32.gmra.mrb[0].mxu0 %v642
        %v773 = vpop.f32.mrb[0].mxu0
        %v774 = vadd.f32 0.0, %v773
        %v775 = vpop.f32.mrb[0].mxu0
        %776 = vmatprep.mubr.f32.mxu0 0.0
        %777 = vmatmul.mubr.f32.gmra.mrb[0].mxu0 %v645
        %v778 = vpop.f32.mrb[0].mxu0
        %v779 = vadd.f32 0.0, %v778
        %v780 = vpop.f32.mrb[0].mxu0
        %781 = vdwg.mxu0
        %v782 = vmax.f32 %v574, %v714
        %v783 = vmax.f32 %v575, %v719
        %v784 = vmax.f32 %v576, %v724
        %v785 = vmax.f32 %v577, %v729
        %v786 = vmax.f32 %v578, %v734
        %v787 = vmax.f32 %v579, %v739
        %v788 = vmax.f32 %v580, %v744
        %v789 = vmax.f32 %v581, %v749
        %v790 = vmax.f32 %v582, %v754
        %v791 = vmax.f32 %v583, %v759
        %v792 = vmax.f32 %v584, %v764
        %v793 = vmax.f32 %v585, %v769
        %v794 = vmax.f32 %v586, %v774
        %v795 = vmax.f32 %v587, %v779
        %796 = vst [vmem:[#allocation2] sm:$0xff] %v782
        %797 = vst [vmem:[#allocation2 + $0x8] sm:$0xff] %v783
        %798 = vst [vmem:[#allocation2 + $0x10] sm:$0xff] %v784
        %799 = vst [vmem:[#allocation2 + $0x18] sm:$0xff] %v785
        %800 = vst [vmem:[#allocation2 + $0x20] sm:$0xff] %v786
        %801 = vst [vmem:[#allocation2 + $0x28] sm:$0xff] %v787
        %802 = vst [vmem:[#allocation2 + $0x30] sm:$0xff] %v788
        %803 = vst [vmem:[#allocation2 + $0x38] sm:$0xff] %v789
        %804 = vst [vmem:[#allocation2 + $0x40] sm:$0xff] %v790
        %805 = vst [vmem:[#allocation2 + $0x48] sm:$0xff] %v791
        %806 = vst [vmem:[#allocation2 + $0x50] sm:$0xff] %v792
        %807 = vst [vmem:[#allocation2 + $0x58] sm:$0xff] %v793
        %808 = vst [vmem:[#allocation2 + $0x60] sm:$0xff] %v794
        %809 = vst [vmem:[#allocation2 + $0x68] sm:$0xf] %v795
        %v810 = vld [vmem:[#allocation2] ss:$3 sm:$0xff]
        %s811 = scalar_lea.vmem [#allocation2], 24
        %v812 = vld [vmem:[%s811] ss:$3 sm:$0xff]
        %s813 = scalar_lea.vmem [#allocation2], 48
        %v814 = vld [vmem:[%s813] ss:$3 sm:$0xff]
        %s815 = scalar_lea.vmem [#allocation2], 72
        %v816 = vld [vmem:[%s815] ss:$3 sm:$0xff]
        %s817 = scalar_lea.vmem [#allocation2], 96
        %v818 = vld [vmem:[%s817] ss:$3 sm:$0xf]
        %s819 = scalar_lea.vmem [#allocation2], 1
        %v820 = vld [vmem:[%s819] ss:$3 sm:$0xff]
        %s821 = scalar_lea.vmem [#allocation2], 25
        %v822 = vld [vmem:[%s821] ss:$3 sm:$0xff]
        %s823 = scalar_lea.vmem [#allocation2], 49
        %v824 = vld [vmem:[%s823] ss:$3 sm:$0xff]
        %s825 = scalar_lea.vmem [#allocation2], 73
        %v826 = vld [vmem:[%s825] ss:$3 sm:$0xff]
        %s827 = scalar_lea.vmem [#allocation2], 97
        %v828 = vld [vmem:[%s827] ss:$3 sm:$0xf]
        %v829 = vmax.f32 %v810, %v820
        %v830 = vmax.f32 %v812, %v822
        %v831 = vmax.f32 %v814, %v824
        %v832 = vmax.f32 %v816, %v826
        %v833 = vmax.f32 %v818, %v828
        %s834 = scalar_lea.vmem [#allocation2], 2
        %v835 = vld [vmem:[%s834] ss:$3 sm:$0xff]
        %s836 = scalar_lea.vmem [#allocation2], 26
        %v837 = vld [vmem:[%s836] ss:$3 sm:$0xff]
        %s838 = scalar_lea.vmem [#allocation2], 50
        %v839 = vld [vmem:[%s838] ss:$3 sm:$0xff]
        %s840 = scalar_lea.vmem [#allocation2], 74
        %v841 = vld [vmem:[%s840] ss:$3 sm:$0xff]
        %s842 = scalar_lea.vmem [#allocation2], 98
        %v843 = vld [vmem:[%s842] ss:$3 sm:$0xf]
        %v844 = vmax.f32 %v829, %v835
        %v845 = vmax.f32 %v830, %v837
        %v846 = vmax.f32 %v831, %v839
        %v847 = vmax.f32 %v832, %v841
        %v848 = vmax.f32 %v833, %v843
        %v849 = vld [vmem:[%s2] sm:$0x1]
        %v851 = vlaneseq
        %v852 = vshrl.u32 %v851, 7
        %v853 = vsub.s32 0, %v852
        %v854 = vrot.slane %v849, %v853
        %v856 = vadd.f32 %v844, %v854
        %v857 = vadd.f32 %v845, %v854
        %v858 = vadd.f32 %v846, %v854
        %v859 = vadd.f32 %v847, %v854
        %v860 = vadd.f32 %v848, %v854
        %v861 = vmax.f32 %v856, 0.0
        %v862 = vmax.f32 %v857, 0.0
        %v863 = vmax.f32 %v858, 0.0
        %v864 = vmax.f32 %v859, 0.0
        %v865 = vmax.f32 %v860, 0.0
        %s866 = smul.u32 %s172, 40
        %s867 = scalar_lea.vmem %s170, %s866
        %868 = vst [vmem:[%s867] sm:$0xff] %v861
        %869 = vst [vmem:[%s867 + $0x8] sm:$0xff] %v862
        %870 = vst [vmem:[%s867 + $0x10] sm:$0xff] %v863
        %871 = vst [vmem:[%s867 + $0x18] sm:$0xff] %v864
        %872 = vst [vmem:[%s867 + $0x20] sm:$0xf] %v865
      $region37: #{net_forward.4} parent=31 // loop_footer
        %s176 = sadd.s32 1, %s172
      $region38: #{net_forward.4} parent=31 // loop_footer_branch
        %171 = sbr.rel target = $region34
      $region39: #{net_forward.4} parent=31 // loop_exit
        _
      %p873 = scmp.lt.s32.totalorder %s14, 1
      %s874 = scalar_select %p873, %s14, 1
      %s875 = smul.addr %s874, 180
      %s876 = smul.addr %s875, 8
      %s877 = scalar_lea.vmem %s3, %s876
      // Predicated region
      $region40: #{net_forward.4} parent=31 // pred_check
        %p878 = pneg %p100
      $region41: #{net_forward.4} parent=31 // pred_check_branch
        %880 = sbr.rel (%p878) target = $region43
      $region42: #{net_forward.4} parent=31 // pred_region
        _
      $region43: #{net_forward.4} parent=31 // pred_fallthru
        _
    $region32: #{net_forward.4} parent=5 // pred_fallthru
      _
    %p881 = scmp.le.s32.totalorder 2, %s9
    // Predicated region
    $region44: #{net_forward.4} parent=5 // pred_check
      %p882 = pneg %p881
    $region45: #{net_forward.4} parent=5 // pred_check_branch
      %884 = sbr.rel (%p882) target = $region47
    $region46: #{net_forward.4} parent=5 // pred_region
      %s885 = ssub.s32 %s9, 2
      // Predicated region
      $region48: #{net_forward.4} parent=46 // pred_check
        %p886 = pneg %p106
      $region49: #{net_forward.4} parent=46 // pred_check_branch
        %888 = sbr.rel (%p886) target = $region51
      $region50: #{net_forward.4} parent=46 // pred_region
        %p889 = scmp.lt.s32.totalorder %s15, 1
        %s890 = scalar_select %p889, %s15, 1
        %s891 = smul.addr %s890, 180
        %s892 = smul.addr %s891, 8
        %s893 = scalar_lea.vmem %s3, %s892
      $region51: #{net_forward.4} parent=46 // pred_fallthru
        _
    $region47: #{net_forward.4} parent=5 // pred_fallthru
      _
  $region6: #{net_forward.4} parent=0 // loop_footer
    %s13 = sadd.s32 1, %s9
  $region7: #{net_forward.4} parent=0 // loop_footer_branch
    %8 = sbr.rel target = $region3
  $region8: #{net_forward.4} parent=0 // loop_exit
    _

// kernel: net_forward.5
$region0: #{net_forward.5}
  #allocation0 [shape = 'u32[]', space=smem, size = 0x4, offset = 0x4, fixed_abs, tag = 'smem constant byte address 0x4 - core index']
  #allocation1 [shape = 'u32[144,128]{1,0:T(1,128)}', space=vmem, size = 0x12000, scoped, tag = 'internal scratch']
  #allocation2 [shape = 'f32[33,64]{1,0:T(8,128)}', space=vmem, size = 0x5000, scoped, tag = 'scratch operand']
  %s0 = inlined_call_operand.vmem [shape: f32[2,36,36,128], index: 0, kind: input, shape index: {}]
  %s1 = inlined_call_operand.vmem [shape: f32[1152,64], index: 1, kind: input, shape index: {}]
  %s2 = inlined_call_operand.vmem [shape: f32[1,64], index: 2, kind: input, shape index: {}]
  %s3 = inlined_call_operand.vmem [shape: f32[2,11,11,64], index: 3, kind: output, shape index: {}]
  %s4 = sld [smem:[#allocation0]]
  $region52: #{net_forward.5} parent=0
    _
  %s6 = ssub.s32 1, %s4
  %s7 = scalar_select 0, %s6, %s4
  loop: start=0, step=1, limit=4
  $region2: #{net_forward.5} parent=0 // loop_pre_header
    _
  $region3: #{net_forward.5} parent=0 // loop_header
    %s9 = sphi 0, %s13
    %p10 = scmp.ge.s32.totalorder %s9, 4
    %s19 = sphi 0, %s21
    %s22 = sphi 0, %s19
    %s23 = sphi 0, %s22
    %s39 = sphi 0, %s23
    %s43 = sphi 0, %s43
    %s45 = sphi 0, %s43
    %s46 = sphi 0, %s45
    %s60 = sphi 0, %s46
    %s64 = sphi 0, %s64
    %s66 = sphi 0, %s64
    %s67 = sphi 0, %s66
    %s81 = sphi 0, %s67
    %s87 = sphi 0, %s89
    %s90 = sphi 0, %s87
    %s91 = sphi 0, %s90
    %s107 = sphi 0, %s91
  $region4: #{net_forward.5} parent=0 // loop_header_branch
    %12 = sbr.rel (%p10) target = $region8
  $region5: #{net_forward.5} parent=0 // loop_body
    %s14 = ssub.s32 %s9, 1
    %s15 = ssub.s32 %s9, 2
    %s16 = sadd.s32 %s9, 1
    %s17 = ssub.s32 %s9, %s16
    %p18 = scmp.eq.s32.totalorder %s17, 0
    %s20 = sadd.s32 %s19, 1
    %s21 = scalar_select %p18, %s19, %s20
    %p24 = pneg %p18
    %p25 = scmp.eq.s32.totalorder %s9, 1
    %p26 = por %p24, %p25
    %p27 = scmp.ne.s32.totalorder %s19, %s22
    %p28 = scmp.eq.s32.totalorder %s9, 0
    %p29 = por %p27, %p28
    %p30 = scmp.ne.s32.totalorder %s19, %s22
    %p31 = scmp.eq.s32.totalorder %s14, 1
    %p32 = por %p30, %p31
    %p33 = scmp.ne.s32.totalorder %s22, %s23
    %p34 = scmp.eq.s32.totalorder %s14, 0
    %p35 = por %p33, %p34
    %p36 = scmp.ne.s32.totalorder %s22, %s23
    %p37 = scmp.eq.s32.totalorder %s15, 1
    %p38 = por %p36, %p37
    %p40 = scmp.ne.s32.totalorder %s23, %s39
    %p41 = scmp.eq.s32.totalorder %s15, 0
    %p42 = por %p40, %p41
    %s44 = sadd.s32 %s43, 1
    %p47 = scmp.eq.s32.totalorder %s9, 1
    %p48 = scmp.ne.s32.totalorder %s43, %s45
    %p49 = scmp.eq.s32.totalorder %s9, 0
    %p50 = por %p48, %p49
    %p51 = scmp.ne.s32.totalorder %s43, %s45
    %p52 = scmp.eq.s32.totalorder %s14, 1
    %p53 = por %p51, %p52
    %p54 = scmp.ne.s32.totalorder %s45, %s46
    %p55 = scmp.eq.s32.totalorder %s14, 0
    %p56 = por %p54, %p55
    %p57 = scmp.ne.s32.totalorder %s45, %s46
    %p58 = scmp.eq.s32.totalorder %s15, 1
    %p59 = por %p57, %p58
    %p61 = scmp.ne.s32.totalorder %s46, %s60
    %p62 = scmp.eq.s32.totalorder %s15, 0
    %p63 = por %p61, %p62
    %s65 = sadd.s32 %s64, 1
    %p68 = scmp.eq.s32.totalorder %s9, 1
    %p69 = scmp.ne.s32.totalorder %s64, %s66
    %p70 = scmp.eq.s32.totalorder %s9, 0
    %p71 = por %p69, %p70
    %p72 = scmp.ne.s32.totalorder %s64, %s66
    %p73 = scmp.eq.s32.totalorder %s14, 1
    %p74 = por %p72, %p73
    %p75 = scmp.ne.s32.totalorder %s66, %s67
    %p76 = scmp.eq.s32.totalorder %s14, 0
    %p77 = por %p75, %p76
    %p78 = scmp.ne.s32.totalorder %s66, %s67
    %p79 = scmp.eq.s32.totalorder %s15, 1
    %p80 = por %p78, %p79
    %p82 = scmp.ne.s32.totalorder %s67, %s81
    %p83 = scmp.eq.s32.totalorder %s15, 0
    %p84 = por %p82, %p83
    %s85 = ssub.s32 %s9, %s16
    %p86 = scmp.eq.s32.totalorder %s85, 0
    %s88 = sadd.s32 %s87, 1
    %s89 = scalar_select %p86, %s87, %s88
    %p92 = pneg %p86
    %p93 = scmp.eq.s32.totalorder %s9, 1
    %p94 = por %p92, %p93
    %p95 = scmp.ne.s32.totalorder %s87, %s90
    %p96 = scmp.eq.s32.totalorder %s9, 0
    %p97 = por %p95, %p96
    %p98 = scmp.ne.s32.totalorder %s87, %s90
    %p99 = scmp.eq.s32.totalorder %s14, 1
    %p100 = por %p98, %p99
    %p101 = scmp.ne.s32.totalorder %s90, %s91
    %p102 = scmp.eq.s32.totalorder %s14, 0
    %p103 = por %p101, %p102
    %p104 = scmp.ne.s32.totalorder %s90, %s91
    %p105 = scmp.eq.s32.totalorder %s15, 1
    %p106 = por %p104, %p105
    %p108 = scmp.ne.s32.totalorder %s91, %s107
    %p109 = scmp.eq.s32.totalorder %s15, 0
    %p110 = por %p108, %p109
    %p111 = scmp.le.s32.totalorder 1, %s9
    %p112 = scmp.lt.s32.totalorder %s9, 3
    %p113 = pnand %p111, %p112
    %p114 = pneg %p113
    // Predicated region
    $region9: #{net_forward.5} parent=5 // pred_check
      _
    $region10: #{net_forward.5} parent=5 // pred_check_branch
      %116 = sbr.rel (%p113) target = $region12
    $region11: #{net_forward.5} parent=5 // pred_region
      %s117 = ssub.s32 %s9, 1
      // Predicated region
      $region13: #{net_forward.5} parent=11 // pred_check
        %p118 = pneg %p56
      $region14: #{net_forward.5} parent=11 // pred_check_branch
        %120 = sbr.rel (%p118) target = $region16
      $region15: #{net_forward.5} parent=11 // pred_region
        _
      $region16: #{net_forward.5} parent=11 // pred_fallthru
        _
      // Predicated region
      $region17: #{net_forward.5} parent=11 // pred_check
        %p121 = pneg %p77
      $region18: #{net_forward.5} parent=11 // pred_check_branch
        %123 = sbr.rel (%p121) target = $region20
      $region19: #{net_forward.5} parent=11 // pred_region
        _
      $region20: #{net_forward.5} parent=11 // pred_fallthru
        _
    $region12: #{net_forward.5} parent=5 // pred_fallthru
      _
    %p124 = scmp.lt.s32.totalorder %s9, 2
    // Predicated region
    $region21: #{net_forward.5} parent=5 // pred_check
      %p125 = pneg %p124
    $region22: #{net_forward.5} parent=5 // pred_check_branch
      %127 = sbr.rel (%p125) target = $region24
    $region23: #{net_forward.5} parent=5 // pred_region
      // Predicated region
      $region25: #{net_forward.5} parent=23 // pred_check
        %p128 = pneg %p29
      $region26: #{net_forward.5} parent=23 // pred_check_branch
        %130 = sbr.rel (%p128) target = $region28
      $region27: #{net_forward.5} parent=23 // pred_region
        %p131 = scmp.lt.s32.totalorder %s9, 1
        %s132 = scalar_select %p131, %s9, 1
        %s133 = smul.addr %s132, 180
        %s134 = smul.addr %s133, 8
        %s135 = scalar_lea.vmem %s0, %s134
      $region28: #{net_forward.5} parent=23 // pred_fallthru
        _
    $region24: #{net_forward.5} parent=5 // pred_fallthru
      _
    %p136 = scmp.le.s32.totalorder 1, %s9
    %p137 = scmp.lt.s32.totalorder %s9, 3
    %p138 = pnand %p136, %p137
    %p139 = pneg %p138
    // Predicated region
    $region29: #{net_forward.5} parent=5 // pred_check
      _
    $region30: #{net_forward.5} parent=5 // pred_check_branch
      %141 = sbr.rel (%p138) target = $region32
    $region31: #{net_forward.5} parent=5 // pred_region
      %s142 = ssub.s32 %s9, 1
      %p143 = scmp.lt.s32.totalorder %s14, 1
      %s144 = scalar_select %p143, %s14, 1
      %s145 = smul.addr %s144, 180
      %s146 = smul.addr %s145, 8
      %s147 = scalar_lea.vmem %s0, %s146
      %p148 = pneg %p35
      %p149 = pneg %p32
      %p150 = pneg %p56
      %p151 = pneg %p53
      %p152 = pneg %p77
      %p153 = pneg %p74
      %p154 = pneg %p103
      %p155 = pneg %p100
      %p156 = scmp.lt.s32.totalorder %s14, 1
      %s157 = scalar_select %p156, %s14, 1
      %s158 = smul.addr %s157, 22
      %s159 = smul.addr %s158, 8
      %s160 = scalar_lea.vmem %s3, %s159
      %p161 = scmp.lt.s32.totalorder %s14, 1
      %s162 = scalar_select %p161, %s14, 1
      %s163 = smul.addr %s162, 180
      %s164 = smul.addr %s163, 8
      %s165 = scalar_lea.vmem %s0, %s164
      %p166 = scmp.lt.s32.totalorder %s14, 1
      %s167 = scalar_select %p166, %s14, 1
      %s168 = smul.addr %s167, 22
      %s169 = smul.addr %s168, 8
      %s170 = scalar_lea.vmem %s3, %s169
      loop: start=0, step=1, limit=11
      $region33: #{net_forward.5} parent=31 // loop_pre_header
        _
      $region34: #{net_forward.5} parent=31 // loop_header
        %s172 = sphi 0, %s176
        %p173 = scmp.ge.s32.totalorder %s172, 11
      $region35: #{net_forward.5} parent=31 // loop_header_branch
        %175 = sbr.rel (%p173) target = $region39
      $region36: #{net_forward.5} parent=31 // loop_body
        %s177 = smul.u32 %s172, 3
        %s178 = smul.u32 %s177, 40
        %s179 = scalar_lea.vmem %s165, %s178
        %v180 = vld [vmem:[%s179] sm:$0xff]
        %v181 = vld [vmem:[%s179 + $0x8] sm:$0xff]
        %v182 = vld [vmem:[%s179 + $0x10] sm:$0xff]
        %v183 = vld [vmem:[%s179 + $0x18] sm:$0xff]
        %v184 = vld [vmem:[%s179 + $0x20] sm:$0xf]
        %s185 = sadd.s32 %s177, 1
        %s186 = smul.u32 %s185, 40
        %s187 = scalar_lea.vmem %s165, %s186
        %v188 = vld [vmem:[%s187] sm:$0xff]
        %v189 = vld [vmem:[%s187 + $0x8] sm:$0xff]
        %v190 = vld [vmem:[%s187 + $0x10] sm:$0xff]
        %v191 = vld [vmem:[%s187 + $0x18] sm:$0xff]
        %v192 = vld [vmem:[%s187 + $0x20] sm:$0xf]
        %s193 = sadd.s32 %s177, 2
        %s194 = smul.u32 %s193, 40
        %s195 = scalar_lea.vmem %s165, %s194
        %v196 = vld [vmem:[%s195] sm:$0xff]
        %v197 = vld [vmem:[%s195 + $0x8] sm:$0xff]
        %v198 = vld [vmem:[%s195 + $0x10] sm:$0xff]
        %v199 = vld [vmem:[%s195 + $0x18] sm:$0xff]
        %v200 = vld [vmem:[%s195 + $0x20] sm:$0xf]
        %vm206 = vcmask 1046528
        %v207 = vrot.slane %v180, 1
        %v208 = vrot.slane %v181, 1
        %v209 = vsel %vm206, %v207, %v208
        %v210 = vrot.slane %v182, 1
        %v211 = vsel %vm206, %v208, %v210
        %v212 = vrot.slane %v183, 1
        %v213 = vsel %vm206, %v210, %v212
        %v214 = vrot.slane %v184, 1
        %v215 = vsel %vm206, %v212, %v214
        %vm221 = vcmask 1045504
        %v222 = vrot.slane %v180, 2
        %v223 = vrot.slane %v181, 2
        %v224 = vsel %vm221, %v222, %v223
        %v225 = vrot.slane %v182, 2
        %v226 = vsel %vm221, %v223, %v225
        %v227 = vrot.slane %v183, 2
        %v228 = vsel %vm221, %v225, %v227
        %v229 = vrot.slane %v184, 2
        %v230 = vsel %vm221, %v227, %v229
        %v241 = vrot.slane %v188, 1
        %v242 = vrot.slane %v189, 1
        %v243 = vsel %vm206, %v241, %v242
        %v244 = vrot.slane %v190, 1
        %v245 = vsel %vm206, %v242, %v244
        %v246 = vrot.slane %v191, 1
        %v247 = vsel %vm206, %v244, %v246
        %v248 = vrot.slane %v192, 1
        %v249 = vsel %vm206, %v246, %v248
        %v255 = vrot.slane %v188, 2
        %v256 = vrot.slane %v189, 2
        %v257 = vsel %vm221, %v255, %v256
        %v258 = vrot.slane %v190, 2
        %v259 = vsel %vm221, %v256, %v258
        %v260 = vrot.slane %v191, 2
        %v261 = vsel %vm221, %v258, %v260
        %v262 = vrot.slane %v192, 2
        %v263 = vsel %vm221, %v260, %v262
        %v274 = vrot.slane %v196, 1
        %v275 = vrot.slane %v197, 1
        %v276 = vsel %vm206, %v274, %v275
        %v277 = vrot.slane %v198, 1
        %v278 = vsel %vm206, %v275, %v277
        %v279 = vrot.slane %v199, 1
        %v280 = vsel %vm206, %v277, %v279
        %v281 = vrot.slane %v200, 1
        %v282 = vsel %vm206, %v279, %v281
        %v288 = vrot.slane %v196, 2
        %v289 = vrot.slane %v197, 2
        %v290 = vsel %vm221, %v288, %v289
        %v291 = vrot.slane %v198, 2
        %v292 = vsel %vm221, %v289, %v291
        %v293 = vrot.slane %v199, 2
        %v294 = vsel %vm221, %v291, %v293
        %v295 = vrot.slane %v200, 2
        %v296 = vsel %vm221, %v293, %v295
        %v302 = vld [vmem:[%s1] sm:$0xff]
        %v303 = vld [vmem:[%s1 + $0x8] sm:$0xff]
        %v304 = vld [vmem:[%s1 + $0x10] sm:$0xff]
        %v305 = vld [vmem:[%s1 + $0x18] sm:$0xff]
        %v306 = vld [vmem:[%s1 + $0x20] sm:$0xff]
        %v307 = vld [vmem:[%s1 + $0x28] sm:$0xff]
        %v308 = vld [vmem:[%s1 + $0x30] sm:$0xff]
        %v309 = vld [vmem:[%s1 + $0x38] sm:$0xff]
        %v310 = vld [vmem:[%s1 + $0x40] sm:$0xff]
        %v311 = vld [vmem:[%s1 + $0x48] sm:$0xff]
        %v312 = vld [vmem:[%s1 + $0x50] sm:$0xff]
        %v313 = vld [vmem:[%s1 + $0x58] sm:$0xff]
        %v314 = vld [vmem:[%s1 + $0x60] sm:$0xff]
        %v315 = vld [vmem:[%s1 + $0x68] sm:$0xff]
        %v316 = vld [vmem:[%s1 + $0x70] sm:$0xff]
        %v317 = vld [vmem:[%s1 + $0x78] sm:$0xff]
        %v318 = vld [vmem:[%s1 + $0x80] sm:$0xff]
        %v319 = vld [vmem:[%s1 + $0x88] sm:$0xff]
        %v320 = vld [vmem:[%s1 + $0x90] sm:$0xff]
        %v321 = vld [vmem:[%s1 + $0x98] sm:$0xff]
        %v322 = vld [vmem:[%s1 + $0xa0] sm:$0xff]
        %v323 = vld [vmem:[%s1 + $0xa8] sm:$0xff]
        %v324 = vld [vmem:[%s1 + $0xb0] sm:$0xff]
        %v325 = vld [vmem:[%s1 + $0xb8] sm:$0xff]
        %v326 = vld [vmem:[%s1 + $0xc0] sm:$0xff]
        %v327 = vld [vmem:[%s1 + $0xc8] sm:$0xff]
        %v328 = vld [vmem:[%s1 + $0xd0] sm:$0xff]
        %v329 = vld [vmem:[%s1 + $0xd8] sm:$0xff]
        %v330 = vld [vmem:[%s1 + $0xe0] sm:$0xff]
        %v331 = vld [vmem:[%s1 + $0xe8] sm:$0xff]
        %v332 = vld [vmem:[%s1 + $0xf0] sm:$0xff]
        %v333 = vld [vmem:[%s1 + $0xf8] sm:$0xff]
        %v334 = vld [vmem:[%s1 + $0x100] sm:$0xff]
        %v335 = vld [vmem:[%s1 + $0x108] sm:$0xff]
        %v336 = vld [vmem:[%s1 + $0x110] sm:$0xff]
        %v337 = vld [vmem:[%s1 + $0x118] sm:$0xff]
        %v338 = vld [vmem:[%s1 + $0x120] sm:$0xff]
        %v339 = vld [vmem:[%s1 + $0x128] sm:$0xff]
        %v340 = vld [vmem:[%s1 + $0x130] sm:$0xff]
        %v341 = vld [vmem:[%s1 + $0x138] sm:$0xff]
        %v342 = vld [vmem:[%s1 + $0x140] sm:$0xff]
        %v343 = vld [vmem:[%s1 + $0x148] sm:$0xff]
        %v344 = vld [vmem:[%s1 + $0x150] sm:$0xff]
        %v345 = vld [vmem:[%s1 + $0x158] sm:$0xff]
        %v346 = vld [vmem:[%s1 + $0x160] sm:$0xff]
        %v347 = vld [vmem:[%s1 + $0x168] sm:$0xff]
        %v348 = vld [vmem:[%s1 + $0x170] sm:$0xff]
        %v349 = vld [vmem:[%s1 + $0x178] sm:$0xff]
        %v350 = vld [vmem:[%s1 + $0x180] sm:$0xff]
        %v351 = vld [vmem:[%s1 + $0x188] sm:$0xff]
        %v352 = vld [vmem:[%s1 + $0x190] sm:$0xff]
        %v353 = vld [vmem:[%s1 + $0x198] sm:$0xff]
        %v354 = vld [vmem:[%s1 + $0x1a0] sm:$0xff]
        %v355 = vld [vmem:[%s1 + $0x1a8] sm:$0xff]
        %v356 = vld [vmem:[%s1 + $0x1b0] sm:$0xff]
        %v357 = vld [vmem:[%s1 + $0x1b8] sm:$0xff]
        %v358 = vld [vmem:[%s1 + $0x1c0] sm:$0xff]
        %v359 = vld [vmem:[%s1 + $0x1c8] sm:$0xff]
        %v360 = vld [vmem:[%s1 + $0x1d0] sm:$0xff]
        %v361 = vld [vmem:[%s1 + $0x1d8] sm:$0xff]
        %v362 = vld [vmem:[%s1 + $0x1e0] sm:$0xff]
        %v363 = vld [vmem:[%s1 + $0x1e8] sm:$0xff]
        %v364 = vld [vmem:[%s1 + $0x1f0] sm:$0xff]
        %v365 = vld [vmem:[%s1 + $0x1f8] sm:$0xff]
        %v366 = vld [vmem:[%s1 + $0x200] sm:$0xff]
        %v367 = vld [vmem:[%s1 + $0x208] sm:$0xff]
        %v368 = vld [vmem:[%s1 + $0x210] sm:$0xff]
        %v369 = vld [vmem:[%s1 + $0x218] sm:$0xff]
        %v370 = vld [vmem:[%s1 + $0x220] sm:$0xff]
        %v371 = vld [vmem:[%s1 + $0x228] sm:$0xff]
        %v372 = vld [vmem:[%s1 + $0x230] sm:$0xff]
        %v373 = vld [vmem:[%s1 + $0x238] sm:$0xff]
        %v374 = vld [vmem:[%s1 + $0x240] sm:$0xff]
        %v375 = vld [vmem:[%s1 + $0x248] sm:$0xff]
        %v376 = vld [vmem:[%s1 + $0x250] sm:$0xff]
        %v377 = vld [vmem:[%s1 + $0x258] sm:$0xff]
        %v378 = vld [vmem:[%s1 + $0x260] sm:$0xff]
        %v379 = vld [vmem:[%s1 + $0x268] sm:$0xff]
        %v380 = vld [vmem:[%s1 + $0x270] sm:$0xff]
        %v381 = vld [vmem:[%s1 + $0x278] sm:$0xff]
        %v382 = vld [vmem:[%s1 + $0x280] sm:$0xff]
        %v383 = vld [vmem:[%s1 + $0x288] sm:$0xff]
        %v384 = vld [vmem:[%s1 + $0x290] sm:$0xff]
        %v385 = vld [vmem:[%s1 + $0x298] sm:$0xff]
        %v386 = vld [vmem:[%s1 + $0x2a0] sm:$0xff]
        %v387 = vld [vmem:[%s1 + $0x2a8] sm:$0xff]
        %v388 = vld [vmem:[%s1 + $0x2b0] sm:$0xff]
        %v389 = vld [vmem:[%s1 + $0x2b8] sm:$0xff]
        %v390 = vld [vmem:[%s1 + $0x2c0] sm:$0xff]
        %v391 = vld [vmem:[%s1 + $0x2c8] sm:$0xff]
        %v392 = vld [vmem:[%s1 + $0x2d0] sm:$0xff]
        %v393 = vld [vmem:[%s1 + $0x2d8] sm:$0xff]
        %v394 = vld [vmem:[%s1 + $0x2e0] sm:$0xff]
        %v395 = vld [vmem:[%s1 + $0x2e8] sm:$0xff]
        %v396 = vld [vmem:[%s1 + $0x2f0] sm:$0xff]
        %v397 = vld [vmem:[%s1 + $0x2f8] sm:$0xff]
        %v398 = vld [vmem:[%s1 + $0x300] sm:$0xff]
        %v399 = vld [vmem:[%s1 + $0x308] sm:$0xff]
        %v400 = vld [vmem:[%s1 + $0x310] sm:$0xff]
        %v401 = vld [vmem:[%s1 + $0x318] sm:$0xff]
        %v402 = vld [vmem:[%s1 + $0x320] sm:$0xff]
        %v403 = vld [vmem:[%s1 + $0x328] sm:$0xff]
        %v404 = vld [vmem:[%s1 + $0x330] sm:$0xff]
        %v405 = vld [vmem:[%s1 + $0x338] sm:$0xff]
        %v406 = vld [vmem:[%s1 + $0x340] sm:$0xff]
        %v407 = vld [vmem:[%s1 + $0x348] sm:$0xff]
        %v408 = vld [vmem:[%s1 + $0x350] sm:$0xff]
        %v409 = vld [vmem:[%s1 + $0x358] sm:$0xff]
        %v410 = vld [vmem:[%s1 + $0x360] sm:$0xff]
        %v411 = vld [vmem:[%s1 + $0x368] sm:$0xff]
        %v412 = vld [vmem:[%s1 + $0x370] sm:$0xff]
        %v413 = vld [vmem:[%s1 + $0x378] sm:$0xff]
        %v414 = vld [vmem:[%s1 + $0x380] sm:$0xff]
        %v415 = vld [vmem:[%s1 + $0x388] sm:$0xff]
        %v416 = vld [vmem:[%s1 + $0x390] sm:$0xff]
        %v417 = vld [vmem:[%s1 + $0x398] sm:$0xff]
        %v418 = vld [vmem:[%s1 + $0x3a0] sm:$0xff]
        %v419 = vld [vmem:[%s1 + $0x3a8] sm:$0xff]
        %v420 = vld [vmem:[%s1 + $0x3b0] sm:$0xff]
        %v421 = vld [vmem:[%s1 + $0x3b8] sm:$0xff]
        %v422 = vld [vmem:[%s1 + $0x3c0] sm:$0xff]
        %v423 = vld [vmem:[%s1 + $0x3c8] sm:$0xff]
        %v424 = vld [vmem:[%s1 + $0x3d0] sm:$0xff]
        %v425 = vld [vmem:[%s1 + $0x3d8] sm:$0xff]
        %v426 = vld [vmem:[%s1 + $0x3e0] sm:$0xff]
        %v427 = vld [vmem:[%s1 + $0x3e8] sm:$0xff]
        %v428 = vld [vmem:[%s1 + $0x3f0] sm:$0xff]
        %v429 = vld [vmem:[%s1 + $0x3f8] sm:$0xff]
        %v430 = vld [vmem:[%s1 + $0x400] sm:$0xff]
        %v431 = vld [vmem:[%s1 + $0x408] sm:$0xff]
        %v432 = vld [vmem:[%s1 + $0x410] sm:$0xff]
        %v433 = vld [vmem:[%s1 + $0x418] sm:$0xff]
        %v434 = vld [vmem:[%s1 + $0x420] sm:$0xff]
        %v435 = vld [vmem:[%s1 + $0x428] sm:$0xff]
        %v436 = vld [vmem:[%s1 + $0x430] sm:$0xff]
        %v437 = vld [vmem:[%s1 + $0x438] sm:$0xff]
        %v438 = vld [vmem:[%s1 + $0x440] sm:$0xff]
        %v439 = vld [vmem:[%s1 + $0x448] sm:$0xff]
        %v440 = vld [vmem:[%s1 + $0x450] sm:$0xff]
        %v441 = vld [vmem:[%s1 + $0x458] sm:$0xff]
        %v442 = vld [vmem:[%s1 + $0x460] sm:$0xff]
        %v443 = vld [vmem:[%s1 + $0x468] sm:$0xff]
        %v444 = vld [vmem:[%s1 + $0x470] sm:$0xff]
        %v445 = vld [vmem:[%s1 + $0x478] sm:$0xff]
        %446 = vmatprep.subr.mxu0 0.0
        %447 = vmatpush1.msra.mxu0 %v302
        %448 = vmatprep.subr.mxu0 0.0
        %449 = vmatpush1.msra.mxu0 %v303
        %450 = vmatprep.subr.mxu0 0.0
        %451 = vmatpush1.msra.mxu0 %v304
        %452 = vmatprep.subr.mxu0 0.0
        %453 = vmatpush1.msra.mxu0 %v305
        %454 = vmatprep.subr.mxu0 0.0
        %455 = vmatpush1.msra.mxu0 %v306
        %456 = vmatprep.subr.mxu0 0.0
        %457 = vmatpush1.msra.mxu0 %v307
        %458 = vmatprep.subr.mxu0 0.0
        %459 = vmatpush1.msra.mxu0 %v308
        %460 = vmatprep.subr.mxu0 0.0
        %461 = vmatpush1.msra.mxu0 %v309
        %462 = vmatprep.subr.mxu0 0.0
        %463 = vmatpush1.msra.mxu0 %v310
        %464 = vmatprep.subr.mxu0 0.0
        %465 = vmatpush1.msra.mxu0 %v311
        %466 = vmatprep.subr.mxu0 0.0
        %467 = vmatpush1.msra.mxu0 %v312
        %468 = vmatprep.subr.mxu0 0.0
        %469 = vmatpush1.msra.mxu0 %v313
        %470 = vmatprep.subr.mxu0 0.0
        %471 = vmatpush1.msra.mxu0 %v314
        %472 = vmatprep.subr.mxu0 0.0
        %473 = vmatpush1.msra.mxu0 %v315
        %474 = vmatprep.subr.mxu0 0.0
        %475 = vmatpush1.msra.mxu0 %v316
        %476 = vmatprep.subr.mxu0 0.0
        %477 = vmatpush1.msra.mxu0 %v317
        %478 = vmatprep.subr.mxu0 0.0
        %479 = vmatpush1.msra.mxu0 %v318
        %480 = vmatprep.subr.mxu0 0.0
        %481 = vmatpush1.msra.mxu0 %v319
        %482 = vmatprep.subr.mxu0 0.0
        %483 = vmatpush1.msra.mxu0 %v320
        %484 = vmatprep.subr.mxu0 0.0
        %485 = vmatpush1.msra.mxu0 %v321
        %486 = vmatprep.subr.mxu0 0.0
        %487 = vmatpush1.msra.mxu0 %v322
        %488 = vmatprep.subr.mxu0 0.0
        %489 = vmatpush1.msra.mxu0 %v323
        %490 = vmatprep.subr.mxu0 0.0
        %491 = vmatpush1.msra.mxu0 %v324
        %492 = vmatprep.subr.mxu0 0.0
        %493 = vmatpush1.msra.mxu0 %v325
        %494 = vmatprep.subr.mxu0 0.0
        %495 = vmatpush1.msra.mxu0 %v326
        %496 = vmatprep.subr.mxu0 0.0
        %497 = vmatpush1.msra.mxu0 %v327
        %498 = vmatprep.subr.mxu0 0.0
        %499 = vmatpush1.msra.mxu0 %v328
        %500 = vmatprep.subr.mxu0 0.0
        %501 = vmatpush1.msra.mxu0 %v329
        %502 = vmatprep.subr.mxu0 0.0
        %503 = vmatpush1.msra.mxu0 %v330
        %504 = vmatprep.subr.mxu0 0.0
        %505 = vmatpush1.msra.mxu0 %v331
        %506 = vmatprep.subr.mxu0 0.0
        %507 = vmatpush1.msra.mxu0 %v332
        %508 = vmatprep.subr.mxu0 0.0
        %509 = vmatpush1.msra.mxu0 %v333
        %510 = vmatprep.mubr.f32.mxu0 %v209
        %511 = vmatmul.mubr.f32.gmra.mrb[0].mxu0 %v180
        %v512 = vpop.f32.mrb[0].mxu0
        %v513 = vadd.f32 0.0, %v512
        %v514 = vpop.f32.mrb[0].mxu0
        %515 = vmatprep.mubr.f32.mxu0 %v211
        %516 = vmatmul.mubr.f32.gmra.mrb[0].mxu0 %v181
        %v517 = vpop.f32.mrb[0].mxu0
        %v518 = vadd.f32 0.0, %v517
        %v519 = vpop.f32.mrb[0].mxu0
        %520 = vmatprep.mubr.f32.mxu0 %v213
        %521 = vmatmul.mubr.f32.gmra.mrb[0].mxu0 %v182
        %v522 = vpop.f32.mrb[0].mxu0
        %v523 = vadd.f32 0.0, %v522
        %v524 = vpop.f32.mrb[0].mxu0
        %525 = vmatprep.mubr.f32.mxu0 %v215
        %526 = vmatmul.mubr.f32.gmra.mrb[0].mxu0 %v183
        %v527 = vpop.f32.mrb[0].mxu0
        %v528 = vadd.f32 0.0, %v527
        %v529 = vpop.f32.mrb[0].mxu0
        %530 = vmatprep.mubr.f32.mxu0 %v214
        %531 = vmatmul.mubr.f32.gmra.mrb[0].mxu0 %v184
        %v532 = vpop.f32.mrb[0].mxu0
        %v533 = vadd.f32 0.0, %v532
        %v534 = vpop.f32.mrb[0].mxu0
        %535 = vdwg.mxu0
        %536 = vmatprep.subr.mxu0 0.0
        %537 = vmatpush1.msra.mxu0 %v334
        %538 = vmatprep.subr.mxu0 0.0
        %539 = vmatpush1.msra.mxu0 %v335
        %540 = vmatprep.subr.mxu0 0.0
        %541 = vmatpush1.msra.mxu0 %v336
        %542 = vmatprep.subr.mxu0 0.0
        %543 = vmatpush1.msra.mxu0 %v337
        %544 = vmatprep.subr.mxu0 0.0
        %545 = vmatpush1.msra.mxu0 %v338
        %546 = vmatprep.subr.mxu0 0.0
        %547 = vmatpush1.msra.mxu0 %v339
        %548 = vmatprep.subr.mxu0 0.0
        %549 = vmatpush1.msra.mxu0 %v340
        %550 = vmatprep.subr.mxu0 0.0
        %551 = vmatpush1.msra.mxu0 %v341
        %552 = vmatprep.subr.mxu0 0.0
        %553 = vmatpush1.msra.mxu0 %v342
        %554 = vmatprep.subr.mxu0 0.0
        %555 = vmatpush1.msra.mxu0 %v343
        %556 = vmatprep.subr.mxu0 0.0
        %557 = vmatpush1.msra.mxu0 %v344
        %558 = vmatprep.subr.mxu0 0.0
        %559 = vmatpush1.msra.mxu0 %v345
        %560 = vmatprep.subr.mxu0 0.0
        %561 = vmatpush1.msra.mxu0 %v346
        %562 = vmatprep.subr.mxu0 0.0
        %563 = vmatpush1.msra.mxu0 %v347
        %564 = vmatprep.subr.mxu0 0.0
        %565 = vmatpush1.msra.mxu0 %v348
        %566 = vmatprep.subr.mxu0 0.0
        %567 = vmatpush1.msra.mxu0 %v349
        %568 = vmatprep.subr.mxu0 0.0
        %569 = vmatpush1.msra.mxu0 %v350
        %570 = vmatprep.subr.mxu0 0.0
        %571 = vmatpush1.msra.mxu0 %v351
        %572 = vmatprep.subr.mxu0 0.0
        %573 = vmatpush1.msra.mxu0 %v352
        %574 = vmatprep.subr.mxu0 0.0
        %575 = vmatpush1.msra.mxu0 %v353
        %576 = vmatprep.subr.mxu0 0.0
        %577 = vmatpush1.msra.mxu0 %v354
        %578 = vmatprep.subr.mxu0 0.0
        %579 = vmatpush1.msra.mxu0 %v355
        %580 = vmatprep.subr.mxu0 0.0
        %581 = vmatpush1.msra.mxu0 %v356
        %582 = vmatprep.subr.mxu0 0.0
        %583 = vmatpush1.msra.mxu0 %v357
        %584 = vmatprep.subr.mxu0 0.0
        %585 = vmatpush1.msra.mxu0 %v358
        %586 = vmatprep.subr.mxu0 0.0
        %587 = vmatpush1.msra.mxu0 %v359
        %588 = vmatprep.subr.mxu0 0.0
        %589 = vmatpush1.msra.mxu0 %v360
        %590 = vmatprep.subr.mxu0 0.0
        %591 = vmatpush1.msra.mxu0 %v361
        %592 = vmatprep.subr.mxu0 0.0
        %593 = vmatpush1.msra.mxu0 %v362
        %594 = vmatprep.subr.mxu0 0.0
        %595 = vmatpush1.msra.mxu0 %v363
        %596 = vmatprep.subr.mxu0 0.0
        %597 = vmatpush1.msra.mxu0 %v364
        %598 = vmatprep.subr.mxu0 0.0
        %599 = vmatpush1.msra.mxu0 %v365
        %600 = vmatprep.mubr.f32.mxu0 %v188
        %601 = vmatmul.mubr.f32.gmra.mrb[0].mxu0 %v224
        %v602 = vpop.f32.mrb[0].mxu0
        %v603 = vadd.f32 %v513, %v602
        %v604 = vpop.f32.mrb[0].mxu0
        %605 = vmatprep.mubr.f32.mxu0 %v189
        %606 = vmatmul.mubr.f32.gmra.mrb[0].mxu0 %v226
        %v607 = vpop.f32.mrb[0].mxu0
        %v608 = vadd.f32 %v518, %v607
        %v609 = vpop.f32.mrb[0].mxu0
        %610 = vmatprep.mubr.f32.mxu0 %v190
        %611 = vmatmul.mubr.f32.gmra.mrb[0].mxu0 %v228
        %v612 = vpop.f32.mrb[0].mxu0
        %v613 = vadd.f32 %v523, %v612
        %v614 = vpop.f32.mrb[0].mxu0
        %615 = vmatprep.mubr.f32.mxu0 %v191
        %616 = vmatmul.mubr.f32.gmra.mrb[0].mxu0 %v230
        %v617 = vpop.f32.mrb[0].mxu0
        %v618 = vadd.f32 %v528, %v617
        %v619 = vpop.f32.mrb[0].mxu0
        %620 = vmatprep.mubr.f32.mxu0 %v192
        %621 = vmatmul.mubr.f32.gmra.mrb[0].mxu0 %v229
        %v622 = vpop.f32.mrb[0].mxu0
        %v623 = vadd.f32 %v533, %v622
        %v624 = vpop.f32.mrb[0].mxu0
        %625 = vdwg.mxu0
        %626 = vmatprep.subr.mxu0 0.0
        %627 = vmatpush1.msra.mxu0 %v366
        %628 = vmatprep.subr.mxu0 0.0
        %629 = vmatpush1.msra.mxu0 %v367
        %630 = vmatprep.subr.mxu0 0.0
        %631 = vmatpush1.msra.mxu0 %v368
        %632 = vmatprep.subr.mxu0 0.0
        %633 = vmatpush1.msra.mxu0 %v369
        %634 = vmatprep.subr.mxu0 0.0
        %635 = vmatpush1.msra.mxu0 %v370
        %636 = vmatprep.subr.mxu0 0.0
        %637 = vmatpush1.msra.mxu0 %v371
        %638 = vmatprep.subr.mxu0 0.0
        %639 = vmatpush1.msra.mxu0 %v372
        %640 = vmatprep.subr.mxu0 0.0
        %641 = vmatpush1.msra.mxu0 %v373
        %642 = vmatprep.subr.mxu0 0.0
        %643 = vmatpush1.msra.mxu0 %v374
        %644 = vmatprep.subr.mxu0 0.0
        %645 = vmatpush1.msra.mxu0 %v375
        %646 = vmatprep.subr.mxu0 0.0
        %647 = vmatpush1.msra.mxu0 %v376
        %648 = vmatprep.subr.mxu0 0.0
        %649 = vmatpush1.msra.mxu0 %v377
        %650 = vmatprep.subr.mxu0 0.0
        %651 = vmatpush1.msra.mxu0 %v378
        %652 = vmatprep.subr.mxu0 0.0
        %653 = vmatpush1.msra.mxu0 %v379
        %654 = vmatprep.subr.mxu0 0.0
        %655 = vmatpush1.msra.mxu0 %v380
        %656 = vmatprep.subr.mxu0 0.0
        %657 = vmatpush1.msra.mxu0 %v381
        %658 = vmatprep.subr.mxu0 0.0
        %659 = vmatpush1.msra.mxu0 %v382
        %660 = vmatprep.subr.mxu0 0.0
        %661 = vmatpush1.msra.mxu0 %v383
        %662 = vmatprep.subr.mxu0 0.0
        %663 = vmatpush1.msra.mxu0 %v384
        %664 = vmatprep.subr.mxu0 0.0
        %665 = vmatpush1.msra.mxu0 %v385
        %666 = vmatprep.subr.mxu0 0.0
        %667 = vmatpush1.msra.mxu0 %v386
        %668 = vmatprep.subr.mxu0 0.0
        %669 = vmatpush1.msra.mxu0 %v387
        %670 = vmatprep.subr.mxu0 0.0
        %671 = vmatpush1.msra.mxu0 %v388
        %672 = vmatprep.subr.mxu0 0.0
        %673 = vmatpush1.msra.mxu0 %v389
        %674 = vmatprep.subr.mxu0 0.0
        %675 = vmatpush1.msra.mxu0 %v390
        %676 = vmatprep.subr.mxu0 0.0
        %677 = vmatpush1.msra.mxu0 %v391
        %678 = vmatprep.subr.mxu0 0.0
        %679 = vmatpush1.msra.mxu0 %v392
        %680 = vmatprep.subr.mxu0 0.0
        %681 = vmatpush1.msra.mxu0 %v393
        %682 = vmatprep.subr.mxu0 0.0
        %683 = vmatpush1.msra.mxu0 %v394
        %684 = vmatprep.subr.mxu0 0.0
        %685 = vmatpush1.msra.mxu0 %v395
        %686 = vmatprep.subr.mxu0 0.0
        %687 = vmatpush1.msra.mxu0 %v396
        %688 = vmatprep.subr.mxu0 0.0
        %689 = vmatpush1.msra.mxu0 %v397
        %690 = vmatprep.mubr.f32.mxu0 %v257
        %691 = vmatmul.mubr.f32.gmra.mrb[0].mxu0 %v243
        %v692 = vpop.f32.mrb[0].mxu0
        %v693 = vadd.f32 %v603, %v692
        %v694 = vpop.f32.mrb[0].mxu0
        %695 = vmatprep.mubr.f32.mxu0 %v259
        %696 = vmatmul.mubr.f32.gmra.mrb[0].mxu0 %v245
        %v697 = vpop.f32.mrb[0].mxu0
        %v698 = vadd.f32 %v608, %v697
        %v699 = vpop.f32.mrb[0].mxu0
        %700 = vmatprep.mubr.f32.mxu0 %v261
        %701 = vmatmul.mubr.f32.gmra.mrb[0].mxu0 %v247
        %v702 = vpop.f32.mrb[0].mxu0
        %v703 = vadd.f32 %v613, %v702
        %v704 = vpop.f32.mrb[0].mxu0
        %705 = vmatprep.mubr.f32.mxu0 %v263
        %706 = vmatmul.mubr.f32.gmra.mrb[0].mxu0 %v249
        %v707 = vpop.f32.mrb[0].mxu0
        %v708 = vadd.f32 %v618, %v707
        %v709 = vpop.f32.mrb[0].mxu0
        %710 = vmatprep.mubr.f32.mxu0 %v262
        %711 = vmatmul.mubr.f32.gmra.mrb[0].mxu0 %v248
        %v712 = vpop.f32.mrb[0].mxu0
        %v713 = vadd.f32 %v623, %v712
        %v714 = vpop.f32.mrb[0].mxu0
        %715 = vdwg.mxu0
        %716 = vmatprep.subr.mxu0 0.0
        %717 = vmatpush1.msra.mxu0 %v398
        %718 = vmatprep.subr.mxu0 0.0
        %719 = vmatpush1.msra.mxu0 %v399
        %720 = vmatprep.subr.mxu0 0.0
        %721 = vmatpush1.msra.mxu0 %v400
        %722 = vmatprep.subr.mxu0 0.0
        %723 = vmatpush1.msra.mxu0 %v401
        %724 = vmatprep.subr.mxu0 0.0
        %725 = vmatpush1.msra.mxu0 %v402
        %726 = vmatprep.subr.mxu0 0.0
        %727 = vmatpush1.msra.mxu0 %v403
        %728 = vmatprep.subr.mxu0 0.0
        %729 = vmatpush1.msra.mxu0 %v404
        %730 = vmatprep.subr.mxu0 0.0
        %731 = vmatpush1.msra.mxu0 %v405
        %732 = vmatprep.subr.mxu0 0.0
        %733 = vmatpush1.msra.mxu0 %v406
        %734 = vmatprep.subr.mxu0 0.0
        %735 = vmatpush1.msra.mxu0 %v407
        %736 = vmatprep.subr.mxu0 0.0
        %737 = vmatpush1.msra.mxu0 %v408
        %738 = vmatprep.subr.mxu0 0.0
        %739 = vmatpush1.msra.mxu0 %v409
        %740 = vmatprep.subr.mxu0 0.0
        %741 = vmatpush1.msra.mxu0 %v410
        %742 = vmatprep.subr.mxu0 0.0
        %743 = vmatpush1.msra.mxu0 %v411
        %744 = vmatprep.subr.mxu0 0.0
        %745 = vmatpush1.msra.mxu0 %v412
        %746 = vmatprep.subr.mxu0 0.0
        %747 = vmatpush1.msra.mxu0 %v413
        %748 = vmatprep.subr.mxu0 0.0
        %749 = vmatpush1.msra.mxu0 %v414
        %750 = vmatprep.subr.mxu0 0.0
        %751 = vmatpush1.msra.mxu0 %v415
        %752 = vmatprep.subr.mxu0 0.0
        %753 = vmatpush1.msra.mxu0 %v416
        %754 = vmatprep.subr.mxu0 0.0
        %755 = vmatpush1.msra.mxu0 %v417
        %756 = vmatprep.subr.mxu0 0.0
        %757 = vmatpush1.msra.mxu0 %v418
        %758 = vmatprep.subr.mxu0 0.0
        %759 = vmatpush1.msra.mxu0 %v419
        %760 = vmatprep.subr.mxu0 0.0
        %761 = vmatpush1.msra.mxu0 %v420
        %762 = vmatprep.subr.mxu0 0.0
        %763 = vmatpush1.msra.mxu0 %v421
        %764 = vmatprep.subr.mxu0 0.0
        %765 = vmatpush1.msra.mxu0 %v422
        %766 = vmatprep.subr.mxu0 0.0
        %767 = vmatpush1.msra.mxu0 %v423
        %768 = vmatprep.subr.mxu0 0.0
        %769 = vmatpush1.msra.mxu0 %v424
        %770 = vmatprep.subr.mxu0 0.0
        %771 = vmatpush1.msra.mxu0 %v425
        %772 = vmatprep.subr.mxu0 0.0
        %773 = vmatpush1.msra.mxu0 %v426
        %774 = vmatprep.subr.mxu0 0.0
        %775 = vmatpush1.msra.mxu0 %v427
        %776 = vmatprep.subr.mxu0 0.0
        %777 = vmatpush1.msra.mxu0 %v428
        %778 = vmatprep.subr.mxu0 0.0
        %779 = vmatpush1.msra.mxu0 %v429
        %780 = vmatprep.mubr.f32.mxu0 %v276
        %781 = vmatmul.mubr.f32.gmra.mrb[0].mxu0 %v196
        %v782 = vpop.f32.mrb[0].mxu0
        %v783 = vadd.f32 %v693, %v782
        %v784 = vpop.f32.mrb[0].mxu0
        %785 = vmatprep.mubr.f32.mxu0 %v278
        %786 = vmatmul.mubr.f32.gmra.mrb[0].mxu0 %v197
        %v787 = vpop.f32.mrb[0].mxu0
        %v788 = vadd.f32 %v698, %v787
        %v789 = vpop.f32.mrb[0].mxu0
        %790 = vmatprep.mubr.f32.mxu0 %v280
        %791 = vmatmul.mubr.f32.gmra.mrb[0].mxu0 %v198
        %v792 = vpop.f32.mrb[0].mxu0
        %v793 = vadd.f32 %v703, %v792
        %v794 = vpop.f32.mrb[0].mxu0
        %795 = vmatprep.mubr.f32.mxu0 %v282
        %796 = vmatmul.mubr.f32.gmra.mrb[0].mxu0 %v199
        %v797 = vpop.f32.mrb[0].mxu0
        %v798 = vadd.f32 %v708, %v797
        %v799 = vpop.f32.mrb[0].mxu0
        %800 = vmatprep.mubr.f32.mxu0 %v281
        %801 = vmatmul.mubr.f32.gmra.mrb[0].mxu0 %v200
        %v802 = vpop.f32.mrb[0].mxu0
        %v803 = vadd.f32 %v713, %v802
        %v804 = vpop.f32.mrb[0].mxu0
        %805 = vdwg.mxu0
        %806 = vmatprep.subr.mxu0 0.0
        %807 = vmatpush1.msra.mxu0 %v430
        %808 = vmatprep.subr.mxu0 0.0
        %809 = vmatpush1.msra.mxu0 %v431
        %810 = vmatprep.subr.mxu0 0.0
        %811 = vmatpush1.msra.mxu0 %v432
        %812 = vmatprep.subr.mxu0 0.0
        %813 = vmatpush1.msra.mxu0 %v433
        %814 = vmatprep.subr.mxu0 0.0
        %815 = vmatpush1.msra.mxu0 %v434
        %816 = vmatprep.subr.mxu0 0.0
        %817 = vmatpush1.msra.mxu0 %v435
        %818 = vmatprep.subr.mxu0 0.0
        %819 = vmatpush1.msra.mxu0 %v436
        %820 = vmatprep.subr.mxu0 0.0
        %821 = vmatpush1.msra.mxu0 %v437
        %822 = vmatprep.subr.mxu0 0.0
        %823 = vmatpush1.msra.mxu0 %v438
        %824 = vmatprep.subr.mxu0 0.0
        %825 = vmatpush1.msra.mxu0 %v439
        %826 = vmatprep.subr.mxu0 0.0
        %827 = vmatpush1.msra.mxu0 %v440
        %828 = vmatprep.subr.mxu0 0.0
        %829 = vmatpush1.msra.mxu0 %v441
        %830 = vmatprep.subr.mxu0 0.0
        %831 = vmatpush1.msra.mxu0 %v442
        %832 = vmatprep.subr.mxu0 0.0
        %833 = vmatpush1.msra.mxu0 %v443
        %834 = vmatprep.subr.mxu0 0.0
        %835 = vmatpush1.msra.mxu0 %v444
        %836 = vmatprep.subr.mxu0 0.0
        %837 = vmatpush1.msra.mxu0 %v445
        %838 = vmatprep.subr.mxu0 0.0
        %839 = vmatpush1.msra.mxu0 0.0
        %840 = vmatprep.subr.mxu0 0.0
        %841 = vmatpush1.msra.mxu0 0.0
        %842 = vmatprep.subr.mxu0 0.0
        %843 = vmatpush1.msra.mxu0 0.0
        %844 = vmatprep.subr.mxu0 0.0
        %845 = vmatpush1.msra.mxu0 0.0
        %846 = vmatprep.subr.mxu0 0.0
        %847 = vmatpush1.msra.mxu0 0.0
        %848 = vmatprep.subr.mxu0 0.0
        %849 = vmatpush1.msra.mxu0 0.0
        %850 = vmatprep.subr.mxu0 0.0
        %851 = vmatpush1.msra.mxu0 0.0
        %852 = vmatprep.subr.mxu0 0.0
        %853 = vmatpush1.msra.mxu0 0.0
        %854 = vmatprep.subr.mxu0 0.0
        %855 = vmatpush1.msra.mxu0 0.0
        %856 = vmatprep.subr.mxu0 0.0
        %857 = vmatpush1.msra.mxu0 0.0
        %858 = vmatprep.subr.mxu0 0.0
        %859 = vmatpush1.msra.mxu0 0.0
        %860 = vmatprep.subr.mxu0 0.0
        %861 = vmatpush1.msra.mxu0 0.0
        %862 = vmatprep.subr.mxu0 0.0
        %863 = vmatpush1.msra.mxu0 0.0
        %864 = vmatprep.subr.mxu0 0.0
        %865 = vmatpush1.msra.mxu0 0.0
        %866 = vmatprep.subr.mxu0 0.0
        %867 = vmatpush1.msra.mxu0 0.0
        %868 = vmatprep.subr.mxu0 0.0
        %869 = vmatpush1.msra.mxu0 0.0
        %870 = vmatprep.mubr.f32.mxu0 0.0
        %871 = vmatmul.mubr.f32.gmra.mrb[0].mxu0 %v290
        %v872 = vpop.f32.mrb[0].mxu0
        %v873 = vadd.f32 %v783, %v872
        %v874 = vpop.f32.mrb[0].mxu0
        %875 = vmatprep.mubr.f32.mxu0 0.0
        %876 = vmatmul.mubr.f32.gmra.mrb[0].mxu0 %v292
        %v877 = vpop.f32.mrb[0].mxu0
        %v878 = vadd.f32 %v788, %v877
        %v879 = vpop.f32.mrb[0].mxu0
        %880 = vmatprep.mubr.f32.mxu0 0.0
        %881 = vmatmul.mubr.f32.gmra.mrb[0].mxu0 %v294
        %v882 = vpop.f32.mrb[0].mxu0
        %v883 = vadd.f32 %v793, %v882
        %v884 = vpop.f32.mrb[0].mxu0
        %885 = vmatprep.mubr.f32.mxu0 0.0
        %886 = vmatmul.mubr.f32.gmra.mrb[0].mxu0 %v296
        %v887 = vpop.f32.mrb[0].mxu0
        %v888 = vadd.f32 %v798, %v887
        %v889 = vpop.f32.mrb[0].mxu0
        %890 = vmatprep.mubr.f32.mxu0 0.0
        %891 = vmatmul.mubr.f32.gmra.mrb[0].mxu0 %v295
        %v892 = vpop.f32.mrb[0].mxu0
        %v893 = vadd.f32 %v803, %v892
        %v894 = vpop.f32.mrb[0].mxu0
        %895 = vdwg.mxu0
        %s896 = sadd.s32 %s177, 3
        %s897 = smul.u32 %s896, 40
        %s898 = scalar_lea.vmem %s165, %s897
        %v899 = vld [vmem:[%s898] sm:$0xff]
        %v900 = vld [vmem:[%s898 + $0x8] sm:$0xff]
        %v901 = vld [vmem:[%s898 + $0x10] sm:$0xff]
        %v902 = vld [vmem:[%s898 + $0x18] sm:$0xff]
        %v903 = vld [vmem:[%s898 + $0x20] sm:$0xf]
        %v909 = vrot.slane %v899, 1
        %v910 = vrot.slane %v900, 1
        %v911 = vsel %vm206, %v909, %v910
        %v912 = vrot.slane %v901, 1
        %v913 = vsel %vm206, %v910, %v912
        %v914 = vrot.slane %v902, 1
        %v915 = vsel %vm206, %v912, %v914
        %v916 = vrot.slane %v903, 1
        %v917 = vsel %vm206, %v914, %v916
        %v923 = vrot.slane %v899, 2
        %v924 = vrot.slane %v900, 2
        %v925 = vsel %vm221, %v923, %v924
        %v926 = vrot.slane %v901, 2
        %v927 = vsel %vm221, %v924, %v926
        %v928 = vrot.slane %v902, 2
        %v929 = vsel %vm221, %v926, %v928
        %v930 = vrot.slane %v903, 2
        %v931 = vsel %vm221, %v928, %v930
        %937 = vmatprep.subr.mxu0 0.0
        %938 = vmatpush1.msra.mxu0 %v302
        %939 = vmatprep.subr.mxu0 0.0
        %940 = vmatpush1.msra.mxu0 %v303
        %941 = vmatprep.subr.mxu0 0.0
        %942 = vmatpush1.msra.mxu0 %v304
        %943 = vmatprep.subr.mxu0 0.0
        %944 = vmatpush1.msra.mxu0 %v305
        %945 = vmatprep.subr.mxu0 0.0
        %946 = vmatpush1.msra.mxu0 %v306
        %947 = vmatprep.subr.mxu0 0.0
        %948 = vmatpush1.msra.mxu0 %v307
        %949 = vmatprep.subr.mxu0 0.0
        %950 = vmatpush1.msra.mxu0 %v308
        %951 = vmatprep.subr.mxu0 0.0
        %952 = vmatpush1.msra.mxu0 %v309
        %953 = vmatprep.subr.mxu0 0.0
        %954 = vmatpush1.msra.mxu0 %v310
        %955 = vmatprep.subr.mxu0 0.0
        %956 = vmatpush1.msra.mxu0 %v311
        %957 = vmatprep.subr.mxu0 0.0
        %958 = vmatpush1.msra.mxu0 %v312
        %959 = vmatprep.subr.mxu0 0.0
        %960 = vmatpush1.msra.mxu0 %v313
        %961 = vmatprep.subr.mxu0 0.0
        %962 = vmatpush1.msra.mxu0 %v314
        %963 = vmatprep.subr.mxu0 0.0
        %964 = vmatpush1.msra.mxu0 %v315
        %965 = vmatprep.subr.mxu0 0.0
        %966 = vmatpush1.msra.mxu0 %v316
        %967 = vmatprep.subr.mxu0 0.0
        %968 = vmatpush1.msra.mxu0 %v317
        %969 = vmatprep.subr.mxu0 0.0
        %970 = vmatpush1.msra.mxu0 %v318
        %971 = vmatprep.subr.mxu0 0.0
        %972 = vmatpush1.msra.mxu0 %v319
        %973 = vmatprep.subr.mxu0 0.0
        %974 = vmatpush1.msra.mxu0 %v320
        %975 = vmatprep.subr.mxu0 0.0
        %976 = vmatpush1.msra.mxu0 %v321
        %977 = vmatprep.subr.mxu0 0.0
        %978 = vmatpush1.msra.mxu0 %v322
        %979 = vmatprep.subr.mxu0 0.0
        %980 = vmatpush1.msra.mxu0 %v323
        %981 = vmatprep.subr.mxu0 0.0
        %982 = vmatpush1.msra.mxu0 %v324
        %983 = vmatprep.subr.mxu0 0.0
        %984 = vmatpush1.msra.mxu0 %v325
        %985 = vmatprep.subr.mxu0 0.0
        %986 = vmatpush1.msra.mxu0 %v326
        %987 = vmatprep.subr.mxu0 0.0
        %988 = vmatpush1.msra.mxu0 %v327
        %989 = vmatprep.subr.mxu0 0.0
        %990 = vmatpush1.msra.mxu0 %v328
        %991 = vmatprep.subr.mxu0 0.0
        %992 = vmatpush1.msra.mxu0 %v329
        %993 = vmatprep.subr.mxu0 0.0
        %994 = vmatpush1.msra.mxu0 %v330
        %995 = vmatprep.subr.mxu0 0.0
        %996 = vmatpush1.msra.mxu0 %v331
        %997 = vmatprep.subr.mxu0 0.0
        %998 = vmatpush1.msra.mxu0 %v332
        %999 = vmatprep.subr.mxu0 0.0
        %1000 = vmatpush1.msra.mxu0 %v333
        %1001 = vmatprep.mubr.f32.mxu0 %v243
        %1002 = vmatmul.mubr.f32.gmra.mrb[0].mxu0 %v188
        %v1003 = vpop.f32.mrb[0].mxu0
        %v1004 = vadd.f32 0.0, %v1003
        %v1005 = vpop.f32.mrb[0].mxu0
        %1006 = vmatprep.mubr.f32.mxu0 %v245
        %1007 = vmatmul.mubr.f32.gmra.mrb[0].mxu0 %v189
        %v1008 = vpop.f32.mrb[0].mxu0
        %v1009 = vadd.f32 0.0, %v1008
        %v1010 = vpop.f32.mrb[0].mxu0
        %1011 = vmatprep.mubr.f32.mxu0 %v247
        %1012 = vmatmul.mubr.f32.gmra.mrb[0].mxu0 %v190
        %v1013 = vpop.f32.mrb[0].mxu0
        %v1014 = vadd.f32 0.0, %v1013
        %v1015 = vpop.f32.mrb[0].mxu0
        %1016 = vmatprep.mubr.f32.mxu0 %v249
        %1017 = vmatmul.mubr.f32.gmra.mrb[0].mxu0 %v191
        %v1018 = vpop.f32.mrb[0].mxu0
        %v1019 = vadd.f32 0.0, %v1018
        %v1020 = vpop.f32.mrb[0].mxu0
        %1021 = vmatprep.mubr.f32.mxu0 %v248
        %1022 = vmatmul.mubr.f32.gmra.mrb[0].mxu0 %v192
        %v1023 = vpop.f32.mrb[0].mxu0
        %v1024 = vadd.f32 0.0, %v1023
        %v1025 = vpop.f32.mrb[0].mxu0
        %1026 = vdwg.mxu0
        %1027 = vmatprep.subr.mxu0 0.0
        %1028 = vmatpush1.msra.mxu0 %v334
        %1029 = vmatprep.subr.mxu0 0.0
        %1030 = vmatpush1.msra.mxu0 %v335
        %1031 = vmatprep.subr.mxu0 0.0
        %1032 = vmatpush1.msra.mxu0 %v336
        %1033 = vmatprep.subr.mxu0 0.0
        %1034 = vmatpush1.msra.mxu0 %v337
        %1035 = vmatprep.subr.mxu0 0.0
        %1036 = vmatpush1.msra.mxu0 %v338
        %1037 = vmatprep.subr.mxu0 0.0
        %1038 = vmatpush1.msra.mxu0 %v339
        %1039 = vmatprep.subr.mxu0 0.0
        %1040 = vmatpush1.msra.mxu0 %v340
        %1041 = vmatprep.subr.mxu0 0.0
        %1042 = vmatpush1.msra.mxu0 %v341
        %1043 = vmatprep.subr.mxu0 0.0
        %1044 = vmatpush1.msra.mxu0 %v342
        %1045 = vmatprep.subr.mxu0 0.0
        %1046 = vmatpush1.msra.mxu0 %v343
        %1047 = vmatprep.subr.mxu0 0.0
        %1048 = vmatpush1.msra.mxu0 %v344
        %1049 = vmatprep.subr.mxu0 0.0
        %1050 = vmatpush1.msra.mxu0 %v345
        %1051 = vmatprep.subr.mxu0 0.0
        %1052 = vmatpush1.msra.mxu0 %v346
        %1053 = vmatprep.subr.mxu0 0.0
        %1054 = vmatpush1.msra.mxu0 %v347
        %1055 = vmatprep.subr.mxu0 0.0
        %1056 = vmatpush1.msra.mxu0 %v348
        %1057 = vmatprep.subr.mxu0 0.0
        %1058 = vmatpush1.msra.mxu0 %v349
        %1059 = vmatprep.subr.mxu0 0.0
        %1060 = vmatpush1.msra.mxu0 %v350
        %1061 = vmatprep.subr.mxu0 0.0
        %1062 = vmatpush1.msra.mxu0 %v351
        %1063 = vmatprep.subr.mxu0 0.0
        %1064 = vmatpush1.msra.mxu0 %v352
        %1065 = vmatprep.subr.mxu0 0.0
        %1066 = vmatpush1.msra.mxu0 %v353
        %1067 = vmatprep.subr.mxu0 0.0
        %1068 = vmatpush1.msra.mxu0 %v354
        %1069 = vmatprep.subr.mxu0 0.0
        %1070 = vmatpush1.msra.mxu0 %v355
        %1071 = vmatprep.subr.mxu0 0.0
        %1072 = vmatpush1.msra.mxu0 %v356
        %1073 = vmatprep.subr.mxu0 0.0
        %1074 = vmatpush1.msra.mxu0 %v357
        %1075 = vmatprep.subr.mxu0 0.0
        %1076 = vmatpush1.msra.mxu0 %v358
        %1077 = vmatprep.subr.mxu0 0.0
        %1078 = vmatpush1.msra.mxu0 %v359
        %1079 = vmatprep.subr.mxu0 0.0
        %1080 = vmatpush1.msra.mxu0 %v360
        %1081 = vmatprep.subr.mxu0 0.0
        %1082 = vmatpush1.msra.mxu0 %v361
        %1083 = vmatprep.subr.mxu0 0.0
        %1084 = vmatpush1.msra.mxu0 %v362
        %1085 = vmatprep.subr.mxu0 0.0
        %1086 = vmatpush1.msra.mxu0 %v363
        %1087 = vmatprep.subr.mxu0 0.0
        %1088 = vmatpush1.msra.mxu0 %v364
        %1089 = vmatprep.subr.mxu0 0.0
        %1090 = vmatpush1.msra.mxu0 %v365
        %1091 = vmatprep.mubr.f32.mxu0 %v196
        %1092 = vmatmul.mubr.f32.gmra.mrb[0].mxu0 %v257
        %v1093 = vpop.f32.mrb[0].mxu0
        %v1094 = vadd.f32 %v1004, %v1093
        %v1095 = vpop.f32.mrb[0].mxu0
        %1096 = vmatprep.mubr.f32.mxu0 %v197
        %1097 = vmatmul.mubr.f32.gmra.mrb[0].mxu0 %v259
        %v1098 = vpop.f32.mrb[0].mxu0
        %v1099 = vadd.f32 %v1009, %v1098
        %v1100 = vpop.f32.mrb[0].mxu0
        %1101 = vmatprep.mubr.f32.mxu0 %v198
        %1102 = vmatmul.mubr.f32.gmra.mrb[0].mxu0 %v261
        %v1103 = vpop.f32.mrb[0].mxu0
        %v1104 = vadd.f32 %v1014, %v1103
        %v1105 = vpop.f32.mrb[0].mxu0
        %1106 = vmatprep.mubr.f32.mxu0 %v199
        %1107 = vmatmul.mubr.f32.gmra.mrb[0].mxu0 %v263
        %v1108 = vpop.f32.mrb[0].mxu0
        %v1109 = vadd.f32 %v1019, %v1108
        %v1110 = vpop.f32.mrb[0].mxu0
        %1111 = vmatprep.mubr.f32.mxu0 %v200
        %1112 = vmatmul.mubr.f32.gmra.mrb[0].mxu0 %v262
        %v1113 = vpop.f32.mrb[0].mxu0
        %v1114 = vadd.f32 %v1024, %v1113
        %v1115 = vpop.f32.mrb[0].mxu0
        %1116 = vdwg.mxu0
        %1117 = vmatprep.subr.mxu0 0.0
        %1118 = vmatpush1.msra.mxu0 %v366
        %1119 = vmatprep.subr.mxu0 0.0
        %1120 = vmatpush1.msra.mxu0 %v367
        %1121 = vmatprep.subr.mxu0 0.0
        %1122 = vmatpush1.msra.mxu0 %v368
        %1123 = vmatprep.subr.mxu0 0.0
        %1124 = vmatpush1.msra.mxu0 %v369
        %1125 = vmatprep.subr.mxu0 0.0
        %1126 = vmatpush1.msra.mxu0 %v370
        %1127 = vmatprep.subr.mxu0 0.0
        %1128 = vmatpush1.msra.mxu0 %v371
        %1129 = vmatprep.subr.mxu0 0.0
        %1130 = vmatpush1.msra.mxu0 %v372
        %1131 = vmatprep.subr.mxu0 0.0
        %1132 = vmatpush1.msra.mxu0 %v373
        %1133 = vmatprep.subr.mxu0 0.0
        %1134 = vmatpush1.msra.mxu0 %v374
        %1135 = vmatprep.subr.mxu0 0.0
        %1136 = vmatpush1.msra.mxu0 %v375
        %1137 = vmatprep.subr.mxu0 0.0
        %1138 = vmatpush1.msra.mxu0 %v376
        %1139 = vmatprep.subr.mxu0 0.0
        %1140 = vmatpush1.msra.mxu0 %v377
        %1141 = vmatprep.subr.mxu0 0.0
        %1142 = vmatpush1.msra.mxu0 %v378
        %1143 = vmatprep.subr.mxu0 0.0
        %1144 = vmatpush1.msra.mxu0 %v379
        %1145 = vmatprep.subr.mxu0 0.0
        %1146 = vmatpush1.msra.mxu0 %v380
        %1147 = vmatprep.subr.mxu0 0.0
        %1148 = vmatpush1.msra.mxu0 %v381
        %1149 = vmatprep.subr.mxu0 0.0
        %1150 = vmatpush1.msra.mxu0 %v382
        %1151 = vmatprep.subr.mxu0 0.0
        %1152 = vmatpush1.msra.mxu0 %v383
        %1153 = vmatprep.subr.mxu0 0.0
        %1154 = vmatpush1.msra.mxu0 %v384
        %1155 = vmatprep.subr.mxu0 0.0
        %1156 = vmatpush1.msra.mxu0 %v385
        %1157 = vmatprep.subr.mxu0 0.0
        %1158 = vmatpush1.msra.mxu0 %v386
        %1159 = vmatprep.subr.mxu0 0.0
        %1160 = vmatpush1.msra.mxu0 %v387
        %1161 = vmatprep.subr.mxu0 0.0
        %1162 = vmatpush1.msra.mxu0 %v388
        %1163 = vmatprep.subr.mxu0 0.0
        %1164 = vmatpush1.msra.mxu0 %v389
        %1165 = vmatprep.subr.mxu0 0.0
        %1166 = vmatpush1.msra.mxu0 %v390
        %1167 = vmatprep.subr.mxu0 0.0
        %1168 = vmatpush1.msra.mxu0 %v391
        %1169 = vmatprep.subr.mxu0 0.0
        %1170 = vmatpush1.msra.mxu0 %v392
        %1171 = vmatprep.subr.mxu0 0.0
        %1172 = vmatpush1.msra.mxu0 %v393
        %1173 = vmatprep.subr.mxu0 0.0
        %1174 = vmatpush1.msra.mxu0 %v394
        %1175 = vmatprep.subr.mxu0 0.0
        %1176 = vmatpush1.msra.mxu0 %v395
        %1177 = vmatprep.subr.mxu0 0.0
        %1178 = vmatpush1.msra.mxu0 %v396
        %1179 = vmatprep.subr.mxu0 0.0
        %1180 = vmatpush1.msra.mxu0 %v397
        %1181 = vmatprep.mubr.f32.mxu0 %v290
        %1182 = vmatmul.mubr.f32.gmra.mrb[0].mxu0 %v276
        %v1183 = vpop.f32.mrb[0].mxu0
        %v1184 = vadd.f32 %v1094, %v1183
        %v1185 = vpop.f32.mrb[0].mxu0
        %1186 = vmatprep.mubr.f32.mxu0 %v292
        %1187 = vmatmul.mubr.f32.gmra.mrb[0].mxu0 %v278
        %v1188 = vpop.f32.mrb[0].mxu0
        %v1189 = vadd.f32 %v1099, %v1188
        %v1190 = vpop.f32.mrb[0].mxu0
        %1191 = vmatprep.mubr.f32.mxu0 %v294
        %1192 = vmatmul.mubr.f32.gmra.mrb[0].mxu0 %v280
        %v1193 = vpop.f32.mrb[0].mxu0
        %v1194 = vadd.f32 %v1104, %v1193
        %v1195 = vpop.f32.mrb[0].mxu0
        %1196 = vmatprep.mubr.f32.mxu0 %v296
        %1197 = vmatmul.mubr.f32.gmra.mrb[0].mxu0 %v282
        %v1198 = vpop.f32.mrb[0].mxu0
        %v1199 = vadd.f32 %v1109, %v1198
        %v1200 = vpop.f32.mrb[0].mxu0
        %1201 = vmatprep.mubr.f32.mxu0 %v295
        %1202 = vmatmul.mubr.f32.gmra.mrb[0].mxu0 %v281
        %v1203 = vpop.f32.mrb[0].mxu0
        %v1204 = vadd.f32 %v1114, %v1203
        %v1205 = vpop.f32.mrb[0].mxu0
        %1206 = vdwg.mxu0
        %1207 = vmatprep.subr.mxu0 0.0
        %1208 = vmatpush1.msra.mxu0 %v398
        %1209 = vmatprep.subr.mxu0 0.0
        %1210 = vmatpush1.msra.mxu0 %v399
        %1211 = vmatprep.subr.mxu0 0.0
        %1212 = vmatpush1.msra.mxu0 %v400
        %1213 = vmatprep.subr.mxu0 0.0
        %1214 = vmatpush1.msra.mxu0 %v401
        %1215 = vmatprep.subr.mxu0 0.0
        %1216 = vmatpush1.msra.mxu0 %v402
        %1217 = vmatprep.subr.mxu0 0.0
        %1218 = vmatpush1.msra.mxu0 %v403
        %1219 = vmatprep.subr.mxu0 0.0
        %1220 = vmatpush1.msra.mxu0 %v404
        %1221 = vmatprep.subr.mxu0 0.0
        %1222 = vmatpush1.msra.mxu0 %v405
        %1223 = vmatprep.subr.mxu0 0.0
        %1224 = vmatpush1.msra.mxu0 %v406
        %1225 = vmatprep.subr.mxu0 0.0
        %1226 = vmatpush1.msra.mxu0 %v407
        %1227 = vmatprep.subr.mxu0 0.0
        %1228 = vmatpush1.msra.mxu0 %v408
        %1229 = vmatprep.subr.mxu0 0.0
        %1230 = vmatpush1.msra.mxu0 %v409
        %1231 = vmatprep.subr.mxu0 0.0
        %1232 = vmatpush1.msra.mxu0 %v410
        %1233 = vmatprep.subr.mxu0 0.0
        %1234 = vmatpush1.msra.mxu0 %v411
        %1235 = vmatprep.subr.mxu0 0.0
        %1236 = vmatpush1.msra.mxu0 %v412
        %1237 = vmatprep.subr.mxu0 0.0
        %1238 = vmatpush1.msra.mxu0 %v413
        %1239 = vmatprep.subr.mxu0 0.0
        %1240 = vmatpush1.msra.mxu0 %v414
        %1241 = vmatprep.subr.mxu0 0.0
        %1242 = vmatpush1.msra.mxu0 %v415
        %1243 = vmatprep.subr.mxu0 0.0
        %1244 = vmatpush1.msra.mxu0 %v416
        %1245 = vmatprep.subr.mxu0 0.0
        %1246 = vmatpush1.msra.mxu0 %v417
        %1247 = vmatprep.subr.mxu0 0.0
        %1248 = vmatpush1.msra.mxu0 %v418
        %1249 = vmatprep.subr.mxu0 0.0
        %1250 = vmatpush1.msra.mxu0 %v419
        %1251 = vmatprep.subr.mxu0 0.0
        %1252 = vmatpush1.msra.mxu0 %v420
        %1253 = vmatprep.subr.mxu0 0.0
        %1254 = vmatpush1.msra.mxu0 %v421
        %1255 = vmatprep.subr.mxu0 0.0
        %1256 = vmatpush1.msra.mxu0 %v422
        %1257 = vmatprep.subr.mxu0 0.0
        %1258 = vmatpush1.msra.mxu0 %v423
        %1259 = vmatprep.subr.mxu0 0.0
        %1260 = vmatpush1.msra.mxu0 %v424
        %1261 = vmatprep.subr.mxu0 0.0
        %1262 = vmatpush1.msra.mxu0 %v425
        %1263 = vmatprep.subr.mxu0 0.0
        %1264 = vmatpush1.msra.mxu0 %v426
        %1265 = vmatprep.subr.mxu0 0.0
        %1266 = vmatpush1.msra.mxu0 %v427
        %1267 = vmatprep.subr.mxu0 0.0
        %1268 = vmatpush1.msra.mxu0 %v428
        %1269 = vmatprep.subr.mxu0 0.0
        %1270 = vmatpush1.msra.mxu0 %v429
        %1271 = vmatprep.mubr.f32.mxu0 %v911
        %1272 = vmatmul.mubr.f32.gmra.mrb[0].mxu0 %v899
        %v1273 = vpop.f32.mrb[0].mxu0
        %v1274 = vadd.f32 %v1184, %v1273
        %v1275 = vpop.f32.mrb[0].mxu0
        %1276 = vmatprep.mubr.f32.mxu0 %v913
        %1277 = vmatmul.mubr.f32.gmra.mrb[0].mxu0 %v900
        %v1278 = vpop.f32.mrb[0].mxu0
        %v1279 = vadd.f32 %v1189, %v1278
        %v1280 = vpop.f32.mrb[0].mxu0
        %1281 = vmatprep.mubr.f32.mxu0 %v915
        %1282 = vmatmul.mubr.f32.gmra.mrb[0].mxu0 %v901
        %v1283 = vpop.f32.mrb[0].mxu0
        %v1284 = vadd.f32 %v1194, %v1283
        %v1285 = vpop.f32.mrb[0].mxu0
        %1286 = vmatprep.mubr.f32.mxu0 %v917
        %1287 = vmatmul.mubr.f32.gmra.mrb[0].mxu0 %v902
        %v1288 = vpop.f32.mrb[0].mxu0
        %v1289 = vadd.f32 %v1199, %v1288
        %v1290 = vpop.f32.mrb[0].mxu0
        %1291 = vmatprep.mubr.f32.mxu0 %v916
        %1292 = vmatmul.mubr.f32.gmra.mrb[0].mxu0 %v903
        %v1293 = vpop.f32.mrb[0].mxu0
        %v1294 = vadd.f32 %v1204, %v1293
        %v1295 = vpop.f32.mrb[0].mxu0
        %1296 = vdwg.mxu0
        %1297 = vmatprep.subr.mxu0 0.0
        %1298 = vmatpush1.msra.mxu0 %v430
        %1299 = vmatprep.subr.mxu0 0.0
        %1300 = vmatpush1.msra.mxu0 %v431
        %1301 = vmatprep.subr.mxu0 0.0
        %1302 = vmatpush1.msra.mxu0 %v432
        %1303 = vmatprep.subr.mxu0 0.0
        %1304 = vmatpush1.msra.mxu0 %v433
        %1305 = vmatprep.subr.mxu0 0.0
        %1306 = vmatpush1.msra.mxu0 %v434
        %1307 = vmatprep.subr.mxu0 0.0
        %1308 = vmatpush1.msra.mxu0 %v435
        %1309 = vmatprep.subr.mxu0 0.0
        %1310 = vmatpush1.msra.mxu0 %v436
        %1311 = vmatprep.subr.mxu0 0.0
        %1312 = vmatpush1.msra.mxu0 %v437
        %1313 = vmatprep.subr.mxu0 0.0
        %1314 = vmatpush1.msra.mxu0 %v438
        %1315 = vmatprep.subr.mxu0 0.0
        %1316 = vmatpush1.msra.mxu0 %v439
        %1317 = vmatprep.subr.mxu0 0.0
        %1318 = vmatpush1.msra.mxu0 %v440
        %1319 = vmatprep.subr.mxu0 0.0
        %1320 = vmatpush1.msra.mxu0 %v441
        %1321 = vmatprep.subr.mxu0 0.0
        %1322 = vmatpush1.msra.mxu0 %v442
        %1323 = vmatprep.subr.mxu0 0.0
        %1324 = vmatpush1.msra.mxu0 %v443
        %1325 = vmatprep.subr.mxu0 0.0
        %1326 = vmatpush1.msra.mxu0 %v444
        %1327 = vmatprep.subr.mxu0 0.0
        %1328 = vmatpush1.msra.mxu0 %v445
        %1329 = vmatprep.subr.mxu0 0.0
        %1330 = vmatpush1.msra.mxu0 0.0
        %1331 = vmatprep.subr.mxu0 0.0
        %1332 = vmatpush1.msra.mxu0 0.0
        %1333 = vmatprep.subr.mxu0 0.0
        %1334 = vmatpush1.msra.mxu0 0.0
        %1335 = vmatprep.subr.mxu0 0.0
        %1336 = vmatpush1.msra.mxu0 0.0
        %1337 = vmatprep.subr.mxu0 0.0
        %1338 = vmatpush1.msra.mxu0 0.0
        %1339 = vmatprep.subr.mxu0 0.0
        %1340 = vmatpush1.msra.mxu0 0.0
        %1341 = vmatprep.subr.mxu0 0.0
        %1342 = vmatpush1.msra.mxu0 0.0
        %1343 = vmatprep.subr.mxu0 0.0
        %1344 = vmatpush1.msra.mxu0 0.0
        %1345 = vmatprep.subr.mxu0 0.0
        %1346 = vmatpush1.msra.mxu0 0.0
        %1347 = vmatprep.subr.mxu0 0.0
        %1348 = vmatpush1.msra.mxu0 0.0
        %1349 = vmatprep.subr.mxu0 0.0
        %1350 = vmatpush1.msra.mxu0 0.0
        %1351 = vmatprep.subr.mxu0 0.0
        %1352 = vmatpush1.msra.mxu0 0.0
        %1353 = vmatprep.subr.mxu0 0.0
        %1354 = vmatpush1.msra.mxu0 0.0
        %1355 = vmatprep.subr.mxu0 0.0
        %1356 = vmatpush1.msra.mxu0 0.0
        %1357 = vmatprep.subr.mxu0 0.0
        %1358 = vmatpush1.msra.mxu0 0.0
        %1359 = vmatprep.subr.mxu0 0.0
        %1360 = vmatpush1.msra.mxu0 0.0
        %1361 = vmatprep.mubr.f32.mxu0 0.0
        %1362 = vmatmul.mubr.f32.gmra.mrb[0].mxu0 %v925
        %v1363 = vpop.f32.mrb[0].mxu0
        %v1364 = vadd.f32 %v1274, %v1363
        %v1365 = vpop.f32.mrb[0].mxu0
        %1366 = vmatprep.mubr.f32.mxu0 0.0
        %1367 = vmatmul.mubr.f32.gmra.mrb[0].mxu0 %v927
        %v1368 = vpop.f32.mrb[0].mxu0
        %v1369 = vadd.f32 %v1279, %v1368
        %v1370 = vpop.f32.mrb[0].mxu0
        %1371 = vmatprep.mubr.f32.mxu0 0.0
        %1372 = vmatmul.mubr.f32.gmra.mrb[0].mxu0 %v929
        %v1373 = vpop.f32.mrb[0].mxu0
        %v1374 = vadd.f32 %v1284, %v1373
        %v1375 = vpop.f32.mrb[0].mxu0
        %1376 = vmatprep.mubr.f32.mxu0 0.0
        %1377 = vmatmul.mubr.f32.gmra.mrb[0].mxu0 %v931
        %v1378 = vpop.f32.mrb[0].mxu0
        %v1379 = vadd.f32 %v1289, %v1378
        %v1380 = vpop.f32.mrb[0].mxu0
        %1381 = vmatprep.mubr.f32.mxu0 0.0
        %1382 = vmatmul.mubr.f32.gmra.mrb[0].mxu0 %v930
        %v1383 = vpop.f32.mrb[0].mxu0
        %v1384 = vadd.f32 %v1294, %v1383
        %v1385 = vpop.f32.mrb[0].mxu0
        %1386 = vdwg.mxu0
        %v1387 = vmax.f32 %v873, %v1364
        %v1388 = vmax.f32 %v878, %v1369
        %v1389 = vmax.f32 %v883, %v1374
        %v1390 = vmax.f32 %v888, %v1379
        %v1391 = vmax.f32 %v893, %v1384
        %s1392 = sadd.s32 %s177, 4
        %s1393 = smul.u32 %s1392, 40
        %s1394 = scalar_lea.vmem %s165, %s1393
        %v1395 = vld [vmem:[%s1394] sm:$0xff]
        %v1396 = vld [vmem:[%s1394 + $0x8] sm:$0xff]
        %v1397 = vld [vmem:[%s1394 + $0x10] sm:$0xff]
        %v1398 = vld [vmem:[%s1394 + $0x18] sm:$0xff]
        %v1399 = vld [vmem:[%s1394 + $0x20] sm:$0xf]
        %v1405 = vrot.slane %v1395, 1
        %v1406 = vrot.slane %v1396, 1
        %v1407 = vsel %vm206, %v1405, %v1406
        %v1408 = vrot.slane %v1397, 1
        %v1409 = vsel %vm206, %v1406, %v1408
        %v1410 = vrot.slane %v1398, 1
        %v1411 = vsel %vm206, %v1408, %v1410
        %v1412 = vrot.slane %v1399, 1
        %v1413 = vsel %vm206, %v1410, %v1412
        %v1419 = vrot.slane %v1395, 2
        %v1420 = vrot.slane %v1396, 2
        %v1421 = vsel %vm221, %v1419, %v1420
        %v1422 = vrot.slane %v1397, 2
        %v1423 = vsel %vm221, %v1420, %v1422
        %v1424 = vrot.slane %v1398, 2
        %v1425 = vsel %vm221, %v1422, %v1424
        %v1426 = vrot.slane %v1399, 2
        %v1427 = vsel %vm221, %v1424, %v1426
        %1433 = vmatprep.subr.mxu0 0.0
        %1434 = vmatpush1.msra.mxu0 %v302
        %1435 = vmatprep.subr.mxu0 0.0
        %1436 = vmatpush1.msra.mxu0 %v303
        %1437 = vmatprep.subr.mxu0 0.0
        %1438 = vmatpush1.msra.mxu0 %v304
        %1439 = vmatprep.subr.mxu0 0.0
        %1440 = vmatpush1.msra.mxu0 %v305
        %1441 = vmatprep.subr.mxu0 0.0
        %1442 = vmatpush1.msra.mxu0 %v306
        %1443 = vmatprep.subr.mxu0 0.0
        %1444 = vmatpush1.msra.mxu0 %v307
        %1445 = vmatprep.subr.mxu0 0.0
        %1446 = vmatpush1.msra.mxu0 %v308
        %1447 = vmatprep.subr.mxu0 0.0
        %1448 = vmatpush1.msra.mxu0 %v309
        %1449 = vmatprep.subr.mxu0 0.0
        %1450 = vmatpush1.msra.mxu0 %v310
        %1451 = vmatprep.subr.mxu0 0.0
        %1452 = vmatpush1.msra.mxu0 %v311
        %1453 = vmatprep.subr.mxu0 0.0
        %1454 = vmatpush1.msra.mxu0 %v312
        %1455 = vmatprep.subr.mxu0 0.0
        %1456 = vmatpush1.msra.mxu0 %v313
        %1457 = vmatprep.subr.mxu0 0.0
        %1458 = vmatpush1.msra.mxu0 %v314
        %1459 = vmatprep.subr.mxu0 0.0
        %1460 = vmatpush1.msra.mxu0 %v315
        %1461 = vmatprep.subr.mxu0 0.0
        %1462 = vmatpush1.msra.mxu0 %v316
        %1463 = vmatprep.subr.mxu0 0.0
        %1464 = vmatpush1.msra.mxu0 %v317
        %1465 = vmatprep.subr.mxu0 0.0
        %1466 = vmatpush1.msra.mxu0 %v318
        %1467 = vmatprep.subr.mxu0 0.0
        %1468 = vmatpush1.msra.mxu0 %v319
        %1469 = vmatprep.subr.mxu0 0.0
        %1470 = vmatpush1.msra.mxu0 %v320
        %1471 = vmatprep.subr.mxu0 0.0
        %1472 = vmatpush1.msra.mxu0 %v321
        %1473 = vmatprep.subr.mxu0 0.0
        %1474 = vmatpush1.msra.mxu0 %v322
        %1475 = vmatprep.subr.mxu0 0.0
        %1476 = vmatpush1.msra.mxu0 %v323
        %1477 = vmatprep.subr.mxu0 0.0
        %1478 = vmatpush1.msra.mxu0 %v324
        %1479 = vmatprep.subr.mxu0 0.0
        %1480 = vmatpush1.msra.mxu0 %v325
        %1481 = vmatprep.subr.mxu0 0.0
        %1482 = vmatpush1.msra.mxu0 %v326
        %1483 = vmatprep.subr.mxu0 0.0
        %1484 = vmatpush1.msra.mxu0 %v327
        %1485 = vmatprep.subr.mxu0 0.0
        %1486 = vmatpush1.msra.mxu0 %v328
        %1487 = vmatprep.subr.mxu0 0.0
        %1488 = vmatpush1.msra.mxu0 %v329
        %1489 = vmatprep.subr.mxu0 0.0
        %1490 = vmatpush1.msra.mxu0 %v330
        %1491 = vmatprep.subr.mxu0 0.0
        %1492 = vmatpush1.msra.mxu0 %v331
        %1493 = vmatprep.subr.mxu0 0.0
        %1494 = vmatpush1.msra.mxu0 %v332
        %1495 = vmatprep.subr.mxu0 0.0
        %1496 = vmatpush1.msra.mxu0 %v333
        %1497 = vmatprep.mubr.f32.mxu0 %v276
        %1498 = vmatmul.mubr.f32.gmra.mrb[0].mxu0 %v196
        %v1499 = vpop.f32.mrb[0].mxu0
        %v1500 = vadd.f32 0.0, %v1499
        %v1501 = vpop.f32.mrb[0].mxu0
        %1502 = vmatprep.mubr.f32.mxu0 %v278
        %1503 = vmatmul.mubr.f32.gmra.mrb[0].mxu0 %v197
        %v1504 = vpop.f32.mrb[0].mxu0
        %v1505 = vadd.f32 0.0, %v1504
        %v1506 = vpop.f32.mrb[0].mxu0
        %1507 = vmatprep.mubr.f32.mxu0 %v280
        %1508 = vmatmul.mubr.f32.gmra.mrb[0].mxu0 %v198
        %v1509 = vpop.f32.mrb[0].mxu0
        %v1510 = vadd.f32 0.0, %v1509
        %v1511 = vpop.f32.mrb[0].mxu0
        %1512 = vmatprep.mubr.f32.mxu0 %v282
        %1513 = vmatmul.mubr.f32.gmra.mrb[0].mxu0 %v199
        %v1514 = vpop.f32.mrb[0].mxu0
        %v1515 = vadd.f32 0.0, %v1514
        %v1516 = vpop.f32.mrb[0].mxu0
        %1517 = vmatprep.mubr.f32.mxu0 %v281
        %1518 = vmatmul.mubr.f32.gmra.mrb[0].mxu0 %v200
        %v1519 = vpop.f32.mrb[0].mxu0
        %v1520 = vadd.f32 0.0, %v1519
        %v1521 = vpop.f32.mrb[0].mxu0
        %1522 = vdwg.mxu0
        %1523 = vmatprep.subr.mxu0 0.0
        %1524 = vmatpush1.msra.mxu0 %v334
        %1525 = vmatprep.subr.mxu0 0.0
        %1526 = vmatpush1.msra.mxu0 %v335
        %1527 = vmatprep.subr.mxu0 0.0
        %1528 = vmatpush1.msra.mxu0 %v336
        %1529 = vmatprep.subr.mxu0 0.0
        %1530 = vmatpush1.msra.mxu0 %v337
        %1531 = vmatprep.subr.mxu0 0.0
        %1532 = vmatpush1.msra.mxu0 %v338
        %1533 = vmatprep.subr.mxu0 0.0
        %1534 = vmatpush1.msra.mxu0 %v339
        %1535 = vmatprep.subr.mxu0 0.0
        %1536 = vmatpush1.msra.mxu0 %v340
        %1537 = vmatprep.subr.mxu0 0.0
        %1538 = vmatpush1.msra.mxu0 %v341
        %1539 = vmatprep.subr.mxu0 0.0
        %1540 = vmatpush1.msra.mxu0 %v342
        %1541 = vmatprep.subr.mxu0 0.0
        %1542 = vmatpush1.msra.mxu0 %v343
        %1543 = vmatprep.subr.mxu0 0.0
        %1544 = vmatpush1.msra.mxu0 %v344
        %1545 = vmatprep.subr.mxu0 0.0
        %1546 = vmatpush1.msra.mxu0 %v345
        %1547 = vmatprep.subr.mxu0 0.0
        %1548 = vmatpush1.msra.mxu0 %v346
        %1549 = vmatprep.subr.mxu0 0.0
        %1550 = vmatpush1.msra.mxu0 %v347
        %1551 = vmatprep.subr.mxu0 0.0
        %1552 = vmatpush1.msra.mxu0 %v348
        %1553 = vmatprep.subr.mxu0 0.0
        %1554 = vmatpush1.msra.mxu0 %v349
        %1555 = vmatprep.subr.mxu0 0.0
        %1556 = vmatpush1.msra.mxu0 %v350
        %1557 = vmatprep.subr.mxu0 0.0
        %1558 = vmatpush1.msra.mxu0 %v351
        %1559 = vmatprep.subr.mxu0 0.0
        %1560 = vmatpush1.msra.mxu0 %v352
        %1561 = vmatprep.subr.mxu0 0.0
        %1562 = vmatpush1.msra.mxu0 %v353
        %1563 = vmatprep.subr.mxu0 0.0
        %1564 = vmatpush1.msra.mxu0 %v354
        %1565 = vmatprep.subr.mxu0 0.0
        %1566 = vmatpush1.msra.mxu0 %v355
        %1567 = vmatprep.subr.mxu0 0.0
        %1568 = vmatpush1.msra.mxu0 %v356
        %1569 = vmatprep.subr.mxu0 0.0
        %1570 = vmatpush1.msra.mxu0 %v357
        %1571 = vmatprep.subr.mxu0 0.0
        %1572 = vmatpush1.msra.mxu0 %v358
        %1573 = vmatprep.subr.mxu0 0.0
        %1574 = vmatpush1.msra.mxu0 %v359
        %1575 = vmatprep.subr.mxu0 0.0
        %1576 = vmatpush1.msra.mxu0 %v360
        %1577 = vmatprep.subr.mxu0 0.0
        %1578 = vmatpush1.msra.mxu0 %v361
        %1579 = vmatprep.subr.mxu0 0.0
        %1580 = vmatpush1.msra.mxu0 %v362
        %1581 = vmatprep.subr.mxu0 0.0
        %1582 = vmatpush1.msra.mxu0 %v363
        %1583 = vmatprep.subr.mxu0 0.0
        %1584 = vmatpush1.msra.mxu0 %v364
        %1585 = vmatprep.subr.mxu0 0.0
        %1586 = vmatpush1.msra.mxu0 %v365
        %1587 = vmatprep.mubr.f32.mxu0 %v899
        %1588 = vmatmul.mubr.f32.gmra.mrb[0].mxu0 %v290
        %v1589 = vpop.f32.mrb[0].mxu0
        %v1590 = vadd.f32 %v1500, %v1589
        %v1591 = vpop.f32.mrb[0].mxu0
        %1592 = vmatprep.mubr.f32.mxu0 %v900
        %1593 = vmatmul.mubr.f32.gmra.mrb[0].mxu0 %v292
        %v1594 = vpop.f32.mrb[0].mxu0
        %v1595 = vadd.f32 %v1505, %v1594
        %v1596 = vpop.f32.mrb[0].mxu0
        %1597 = vmatprep.mubr.f32.mxu0 %v901
        %1598 = vmatmul.mubr.f32.gmra.mrb[0].mxu0 %v294
        %v1599 = vpop.f32.mrb[0].mxu0
        %v1600 = vadd.f32 %v1510, %v1599
        %v1601 = vpop.f32.mrb[0].mxu0
        %1602 = vmatprep.mubr.f32.mxu0 %v902
        %1603 = vmatmul.mubr.f32.gmra.mrb[0].mxu0 %v296
        %v1604 = vpop.f32.mrb[0].mxu0
        %v1605 = vadd.f32 %v1515, %v1604
        %v1606 = vpop.f32.mrb[0].mxu0
        %1607 = vmatprep.mubr.f32.mxu0 %v903
        %1608 = vmatmul.mubr.f32.gmra.mrb[0].mxu0 %v295
        %v1609 = vpop.f32.mrb[0].mxu0
        %v1610 = vadd.f32 %v1520, %v1609
        %v1611 = vpop.f32.mrb[0].mxu0
        %1612 = vdwg.mxu0
        %1613 = vmatprep.subr.mxu0 0.0
        %1614 = vmatpush1.msra.mxu0 %v366
        %1615 = vmatprep.subr.mxu0 0.0
        %1616 = vmatpush1.msra.mxu0 %v367
        %1617 = vmatprep.subr.mxu0 0.0
        %1618 = vmatpush1.msra.mxu0 %v368
        %1619 = vmatprep.subr.mxu0 0.0
        %1620 = vmatpush1.msra.mxu0 %v369
        %1621 = vmatprep.subr.mxu0 0.0
        %1622 = vmatpush1.msra.mxu0 %v370
        %1623 = vmatprep.subr.mxu0 0.0
        %1624 = vmatpush1.msra.mxu0 %v371
        %1625 = vmatprep.subr.mxu0 0.0
        %1626 = vmatpush1.msra.mxu0 %v372
        %1627 = vmatprep.subr.mxu0 0.0
        %1628 = vmatpush1.msra.mxu0 %v373
        %1629 = vmatprep.subr.mxu0 0.0
        %1630 = vmatpush1.msra.mxu0 %v374
        %1631 = vmatprep.subr.mxu0 0.0
        %1632 = vmatpush1.msra.mxu0 %v375
        %1633 = vmatprep.subr.mxu0 0.0
        %1634 = vmatpush1.msra.mxu0 %v376
        %1635 = vmatprep.subr.mxu0 0.0
        %1636 = vmatpush1.msra.mxu0 %v377
        %1637 = vmatprep.subr.mxu0 0.0
        %1638 = vmatpush1.msra.mxu0 %v378
        %1639 = vmatprep.subr.mxu0 0.0
        %1640 = vmatpush1.msra.mxu0 %v379
        %1641 = vmatprep.subr.mxu0 0.0
        %1642 = vmatpush1.msra.mxu0 %v380
        %1643 = vmatprep.subr.mxu0 0.0
        %1644 = vmatpush1.msra.mxu0 %v381
        %1645 = vmatprep.subr.mxu0 0.0
        %1646 = vmatpush1.msra.mxu0 %v382
        %1647 = vmatprep.subr.mxu0 0.0
        %1648 = vmatpush1.msra.mxu0 %v383
        %1649 = vmatprep.subr.mxu0 0.0
        %1650 = vmatpush1.msra.mxu0 %v384
        %1651 = vmatprep.subr.mxu0 0.0
        %1652 = vmatpush1.msra.mxu0 %v385
        %1653 = vmatprep.subr.mxu0 0.0
        %1654 = vmatpush1.msra.mxu0 %v386
        %1655 = vmatprep.subr.mxu0 0.0
        %1656 = vmatpush1.msra.mxu0 %v387
        %1657 = vmatprep.subr.mxu0 0.0
        %1658 = vmatpush1.msra.mxu0 %v388
        %1659 = vmatprep.subr.mxu0 0.0
        %1660 = vmatpush1.msra.mxu0 %v389
        %1661 = vmatprep.subr.mxu0 0.0
        %1662 = vmatpush1.msra.mxu0 %v390
        %1663 = vmatprep.subr.mxu0 0.0
        %1664 = vmatpush1.msra.mxu0 %v391
        %1665 = vmatprep.subr.mxu0 0.0
        %1666 = vmatpush1.msra.mxu0 %v392
        %1667 = vmatprep.subr.mxu0 0.0
        %1668 = vmatpush1.msra.mxu0 %v393
        %1669 = vmatprep.subr.mxu0 0.0
        %1670 = vmatpush1.msra.mxu0 %v394
        %1671 = vmatprep.subr.mxu0 0.0
        %1672 = vmatpush1.msra.mxu0 %v395
        %1673 = vmatprep.subr.mxu0 0.0
        %1674 = vmatpush1.msra.mxu0 %v396
        %1675 = vmatprep.subr.mxu0 0.0
        %1676 = vmatpush1.msra.mxu0 %v397
        %1677 = vmatprep.mubr.f32.mxu0 %v925
        %1678 = vmatmul.mubr.f32.gmra.mrb[0].mxu0 %v911
        %v1679 = vpop.f32.mrb[0].mxu0
        %v1680 = vadd.f32 %v1590, %v1679
        %v1681 = vpop.f32.mrb[0].mxu0
        %1682 = vmatprep.mubr.f32.mxu0 %v927
        %1683 = vmatmul.mubr.f32.gmra.mrb[0].mxu0 %v913
        %v1684 = vpop.f32.mrb[0].mxu0
        %v1685 = vadd.f32 %v1595, %v1684
        %v1686 = vpop.f32.mrb[0].mxu0
        %1687 = vmatprep.mubr.f32.mxu0 %v929
        %1688 = vmatmul.mubr.f32.gmra.mrb[0].mxu0 %v915
        %v1689 = vpop.f32.mrb[0].mxu0
        %v1690 = vadd.f32 %v1600, %v1689
        %v1691 = vpop.f32.mrb[0].mxu0
        %1692 = vmatprep.mubr.f32.mxu0 %v931
        %1693 = vmatmul.mubr.f32.gmra.mrb[0].mxu0 %v917
        %v1694 = vpop.f32.mrb[0].mxu0
        %v1695 = vadd.f32 %v1605, %v1694
        %v1696 = vpop.f32.mrb[0].mxu0
        %1697 = vmatprep.mubr.f32.mxu0 %v930
        %1698 = vmatmul.mubr.f32.gmra.mrb[0].mxu0 %v916
        %v1699 = vpop.f32.mrb[0].mxu0
        %v1700 = vadd.f32 %v1610, %v1699
        %v1701 = vpop.f32.mrb[0].mxu0
        %1702 = vdwg.mxu0
        %1703 = vmatprep.subr.mxu0 0.0
        %1704 = vmatpush1.msra.mxu0 %v398
        %1705 = vmatprep.subr.mxu0 0.0
        %1706 = vmatpush1.msra.mxu0 %v399
        %1707 = vmatprep.subr.mxu0 0.0
        %1708 = vmatpush1.msra.mxu0 %v400
        %1709 = vmatprep.subr.mxu0 0.0
        %1710 = vmatpush1.msra.mxu0 %v401
        %1711 = vmatprep.subr.mxu0 0.0
        %1712 = vmatpush1.msra.mxu0 %v402
        %1713 = vmatprep.subr.mxu0 0.0
        %1714 = vmatpush1.msra.mxu0 %v403
        %1715 = vmatprep.subr.mxu0 0.0
        %1716 = vmatpush1.msra.mxu0 %v404
        %1717 = vmatprep.subr.mxu0 0.0
        %1718 = vmatpush1.msra.mxu0 %v405
        %1719 = vmatprep.subr.mxu0 0.0
        %1720 = vmatpush1.msra.mxu0 %v406
        %1721 = vmatprep.subr.mxu0 0.0
        %1722 = vmatpush1.msra.mxu0 %v407
        %1723 = vmatprep.subr.mxu0 0.0
        %1724 = vmatpush1.msra.mxu0 %v408
        %1725 = vmatprep.subr.mxu0 0.0
        %1726 = vmatpush1.msra.mxu0 %v409
        %1727 = vmatprep.subr.mxu0 0.0
        %1728 = vmatpush1.msra.mxu0 %v410
        %1729 = vmatprep.subr.mxu0 0.0
        %1730 = vmatpush1.msra.mxu0 %v411
        %1731 = vmatprep.subr.mxu0 0.0
        %1732 = vmatpush1.msra.mxu0 %v412
        %1733 = vmatprep.subr.mxu0 0.0
        %1734 = vmatpush1.msra.mxu0 %v413
        %1735 = vmatprep.subr.mxu0 0.0
        %1736 = vmatpush1.msra.mxu0 %v414
        %1737 = vmatprep.subr.mxu0 0.0
        %1738 = vmatpush1.msra.mxu0 %v415
        %1739 = vmatprep.subr.mxu0 0.0
        %1740 = vmatpush1.msra.mxu0 %v416
        %1741 = vmatprep.subr.mxu0 0.0
        %1742 = vmatpush1.msra.mxu0 %v417
        %1743 = vmatprep.subr.mxu0 0.0
        %1744 = vmatpush1.msra.mxu0 %v418
        %1745 = vmatprep.subr.mxu0 0.0
        %1746 = vmatpush1.msra.mxu0 %v419
        %1747 = vmatprep.subr.mxu0 0.0
        %1748 = vmatpush1.msra.mxu0 %v420
        %1749 = vmatprep.subr.mxu0 0.0
        %1750 = vmatpush1.msra.mxu0 %v421
        %1751 = vmatprep.subr.mxu0 0.0
        %1752 = vmatpush1.msra.mxu0 %v422
        %1753 = vmatprep.subr.mxu0 0.0
        %1754 = vmatpush1.msra.mxu0 %v423
        %1755 = vmatprep.subr.mxu0 0.0
        %1756 = vmatpush1.msra.mxu0 %v424
        %1757 = vmatprep.subr.mxu0 0.0
        %1758 = vmatpush1.msra.mxu0 %v425
        %1759 = vmatprep.subr.mxu0 0.0
        %1760 = vmatpush1.msra.mxu0 %v426
        %1761 = vmatprep.subr.mxu0 0.0
        %1762 = vmatpush1.msra.mxu0 %v427
        %1763 = vmatprep.subr.mxu0 0.0
        %1764 = vmatpush1.msra.mxu0 %v428
        %1765 = vmatprep.subr.mxu0 0.0
        %1766 = vmatpush1.msra.mxu0 %v429
        %1767 = vmatprep.mubr.f32.mxu0 %v1407
        %1768 = vmatmul.mubr.f32.gmra.mrb[0].mxu0 %v1395
        %v1769 = vpop.f32.mrb[0].mxu0
        %v1770 = vadd.f32 %v1680, %v1769
        %v1771 = vpop.f32.mrb[0].mxu0
        %1772 = vmatprep.mubr.f32.mxu0 %v1409
        %1773 = vmatmul.mubr.f32.gmra.mrb[0].mxu0 %v1396
        %v1774 = vpop.f32.mrb[0].mxu0
        %v1775 = vadd.f32 %v1685, %v1774
        %v1776 = vpop.f32.mrb[0].mxu0
        %1777 = vmatprep.mubr.f32.mxu0 %v1411
        %1778 = vmatmul.mubr.f32.gmra.mrb[0].mxu0 %v1397
        %v1779 = vpop.f32.mrb[0].mxu0
        %v1780 = vadd.f32 %v1690, %v1779
        %v1781 = vpop.f32.mrb[0].mxu0
        %1782 = vmatprep.mubr.f32.mxu0 %v1413
        %1783 = vmatmul.mubr.f32.gmra.mrb[0].mxu0 %v1398
        %v1784 = vpop.f32.mrb[0].mxu0
        %v1785 = vadd.f32 %v1695, %v1784
        %v1786 = vpop.f32.mrb[0].mxu0
        %1787 = vmatprep.mubr.f32.mxu0 %v1412
        %1788 = vmatmul.mubr.f32.gmra.mrb[0].mxu0 %v1399
        %v1789 = vpop.f32.mrb[0].mxu0
        %v1790 = vadd.f32 %v1700, %v1789
        %v1791 = vpop.f32.mrb[0].mxu0
        %1792 = vdwg.mxu0
        %1793 = vmatprep.subr.mxu0 0.0
        %1794 = vmatpush1.msra.mxu0 %v430
        %1795 = vmatprep.subr.mxu0 0.0
        %1796 = vmatpush1.msra.mxu0 %v431
        %1797 = vmatprep.subr.mxu0 0.0
        %1798 = vmatpush1.msra.mxu0 %v432
        %1799 = vmatprep.subr.mxu0 0.0
        %1800 = vmatpush1.msra.mxu0 %v433
        %1801 = vmatprep.subr.mxu0 0.0
        %1802 = vmatpush1.msra.mxu0 %v434
        %1803 = vmatprep.subr.mxu0 0.0
        %1804 = vmatpush1.msra.mxu0 %v435
        %1805 = vmatprep.subr.mxu0 0.0
        %1806 = vmatpush1.msra.mxu0 %v436
        %1807 = vmatprep.subr.mxu0 0.0
        %1808 = vmatpush1.msra.mxu0 %v437
        %1809 = vmatprep.subr.mxu0 0.0
        %1810 = vmatpush1.msra.mxu0 %v438
        %1811 = vmatprep.subr.mxu0 0.0
        %1812 = vmatpush1.msra.mxu0 %v439
        %1813 = vmatprep.subr.mxu0 0.0
        %1814 = vmatpush1.msra.mxu0 %v440
        %1815 = vmatprep.subr.mxu0 0.0
        %1816 = vmatpush1.msra.mxu0 %v441
        %1817 = vmatprep.subr.mxu0 0.0
        %1818 = vmatpush1.msra.mxu0 %v442
        %1819 = vmatprep.subr.mxu0 0.0
        %1820 = vmatpush1.msra.mxu0 %v443
        %1821 = vmatprep.subr.mxu0 0.0
        %1822 = vmatpush1.msra.mxu0 %v444
        %1823 = vmatprep.subr.mxu0 0.0
        %1824 = vmatpush1.msra.mxu0 %v445
        %1825 = vmatprep.subr.mxu0 0.0
        %1826 = vmatpush1.msra.mxu0 0.0
        %1827 = vmatprep.subr.mxu0 0.0
        %1828 = vmatpush1.msra.mxu0 0.0
        %1829 = vmatprep.subr.mxu0 0.0
        %1830 = vmatpush1.msra.mxu0 0.0
        %1831 = vmatprep.subr.mxu0 0.0
        %1832 = vmatpush1.msra.mxu0 0.0
        %1833 = vmatprep.subr.mxu0 0.0
        %1834 = vmatpush1.msra.mxu0 0.0
        %1835 = vmatprep.subr.mxu0 0.0
        %1836 = vmatpush1.msra.mxu0 0.0
        %1837 = vmatprep.subr.mxu0 0.0
        %1838 = vmatpush1.msra.mxu0 0.0
        %1839 = vmatprep.subr.mxu0 0.0
        %1840 = vmatpush1.msra.mxu0 0.0
        %1841 = vmatprep.subr.mxu0 0.0
        %1842 = vmatpush1.msra.mxu0 0.0
        %1843 = vmatprep.subr.mxu0 0.0
        %1844 = vmatpush1.msra.mxu0 0.0
        %1845 = vmatprep.subr.mxu0 0.0
        %1846 = vmatpush1.msra.mxu0 0.0
        %1847 = vmatprep.subr.mxu0 0.0
        %1848 = vmatpush1.msra.mxu0 0.0
        %1849 = vmatprep.subr.mxu0 0.0
        %1850 = vmatpush1.msra.mxu0 0.0
        %1851 = vmatprep.subr.mxu0 0.0
        %1852 = vmatpush1.msra.mxu0 0.0
        %1853 = vmatprep.subr.mxu0 0.0
        %1854 = vmatpush1.msra.mxu0 0.0
        %1855 = vmatprep.subr.mxu0 0.0
        %1856 = vmatpush1.msra.mxu0 0.0
        %1857 = vmatprep.mubr.f32.mxu0 0.0
        %1858 = vmatmul.mubr.f32.gmra.mrb[0].mxu0 %v1421
        %v1859 = vpop.f32.mrb[0].mxu0
        %v1860 = vadd.f32 %v1770, %v1859
        %v1861 = vpop.f32.mrb[0].mxu0
        %1862 = vmatprep.mubr.f32.mxu0 0.0
        %1863 = vmatmul.mubr.f32.gmra.mrb[0].mxu0 %v1423
        %v1864 = vpop.f32.mrb[0].mxu0
        %v1865 = vadd.f32 %v1775, %v1864
        %v1866 = vpop.f32.mrb[0].mxu0
        %1867 = vmatprep.mubr.f32.mxu0 0.0
        %1868 = vmatmul.mubr.f32.gmra.mrb[0].mxu0 %v1425
        %v1869 = vpop.f32.mrb[0].mxu0
        %v1870 = vadd.f32 %v1780, %v1869
        %v1871 = vpop.f32.mrb[0].mxu0
        %1872 = vmatprep.mubr.f32.mxu0 0.0
        %1873 = vmatmul.mubr.f32.gmra.mrb[0].mxu0 %v1427
        %v1874 = vpop.f32.mrb[0].mxu0
        %v1875 = vadd.f32 %v1785, %v1874
        %v1876 = vpop.f32.mrb[0].mxu0
        %1877 = vmatprep.mubr.f32.mxu0 0.0
        %1878 = vmatmul.mubr.f32.gmra.mrb[0].mxu0 %v1426
        %v1879 = vpop.f32.mrb[0].mxu0
        %v1880 = vadd.f32 %v1790, %v1879
        %v1881 = vpop.f32.mrb[0].mxu0
        %1882 = vdwg.mxu0
        %v1883 = vmax.f32 %v1387, %v1860
        %v1884 = vmax.f32 %v1388, %v1865
        %v1885 = vmax.f32 %v1389, %v1870
        %v1886 = vmax.f32 %v1390, %v1875
        %v1887 = vmax.f32 %v1391, %v1880
        %vm1888 = vcmask 523264
        %1889 = vst.msk [vmem:[#allocation2] sm:$0xff] %vm1888, %v1883
        %1890 = vst.msk [vmem:[#allocation2 + $0x8] sm:$0xff] %vm1888, %v1884
        %1891 = vst.msk [vmem:[#allocation2 + $0x10] sm:$0xff] %vm1888, %v1885
        %1892 = vst.msk [vmem:[#allocation2 + $0x18] sm:$0xff] %vm1888, %v1886
        %vm1893 = vcmask 516096
        %1894 = vst.msk [vmem:[#allocation2 + $0x20] sm:$0x1] %vm1893, %v1887
        %v1895 = vld [vmem:[#allocation2] ss:$3 sm:$0xff]
        %s1896 = scalar_lea.vmem [#allocation2], 24
        %v1897 = vld [vmem:[%s1896] ss:$3 sm:$0x7]
        %s1898 = scalar_lea.vmem [#allocation2], 1
        %v1899 = vld [vmem:[%s1898] ss:$3 sm:$0xff]
        %s1900 = scalar_lea.vmem [#allocation2], 25
        %v1901 = vld [vmem:[%s1900] ss:$3 sm:$0x7]
        %v1902 = vmax.f32 %v1895, %v1899
        %v1903 = vmax.f32 %v1897, %v1901
        %s1904 = scalar_lea.vmem [#allocation2], 2
        %v1905 = vld [vmem:[%s1904] ss:$3 sm:$0xff]
        %s1906 = scalar_lea.vmem [#allocation2], 26
        %v1907 = vld [vmem:[%s1906] ss:$3 sm:$0x7]
        %v1908 = vmax.f32 %v1902, %v1905
        %v1909 = vmax.f32 %v1903, %v1907
        %v1910 = vld [vmem:[%s2] sm:$0x1]
        %v1912 = vlaneseq
        %v1913 = vshrl.u32 %v1912, 7
        %v1914 = vsub.s32 0, %v1913
        %v1915 = vrot.slane %v1910, %v1914
        %v1917 = vadd.f32 %v1908, %v1915
        %v1918 = vadd.f32 %v1909, %v1915
        %v1919 = vmax.f32 %v1917, 0.0
        %v1920 = vmax.f32 %v1918, 0.0
        %s1921 = smul.u32 %s172, 16
        %s1922 = scalar_lea.vmem %s170, %s1921
        %1923 = vst.msk [vmem:[%s1922] sm:$0xff] %vm1888, %v1919
        %vm1924 = vcmask 518144
        %1925 = vst.msk [vmem:[%s1922 + $0x8] sm:$0x7] %vm1924, %v1920
      $region37: #{net_forward.5} parent=31 // loop_footer
        %s176 = sadd.s32 1, %s172
      $region38: #{net_forward.5} parent=31 // loop_footer_branch
        %171 = sbr.rel target = $region34
      $region39: #{net_forward.5} parent=31 // loop_exit
        _
      %p1926 = scmp.lt.s32.totalorder %s14, 1
      %s1927 = scalar_select %p1926, %s14, 1
      %s1928 = smul.addr %s1927, 22
      %s1929 = smul.addr %s1928, 8
      %s1930 = scalar_lea.vmem %s3, %s1929
      // Predicated region
      $region40: #{net_forward.5} parent=31 // pred_check
        %p1931 = pneg %p100
      $region41: #{net_forward.5} parent=31 // pred_check_branch
        %1933 = sbr.rel (%p1931) target = $region43
      $region42: #{net_forward.5} parent=31 // pred_region
        _
      $region43: #{net_forward.5} parent=31 // pred_fallthru
        _
    $region32: #{net_forward.5} parent=5 // pred_fallthru
      _
    %p1934 = scmp.le.s32.totalorder 2, %s9
    // Predicated region
    $region44: #{net_forward.5} parent=5 // pred_check
      %p1935 = pneg %p1934
    $region45: #{net_forward.5} parent=5 // pred_check_branch
      %1937 = sbr.rel (%p1935) target = $region47
    $region46: #{net_forward.5} parent=5 // pred_region
      %s1938 = ssub.s32 %s9, 2
      // Predicated region
      $region48: #{net_forward.5} parent=46 // pred_check
        %p1939 = pneg %p106
      $region49: #{net_forward.5} parent=46 // pred_check_branch
        %1941 = sbr.rel (%p1939) target = $region51
      $region50: #{net_forward.5} parent=46 // pred_region
        %p1942 = scmp.lt.s32.totalorder %s15, 1
        %s1943 = scalar_select %p1942, %s15, 1
        %s1944 = smul.addr %s1943, 22
        %s1945 = smul.addr %s1944, 8
        %s1946 = scalar_lea.vmem %s3, %s1945
      $region51: #{net_forward.5} parent=46 // pred_fallthru
        _
    $region47: #{net_forward.5} parent=5 // pred_fallthru
      _
  $region6: #{net_forward.5} parent=0 // loop_footer
    %s13 = sadd.s32 1, %s9
  $region7: #{net_forward.5} parent=0 // loop_footer_branch
    %8 = sbr.rel target = $region3
  $region8: #{net_forward.5} parent=0 // loop_exit
    _

// kernel: net_forward.6
$region0: #{net_forward.6}
  #allocation0 [shape = 'u32[]', space=smem, size = 0x4, offset = 0x4, fixed_abs, tag = 'smem constant byte address 0x4 - core index']
  #allocation1 [shape = 'u32[144,128]{1,0:T(1,128)}', space=vmem, size = 0x12000, scoped, tag = 'internal scratch']
  #allocation2 [shape = 'f32[9,32]{1,0:T(8,128)}', space=vmem, size = 0x2000, scoped, tag = 'scratch operand']
  %s0 = inlined_call_operand.vmem [shape: f32[2,11,11,64], index: 0, kind: input, shape index: {}]
  %s1 = inlined_call_operand.vmem [shape: f32[576,32], index: 1, kind: input, shape index: {}]
  %s2 = inlined_call_operand.vmem [shape: f32[1,32], index: 2, kind: input, shape index: {}]
  %s3 = inlined_call_operand.vmem [shape: f32[2,3,3,32], index: 3, kind: output, shape index: {}]
  %s4 = sld [smem:[#allocation0]]
  $region52: #{net_forward.6} parent=0
    _
  %s6 = ssub.s32 1, %s4
  %s7 = scalar_select 0, %s6, %s4
  loop: start=0, step=1, limit=4
  $region2: #{net_forward.6} parent=0 // loop_pre_header
    _
  $region3: #{net_forward.6} parent=0 // loop_header
    %s9 = sphi 0, %s13
    %p10 = scmp.ge.s32.totalorder %s9, 4
    %s19 = sphi 0, %s21
    %s22 = sphi 0, %s19
    %s23 = sphi 0, %s22
    %s39 = sphi 0, %s23
    %s43 = sphi 0, %s43
    %s45 = sphi 0, %s43
    %s46 = sphi 0, %s45
    %s60 = sphi 0, %s46
    %s64 = sphi 0, %s64
    %s66 = sphi 0, %s64
    %s67 = sphi 0, %s66
    %s81 = sphi 0, %s67
    %s87 = sphi 0, %s89
    %s90 = sphi 0, %s87
    %s91 = sphi 0, %s90
    %s107 = sphi 0, %s91
  $region4: #{net_forward.6} parent=0 // loop_header_branch
    %12 = sbr.rel (%p10) target = $region8
  $region5: #{net_forward.6} parent=0 // loop_body
    %s14 = ssub.s32 %s9, 1
    %s15 = ssub.s32 %s9, 2
    %s16 = sadd.s32 %s9, 1
    %s17 = ssub.s32 %s9, %s16
    %p18 = scmp.eq.s32.totalorder %s17, 0
    %s20 = sadd.s32 %s19, 1
    %s21 = scalar_select %p18, %s19, %s20
    %p24 = pneg %p18
    %p25 = scmp.eq.s32.totalorder %s9, 1
    %p26 = por %p24, %p25
    %p27 = scmp.ne.s32.totalorder %s19, %s22
    %p28 = scmp.eq.s32.totalorder %s9, 0
    %p29 = por %p27, %p28
    %p30 = scmp.ne.s32.totalorder %s19, %s22
    %p31 = scmp.eq.s32.totalorder %s14, 1
    %p32 = por %p30, %p31
    %p33 = scmp.ne.s32.totalorder %s22, %s23
    %p34 = scmp.eq.s32.totalorder %s14, 0
    %p35 = por %p33, %p34
    %p36 = scmp.ne.s32.totalorder %s22, %s23
    %p37 = scmp.eq.s32.totalorder %s15, 1
    %p38 = por %p36, %p37
    %p40 = scmp.ne.s32.totalorder %s23, %s39
    %p41 = scmp.eq.s32.totalorder %s15, 0
    %p42 = por %p40, %p41
    %s44 = sadd.s32 %s43, 1
    %p47 = scmp.eq.s32.totalorder %s9, 1
    %p48 = scmp.ne.s32.totalorder %s43, %s45
    %p49 = scmp.eq.s32.totalorder %s9, 0
    %p50 = por %p48, %p49
    %p51 = scmp.ne.s32.totalorder %s43, %s45
    %p52 = scmp.eq.s32.totalorder %s14, 1
    %p53 = por %p51, %p52
    %p54 = scmp.ne.s32.totalorder %s45, %s46
    %p55 = scmp.eq.s32.totalorder %s14, 0
    %p56 = por %p54, %p55
    %p57 = scmp.ne.s32.totalorder %s45, %s46
    %p58 = scmp.eq.s32.totalorder %s15, 1
    %p59 = por %p57, %p58
    %p61 = scmp.ne.s32.totalorder %s46, %s60
    %p62 = scmp.eq.s32.totalorder %s15, 0
    %p63 = por %p61, %p62
    %s65 = sadd.s32 %s64, 1
    %p68 = scmp.eq.s32.totalorder %s9, 1
    %p69 = scmp.ne.s32.totalorder %s64, %s66
    %p70 = scmp.eq.s32.totalorder %s9, 0
    %p71 = por %p69, %p70
    %p72 = scmp.ne.s32.totalorder %s64, %s66
    %p73 = scmp.eq.s32.totalorder %s14, 1
    %p74 = por %p72, %p73
    %p75 = scmp.ne.s32.totalorder %s66, %s67
    %p76 = scmp.eq.s32.totalorder %s14, 0
    %p77 = por %p75, %p76
    %p78 = scmp.ne.s32.totalorder %s66, %s67
    %p79 = scmp.eq.s32.totalorder %s15, 1
    %p80 = por %p78, %p79
    %p82 = scmp.ne.s32.totalorder %s67, %s81
    %p83 = scmp.eq.s32.totalorder %s15, 0
    %p84 = por %p82, %p83
    %s85 = ssub.s32 %s9, %s16
    %p86 = scmp.eq.s32.totalorder %s85, 0
    %s88 = sadd.s32 %s87, 1
    %s89 = scalar_select %p86, %s87, %s88
    %p92 = pneg %p86
    %p93 = scmp.eq.s32.totalorder %s9, 1
    %p94 = por %p92, %p93
    %p95 = scmp.ne.s32.totalorder %s87, %s90
    %p96 = scmp.eq.s32.totalorder %s9, 0
    %p97 = por %p95, %p96
    %p98 = scmp.ne.s32.totalorder %s87, %s90
    %p99 = scmp.eq.s32.totalorder %s14, 1
    %p100 = por %p98, %p99
    %p101 = scmp.ne.s32.totalorder %s90, %s91
    %p102 = scmp.eq.s32.totalorder %s14, 0
    %p103 = por %p101, %p102
    %p104 = scmp.ne.s32.totalorder %s90, %s91
    %p105 = scmp.eq.s32.totalorder %s15, 1
    %p106 = por %p104, %p105
    %p108 = scmp.ne.s32.totalorder %s91, %s107
    %p109 = scmp.eq.s32.totalorder %s15, 0
    %p110 = por %p108, %p109
    %p111 = scmp.le.s32.totalorder 1, %s9
    %p112 = scmp.lt.s32.totalorder %s9, 3
    %p113 = pnand %p111, %p112
    %p114 = pneg %p113
    // Predicated region
    $region9: #{net_forward.6} parent=5 // pred_check
      _
    $region10: #{net_forward.6} parent=5 // pred_check_branch
      %116 = sbr.rel (%p113) target = $region12
    $region11: #{net_forward.6} parent=5 // pred_region
      %s117 = ssub.s32 %s9, 1
      // Predicated region
      $region13: #{net_forward.6} parent=11 // pred_check
        %p118 = pneg %p56
      $region14: #{net_forward.6} parent=11 // pred_check_branch
        %120 = sbr.rel (%p118) target = $region16
      $region15: #{net_forward.6} parent=11 // pred_region
        _
      $region16: #{net_forward.6} parent=11 // pred_fallthru
        _
      // Predicated region
      $region17: #{net_forward.6} parent=11 // pred_check
        %p121 = pneg %p77
      $region18: #{net_forward.6} parent=11 // pred_check_branch
        %123 = sbr.rel (%p121) target = $region20
      $region19: #{net_forward.6} parent=11 // pred_region
        _
      $region20: #{net_forward.6} parent=11 // pred_fallthru
        _
    $region12: #{net_forward.6} parent=5 // pred_fallthru
      _
    %p124 = scmp.lt.s32.totalorder %s9, 2
    // Predicated region
    $region21: #{net_forward.6} parent=5 // pred_check
      %p125 = pneg %p124
    $region22: #{net_forward.6} parent=5 // pred_check_branch
      %127 = sbr.rel (%p125) target = $region24
    $region23: #{net_forward.6} parent=5 // pred_region
      // Predicated region
      $region25: #{net_forward.6} parent=23 // pred_check
        %p128 = pneg %p29
      $region26: #{net_forward.6} parent=23 // pred_check_branch
        %130 = sbr.rel (%p128) target = $region28
      $region27: #{net_forward.6} parent=23 // pred_region
        %p131 = scmp.lt.s32.totalorder %s9, 1
        %s132 = scalar_select %p131, %s9, 1
        %s133 = smul.addr %s132, 22
        %s134 = smul.addr %s133, 8
        %s135 = scalar_lea.vmem %s0, %s134
      $region28: #{net_forward.6} parent=23 // pred_fallthru
        _
    $region24: #{net_forward.6} parent=5 // pred_fallthru
      _
    %p136 = scmp.le.s32.totalorder 1, %s9
    %p137 = scmp.lt.s32.totalorder %s9, 3
    %p138 = pnand %p136, %p137
    %p139 = pneg %p138
    // Predicated region
    $region29: #{net_forward.6} parent=5 // pred_check
      _
    $region30: #{net_forward.6} parent=5 // pred_check_branch
      %141 = sbr.rel (%p138) target = $region32
    $region31: #{net_forward.6} parent=5 // pred_region
      %s142 = ssub.s32 %s9, 1
      %p143 = scmp.lt.s32.totalorder %s14, 1
      %s144 = scalar_select %p143, %s14, 1
      %s145 = smul.addr %s144, 22
      %s146 = smul.addr %s145, 8
      %s147 = scalar_lea.vmem %s0, %s146
      %p148 = pneg %p35
      %p149 = pneg %p32
      %p150 = pneg %p56
      %p151 = pneg %p53
      %p152 = pneg %p77
      %p153 = pneg %p74
      %p154 = pneg %p103
      %p155 = pneg %p100
      %p156 = scmp.lt.s32.totalorder %s14, 1
      %s157 = scalar_select %p156, %s14, 1
      %s158 = smul.addr %s157, 3
      %s159 = smul.addr %s158, 4
      %s160 = scalar_lea.vmem %s3, %s159
      %p161 = scmp.lt.s32.totalorder %s14, 1
      %s162 = scalar_select %p161, %s14, 1
      %s163 = smul.addr %s162, 22
      %s164 = smul.addr %s163, 8
      %s165 = scalar_lea.vmem %s0, %s164
      %p166 = scmp.lt.s32.totalorder %s14, 1
      %s167 = scalar_select %p166, %s14, 1
      %s168 = smul.addr %s167, 3
      %s169 = smul.addr %s168, 4
      %s170 = scalar_lea.vmem %s3, %s169
      loop: start=0, step=1, limit=3
      $region33: #{net_forward.6} parent=31 // loop_pre_header
        _
      $region34: #{net_forward.6} parent=31 // loop_header
        %s172 = sphi 0, %s176
        %p173 = scmp.ge.s32.totalorder %s172, 3
      $region35: #{net_forward.6} parent=31 // loop_header_branch
        %175 = sbr.rel (%p173) target = $region39
      $region36: #{net_forward.6} parent=31 // loop_body
        %s177 = smul.u32 %s172, 3
        %s178 = smul.u32 %s177, 16
        %s179 = scalar_lea.vmem %s165, %s178
        %v180 = vld [vmem:[%s179] sm:$0xff]
        %v181 = vld [vmem:[%s179 + $0x8] sm:$0x7]
        %s182 = sadd.s32 %s177, 1
        %s183 = smul.u32 %s182, 16
        %s184 = scalar_lea.vmem %s165, %s183
        %v185 = vld [vmem:[%s184] sm:$0xff]
        %v186 = vld [vmem:[%s184 + $0x8] sm:$0x7]
        %s187 = sadd.s32 %s177, 2
        %s188 = smul.u32 %s187, 16
        %s189 = scalar_lea.vmem %s165, %s188
        %v190 = vld [vmem:[%s189] sm:$0xff]
        %v191 = vld [vmem:[%s189 + $0x8] sm:$0x7]
        %v192 = vld [vmem:[%s1] sm:$0xff]
        %v193 = vld [vmem:[%s1 + $0x8] sm:$0xff]
        %v194 = vld [vmem:[%s1 + $0x10] sm:$0xff]
        %v195 = vld [vmem:[%s1 + $0x18] sm:$0xff]
        %v196 = vld [vmem:[%s1 + $0x20] sm:$0xff]
        %v197 = vld [vmem:[%s1 + $0x28] sm:$0xff]
        %v198 = vld [vmem:[%s1 + $0x30] sm:$0xff]
        %v199 = vld [vmem:[%s1 + $0x38] sm:$0xff]
        %v200 = vld [vmem:[%s1 + $0x40] sm:$0xff]
        %v201 = vld [vmem:[%s1 + $0x48] sm:$0xff]
        %v202 = vld [vmem:[%s1 + $0x50] sm:$0xff]
        %v203 = vld [vmem:[%s1 + $0x58] sm:$0xff]
        %v204 = vld [vmem:[%s1 + $0x60] sm:$0xff]
        %v205 = vld [vmem:[%s1 + $0x68] sm:$0xff]
        %v206 = vld [vmem:[%s1 + $0x70] sm:$0xff]
        %v207 = vld [vmem:[%s1 + $0x78] sm:$0xff]
        %vm210 = vcmask 1046528
        %v211 = vrot.slane %v180, 1
        %v212 = vrot.slane %v181, 1
        %v213 = vsel %vm210, %v211, %v212
        %vm214 = vcmask 523264
        %v215 = vsel %vm214, %v213, 0
        %v217 = vsel %vm214, %v212, 0
        %219 = vmatprep.subr.mxu0 0.0
        %220 = vmatpush1.msra.mxu0 %v200
        %221 = vmatprep.subr.mxu0 0.0
        %222 = vmatpush1.msra.mxu0 %v201
        %223 = vmatprep.subr.mxu0 0.0
        %224 = vmatpush1.msra.mxu0 %v202
        %225 = vmatprep.subr.mxu0 0.0
        %226 = vmatpush1.msra.mxu0 %v203
        %227 = vmatprep.subr.mxu0 0.0
        %228 = vmatpush1.msra.mxu0 %v204
        %229 = vmatprep.subr.mxu0 0.0
        %230 = vmatpush1.msra.mxu0 %v205
        %231 = vmatprep.subr.mxu0 0.0
        %232 = vmatpush1.msra.mxu0 %v206
        %233 = vmatprep.subr.mxu0 0.0
        %234 = vmatpush1.msra.mxu0 %v207
        %235 = vmatprep.subr.mxu0 0.0
        %236 = vmatpush1.msra.mxu0 0.0
        %237 = vmatprep.subr.mxu0 0.0
        %238 = vmatpush1.msra.mxu0 0.0
        %239 = vmatprep.subr.mxu0 0.0
        %240 = vmatpush1.msra.mxu0 0.0
        %241 = vmatprep.subr.mxu0 0.0
        %242 = vmatpush1.msra.mxu0 0.0
        %243 = vmatprep.subr.mxu0 0.0
        %244 = vmatpush1.msra.mxu0 0.0
        %245 = vmatprep.subr.mxu0 0.0
        %246 = vmatpush1.msra.mxu0 0.0
        %247 = vmatprep.subr.mxu0 0.0
        %248 = vmatpush1.msra.mxu0 0.0
        %249 = vmatprep.subr.mxu0 0.0
        %250 = vmatpush1.msra.mxu0 0.0
        %251 = vmatprep.subr.mxu0 0.0
        %252 = vmatpush1.msra.mxu0 0.0
        %253 = vmatprep.subr.mxu0 0.0
        %254 = vmatpush1.msra.mxu0 0.0
        %255 = vmatprep.subr.mxu0 0.0
        %256 = vmatpush1.msra.mxu0 0.0
        %257 = vmatprep.subr.mxu0 0.0
        %258 = vmatpush1.msra.mxu0 0.0
        %259 = vmatprep.subr.mxu0 0.0
        %260 = vmatpush1.msra.mxu0 0.0
        %261 = vmatprep.subr.mxu0 0.0
        %262 = vmatpush1.msra.mxu0 0.0
        %263 = vmatprep.subr.mxu0 0.0
        %264 = vmatpush1.msra.mxu0 0.0
        %265 = vmatprep.subr.mxu0 0.0
        %266 = vmatpush1.msra.mxu0 0.0
        %267 = vmatprep.subr.mxu0 0.0
        %268 = vmatpush1.msra.mxu0 0.0
        %269 = vmatprep.subr.mxu0 0.0
        %270 = vmatpush1.msra.mxu0 0.0
        %271 = vmatprep.subr.mxu0 0.0
        %272 = vmatpush1.msra.mxu0 0.0
        %273 = vmatprep.subr.mxu0 0.0
        %274 = vmatpush1.msra.mxu0 0.0
        %275 = vmatprep.subr.mxu0 0.0
        %276 = vmatpush1.msra.mxu0 0.0
        %277 = vmatprep.subr.mxu0 0.0
        %278 = vmatpush1.msra.mxu0 0.0
        %279 = vmatprep.subr.mxu0 0.0
        %280 = vmatpush1.msra.mxu0 0.0
        %281 = vmatprep.subr.mxu0 0.0
        %282 = vmatpush1.msra.mxu0 0.0
        %283 = vmatprep.mubr.f32.mxu0 0.0
        %284 = vmatmul.mubr.f32.gmra.mrb[0].mxu0 %v215
        %v285 = vpop.f32.mrb[0].mxu0
        %v286 = vadd.f32 0.0, %v285
        %v287 = vpop.f32.mrb[0].mxu0
        %288 = vmatprep.mubr.f32.mxu0 0.0
        %289 = vmatmul.mubr.f32.gmra.mrb[0].mxu0 %v217
        %v290 = vpop.f32.mrb[0].mxu0
        %v291 = vadd.f32 0.0, %v290
        %v292 = vpop.f32.mrb[0].mxu0
        %293 = vdwg.mxu0
        %v294 = vsel %vm214, %v180, 0
        %v296 = vsel %vm214, %v181, 0
        %298 = vmatprep.subr.mxu0 0.0
        %299 = vmatpush1.msra.mxu0 %v192
        %300 = vmatprep.subr.mxu0 0.0
        %301 = vmatpush1.msra.mxu0 %v193
        %302 = vmatprep.subr.mxu0 0.0
        %303 = vmatpush1.msra.mxu0 %v194
        %304 = vmatprep.subr.mxu0 0.0
        %305 = vmatpush1.msra.mxu0 %v195
        %306 = vmatprep.subr.mxu0 0.0
        %307 = vmatpush1.msra.mxu0 %v196
        %308 = vmatprep.subr.mxu0 0.0
        %309 = vmatpush1.msra.mxu0 %v197
        %310 = vmatprep.subr.mxu0 0.0
        %311 = vmatpush1.msra.mxu0 %v198
        %312 = vmatprep.subr.mxu0 0.0
        %313 = vmatpush1.msra.mxu0 %v199
        %314 = vmatprep.subr.mxu0 0.0
        %315 = vmatpush1.msra.mxu0 0.0
        %316 = vmatprep.subr.mxu0 0.0
        %317 = vmatpush1.msra.mxu0 0.0
        %318 = vmatprep.subr.mxu0 0.0
        %319 = vmatpush1.msra.mxu0 0.0
        %320 = vmatprep.subr.mxu0 0.0
        %321 = vmatpush1.msra.mxu0 0.0
        %322 = vmatprep.subr.mxu0 0.0
        %323 = vmatpush1.msra.mxu0 0.0
        %324 = vmatprep.subr.mxu0 0.0
        %325 = vmatpush1.msra.mxu0 0.0
        %326 = vmatprep.subr.mxu0 0.0
        %327 = vmatpush1.msra.mxu0 0.0
        %328 = vmatprep.subr.mxu0 0.0
        %329 = vmatpush1.msra.mxu0 0.0
        %330 = vmatprep.subr.mxu0 0.0
        %331 = vmatpush1.msra.mxu0 0.0
        %332 = vmatprep.subr.mxu0 0.0
        %333 = vmatpush1.msra.mxu0 0.0
        %334 = vmatprep.subr.mxu0 0.0
        %335 = vmatpush1.msra.mxu0 0.0
        %336 = vmatprep.subr.mxu0 0.0
        %337 = vmatpush1.msra.mxu0 0.0
        %338 = vmatprep.subr.mxu0 0.0
        %339 = vmatpush1.msra.mxu0 0.0
        %340 = vmatprep.subr.mxu0 0.0
        %341 = vmatpush1.msra.mxu0 0.0
        %342 = vmatprep.subr.mxu0 0.0
        %343 = vmatpush1.msra.mxu0 0.0
        %344 = vmatprep.subr.mxu0 0.0
        %345 = vmatpush1.msra.mxu0 0.0
        %346 = vmatprep.subr.mxu0 0.0
        %347 = vmatpush1.msra.mxu0 0.0
        %348 = vmatprep.subr.mxu0 0.0
        %349 = vmatpush1.msra.mxu0 0.0
        %350 = vmatprep.subr.mxu0 0.0
        %351 = vmatpush1.msra.mxu0 0.0
        %352 = vmatprep.subr.mxu0 0.0
        %353 = vmatpush1.msra.mxu0 0.0
        %354 = vmatprep.subr.mxu0 0.0
        %355 = vmatpush1.msra.mxu0 0.0
        %356 = vmatprep.subr.mxu0 0.0
        %357 = vmatpush1.msra.mxu0 0.0
        %358 = vmatprep.subr.mxu0 0.0
        %359 = vmatpush1.msra.mxu0 0.0
        %360 = vmatprep.subr.mxu0 0.0
        %361 = vmatpush1.msra.mxu0 0.0
        %362 = vmatprep.mubr.f32.mxu0 0.0
        %363 = vmatmul.mubr.f32.gmra.mrb[0].mxu0 %v294
        %v364 = vpop.f32.mrb[0].mxu0
        %v365 = vadd.f32 %v286, %v364
        %v366 = vpop.f32.mrb[0].mxu0
        %367 = vmatprep.mubr.f32.mxu0 0.0
        %368 = vmatmul.mubr.f32.gmra.mrb[0].mxu0 %v296
        %v369 = vpop.f32.mrb[0].mxu0
        %v370 = vadd.f32 %v291, %v369
        %v371 = vpop.f32.mrb[0].mxu0
        %372 = vdwg.mxu0
        %v373 = vld [vmem:[%s1 + $0x80] sm:$0xff]
        %v374 = vld [vmem:[%s1 + $0x88] sm:$0xff]
        %v375 = vld [vmem:[%s1 + $0x90] sm:$0xff]
        %v376 = vld [vmem:[%s1 + $0x98] sm:$0xff]
        %v377 = vld [vmem:[%s1 + $0xa0] sm:$0xff]
        %v378 = vld [vmem:[%s1 + $0xa8] sm:$0xff]
        %v379 = vld [vmem:[%s1 + $0xb0] sm:$0xff]
        %v380 = vld [vmem:[%s1 + $0xb8] sm:$0xff]
        %vm381 = vcmask 1045504
        %v382 = vrot.slane %v180, 2
        %v383 = vrot.slane %v181, 2
        %v384 = vsel %vm381, %v382, %v383
        %v385 = vsel %vm214, %v384, 0
        %v387 = vsel %vm214, %v383, 0
        %389 = vmatprep.subr.mxu0 0.0
        %390 = vmatpush1.msra.mxu0 %v373
        %391 = vmatprep.subr.mxu0 0.0
        %392 = vmatpush1.msra.mxu0 %v374
        %393 = vmatprep.subr.mxu0 0.0
        %394 = vmatpush1.msra.mxu0 %v375
        %395 = vmatprep.subr.mxu0 0.0
        %396 = vmatpush1.msra.mxu0 %v376
        %397 = vmatprep.subr.mxu0 0.0
        %398 = vmatpush1.msra.mxu0 %v377
        %399 = vmatprep.subr.mxu0 0.0
        %400 = vmatpush1.msra.mxu0 %v378
        %401 = vmatprep.subr.mxu0 0.0
        %402 = vmatpush1.msra.mxu0 %v379
        %403 = vmatprep.subr.mxu0 0.0
        %404 = vmatpush1.msra.mxu0 %v380
        %405 = vmatprep.subr.mxu0 0.0
        %406 = vmatpush1.msra.mxu0 0.0
        %407 = vmatprep.subr.mxu0 0.0
        %408 = vmatpush1.msra.mxu0 0.0
        %409 = vmatprep.subr.mxu0 0.0
        %410 = vmatpush1.msra.mxu0 0.0
        %411 = vmatprep.subr.mxu0 0.0
        %412 = vmatpush1.msra.mxu0 0.0
        %413 = vmatprep.subr.mxu0 0.0
        %414 = vmatpush1.msra.mxu0 0.0
        %415 = vmatprep.subr.mxu0 0.0
        %416 = vmatpush1.msra.mxu0 0.0
        %417 = vmatprep.subr.mxu0 0.0
        %418 = vmatpush1.msra.mxu0 0.0
        %419 = vmatprep.subr.mxu0 0.0
        %420 = vmatpush1.msra.mxu0 0.0
        %421 = vmatprep.subr.mxu0 0.0
        %422 = vmatpush1.msra.mxu0 0.0
        %423 = vmatprep.subr.mxu0 0.0
        %424 = vmatpush1.msra.mxu0 0.0
        %425 = vmatprep.subr.mxu0 0.0
        %426 = vmatpush1.msra.mxu0 0.0
        %427 = vmatprep.subr.mxu0 0.0
        %428 = vmatpush1.msra.mxu0 0.0
        %429 = vmatprep.subr.mxu0 0.0
        %430 = vmatpush1.msra.mxu0 0.0
        %431 = vmatprep.subr.mxu0 0.0
        %432 = vmatpush1.msra.mxu0 0.0
        %433 = vmatprep.subr.mxu0 0.0
        %434 = vmatpush1.msra.mxu0 0.0
        %435 = vmatprep.subr.mxu0 0.0
        %436 = vmatpush1.msra.mxu0 0.0
        %437 = vmatprep.subr.mxu0 0.0
        %438 = vmatpush1.msra.mxu0 0.0
        %439 = vmatprep.subr.mxu0 0.0
        %440 = vmatpush1.msra.mxu0 0.0
        %441 = vmatprep.subr.mxu0 0.0
        %442 = vmatpush1.msra.mxu0 0.0
        %443 = vmatprep.subr.mxu0 0.0
        %444 = vmatpush1.msra.mxu0 0.0
        %445 = vmatprep.subr.mxu0 0.0
        %446 = vmatpush1.msra.mxu0 0.0
        %447 = vmatprep.subr.mxu0 0.0
        %448 = vmatpush1.msra.mxu0 0.0
        %449 = vmatprep.subr.mxu0 0.0
        %450 = vmatpush1.msra.mxu0 0.0
        %451 = vmatprep.subr.mxu0 0.0
        %452 = vmatpush1.msra.mxu0 0.0
        %453 = vmatprep.mubr.f32.mxu0 0.0
        %454 = vmatmul.mubr.f32.gmra.mrb[0].mxu0 %v385
        %v455 = vpop.f32.mrb[0].mxu0
        %v456 = vadd.f32 0.0, %v455
        %v457 = vpop.f32.mrb[0].mxu0
        %458 = vmatprep.mubr.f32.mxu0 0.0
        %459 = vmatmul.mubr.f32.gmra.mrb[0].mxu0 %v387
        %v460 = vpop.f32.mrb[0].mxu0
        %v461 = vadd.f32 0.0, %v460
        %v462 = vpop.f32.mrb[0].mxu0
        %463 = vdwg.mxu0
        %v464 = vadd.f32 %v365, %v456
        %v465 = vadd.f32 %v370, %v461
        %v466 = vld [vmem:[%s1 + $0xc0] sm:$0xff]
        %v467 = vld [vmem:[%s1 + $0xc8] sm:$0xff]
        %v468 = vld [vmem:[%s1 + $0xd0] sm:$0xff]
        %v469 = vld [vmem:[%s1 + $0xd8] sm:$0xff]
        %v470 = vld [vmem:[%s1 + $0xe0] sm:$0xff]
        %v471 = vld [vmem:[%s1 + $0xe8] sm:$0xff]
        %v472 = vld [vmem:[%s1 + $0xf0] sm:$0xff]
        %v473 = vld [vmem:[%s1 + $0xf8] sm:$0xff]
        %v475 = vsel %vm214, %v185, 0
        %v478 = vsel %vm214, %v186, 0
        %480 = vmatprep.subr.mxu0 0.0
        %481 = vmatpush1.msra.mxu0 %v466
        %482 = vmatprep.subr.mxu0 0.0
        %483 = vmatpush1.msra.mxu0 %v467
        %484 = vmatprep.subr.mxu0 0.0
        %485 = vmatpush1.msra.mxu0 %v468
        %486 = vmatprep.subr.mxu0 0.0
        %487 = vmatpush1.msra.mxu0 %v469
        %488 = vmatprep.subr.mxu0 0.0
        %489 = vmatpush1.msra.mxu0 %v470
        %490 = vmatprep.subr.mxu0 0.0
        %491 = vmatpush1.msra.mxu0 %v471
        %492 = vmatprep.subr.mxu0 0.0
        %493 = vmatpush1.msra.mxu0 %v472
        %494 = vmatprep.subr.mxu0 0.0
        %495 = vmatpush1.msra.mxu0 %v473
        %496 = vmatprep.subr.mxu0 0.0
        %497 = vmatpush1.msra.mxu0 0.0
        %498 = vmatprep.subr.mxu0 0.0
        %499 = vmatpush1.msra.mxu0 0.0
        %500 = vmatprep.subr.mxu0 0.0
        %501 = vmatpush1.msra.mxu0 0.0
        %502 = vmatprep.subr.mxu0 0.0
        %503 = vmatpush1.msra.mxu0 0.0
        %504 = vmatprep.subr.mxu0 0.0
        %505 = vmatpush1.msra.mxu0 0.0
        %506 = vmatprep.subr.mxu0 0.0
        %507 = vmatpush1.msra.mxu0 0.0
        %508 = vmatprep.subr.mxu0 0.0
        %509 = vmatpush1.msra.mxu0 0.0
        %510 = vmatprep.subr.mxu0 0.0
        %511 = vmatpush1.msra.mxu0 0.0
        %512 = vmatprep.subr.mxu0 0.0
        %513 = vmatpush1.msra.mxu0 0.0
        %514 = vmatprep.subr.mxu0 0.0
        %515 = vmatpush1.msra.mxu0 0.0
        %516 = vmatprep.subr.mxu0 0.0
        %517 = vmatpush1.msra.mxu0 0.0
        %518 = vmatprep.subr.mxu0 0.0
        %519 = vmatpush1.msra.mxu0 0.0
        %520 = vmatprep.subr.mxu0 0.0
        %521 = vmatpush1.msra.mxu0 0.0
        %522 = vmatprep.subr.mxu0 0.0
        %523 = vmatpush1.msra.mxu0 0.0
        %524 = vmatprep.subr.mxu0 0.0
        %525 = vmatpush1.msra.mxu0 0.0
        %526 = vmatprep.subr.mxu0 0.0
        %527 = vmatpush1.msra.mxu0 0.0
        %528 = vmatprep.subr.mxu0 0.0
        %529 = vmatpush1.msra.mxu0 0.0
        %530 = vmatprep.subr.mxu0 0.0
        %531 = vmatpush1.msra.mxu0 0.0
        %532 = vmatprep.subr.mxu0 0.0
        %533 = vmatpush1.msra.mxu0 0.0
        %534 = vmatprep.subr.mxu0 0.0
        %535 = vmatpush1.msra.mxu0 0.0
        %536 = vmatprep.subr.mxu0 0.0
        %537 = vmatpush1.msra.mxu0 0.0
        %538 = vmatprep.subr.mxu0 0.0
        %539 = vmatpush1.msra.mxu0 0.0
        %540 = vmatprep.subr.mxu0 0.0
        %541 = vmatpush1.msra.mxu0 0.0
        %542 = vmatprep.subr.mxu0 0.0
        %543 = vmatpush1.msra.mxu0 0.0
        %544 = vmatprep.mubr.f32.mxu0 0.0
        %545 = vmatmul.mubr.f32.gmra.mrb[0].mxu0 %v475
        %v546 = vpop.f32.mrb[0].mxu0
        %v547 = vadd.f32 0.0, %v546
        %v548 = vpop.f32.mrb[0].mxu0
        %549 = vmatprep.mubr.f32.mxu0 0.0
        %550 = vmatmul.mubr.f32.gmra.mrb[0].mxu0 %v478
        %v551 = vpop.f32.mrb[0].mxu0
        %v552 = vadd.f32 0.0, %v551
        %v553 = vpop.f32.mrb[0].mxu0
        %554 = vdwg.mxu0
        %v555 = vadd.f32 %v464, %v547
        %v556 = vadd.f32 %v465, %v552
        %v557 = vld [vmem:[%s1 + $0x100] sm:$0xff]
        %v558 = vld [vmem:[%s1 + $0x108] sm:$0xff]
        %v559 = vld [vmem:[%s1 + $0x110] sm:$0xff]
        %v560 = vld [vmem:[%s1 + $0x118] sm:$0xff]
        %v561 = vld [vmem:[%s1 + $0x120] sm:$0xff]
        %v562 = vld [vmem:[%s1 + $0x128] sm:$0xff]
        %v563 = vld [vmem:[%s1 + $0x130] sm:$0xff]
        %v564 = vld [vmem:[%s1 + $0x138] sm:$0xff]
        %v565 = vrot.slane %v185, 1
        %v566 = vrot.slane %v186, 1
        %v567 = vsel %vm210, %v565, %v566
        %v568 = vsel %vm214, %v567, 0
        %v570 = vsel %vm214, %v566, 0
        %572 = vmatprep.subr.mxu0 0.0
        %573 = vmatpush1.msra.mxu0 %v557
        %574 = vmatprep.subr.mxu0 0.0
        %575 = vmatpush1.msra.mxu0 %v558
        %576 = vmatprep.subr.mxu0 0.0
        %577 = vmatpush1.msra.mxu0 %v559
        %578 = vmatprep.subr.mxu0 0.0
        %579 = vmatpush1.msra.mxu0 %v560
        %580 = vmatprep.subr.mxu0 0.0
        %581 = vmatpush1.msra.mxu0 %v561
        %582 = vmatprep.subr.mxu0 0.0
        %583 = vmatpush1.msra.mxu0 %v562
        %584 = vmatprep.subr.mxu0 0.0
        %585 = vmatpush1.msra.mxu0 %v563
        %586 = vmatprep.subr.mxu0 0.0
        %587 = vmatpush1.msra.mxu0 %v564
        %588 = vmatprep.subr.mxu0 0.0
        %589 = vmatpush1.msra.mxu0 0.0
        %590 = vmatprep.subr.mxu0 0.0
        %591 = vmatpush1.msra.mxu0 0.0
        %592 = vmatprep.subr.mxu0 0.0
        %593 = vmatpush1.msra.mxu0 0.0
        %594 = vmatprep.subr.mxu0 0.0
        %595 = vmatpush1.msra.mxu0 0.0
        %596 = vmatprep.subr.mxu0 0.0
        %597 = vmatpush1.msra.mxu0 0.0
        %598 = vmatprep.subr.mxu0 0.0
        %599 = vmatpush1.msra.mxu0 0.0
        %600 = vmatprep.subr.mxu0 0.0
        %601 = vmatpush1.msra.mxu0 0.0
        %602 = vmatprep.subr.mxu0 0.0
        %603 = vmatpush1.msra.mxu0 0.0
        %604 = vmatprep.subr.mxu0 0.0
        %605 = vmatpush1.msra.mxu0 0.0
        %606 = vmatprep.subr.mxu0 0.0
        %607 = vmatpush1.msra.mxu0 0.0
        %608 = vmatprep.subr.mxu0 0.0
        %609 = vmatpush1.msra.mxu0 0.0
        %610 = vmatprep.subr.mxu0 0.0
        %611 = vmatpush1.msra.mxu0 0.0
        %612 = vmatprep.subr.mxu0 0.0
        %613 = vmatpush1.msra.mxu0 0.0
        %614 = vmatprep.subr.mxu0 0.0
        %615 = vmatpush1.msra.mxu0 0.0
        %616 = vmatprep.subr.mxu0 0.0
        %617 = vmatpush1.msra.mxu0 0.0
        %618 = vmatprep.subr.mxu0 0.0
        %619 = vmatpush1.msra.mxu0 0.0
        %620 = vmatprep.subr.mxu0 0.0
        %621 = vmatpush1.msra.mxu0 0.0
        %622 = vmatprep.subr.mxu0 0.0
        %623 = vmatpush1.msra.mxu0 0.0
        %624 = vmatprep.subr.mxu0 0.0
        %625 = vmatpush1.msra.mxu0 0.0
        %626 = vmatprep.subr.mxu0 0.0
        %627 = vmatpush1.msra.mxu0 0.0
        %628 = vmatprep.subr.mxu0 0.0
        %629 = vmatpush1.msra.mxu0 0.0
        %630 = vmatprep.subr.mxu0 0.0
        %631 = vmatpush1.msra.mxu0 0.0
        %632 = vmatprep.subr.mxu0 0.0
        %633 = vmatpush1.msra.mxu0 0.0
        %634 = vmatprep.subr.mxu0 0.0
        %635 = vmatpush1.msra.mxu0 0.0
        %636 = vmatprep.mubr.f32.mxu0 0.0
        %637 = vmatmul.mubr.f32.gmra.mrb[0].mxu0 %v568
        %v638 = vpop.f32.mrb[0].mxu0
        %v639 = vadd.f32 0.0, %v638
        %v640 = vpop.f32.mrb[0].mxu0
        %641 = vmatprep.mubr.f32.mxu0 0.0
        %642 = vmatmul.mubr.f32.gmra.mrb[0].mxu0 %v570
        %v643 = vpop.f32.mrb[0].mxu0
        %v644 = vadd.f32 0.0, %v643
        %v645 = vpop.f32.mrb[0].mxu0
        %646 = vdwg.mxu0
        %v647 = vadd.f32 %v555, %v639
        %v648 = vadd.f32 %v556, %v644
        %v649 = vld [vmem:[%s1 + $0x140] sm:$0xff]
        %v650 = vld [vmem:[%s1 + $0x148] sm:$0xff]
        %v651 = vld [vmem:[%s1 + $0x150] sm:$0xff]
        %v652 = vld [vmem:[%s1 + $0x158] sm:$0xff]
        %v653 = vld [vmem:[%s1 + $0x160] sm:$0xff]
        %v654 = vld [vmem:[%s1 + $0x168] sm:$0xff]
        %v655 = vld [vmem:[%s1 + $0x170] sm:$0xff]
        %v656 = vld [vmem:[%s1 + $0x178] sm:$0xff]
        %v657 = vrot.slane %v185, 2
        %v658 = vrot.slane %v186, 2
        %v659 = vsel %vm381, %v657, %v658
        %v660 = vsel %vm214, %v659, 0
        %v662 = vsel %vm214, %v658, 0
        %664 = vmatprep.subr.mxu0 0.0
        %665 = vmatpush1.msra.mxu0 %v649
        %666 = vmatprep.subr.mxu0 0.0
        %667 = vmatpush1.msra.mxu0 %v650
        %668 = vmatprep.subr.mxu0 0.0
        %669 = vmatpush1.msra.mxu0 %v651
        %670 = vmatprep.subr.mxu0 0.0
        %671 = vmatpush1.msra.mxu0 %v652
        %672 = vmatprep.subr.mxu0 0.0
        %673 = vmatpush1.msra.mxu0 %v653
        %674 = vmatprep.subr.mxu0 0.0
        %675 = vmatpush1.msra.mxu0 %v654
        %676 = vmatprep.subr.mxu0 0.0
        %677 = vmatpush1.msra.mxu0 %v655
        %678 = vmatprep.subr.mxu0 0.0
        %679 = vmatpush1.msra.mxu0 %v656
        %680 = vmatprep.subr.mxu0 0.0
        %681 = vmatpush1.msra.mxu0 0.0
        %682 = vmatprep.subr.mxu0 0.0
        %683 = vmatpush1.msra.mxu0 0.0
        %684 = vmatprep.subr.mxu0 0.0
        %685 = vmatpush1.msra.mxu0 0.0
        %686 = vmatprep.subr.mxu0 0.0
        %687 = vmatpush1.msra.mxu0 0.0
        %688 = vmatprep.subr.mxu0 0.0
        %689 = vmatpush1.msra.mxu0 0.0
        %690 = vmatprep.subr.mxu0 0.0
        %691 = vmatpush1.msra.mxu0 0.0
        %692 = vmatprep.subr.mxu0 0.0
        %693 = vmatpush1.msra.mxu0 0.0
        %694 = vmatprep.subr.mxu0 0.0
        %695 = vmatpush1.msra.mxu0 0.0
        %696 = vmatprep.subr.mxu0 0.0
        %697 = vmatpush1.msra.mxu0 0.0
        %698 = vmatprep.subr.mxu0 0.0
        %699 = vmatpush1.msra.mxu0 0.0
        %700 = vmatprep.subr.mxu0 0.0
        %701 = vmatpush1.msra.mxu0 0.0
        %702 = vmatprep.subr.mxu0 0.0
        %703 = vmatpush1.msra.mxu0 0.0
        %704 = vmatprep.subr.mxu0 0.0
        %705 = vmatpush1.msra.mxu0 0.0
        %706 = vmatprep.subr.mxu0 0.0
        %707 = vmatpush1.msra.mxu0 0.0
        %708 = vmatprep.subr.mxu0 0.0
        %709 = vmatpush1.msra.mxu0 0.0
        %710 = vmatprep.subr.mxu0 0.0
        %711 = vmatpush1.msra.mxu0 0.0
        %712 = vmatprep.subr.mxu0 0.0
        %713 = vmatpush1.msra.mxu0 0.0
        %714 = vmatprep.subr.mxu0 0.0
        %715 = vmatpush1.msra.mxu0 0.0
        %716 = vmatprep.subr.mxu0 0.0
        %717 = vmatpush1.msra.mxu0 0.0
        %718 = vmatprep.subr.mxu0 0.0
        %719 = vmatpush1.msra.mxu0 0.0
        %720 = vmatprep.subr.mxu0 0.0
        %721 = vmatpush1.msra.mxu0 0.0
        %722 = vmatprep.subr.mxu0 0.0
        %723 = vmatpush1.msra.mxu0 0.0
        %724 = vmatprep.subr.mxu0 0.0
        %725 = vmatpush1.msra.mxu0 0.0
        %726 = vmatprep.subr.mxu0 0.0
        %727 = vmatpush1.msra.mxu0 0.0
        %728 = vmatprep.mubr.f32.mxu0 0.0
        %729 = vmatmul.mubr.f32.gmra.mrb[0].mxu0 %v660
        %v730 = vpop.f32.mrb[0].mxu0
        %v731 = vadd.f32 0.0, %v730
        %v732 = vpop.f32.mrb[0].mxu0
        %733 = vmatprep.mubr.f32.mxu0 0.0
        %734 = vmatmul.mubr.f32.gmra.mrb[0].mxu0 %v662
        %v735 = vpop.f32.mrb[0].mxu0
        %v736 = vadd.f32 0.0, %v735
        %v737 = vpop.f32.mrb[0].mxu0
        %738 = vdwg.mxu0
        %v739 = vadd.f32 %v647, %v731
        %v740 = vadd.f32 %v648, %v736
        %v741 = vld [vmem:[%s1 + $0x180] sm:$0xff]
        %v742 = vld [vmem:[%s1 + $0x188] sm:$0xff]
        %v743 = vld [vmem:[%s1 + $0x190] sm:$0xff]
        %v744 = vld [vmem:[%s1 + $0x198] sm:$0xff]
        %v745 = vld [vmem:[%s1 + $0x1a0] sm:$0xff]
        %v746 = vld [vmem:[%s1 + $0x1a8] sm:$0xff]
        %v747 = vld [vmem:[%s1 + $0x1b0] sm:$0xff]
        %v748 = vld [vmem:[%s1 + $0x1b8] sm:$0xff]
        %v750 = vsel %vm214, %v190, 0
        %v753 = vsel %vm214, %v191, 0
        %755 = vmatprep.subr.mxu0 0.0
        %756 = vmatpush1.msra.mxu0 %v741
        %757 = vmatprep.subr.mxu0 0.0
        %758 = vmatpush1.msra.mxu0 %v742
        %759 = vmatprep.subr.mxu0 0.0
        %760 = vmatpush1.msra.mxu0 %v743
        %761 = vmatprep.subr.mxu0 0.0
        %762 = vmatpush1.msra.mxu0 %v744
        %763 = vmatprep.subr.mxu0 0.0
        %764 = vmatpush1.msra.mxu0 %v745
        %765 = vmatprep.subr.mxu0 0.0
        %766 = vmatpush1.msra.mxu0 %v746
        %767 = vmatprep.subr.mxu0 0.0
        %768 = vmatpush1.msra.mxu0 %v747
        %769 = vmatprep.subr.mxu0 0.0
        %770 = vmatpush1.msra.mxu0 %v748
        %771 = vmatprep.subr.mxu0 0.0
        %772 = vmatpush1.msra.mxu0 0.0
        %773 = vmatprep.subr.mxu0 0.0
        %774 = vmatpush1.msra.mxu0 0.0
        %775 = vmatprep.subr.mxu0 0.0
        %776 = vmatpush1.msra.mxu0 0.0
        %777 = vmatprep.subr.mxu0 0.0
        %778 = vmatpush1.msra.mxu0 0.0
        %779 = vmatprep.subr.mxu0 0.0
        %780 = vmatpush1.msra.mxu0 0.0
        %781 = vmatprep.subr.mxu0 0.0
        %782 = vmatpush1.msra.mxu0 0.0
        %783 = vmatprep.subr.mxu0 0.0
        %784 = vmatpush1.msra.mxu0 0.0
        %785 = vmatprep.subr.mxu0 0.0
        %786 = vmatpush1.msra.mxu0 0.0
        %787 = vmatprep.subr.mxu0 0.0
        %788 = vmatpush1.msra.mxu0 0.0
        %789 = vmatprep.subr.mxu0 0.0
        %790 = vmatpush1.msra.mxu0 0.0
        %791 = vmatprep.subr.mxu0 0.0
        %792 = vmatpush1.msra.mxu0 0.0
        %793 = vmatprep.subr.mxu0 0.0
        %794 = vmatpush1.msra.mxu0 0.0
        %795 = vmatprep.subr.mxu0 0.0
        %796 = vmatpush1.msra.mxu0 0.0
        %797 = vmatprep.subr.mxu0 0.0
        %798 = vmatpush1.msra.mxu0 0.0
        %799 = vmatprep.subr.mxu0 0.0
        %800 = vmatpush1.msra.mxu0 0.0
        %801 = vmatprep.subr.mxu0 0.0
        %802 = vmatpush1.msra.mxu0 0.0
        %803 = vmatprep.subr.mxu0 0.0
        %804 = vmatpush1.msra.mxu0 0.0
        %805 = vmatprep.subr.mxu0 0.0
        %806 = vmatpush1.msra.mxu0 0.0
        %807 = vmatprep.subr.mxu0 0.0
        %808 = vmatpush1.msra.mxu0 0.0
        %809 = vmatprep.subr.mxu0 0.0
        %810 = vmatpush1.msra.mxu0 0.0
        %811 = vmatprep.subr.mxu0 0.0
        %812 = vmatpush1.msra.mxu0 0.0
        %813 = vmatprep.subr.mxu0 0.0
        %814 = vmatpush1.msra.mxu0 0.0
        %815 = vmatprep.subr.mxu0 0.0
        %816 = vmatpush1.msra.mxu0 0.0
        %817 = vmatprep.subr.mxu0 0.0
        %818 = vmatpush1.msra.mxu0 0.0
        %819 = vmatprep.mubr.f32.mxu0 0.0
        %820 = vmatmul.mubr.f32.gmra.mrb[0].mxu0 %v750
        %v821 = vpop.f32.mrb[0].mxu0
        %v822 = vadd.f32 0.0, %v821
        %v823 = vpop.f32.mrb[0].mxu0
        %824 = vmatprep.mubr.f32.mxu0 0.0
        %825 = vmatmul.mubr.f32.gmra.mrb[0].mxu0 %v753
        %v826 = vpop.f32.mrb[0].mxu0
        %v827 = vadd.f32 0.0, %v826
        %v828 = vpop.f32.mrb[0].mxu0
        %829 = vdwg.mxu0
        %v830 = vadd.f32 %v739, %v822
        %v831 = vadd.f32 %v740, %v827
        %v832 = vld [vmem:[%s1 + $0x1c0] sm:$0xff]
        %v833 = vld [vmem:[%s1 + $0x1c8] sm:$0xff]
        %v834 = vld [vmem:[%s1 + $0x1d0] sm:$0xff]
        %v835 = vld [vmem:[%s1 + $0x1d8] sm:$0xff]
        %v836 = vld [vmem:[%s1 + $0x1e0] sm:$0xff]
        %v837 = vld [vmem:[%s1 + $0x1e8] sm:$0xff]
        %v838 = vld [vmem:[%s1 + $0x1f0] sm:$0xff]
        %v839 = vld [vmem:[%s1 + $0x1f8] sm:$0xff]
        %v840 = vrot.slane %v190, 1
        %v841 = vrot.slane %v191, 1
        %v842 = vsel %vm210, %v840, %v841
        %v843 = vsel %vm214, %v842, 0
        %v845 = vsel %vm214, %v841, 0
        %847 = vmatprep.subr.mxu0 0.0
        %848 = vmatpush1.msra.mxu0 %v832
        %849 = vmatprep.subr.mxu0 0.0
        %850 = vmatpush1.msra.mxu0 %v833
        %851 = vmatprep.subr.mxu0 0.0
        %852 = vmatpush1.msra.mxu0 %v834
        %853 = vmatprep.subr.mxu0 0.0
        %854 = vmatpush1.msra.mxu0 %v835
        %855 = vmatprep.subr.mxu0 0.0
        %856 = vmatpush1.msra.mxu0 %v836
        %857 = vmatprep.subr.mxu0 0.0
        %858 = vmatpush1.msra.mxu0 %v837
        %859 = vmatprep.subr.mxu0 0.0
        %860 = vmatpush1.msra.mxu0 %v838
        %861 = vmatprep.subr.mxu0 0.0
        %862 = vmatpush1.msra.mxu0 %v839
        %863 = vmatprep.subr.mxu0 0.0
        %864 = vmatpush1.msra.mxu0 0.0
        %865 = vmatprep.subr.mxu0 0.0
        %866 = vmatpush1.msra.mxu0 0.0
        %867 = vmatprep.subr.mxu0 0.0
        %868 = vmatpush1.msra.mxu0 0.0
        %869 = vmatprep.subr.mxu0 0.0
        %870 = vmatpush1.msra.mxu0 0.0
        %871 = vmatprep.subr.mxu0 0.0
        %872 = vmatpush1.msra.mxu0 0.0
        %873 = vmatprep.subr.mxu0 0.0
        %874 = vmatpush1.msra.mxu0 0.0
        %875 = vmatprep.subr.mxu0 0.0
        %876 = vmatpush1.msra.mxu0 0.0
        %877 = vmatprep.subr.mxu0 0.0
        %878 = vmatpush1.msra.mxu0 0.0
        %879 = vmatprep.subr.mxu0 0.0
        %880 = vmatpush1.msra.mxu0 0.0
        %881 = vmatprep.subr.mxu0 0.0
        %882 = vmatpush1.msra.mxu0 0.0
        %883 = vmatprep.subr.mxu0 0.0
        %884 = vmatpush1.msra.mxu0 0.0
        %885 = vmatprep.subr.mxu0 0.0
        %886 = vmatpush1.msra.mxu0 0.0
        %887 = vmatprep.subr.mxu0 0.0
        %888 = vmatpush1.msra.mxu0 0.0
        %889 = vmatprep.subr.mxu0 0.0
        %890 = vmatpush1.msra.mxu0 0.0
        %891 = vmatprep.subr.mxu0 0.0
        %892 = vmatpush1.msra.mxu0 0.0
        %893 = vmatprep.subr.mxu0 0.0
        %894 = vmatpush1.msra.mxu0 0.0
        %895 = vmatprep.subr.mxu0 0.0
        %896 = vmatpush1.msra.mxu0 0.0
        %897 = vmatprep.subr.mxu0 0.0
        %898 = vmatpush1.msra.mxu0 0.0
        %899 = vmatprep.subr.mxu0 0.0
        %900 = vmatpush1.msra.mxu0 0.0
        %901 = vmatprep.subr.mxu0 0.0
        %902 = vmatpush1.msra.mxu0 0.0
        %903 = vmatprep.subr.mxu0 0.0
        %904 = vmatpush1.msra.mxu0 0.0
        %905 = vmatprep.subr.mxu0 0.0
        %906 = vmatpush1.msra.mxu0 0.0
        %907 = vmatprep.subr.mxu0 0.0
        %908 = vmatpush1.msra.mxu0 0.0
        %909 = vmatprep.subr.mxu0 0.0
        %910 = vmatpush1.msra.mxu0 0.0
        %911 = vmatprep.mubr.f32.mxu0 0.0
        %912 = vmatmul.mubr.f32.gmra.mrb[0].mxu0 %v843
        %v913 = vpop.f32.mrb[0].mxu0
        %v914 = vadd.f32 0.0, %v913
        %v915 = vpop.f32.mrb[0].mxu0
        %916 = vmatprep.mubr.f32.mxu0 0.0
        %917 = vmatmul.mubr.f32.gmra.mrb[0].mxu0 %v845
        %v918 = vpop.f32.mrb[0].mxu0
        %v919 = vadd.f32 0.0, %v918
        %v920 = vpop.f32.mrb[0].mxu0
        %921 = vdwg.mxu0
        %v922 = vadd.f32 %v830, %v914
        %v923 = vadd.f32 %v831, %v919
        %v924 = vld [vmem:[%s1 + $0x200] sm:$0xff]
        %v925 = vld [vmem:[%s1 + $0x208] sm:$0xff]
        %v926 = vld [vmem:[%s1 + $0x210] sm:$0xff]
        %v927 = vld [vmem:[%s1 + $0x218] sm:$0xff]
        %v928 = vld [vmem:[%s1 + $0x220] sm:$0xff]
        %v929 = vld [vmem:[%s1 + $0x228] sm:$0xff]
        %v930 = vld [vmem:[%s1 + $0x230] sm:$0xff]
        %v931 = vld [vmem:[%s1 + $0x238] sm:$0xff]
        %v932 = vrot.slane %v190, 2
        %v933 = vrot.slane %v191, 2
        %v934 = vsel %vm381, %v932, %v933
        %v935 = vsel %vm214, %v934, 0
        %v937 = vsel %vm214, %v933, 0
        %939 = vmatprep.subr.mxu0 0.0
        %940 = vmatpush1.msra.mxu0 %v924
        %941 = vmatprep.subr.mxu0 0.0
        %942 = vmatpush1.msra.mxu0 %v925
        %943 = vmatprep.subr.mxu0 0.0
        %944 = vmatpush1.msra.mxu0 %v926
        %945 = vmatprep.subr.mxu0 0.0
        %946 = vmatpush1.msra.mxu0 %v927
        %947 = vmatprep.subr.mxu0 0.0
        %948 = vmatpush1.msra.mxu0 %v928
        %949 = vmatprep.subr.mxu0 0.0
        %950 = vmatpush1.msra.mxu0 %v929
        %951 = vmatprep.subr.mxu0 0.0
        %952 = vmatpush1.msra.mxu0 %v930
        %953 = vmatprep.subr.mxu0 0.0
        %954 = vmatpush1.msra.mxu0 %v931
        %955 = vmatprep.subr.mxu0 0.0
        %956 = vmatpush1.msra.mxu0 0.0
        %957 = vmatprep.subr.mxu0 0.0
        %958 = vmatpush1.msra.mxu0 0.0
        %959 = vmatprep.subr.mxu0 0.0
        %960 = vmatpush1.msra.mxu0 0.0
        %961 = vmatprep.subr.mxu0 0.0
        %962 = vmatpush1.msra.mxu0 0.0
        %963 = vmatprep.subr.mxu0 0.0
        %964 = vmatpush1.msra.mxu0 0.0
        %965 = vmatprep.subr.mxu0 0.0
        %966 = vmatpush1.msra.mxu0 0.0
        %967 = vmatprep.subr.mxu0 0.0
        %968 = vmatpush1.msra.mxu0 0.0
        %969 = vmatprep.subr.mxu0 0.0
        %970 = vmatpush1.msra.mxu0 0.0
        %971 = vmatprep.subr.mxu0 0.0
        %972 = vmatpush1.msra.mxu0 0.0
        %973 = vmatprep.subr.mxu0 0.0
        %974 = vmatpush1.msra.mxu0 0.0
        %975 = vmatprep.subr.mxu0 0.0
        %976 = vmatpush1.msra.mxu0 0.0
        %977 = vmatprep.subr.mxu0 0.0
        %978 = vmatpush1.msra.mxu0 0.0
        %979 = vmatprep.subr.mxu0 0.0
        %980 = vmatpush1.msra.mxu0 0.0
        %981 = vmatprep.subr.mxu0 0.0
        %982 = vmatpush1.msra.mxu0 0.0
        %983 = vmatprep.subr.mxu0 0.0
        %984 = vmatpush1.msra.mxu0 0.0
        %985 = vmatprep.subr.mxu0 0.0
        %986 = vmatpush1.msra.mxu0 0.0
        %987 = vmatprep.subr.mxu0 0.0
        %988 = vmatpush1.msra.mxu0 0.0
        %989 = vmatprep.subr.mxu0 0.0
        %990 = vmatpush1.msra.mxu0 0.0
        %991 = vmatprep.subr.mxu0 0.0
        %992 = vmatpush1.msra.mxu0 0.0
        %993 = vmatprep.subr.mxu0 0.0
        %994 = vmatpush1.msra.mxu0 0.0
        %995 = vmatprep.subr.mxu0 0.0
        %996 = vmatpush1.msra.mxu0 0.0
        %997 = vmatprep.subr.mxu0 0.0
        %998 = vmatpush1.msra.mxu0 0.0
        %999 = vmatprep.subr.mxu0 0.0
        %1000 = vmatpush1.msra.mxu0 0.0
        %1001 = vmatprep.subr.mxu0 0.0
        %1002 = vmatpush1.msra.mxu0 0.0
        %1003 = vmatprep.mubr.f32.mxu0 0.0
        %1004 = vmatmul.mubr.f32.gmra.mrb[0].mxu0 %v935
        %v1005 = vpop.f32.mrb[0].mxu0
        %v1006 = vadd.f32 0.0, %v1005
        %v1007 = vpop.f32.mrb[0].mxu0
        %1008 = vmatprep.mubr.f32.mxu0 0.0
        %1009 = vmatmul.mubr.f32.gmra.mrb[0].mxu0 %v937
        %v1010 = vpop.f32.mrb[0].mxu0
        %v1011 = vadd.f32 0.0, %v1010
        %v1012 = vpop.f32.mrb[0].mxu0
        %1013 = vdwg.mxu0
        %v1014 = vadd.f32 %v922, %v1006
        %v1015 = vadd.f32 %v923, %v1011
        %s1016 = sadd.s32 %s177, 3
        %s1017 = smul.u32 %s1016, 16
        %s1018 = scalar_lea.vmem %s165, %s1017
        %v1019 = vld [vmem:[%s1018] sm:$0xff]
        %v1020 = vld [vmem:[%s1018 + $0x8] sm:$0x7]
        %1021 = vmatprep.subr.mxu0 0.0
        %1022 = vmatpush1.msra.mxu0 %v200
        %1023 = vmatprep.subr.mxu0 0.0
        %1024 = vmatpush1.msra.mxu0 %v201
        %1025 = vmatprep.subr.mxu0 0.0
        %1026 = vmatpush1.msra.mxu0 %v202
        %1027 = vmatprep.subr.mxu0 0.0
        %1028 = vmatpush1.msra.mxu0 %v203
        %1029 = vmatprep.subr.mxu0 0.0
        %1030 = vmatpush1.msra.mxu0 %v204
        %1031 = vmatprep.subr.mxu0 0.0
        %1032 = vmatpush1.msra.mxu0 %v205
        %1033 = vmatprep.subr.mxu0 0.0
        %1034 = vmatpush1.msra.mxu0 %v206
        %1035 = vmatprep.subr.mxu0 0.0
        %1036 = vmatpush1.msra.mxu0 %v207
        %1037 = vmatprep.subr.mxu0 0.0
        %1038 = vmatpush1.msra.mxu0 0.0
        %1039 = vmatprep.subr.mxu0 0.0
        %1040 = vmatpush1.msra.mxu0 0.0
        %1041 = vmatprep.subr.mxu0 0.0
        %1042 = vmatpush1.msra.mxu0 0.0
        %1043 = vmatprep.subr.mxu0 0.0
        %1044 = vmatpush1.msra.mxu0 0.0
        %1045 = vmatprep.subr.mxu0 0.0
        %1046 = vmatpush1.msra.mxu0 0.0
        %1047 = vmatprep.subr.mxu0 0.0
        %1048 = vmatpush1.msra.mxu0 0.0
        %1049 = vmatprep.subr.mxu0 0.0
        %1050 = vmatpush1.msra.mxu0 0.0
        %1051 = vmatprep.subr.mxu0 0.0
        %1052 = vmatpush1.msra.mxu0 0.0
        %1053 = vmatprep.subr.mxu0 0.0
        %1054 = vmatpush1.msra.mxu0 0.0
        %1055 = vmatprep.subr.mxu0 0.0
        %1056 = vmatpush1.msra.mxu0 0.0
        %1057 = vmatprep.subr.mxu0 0.0
        %1058 = vmatpush1.msra.mxu0 0.0
        %1059 = vmatprep.subr.mxu0 0.0
        %1060 = vmatpush1.msra.mxu0 0.0
        %1061 = vmatprep.subr.mxu0 0.0
        %1062 = vmatpush1.msra.mxu0 0.0
        %1063 = vmatprep.subr.mxu0 0.0
        %1064 = vmatpush1.msra.mxu0 0.0
        %1065 = vmatprep.subr.mxu0 0.0
        %1066 = vmatpush1.msra.mxu0 0.0
        %1067 = vmatprep.subr.mxu0 0.0
        %1068 = vmatpush1.msra.mxu0 0.0
        %1069 = vmatprep.subr.mxu0 0.0
        %1070 = vmatpush1.msra.mxu0 0.0
        %1071 = vmatprep.subr.mxu0 0.0
        %1072 = vmatpush1.msra.mxu0 0.0
        %1073 = vmatprep.subr.mxu0 0.0
        %1074 = vmatpush1.msra.mxu0 0.0
        %1075 = vmatprep.subr.mxu0 0.0
        %1076 = vmatpush1.msra.mxu0 0.0
        %1077 = vmatprep.subr.mxu0 0.0
        %1078 = vmatpush1.msra.mxu0 0.0
        %1079 = vmatprep.subr.mxu0 0.0
        %1080 = vmatpush1.msra.mxu0 0.0
        %1081 = vmatprep.subr.mxu0 0.0
        %1082 = vmatpush1.msra.mxu0 0.0
        %1083 = vmatprep.subr.mxu0 0.0
        %1084 = vmatpush1.msra.mxu0 0.0
        %1085 = vmatprep.mubr.f32.mxu0 0.0
        %1086 = vmatmul.mubr.f32.gmra.mrb[0].mxu0 %v568
        %v1087 = vpop.f32.mrb[0].mxu0
        %v1088 = vadd.f32 0.0, %v1087
        %v1089 = vpop.f32.mrb[0].mxu0
        %1090 = vmatprep.mubr.f32.mxu0 0.0
        %1091 = vmatmul.mubr.f32.gmra.mrb[0].mxu0 %v570
        %v1092 = vpop.f32.mrb[0].mxu0
        %v1093 = vadd.f32 0.0, %v1092
        %v1094 = vpop.f32.mrb[0].mxu0
        %1095 = vdwg.mxu0
        %1096 = vmatprep.subr.mxu0 0.0
        %1097 = vmatpush1.msra.mxu0 %v192
        %1098 = vmatprep.subr.mxu0 0.0
        %1099 = vmatpush1.msra.mxu0 %v193
        %1100 = vmatprep.subr.mxu0 0.0
        %1101 = vmatpush1.msra.mxu0 %v194
        %1102 = vmatprep.subr.mxu0 0.0
        %1103 = vmatpush1.msra.mxu0 %v195
        %1104 = vmatprep.subr.mxu0 0.0
        %1105 = vmatpush1.msra.mxu0 %v196
        %1106 = vmatprep.subr.mxu0 0.0
        %1107 = vmatpush1.msra.mxu0 %v197
        %1108 = vmatprep.subr.mxu0 0.0
        %1109 = vmatpush1.msra.mxu0 %v198
        %1110 = vmatprep.subr.mxu0 0.0
        %1111 = vmatpush1.msra.mxu0 %v199
        %1112 = vmatprep.subr.mxu0 0.0
        %1113 = vmatpush1.msra.mxu0 0.0
        %1114 = vmatprep.subr.mxu0 0.0
        %1115 = vmatpush1.msra.mxu0 0.0
        %1116 = vmatprep.subr.mxu0 0.0
        %1117 = vmatpush1.msra.mxu0 0.0
        %1118 = vmatprep.subr.mxu0 0.0
        %1119 = vmatpush1.msra.mxu0 0.0
        %1120 = vmatprep.subr.mxu0 0.0
        %1121 = vmatpush1.msra.mxu0 0.0
        %1122 = vmatprep.subr.mxu0 0.0
        %1123 = vmatpush1.msra.mxu0 0.0
        %1124 = vmatprep.subr.mxu0 0.0
        %1125 = vmatpush1.msra.mxu0 0.0
        %1126 = vmatprep.subr.mxu0 0.0
        %1127 = vmatpush1.msra.mxu0 0.0
        %1128 = vmatprep.subr.mxu0 0.0
        %1129 = vmatpush1.msra.mxu0 0.0
        %1130 = vmatprep.subr.mxu0 0.0
        %1131 = vmatpush1.msra.mxu0 0.0
        %1132 = vmatprep.subr.mxu0 0.0
        %1133 = vmatpush1.msra.mxu0 0.0
        %1134 = vmatprep.subr.mxu0 0.0
        %1135 = vmatpush1.msra.mxu0 0.0
        %1136 = vmatprep.subr.mxu0 0.0
        %1137 = vmatpush1.msra.mxu0 0.0
        %1138 = vmatprep.subr.mxu0 0.0
        %1139 = vmatpush1.msra.mxu0 0.0
        %1140 = vmatprep.subr.mxu0 0.0
        %1141 = vmatpush1.msra.mxu0 0.0
        %1142 = vmatprep.subr.mxu0 0.0
        %1143 = vmatpush1.msra.mxu0 0.0
        %1144 = vmatprep.subr.mxu0 0.0
        %1145 = vmatpush1.msra.mxu0 0.0
        %1146 = vmatprep.subr.mxu0 0.0
        %1147 = vmatpush1.msra.mxu0 0.0
        %1148 = vmatprep.subr.mxu0 0.0
        %1149 = vmatpush1.msra.mxu0 0.0
        %1150 = vmatprep.subr.mxu0 0.0
        %1151 = vmatpush1.msra.mxu0 0.0
        %1152 = vmatprep.subr.mxu0 0.0
        %1153 = vmatpush1.msra.mxu0 0.0
        %1154 = vmatprep.subr.mxu0 0.0
        %1155 = vmatpush1.msra.mxu0 0.0
        %1156 = vmatprep.subr.mxu0 0.0
        %1157 = vmatpush1.msra.mxu0 0.0
        %1158 = vmatprep.subr.mxu0 0.0
        %1159 = vmatpush1.msra.mxu0 0.0
        %1160 = vmatprep.mubr.f32.mxu0 0.0
        %1161 = vmatmul.mubr.f32.gmra.mrb[0].mxu0 %v475
        %v1162 = vpop.f32.mrb[0].mxu0
        %v1163 = vadd.f32 %v1088, %v1162
        %v1164 = vpop.f32.mrb[0].mxu0
        %1165 = vmatprep.mubr.f32.mxu0 0.0
        %1166 = vmatmul.mubr.f32.gmra.mrb[0].mxu0 %v478
        %v1167 = vpop.f32.mrb[0].mxu0
        %v1168 = vadd.f32 %v1093, %v1167
        %v1169 = vpop.f32.mrb[0].mxu0
        %1170 = vdwg.mxu0
        %1171 = vmatprep.subr.mxu0 0.0
        %1172 = vmatpush1.msra.mxu0 %v373
        %1173 = vmatprep.subr.mxu0 0.0
        %1174 = vmatpush1.msra.mxu0 %v374
        %1175 = vmatprep.subr.mxu0 0.0
        %1176 = vmatpush1.msra.mxu0 %v375
        %1177 = vmatprep.subr.mxu0 0.0
        %1178 = vmatpush1.msra.mxu0 %v376
        %1179 = vmatprep.subr.mxu0 0.0
        %1180 = vmatpush1.msra.mxu0 %v377
        %1181 = vmatprep.subr.mxu0 0.0
        %1182 = vmatpush1.msra.mxu0 %v378
        %1183 = vmatprep.subr.mxu0 0.0
        %1184 = vmatpush1.msra.mxu0 %v379
        %1185 = vmatprep.subr.mxu0 0.0
        %1186 = vmatpush1.msra.mxu0 %v380
        %1187 = vmatprep.subr.mxu0 0.0
        %1188 = vmatpush1.msra.mxu0 0.0
        %1189 = vmatprep.subr.mxu0 0.0
        %1190 = vmatpush1.msra.mxu0 0.0
        %1191 = vmatprep.subr.mxu0 0.0
        %1192 = vmatpush1.msra.mxu0 0.0
        %1193 = vmatprep.subr.mxu0 0.0
        %1194 = vmatpush1.msra.mxu0 0.0
        %1195 = vmatprep.subr.mxu0 0.0
        %1196 = vmatpush1.msra.mxu0 0.0
        %1197 = vmatprep.subr.mxu0 0.0
        %1198 = vmatpush1.msra.mxu0 0.0
        %1199 = vmatprep.subr.mxu0 0.0
        %1200 = vmatpush1.msra.mxu0 0.0
        %1201 = vmatprep.subr.mxu0 0.0
        %1202 = vmatpush1.msra.mxu0 0.0
        %1203 = vmatprep.subr.mxu0 0.0
        %1204 = vmatpush1.msra.mxu0 0.0
        %1205 = vmatprep.subr.mxu0 0.0
        %1206 = vmatpush1.msra.mxu0 0.0
        %1207 = vmatprep.subr.mxu0 0.0
        %1208 = vmatpush1.msra.mxu0 0.0
        %1209 = vmatprep.subr.mxu0 0.0
        %1210 = vmatpush1.msra.mxu0 0.0
        %1211 = vmatprep.subr.mxu0 0.0
        %1212 = vmatpush1.msra.mxu0 0.0
        %1213 = vmatprep.subr.mxu0 0.0
        %1214 = vmatpush1.msra.mxu0 0.0
        %1215 = vmatprep.subr.mxu0 0.0
        %1216 = vmatpush1.msra.mxu0 0.0
        %1217 = vmatprep.subr.mxu0 0.0
        %1218 = vmatpush1.msra.mxu0 0.0
        %1219 = vmatprep.subr.mxu0 0.0
        %1220 = vmatpush1.msra.mxu0 0.0
        %1221 = vmatprep.subr.mxu0 0.0
        %1222 = vmatpush1.msra.mxu0 0.0
        %1223 = vmatprep.subr.mxu0 0.0
        %1224 = vmatpush1.msra.mxu0 0.0
        %1225 = vmatprep.subr.mxu0 0.0
        %1226 = vmatpush1.msra.mxu0 0.0
        %1227 = vmatprep.subr.mxu0 0.0
        %1228 = vmatpush1.msra.mxu0 0.0
        %1229 = vmatprep.subr.mxu0 0.0
        %1230 = vmatpush1.msra.mxu0 0.0
        %1231 = vmatprep.subr.mxu0 0.0
        %1232 = vmatpush1.msra.mxu0 0.0
        %1233 = vmatprep.subr.mxu0 0.0
        %1234 = vmatpush1.msra.mxu0 0.0
        %1235 = vmatprep.mubr.f32.mxu0 0.0
        %1236 = vmatmul.mubr.f32.gmra.mrb[0].mxu0 %v660
        %v1237 = vpop.f32.mrb[0].mxu0
        %v1238 = vadd.f32 0.0, %v1237
        %v1239 = vpop.f32.mrb[0].mxu0
        %1240 = vmatprep.mubr.f32.mxu0 0.0
        %1241 = vmatmul.mubr.f32.gmra.mrb[0].mxu0 %v662
        %v1242 = vpop.f32.mrb[0].mxu0
        %v1243 = vadd.f32 0.0, %v1242
        %v1244 = vpop.f32.mrb[0].mxu0
        %1245 = vdwg.mxu0
        %v1246 = vadd.f32 %v1163, %v1238
        %v1247 = vadd.f32 %v1168, %v1243
        %1248 = vmatprep.subr.mxu0 0.0
        %1249 = vmatpush1.msra.mxu0 %v466
        %1250 = vmatprep.subr.mxu0 0.0
        %1251 = vmatpush1.msra.mxu0 %v467
        %1252 = vmatprep.subr.mxu0 0.0
        %1253 = vmatpush1.msra.mxu0 %v468
        %1254 = vmatprep.subr.mxu0 0.0
        %1255 = vmatpush1.msra.mxu0 %v469
        %1256 = vmatprep.subr.mxu0 0.0
        %1257 = vmatpush1.msra.mxu0 %v470
        %1258 = vmatprep.subr.mxu0 0.0
        %1259 = vmatpush1.msra.mxu0 %v471
        %1260 = vmatprep.subr.mxu0 0.0
        %1261 = vmatpush1.msra.mxu0 %v472
        %1262 = vmatprep.subr.mxu0 0.0
        %1263 = vmatpush1.msra.mxu0 %v473
        %1264 = vmatprep.subr.mxu0 0.0
        %1265 = vmatpush1.msra.mxu0 0.0
        %1266 = vmatprep.subr.mxu0 0.0
        %1267 = vmatpush1.msra.mxu0 0.0
        %1268 = vmatprep.subr.mxu0 0.0
        %1269 = vmatpush1.msra.mxu0 0.0
        %1270 = vmatprep.subr.mxu0 0.0
        %1271 = vmatpush1.msra.mxu0 0.0
        %1272 = vmatprep.subr.mxu0 0.0
        %1273 = vmatpush1.msra.mxu0 0.0
        %1274 = vmatprep.subr.mxu0 0.0
        %1275 = vmatpush1.msra.mxu0 0.0
        %1276 = vmatprep.subr.mxu0 0.0
        %1277 = vmatpush1.msra.mxu0 0.0
        %1278 = vmatprep.subr.mxu0 0.0
        %1279 = vmatpush1.msra.mxu0 0.0
        %1280 = vmatprep.subr.mxu0 0.0
        %1281 = vmatpush1.msra.mxu0 0.0
        %1282 = vmatprep.subr.mxu0 0.0
        %1283 = vmatpush1.msra.mxu0 0.0
        %1284 = vmatprep.subr.mxu0 0.0
        %1285 = vmatpush1.msra.mxu0 0.0
        %1286 = vmatprep.subr.mxu0 0.0
        %1287 = vmatpush1.msra.mxu0 0.0
        %1288 = vmatprep.subr.mxu0 0.0
        %1289 = vmatpush1.msra.mxu0 0.0
        %1290 = vmatprep.subr.mxu0 0.0
        %1291 = vmatpush1.msra.mxu0 0.0
        %1292 = vmatprep.subr.mxu0 0.0
        %1293 = vmatpush1.msra.mxu0 0.0
        %1294 = vmatprep.subr.mxu0 0.0
        %1295 = vmatpush1.msra.mxu0 0.0
        %1296 = vmatprep.subr.mxu0 0.0
        %1297 = vmatpush1.msra.mxu0 0.0
        %1298 = vmatprep.subr.mxu0 0.0
        %1299 = vmatpush1.msra.mxu0 0.0
        %1300 = vmatprep.subr.mxu0 0.0
        %1301 = vmatpush1.msra.mxu0 0.0
        %1302 = vmatprep.subr.mxu0 0.0
        %1303 = vmatpush1.msra.mxu0 0.0
        %1304 = vmatprep.subr.mxu0 0.0
        %1305 = vmatpush1.msra.mxu0 0.0
        %1306 = vmatprep.subr.mxu0 0.0
        %1307 = vmatpush1.msra.mxu0 0.0
        %1308 = vmatprep.subr.mxu0 0.0
        %1309 = vmatpush1.msra.mxu0 0.0
        %1310 = vmatprep.subr.mxu0 0.0
        %1311 = vmatpush1.msra.mxu0 0.0
        %1312 = vmatprep.mubr.f32.mxu0 0.0
        %1313 = vmatmul.mubr.f32.gmra.mrb[0].mxu0 %v750
        %v1314 = vpop.f32.mrb[0].mxu0
        %v1315 = vadd.f32 0.0, %v1314
        %v1316 = vpop.f32.mrb[0].mxu0
        %1317 = vmatprep.mubr.f32.mxu0 0.0
        %1318 = vmatmul.mubr.f32.gmra.mrb[0].mxu0 %v753
        %v1319 = vpop.f32.mrb[0].mxu0
        %v1320 = vadd.f32 0.0, %v1319
        %v1321 = vpop.f32.mrb[0].mxu0
        %1322 = vdwg.mxu0
        %v1323 = vadd.f32 %v1246, %v1315
        %v1324 = vadd.f32 %v1247, %v1320
        %1325 = vmatprep.subr.mxu0 0.0
        %1326 = vmatpush1.msra.mxu0 %v557
        %1327 = vmatprep.subr.mxu0 0.0
        %1328 = vmatpush1.msra.mxu0 %v558
        %1329 = vmatprep.subr.mxu0 0.0
        %1330 = vmatpush1.msra.mxu0 %v559
        %1331 = vmatprep.subr.mxu0 0.0
        %1332 = vmatpush1.msra.mxu0 %v560
        %1333 = vmatprep.subr.mxu0 0.0
        %1334 = vmatpush1.msra.mxu0 %v561
        %1335 = vmatprep.subr.mxu0 0.0
        %1336 = vmatpush1.msra.mxu0 %v562
        %1337 = vmatprep.subr.mxu0 0.0
        %1338 = vmatpush1.msra.mxu0 %v563
        %1339 = vmatprep.subr.mxu0 0.0
        %1340 = vmatpush1.msra.mxu0 %v564
        %1341 = vmatprep.subr.mxu0 0.0
        %1342 = vmatpush1.msra.mxu0 0.0
        %1343 = vmatprep.subr.mxu0 0.0
        %1344 = vmatpush1.msra.mxu0 0.0
        %1345 = vmatprep.subr.mxu0 0.0
        %1346 = vmatpush1.msra.mxu0 0.0
        %1347 = vmatprep.subr.mxu0 0.0
        %1348 = vmatpush1.msra.mxu0 0.0
        %1349 = vmatprep.subr.mxu0 0.0
        %1350 = vmatpush1.msra.mxu0 0.0
        %1351 = vmatprep.subr.mxu0 0.0
        %1352 = vmatpush1.msra.mxu0 0.0
        %1353 = vmatprep.subr.mxu0 0.0
        %1354 = vmatpush1.msra.mxu0 0.0
        %1355 = vmatprep.subr.mxu0 0.0
        %1356 = vmatpush1.msra.mxu0 0.0
        %1357 = vmatprep.subr.mxu0 0.0
        %1358 = vmatpush1.msra.mxu0 0.0
        %1359 = vmatprep.subr.mxu0 0.0
        %1360 = vmatpush1.msra.mxu0 0.0
        %1361 = vmatprep.subr.mxu0 0.0
        %1362 = vmatpush1.msra.mxu0 0.0
        %1363 = vmatprep.subr.mxu0 0.0
        %1364 = vmatpush1.msra.mxu0 0.0
        %1365 = vmatprep.subr.mxu0 0.0
        %1366 = vmatpush1.msra.mxu0 0.0
        %1367 = vmatprep.subr.mxu0 0.0
        %1368 = vmatpush1.msra.mxu0 0.0
        %1369 = vmatprep.subr.mxu0 0.0
        %1370 = vmatpush1.msra.mxu0 0.0
        %1371 = vmatprep.subr.mxu0 0.0
        %1372 = vmatpush1.msra.mxu0 0.0
        %1373 = vmatprep.subr.mxu0 0.0
        %1374 = vmatpush1.msra.mxu0 0.0
        %1375 = vmatprep.subr.mxu0 0.0
        %1376 = vmatpush1.msra.mxu0 0.0
        %1377 = vmatprep.subr.mxu0 0.0
        %1378 = vmatpush1.msra.mxu0 0.0
        %1379 = vmatprep.subr.mxu0 0.0
        %1380 = vmatpush1.msra.mxu0 0.0
        %1381 = vmatprep.subr.mxu0 0.0
        %1382 = vmatpush1.msra.mxu0 0.0
        %1383 = vmatprep.subr.mxu0 0.0
        %1384 = vmatpush1.msra.mxu0 0.0
        %1385 = vmatprep.subr.mxu0 0.0
        %1386 = vmatpush1.msra.mxu0 0.0
        %1387 = vmatprep.subr.mxu0 0.0
        %1388 = vmatpush1.msra.mxu0 0.0
        %1389 = vmatprep.mubr.f32.mxu0 0.0
        %1390 = vmatmul.mubr.f32.gmra.mrb[0].mxu0 %v843
        %v1391 = vpop.f32.mrb[0].mxu0
        %v1392 = vadd.f32 0.0, %v1391
        %v1393 = vpop.f32.mrb[0].mxu0
        %1394 = vmatprep.mubr.f32.mxu0 0.0
        %1395 = vmatmul.mubr.f32.gmra.mrb[0].mxu0 %v845
        %v1396 = vpop.f32.mrb[0].mxu0
        %v1397 = vadd.f32 0.0, %v1396
        %v1398 = vpop.f32.mrb[0].mxu0
        %1399 = vdwg.mxu0
        %v1400 = vadd.f32 %v1323, %v1392
        %v1401 = vadd.f32 %v1324, %v1397
        %1402 = vmatprep.subr.mxu0 0.0
        %1403 = vmatpush1.msra.mxu0 %v649
        %1404 = vmatprep.subr.mxu0 0.0
        %1405 = vmatpush1.msra.mxu0 %v650
        %1406 = vmatprep.subr.mxu0 0.0
        %1407 = vmatpush1.msra.mxu0 %v651
        %1408 = vmatprep.subr.mxu0 0.0
        %1409 = vmatpush1.msra.mxu0 %v652
        %1410 = vmatprep.subr.mxu0 0.0
        %1411 = vmatpush1.msra.mxu0 %v653
        %1412 = vmatprep.subr.mxu0 0.0
        %1413 = vmatpush1.msra.mxu0 %v654
        %1414 = vmatprep.subr.mxu0 0.0
        %1415 = vmatpush1.msra.mxu0 %v655
        %1416 = vmatprep.subr.mxu0 0.0
        %1417 = vmatpush1.msra.mxu0 %v656
        %1418 = vmatprep.subr.mxu0 0.0
        %1419 = vmatpush1.msra.mxu0 0.0
        %1420 = vmatprep.subr.mxu0 0.0
        %1421 = vmatpush1.msra.mxu0 0.0
        %1422 = vmatprep.subr.mxu0 0.0
        %1423 = vmatpush1.msra.mxu0 0.0
        %1424 = vmatprep.subr.mxu0 0.0
        %1425 = vmatpush1.msra.mxu0 0.0
        %1426 = vmatprep.subr.mxu0 0.0
        %1427 = vmatpush1.msra.mxu0 0.0
        %1428 = vmatprep.subr.mxu0 0.0
        %1429 = vmatpush1.msra.mxu0 0.0
        %1430 = vmatprep.subr.mxu0 0.0
        %1431 = vmatpush1.msra.mxu0 0.0
        %1432 = vmatprep.subr.mxu0 0.0
        %1433 = vmatpush1.msra.mxu0 0.0
        %1434 = vmatprep.subr.mxu0 0.0
        %1435 = vmatpush1.msra.mxu0 0.0
        %1436 = vmatprep.subr.mxu0 0.0
        %1437 = vmatpush1.msra.mxu0 0.0
        %1438 = vmatprep.subr.mxu0 0.0
        %1439 = vmatpush1.msra.mxu0 0.0
        %1440 = vmatprep.subr.mxu0 0.0
        %1441 = vmatpush1.msra.mxu0 0.0
        %1442 = vmatprep.subr.mxu0 0.0
        %1443 = vmatpush1.msra.mxu0 0.0
        %1444 = vmatprep.subr.mxu0 0.0
        %1445 = vmatpush1.msra.mxu0 0.0
        %1446 = vmatprep.subr.mxu0 0.0
        %1447 = vmatpush1.msra.mxu0 0.0
        %1448 = vmatprep.subr.mxu0 0.0
        %1449 = vmatpush1.msra.mxu0 0.0
        %1450 = vmatprep.subr.mxu0 0.0
        %1451 = vmatpush1.msra.mxu0 0.0
        %1452 = vmatprep.subr.mxu0 0.0
        %1453 = vmatpush1.msra.mxu0 0.0
        %1454 = vmatprep.subr.mxu0 0.0
        %1455 = vmatpush1.msra.mxu0 0.0
        %1456 = vmatprep.subr.mxu0 0.0
        %1457 = vmatpush1.msra.mxu0 0.0
        %1458 = vmatprep.subr.mxu0 0.0
        %1459 = vmatpush1.msra.mxu0 0.0
        %1460 = vmatprep.subr.mxu0 0.0
        %1461 = vmatpush1.msra.mxu0 0.0
        %1462 = vmatprep.subr.mxu0 0.0
        %1463 = vmatpush1.msra.mxu0 0.0
        %1464 = vmatprep.subr.mxu0 0.0
        %1465 = vmatpush1.msra.mxu0 0.0
        %1466 = vmatprep.mubr.f32.mxu0 0.0
        %1467 = vmatmul.mubr.f32.gmra.mrb[0].mxu0 %v935
        %v1468 = vpop.f32.mrb[0].mxu0
        %v1469 = vadd.f32 0.0, %v1468
        %v1470 = vpop.f32.mrb[0].mxu0
        %1471 = vmatprep.mubr.f32.mxu0 0.0
        %1472 = vmatmul.mubr.f32.gmra.mrb[0].mxu0 %v937
        %v1473 = vpop.f32.mrb[0].mxu0
        %v1474 = vadd.f32 0.0, %v1473
        %v1475 = vpop.f32.mrb[0].mxu0
        %1476 = vdwg.mxu0
        %v1477 = vadd.f32 %v1400, %v1469
        %v1478 = vadd.f32 %v1401, %v1474
        %v1480 = vsel %vm214, %v1019, 0
        %v1483 = vsel %vm214, %v1020, 0
        %1485 = vmatprep.subr.mxu0 0.0
        %1486 = vmatpush1.msra.mxu0 %v741
        %1487 = vmatprep.subr.mxu0 0.0
        %1488 = vmatpush1.msra.mxu0 %v742
        %1489 = vmatprep.subr.mxu0 0.0
        %1490 = vmatpush1.msra.mxu0 %v743
        %1491 = vmatprep.subr.mxu0 0.0
        %1492 = vmatpush1.msra.mxu0 %v744
        %1493 = vmatprep.subr.mxu0 0.0
        %1494 = vmatpush1.msra.mxu0 %v745
        %1495 = vmatprep.subr.mxu0 0.0
        %1496 = vmatpush1.msra.mxu0 %v746
        %1497 = vmatprep.subr.mxu0 0.0
        %1498 = vmatpush1.msra.mxu0 %v747
        %1499 = vmatprep.subr.mxu0 0.0
        %1500 = vmatpush1.msra.mxu0 %v748
        %1501 = vmatprep.subr.mxu0 0.0
        %1502 = vmatpush1.msra.mxu0 0.0
        %1503 = vmatprep.subr.mxu0 0.0
        %1504 = vmatpush1.msra.mxu0 0.0
        %1505 = vmatprep.subr.mxu0 0.0
        %1506 = vmatpush1.msra.mxu0 0.0
        %1507 = vmatprep.subr.mxu0 0.0
        %1508 = vmatpush1.msra.mxu0 0.0
        %1509 = vmatprep.subr.mxu0 0.0
        %1510 = vmatpush1.msra.mxu0 0.0
        %1511 = vmatprep.subr.mxu0 0.0
        %1512 = vmatpush1.msra.mxu0 0.0
        %1513 = vmatprep.subr.mxu0 0.0
        %1514 = vmatpush1.msra.mxu0 0.0
        %1515 = vmatprep.subr.mxu0 0.0
        %1516 = vmatpush1.msra.mxu0 0.0
        %1517 = vmatprep.subr.mxu0 0.0
        %1518 = vmatpush1.msra.mxu0 0.0
        %1519 = vmatprep.subr.mxu0 0.0
        %1520 = vmatpush1.msra.mxu0 0.0
        %1521 = vmatprep.subr.mxu0 0.0
        %1522 = vmatpush1.msra.mxu0 0.0
        %1523 = vmatprep.subr.mxu0 0.0
        %1524 = vmatpush1.msra.mxu0 0.0
        %1525 = vmatprep.subr.mxu0 0.0
        %1526 = vmatpush1.msra.mxu0 0.0
        %1527 = vmatprep.subr.mxu0 0.0
        %1528 = vmatpush1.msra.mxu0 0.0
        %1529 = vmatprep.subr.mxu0 0.0
        %1530 = vmatpush1.msra.mxu0 0.0
        %1531 = vmatprep.subr.mxu0 0.0
        %1532 = vmatpush1.msra.mxu0 0.0
        %1533 = vmatprep.subr.mxu0 0.0
        %1534 = vmatpush1.msra.mxu0 0.0
        %1535 = vmatprep.subr.mxu0 0.0
        %1536 = vmatpush1.msra.mxu0 0.0
        %1537 = vmatprep.subr.mxu0 0.0
        %1538 = vmatpush1.msra.mxu0 0.0
        %1539 = vmatprep.subr.mxu0 0.0
        %1540 = vmatpush1.msra.mxu0 0.0
        %1541 = vmatprep.subr.mxu0 0.0
        %1542 = vmatpush1.msra.mxu0 0.0
        %1543 = vmatprep.subr.mxu0 0.0
        %1544 = vmatpush1.msra.mxu0 0.0
        %1545 = vmatprep.subr.mxu0 0.0
        %1546 = vmatpush1.msra.mxu0 0.0
        %1547 = vmatprep.subr.mxu0 0.0
        %1548 = vmatpush1.msra.mxu0 0.0
        %1549 = vmatprep.mubr.f32.mxu0 0.0
        %1550 = vmatmul.mubr.f32.gmra.mrb[0].mxu0 %v1480
        %v1551 = vpop.f32.mrb[0].mxu0
        %v1552 = vadd.f32 0.0, %v1551
        %v1553 = vpop.f32.mrb[0].mxu0
        %1554 = vmatprep.mubr.f32.mxu0 0.0
        %1555 = vmatmul.mubr.f32.gmra.mrb[0].mxu0 %v1483
        %v1556 = vpop.f32.mrb[0].mxu0
        %v1557 = vadd.f32 0.0, %v1556
        %v1558 = vpop.f32.mrb[0].mxu0
        %1559 = vdwg.mxu0
        %v1560 = vadd.f32 %v1477, %v1552
        %v1561 = vadd.f32 %v1478, %v1557
        %v1562 = vrot.slane %v1019, 1
        %v1563 = vrot.slane %v1020, 1
        %v1564 = vsel %vm210, %v1562, %v1563
        %v1565 = vsel %vm214, %v1564, 0
        %v1567 = vsel %vm214, %v1563, 0
        %1569 = vmatprep.subr.mxu0 0.0
        %1570 = vmatpush1.msra.mxu0 %v832
        %1571 = vmatprep.subr.mxu0 0.0
        %1572 = vmatpush1.msra.mxu0 %v833
        %1573 = vmatprep.subr.mxu0 0.0
        %1574 = vmatpush1.msra.mxu0 %v834
        %1575 = vmatprep.subr.mxu0 0.0
        %1576 = vmatpush1.msra.mxu0 %v835
        %1577 = vmatprep.subr.mxu0 0.0
        %1578 = vmatpush1.msra.mxu0 %v836
        %1579 = vmatprep.subr.mxu0 0.0
        %1580 = vmatpush1.msra.mxu0 %v837
        %1581 = vmatprep.subr.mxu0 0.0
        %1582 = vmatpush1.msra.mxu0 %v838
        %1583 = vmatprep.subr.mxu0 0.0
        %1584 = vmatpush1.msra.mxu0 %v839
        %1585 = vmatprep.subr.mxu0 0.0
        %1586 = vmatpush1.msra.mxu0 0.0
        %1587 = vmatprep.subr.mxu0 0.0
        %1588 = vmatpush1.msra.mxu0 0.0
        %1589 = vmatprep.subr.mxu0 0.0
        %1590 = vmatpush1.msra.mxu0 0.0
        %1591 = vmatprep.subr.mxu0 0.0
        %1592 = vmatpush1.msra.mxu0 0.0
        %1593 = vmatprep.subr.mxu0 0.0
        %1594 = vmatpush1.msra.mxu0 0.0
        %1595 = vmatprep.subr.mxu0 0.0
        %1596 = vmatpush1.msra.mxu0 0.0
        %1597 = vmatprep.subr.mxu0 0.0
        %1598 = vmatpush1.msra.mxu0 0.0
        %1599 = vmatprep.subr.mxu0 0.0
        %1600 = vmatpush1.msra.mxu0 0.0
        %1601 = vmatprep.subr.mxu0 0.0
        %1602 = vmatpush1.msra.mxu0 0.0
        %1603 = vmatprep.subr.mxu0 0.0
        %1604 = vmatpush1.msra.mxu0 0.0
        %1605 = vmatprep.subr.mxu0 0.0
        %1606 = vmatpush1.msra.mxu0 0.0
        %1607 = vmatprep.subr.mxu0 0.0
        %1608 = vmatpush1.msra.mxu0 0.0
        %1609 = vmatprep.subr.mxu0 0.0
        %1610 = vmatpush1.msra.mxu0 0.0
        %1611 = vmatprep.subr.mxu0 0.0
        %1612 = vmatpush1.msra.mxu0 0.0
        %1613 = vmatprep.subr.mxu0 0.0
        %1614 = vmatpush1.msra.mxu0 0.0
        %1615 = vmatprep.subr.mxu0 0.0
        %1616 = vmatpush1.msra.mxu0 0.0
        %1617 = vmatprep.subr.mxu0 0.0
        %1618 = vmatpush1.msra.mxu0 0.0
        %1619 = vmatprep.subr.mxu0 0.0
        %1620 = vmatpush1.msra.mxu0 0.0
        %1621 = vmatprep.subr.mxu0 0.0
        %1622 = vmatpush1.msra.mxu0 0.0
        %1623 = vmatprep.subr.mxu0 0.0
        %1624 = vmatpush1.msra.mxu0 0.0
        %1625 = vmatprep.subr.mxu0 0.0
        %1626 = vmatpush1.msra.mxu0 0.0
        %1627 = vmatprep.subr.mxu0 0.0
        %1628 = vmatpush1.msra.mxu0 0.0
        %1629 = vmatprep.subr.mxu0 0.0
        %1630 = vmatpush1.msra.mxu0 0.0
        %1631 = vmatprep.subr.mxu0 0.0
        %1632 = vmatpush1.msra.mxu0 0.0
        %1633 = vmatprep.mubr.f32.mxu0 0.0
        %1634 = vmatmul.mubr.f32.gmra.mrb[0].mxu0 %v1565
        %v1635 = vpop.f32.mrb[0].mxu0
        %v1636 = vadd.f32 0.0, %v1635
        %v1637 = vpop.f32.mrb[0].mxu0
        %1638 = vmatprep.mubr.f32.mxu0 0.0
        %1639 = vmatmul.mubr.f32.gmra.mrb[0].mxu0 %v1567
        %v1640 = vpop.f32.mrb[0].mxu0
        %v1641 = vadd.f32 0.0, %v1640
        %v1642 = vpop.f32.mrb[0].mxu0
        %1643 = vdwg.mxu0
        %v1644 = vadd.f32 %v1560, %v1636
        %v1645 = vadd.f32 %v1561, %v1641
        %v1646 = vrot.slane %v1019, 2
        %v1647 = vrot.slane %v1020, 2
        %v1648 = vsel %vm381, %v1646, %v1647
        %v1649 = vsel %vm214, %v1648, 0
        %v1651 = vsel %vm214, %v1647, 0
        %1653 = vmatprep.subr.mxu0 0.0
        %1654 = vmatpush1.msra.mxu0 %v924
        %1655 = vmatprep.subr.mxu0 0.0
        %1656 = vmatpush1.msra.mxu0 %v925
        %1657 = vmatprep.subr.mxu0 0.0
        %1658 = vmatpush1.msra.mxu0 %v926
        %1659 = vmatprep.subr.mxu0 0.0
        %1660 = vmatpush1.msra.mxu0 %v927
        %1661 = vmatprep.subr.mxu0 0.0
        %1662 = vmatpush1.msra.mxu0 %v928
        %1663 = vmatprep.subr.mxu0 0.0
        %1664 = vmatpush1.msra.mxu0 %v929
        %1665 = vmatprep.subr.mxu0 0.0
        %1666 = vmatpush1.msra.mxu0 %v930
        %1667 = vmatprep.subr.mxu0 0.0
        %1668 = vmatpush1.msra.mxu0 %v931
        %1669 = vmatprep.subr.mxu0 0.0
        %1670 = vmatpush1.msra.mxu0 0.0
        %1671 = vmatprep.subr.mxu0 0.0
        %1672 = vmatpush1.msra.mxu0 0.0
        %1673 = vmatprep.subr.mxu0 0.0
        %1674 = vmatpush1.msra.mxu0 0.0
        %1675 = vmatprep.subr.mxu0 0.0
        %1676 = vmatpush1.msra.mxu0 0.0
        %1677 = vmatprep.subr.mxu0 0.0
        %1678 = vmatpush1.msra.mxu0 0.0
        %1679 = vmatprep.subr.mxu0 0.0
        %1680 = vmatpush1.msra.mxu0 0.0
        %1681 = vmatprep.subr.mxu0 0.0
        %1682 = vmatpush1.msra.mxu0 0.0
        %1683 = vmatprep.subr.mxu0 0.0
        %1684 = vmatpush1.msra.mxu0 0.0
        %1685 = vmatprep.subr.mxu0 0.0
        %1686 = vmatpush1.msra.mxu0 0.0
        %1687 = vmatprep.subr.mxu0 0.0
        %1688 = vmatpush1.msra.mxu0 0.0
        %1689 = vmatprep.subr.mxu0 0.0
        %1690 = vmatpush1.msra.mxu0 0.0
        %1691 = vmatprep.subr.mxu0 0.0
        %1692 = vmatpush1.msra.mxu0 0.0
        %1693 = vmatprep.subr.mxu0 0.0
        %1694 = vmatpush1.msra.mxu0 0.0
        %1695 = vmatprep.subr.mxu0 0.0
        %1696 = vmatpush1.msra.mxu0 0.0
        %1697 = vmatprep.subr.mxu0 0.0
        %1698 = vmatpush1.msra.mxu0 0.0
        %1699 = vmatprep.subr.mxu0 0.0
        %1700 = vmatpush1.msra.mxu0 0.0
        %1701 = vmatprep.subr.mxu0 0.0
        %1702 = vmatpush1.msra.mxu0 0.0
        %1703 = vmatprep.subr.mxu0 0.0
        %1704 = vmatpush1.msra.mxu0 0.0
        %1705 = vmatprep.subr.mxu0 0.0
        %1706 = vmatpush1.msra.mxu0 0.0
        %1707 = vmatprep.subr.mxu0 0.0
        %1708 = vmatpush1.msra.mxu0 0.0
        %1709 = vmatprep.subr.mxu0 0.0
        %1710 = vmatpush1.msra.mxu0 0.0
        %1711 = vmatprep.subr.mxu0 0.0
        %1712 = vmatpush1.msra.mxu0 0.0
        %1713 = vmatprep.subr.mxu0 0.0
        %1714 = vmatpush1.msra.mxu0 0.0
        %1715 = vmatprep.subr.mxu0 0.0
        %1716 = vmatpush1.msra.mxu0 0.0
        %1717 = vmatprep.mubr.f32.mxu0 0.0
        %1718 = vmatmul.mubr.f32.gmra.mrb[0].mxu0 %v1649
        %v1719 = vpop.f32.mrb[0].mxu0
        %v1720 = vadd.f32 0.0, %v1719
        %v1721 = vpop.f32.mrb[0].mxu0
        %1722 = vmatprep.mubr.f32.mxu0 0.0
        %1723 = vmatmul.mubr.f32.gmra.mrb[0].mxu0 %v1651
        %v1724 = vpop.f32.mrb[0].mxu0
        %v1725 = vadd.f32 0.0, %v1724
        %v1726 = vpop.f32.mrb[0].mxu0
        %1727 = vdwg.mxu0
        %v1728 = vadd.f32 %v1644, %v1720
        %v1729 = vadd.f32 %v1645, %v1725
        %v1730 = vmax.f32 %v1014, %v1728
        %v1731 = vmax.f32 %v1015, %v1729
        %s1732 = sadd.s32 %s177, 4
        %s1733 = smul.u32 %s1732, 16
        %s1734 = scalar_lea.vmem %s165, %s1733
        %v1735 = vld [vmem:[%s1734] sm:$0xff]
        %v1736 = vld [vmem:[%s1734 + $0x8] sm:$0x7]
        %1737 = vmatprep.subr.mxu0 0.0
        %1738 = vmatpush1.msra.mxu0 %v200
        %1739 = vmatprep.subr.mxu0 0.0
        %1740 = vmatpush1.msra.mxu0 %v201
        %1741 = vmatprep.subr.mxu0 0.0
        %1742 = vmatpush1.msra.mxu0 %v202
        %1743 = vmatprep.subr.mxu0 0.0
        %1744 = vmatpush1.msra.mxu0 %v203
        %1745 = vmatprep.subr.mxu0 0.0
        %1746 = vmatpush1.msra.mxu0 %v204
        %1747 = vmatprep.subr.mxu0 0.0
        %1748 = vmatpush1.msra.mxu0 %v205
        %1749 = vmatprep.subr.mxu0 0.0
        %1750 = vmatpush1.msra.mxu0 %v206
        %1751 = vmatprep.subr.mxu0 0.0
        %1752 = vmatpush1.msra.mxu0 %v207
        %1753 = vmatprep.subr.mxu0 0.0
        %1754 = vmatpush1.msra.mxu0 0.0
        %1755 = vmatprep.subr.mxu0 0.0
        %1756 = vmatpush1.msra.mxu0 0.0
        %1757 = vmatprep.subr.mxu0 0.0
        %1758 = vmatpush1.msra.mxu0 0.0
        %1759 = vmatprep.subr.mxu0 0.0
        %1760 = vmatpush1.msra.mxu0 0.0
        %1761 = vmatprep.subr.mxu0 0.0
        %1762 = vmatpush1.msra.mxu0 0.0
        %1763 = vmatprep.subr.mxu0 0.0
        %1764 = vmatpush1.msra.mxu0 0.0
        %1765 = vmatprep.subr.mxu0 0.0
        %1766 = vmatpush1.msra.mxu0 0.0
        %1767 = vmatprep.subr.mxu0 0.0
        %1768 = vmatpush1.msra.mxu0 0.0
        %1769 = vmatprep.subr.mxu0 0.0
        %1770 = vmatpush1.msra.mxu0 0.0
        %1771 = vmatprep.subr.mxu0 0.0
        %1772 = vmatpush1.msra.mxu0 0.0
        %1773 = vmatprep.subr.mxu0 0.0
        %1774 = vmatpush1.msra.mxu0 0.0
        %1775 = vmatprep.subr.mxu0 0.0
        %1776 = vmatpush1.msra.mxu0 0.0
        %1777 = vmatprep.subr.mxu0 0.0
        %1778 = vmatpush1.msra.mxu0 0.0
        %1779 = vmatprep.subr.mxu0 0.0
        %1780 = vmatpush1.msra.mxu0 0.0
        %1781 = vmatprep.subr.mxu0 0.0
        %1782 = vmatpush1.msra.mxu0 0.0
        %1783 = vmatprep.subr.mxu0 0.0
        %1784 = vmatpush1.msra.mxu0 0.0
        %1785 = vmatprep.subr.mxu0 0.0
        %1786 = vmatpush1.msra.mxu0 0.0
        %1787 = vmatprep.subr.mxu0 0.0
        %1788 = vmatpush1.msra.mxu0 0.0
        %1789 = vmatprep.subr.mxu0 0.0
        %1790 = vmatpush1.msra.mxu0 0.0
        %1791 = vmatprep.subr.mxu0 0.0
        %1792 = vmatpush1.msra.mxu0 0.0
        %1793 = vmatprep.subr.mxu0 0.0
        %1794 = vmatpush1.msra.mxu0 0.0
        %1795 = vmatprep.subr.mxu0 0.0
        %1796 = vmatpush1.msra.mxu0 0.0
        %1797 = vmatprep.subr.mxu0 0.0
        %1798 = vmatpush1.msra.mxu0 0.0
        %1799 = vmatprep.subr.mxu0 0.0
        %1800 = vmatpush1.msra.mxu0 0.0
        %1801 = vmatprep.mubr.f32.mxu0 0.0
        %1802 = vmatmul.mubr.f32.gmra.mrb[0].mxu0 %v843
        %v1803 = vpop.f32.mrb[0].mxu0
        %v1804 = vadd.f32 0.0, %v1803
        %v1805 = vpop.f32.mrb[0].mxu0
        %1806 = vmatprep.mubr.f32.mxu0 0.0
        %1807 = vmatmul.mubr.f32.gmra.mrb[0].mxu0 %v845
        %v1808 = vpop.f32.mrb[0].mxu0
        %v1809 = vadd.f32 0.0, %v1808
        %v1810 = vpop.f32.mrb[0].mxu0
        %1811 = vdwg.mxu0
        %1812 = vmatprep.subr.mxu0 0.0
        %1813 = vmatpush1.msra.mxu0 %v192
        %1814 = vmatprep.subr.mxu0 0.0
        %1815 = vmatpush1.msra.mxu0 %v193
        %1816 = vmatprep.subr.mxu0 0.0
        %1817 = vmatpush1.msra.mxu0 %v194
        %1818 = vmatprep.subr.mxu0 0.0
        %1819 = vmatpush1.msra.mxu0 %v195
        %1820 = vmatprep.subr.mxu0 0.0
        %1821 = vmatpush1.msra.mxu0 %v196
        %1822 = vmatprep.subr.mxu0 0.0
        %1823 = vmatpush1.msra.mxu0 %v197
        %1824 = vmatprep.subr.mxu0 0.0
        %1825 = vmatpush1.msra.mxu0 %v198
        %1826 = vmatprep.subr.mxu0 0.0
        %1827 = vmatpush1.msra.mxu0 %v199
        %1828 = vmatprep.subr.mxu0 0.0
        %1829 = vmatpush1.msra.mxu0 0.0
        %1830 = vmatprep.subr.mxu0 0.0
        %1831 = vmatpush1.msra.mxu0 0.0
        %1832 = vmatprep.subr.mxu0 0.0
        %1833 = vmatpush1.msra.mxu0 0.0
        %1834 = vmatprep.subr.mxu0 0.0
        %1835 = vmatpush1.msra.mxu0 0.0
        %1836 = vmatprep.subr.mxu0 0.0
        %1837 = vmatpush1.msra.mxu0 0.0
        %1838 = vmatprep.subr.mxu0 0.0
        %1839 = vmatpush1.msra.mxu0 0.0
        %1840 = vmatprep.subr.mxu0 0.0
        %1841 = vmatpush1.msra.mxu0 0.0
        %1842 = vmatprep.subr.mxu0 0.0
        %1843 = vmatpush1.msra.mxu0 0.0
        %1844 = vmatprep.subr.mxu0 0.0
        %1845 = vmatpush1.msra.mxu0 0.0
        %1846 = vmatprep.subr.mxu0 0.0
        %1847 = vmatpush1.msra.mxu0 0.0
        %1848 = vmatprep.subr.mxu0 0.0
        %1849 = vmatpush1.msra.mxu0 0.0
        %1850 = vmatprep.subr.mxu0 0.0
        %1851 = vmatpush1.msra.mxu0 0.0
        %1852 = vmatprep.subr.mxu0 0.0
        %1853 = vmatpush1.msra.mxu0 0.0
        %1854 = vmatprep.subr.mxu0 0.0
        %1855 = vmatpush1.msra.mxu0 0.0
        %1856 = vmatprep.subr.mxu0 0.0
        %1857 = vmatpush1.msra.mxu0 0.0
        %1858 = vmatprep.subr.mxu0 0.0
        %1859 = vmatpush1.msra.mxu0 0.0
        %1860 = vmatprep.subr.mxu0 0.0
        %1861 = vmatpush1.msra.mxu0 0.0
        %1862 = vmatprep.subr.mxu0 0.0
        %1863 = vmatpush1.msra.mxu0 0.0
        %1864 = vmatprep.subr.mxu0 0.0
        %1865 = vmatpush1.msra.mxu0 0.0
        %1866 = vmatprep.subr.mxu0 0.0
        %1867 = vmatpush1.msra.mxu0 0.0
        %1868 = vmatprep.subr.mxu0 0.0
        %1869 = vmatpush1.msra.mxu0 0.0
        %1870 = vmatprep.subr.mxu0 0.0
        %1871 = vmatpush1.msra.mxu0 0.0
        %1872 = vmatprep.subr.mxu0 0.0
        %1873 = vmatpush1.msra.mxu0 0.0
        %1874 = vmatprep.subr.mxu0 0.0
        %1875 = vmatpush1.msra.mxu0 0.0
        %1876 = vmatprep.mubr.f32.mxu0 0.0
        %1877 = vmatmul.mubr.f32.gmra.mrb[0].mxu0 %v750
        %v1878 = vpop.f32.mrb[0].mxu0
        %v1879 = vadd.f32 %v1804, %v1878
        %v1880 = vpop.f32.mrb[0].mxu0
        %1881 = vmatprep.mubr.f32.mxu0 0.0
        %1882 = vmatmul.mubr.f32.gmra.mrb[0].mxu0 %v753
        %v1883 = vpop.f32.mrb[0].mxu0
        %v1884 = vadd.f32 %v1809, %v1883
        %v1885 = vpop.f32.mrb[0].mxu0
        %1886 = vdwg.mxu0
        %1887 = vmatprep.subr.mxu0 0.0
        %1888 = vmatpush1.msra.mxu0 %v373
        %1889 = vmatprep.subr.mxu0 0.0
        %1890 = vmatpush1.msra.mxu0 %v374
        %1891 = vmatprep.subr.mxu0 0.0
        %1892 = vmatpush1.msra.mxu0 %v375
        %1893 = vmatprep.subr.mxu0 0.0
        %1894 = vmatpush1.msra.mxu0 %v376
        %1895 = vmatprep.subr.mxu0 0.0
        %1896 = vmatpush1.msra.mxu0 %v377
        %1897 = vmatprep.subr.mxu0 0.0
        %1898 = vmatpush1.msra.mxu0 %v378
        %1899 = vmatprep.subr.mxu0 0.0
        %1900 = vmatpush1.msra.mxu0 %v379
        %1901 = vmatprep.subr.mxu0 0.0
        %1902 = vmatpush1.msra.mxu0 %v380
        %1903 = vmatprep.subr.mxu0 0.0
        %1904 = vmatpush1.msra.mxu0 0.0
        %1905 = vmatprep.subr.mxu0 0.0
        %1906 = vmatpush1.msra.mxu0 0.0
        %1907 = vmatprep.subr.mxu0 0.0
        %1908 = vmatpush1.msra.mxu0 0.0
        %1909 = vmatprep.subr.mxu0 0.0
        %1910 = vmatpush1.msra.mxu0 0.0
        %1911 = vmatprep.subr.mxu0 0.0
        %1912 = vmatpush1.msra.mxu0 0.0
        %1913 = vmatprep.subr.mxu0 0.0
        %1914 = vmatpush1.msra.mxu0 0.0
        %1915 = vmatprep.subr.mxu0 0.0
        %1916 = vmatpush1.msra.mxu0 0.0
        %1917 = vmatprep.subr.mxu0 0.0
        %1918 = vmatpush1.msra.mxu0 0.0
        %1919 = vmatprep.subr.mxu0 0.0
        %1920 = vmatpush1.msra.mxu0 0.0
        %1921 = vmatprep.subr.mxu0 0.0
        %1922 = vmatpush1.msra.mxu0 0.0
        %1923 = vmatprep.subr.mxu0 0.0
        %1924 = vmatpush1.msra.mxu0 0.0
        %1925 = vmatprep.subr.mxu0 0.0
        %1926 = vmatpush1.msra.mxu0 0.0
        %1927 = vmatprep.subr.mxu0 0.0
        %1928 = vmatpush1.msra.mxu0 0.0
        %1929 = vmatprep.subr.mxu0 0.0
        %1930 = vmatpush1.msra.mxu0 0.0
        %1931 = vmatprep.subr.mxu0 0.0
        %1932 = vmatpush1.msra.mxu0 0.0
        %1933 = vmatprep.subr.mxu0 0.0
        %1934 = vmatpush1.msra.mxu0 0.0
        %1935 = vmatprep.subr.mxu0 0.0
        %1936 = vmatpush1.msra.mxu0 0.0
        %1937 = vmatprep.subr.mxu0 0.0
        %1938 = vmatpush1.msra.mxu0 0.0
        %1939 = vmatprep.subr.mxu0 0.0
        %1940 = vmatpush1.msra.mxu0 0.0
        %1941 = vmatprep.subr.mxu0 0.0
        %1942 = vmatpush1.msra.mxu0 0.0
        %1943 = vmatprep.subr.mxu0 0.0
        %1944 = vmatpush1.msra.mxu0 0.0
        %1945 = vmatprep.subr.mxu0 0.0
        %1946 = vmatpush1.msra.mxu0 0.0
        %1947 = vmatprep.subr.mxu0 0.0
        %1948 = vmatpush1.msra.mxu0 0.0
        %1949 = vmatprep.subr.mxu0 0.0
        %1950 = vmatpush1.msra.mxu0 0.0
        %1951 = vmatprep.mubr.f32.mxu0 0.0
        %1952 = vmatmul.mubr.f32.gmra.mrb[0].mxu0 %v935
        %v1953 = vpop.f32.mrb[0].mxu0
        %v1954 = vadd.f32 0.0, %v1953
        %v1955 = vpop.f32.mrb[0].mxu0
        %1956 = vmatprep.mubr.f32.mxu0 0.0
        %1957 = vmatmul.mubr.f32.gmra.mrb[0].mxu0 %v937
        %v1958 = vpop.f32.mrb[0].mxu0
        %v1959 = vadd.f32 0.0, %v1958
        %v1960 = vpop.f32.mrb[0].mxu0
        %1961 = vdwg.mxu0
        %v1962 = vadd.f32 %v1879, %v1954
        %v1963 = vadd.f32 %v1884, %v1959
        %1964 = vmatprep.subr.mxu0 0.0
        %1965 = vmatpush1.msra.mxu0 %v466
        %1966 = vmatprep.subr.mxu0 0.0
        %1967 = vmatpush1.msra.mxu0 %v467
        %1968 = vmatprep.subr.mxu0 0.0
        %1969 = vmatpush1.msra.mxu0 %v468
        %1970 = vmatprep.subr.mxu0 0.0
        %1971 = vmatpush1.msra.mxu0 %v469
        %1972 = vmatprep.subr.mxu0 0.0
        %1973 = vmatpush1.msra.mxu0 %v470
        %1974 = vmatprep.subr.mxu0 0.0
        %1975 = vmatpush1.msra.mxu0 %v471
        %1976 = vmatprep.subr.mxu0 0.0
        %1977 = vmatpush1.msra.mxu0 %v472
        %1978 = vmatprep.subr.mxu0 0.0
        %1979 = vmatpush1.msra.mxu0 %v473
        %1980 = vmatprep.subr.mxu0 0.0
        %1981 = vmatpush1.msra.mxu0 0.0
        %1982 = vmatprep.subr.mxu0 0.0
        %1983 = vmatpush1.msra.mxu0 0.0
        %1984 = vmatprep.subr.mxu0 0.0
        %1985 = vmatpush1.msra.mxu0 0.0
        %1986 = vmatprep.subr.mxu0 0.0
        %1987 = vmatpush1.msra.mxu0 0.0
        %1988 = vmatprep.subr.mxu0 0.0
        %1989 = vmatpush1.msra.mxu0 0.0
        %1990 = vmatprep.subr.mxu0 0.0
        %1991 = vmatpush1.msra.mxu0 0.0
        %1992 = vmatprep.subr.mxu0 0.0
        %1993 = vmatpush1.msra.mxu0 0.0
        %1994 = vmatprep.subr.mxu0 0.0
        %1995 = vmatpush1.msra.mxu0 0.0
        %1996 = vmatprep.subr.mxu0 0.0
        %1997 = vmatpush1.msra.mxu0 0.0
        %1998 = vmatprep.subr.mxu0 0.0
        %1999 = vmatpush1.msra.mxu0 0.0
        %2000 = vmatprep.subr.mxu0 0.0
        %2001 = vmatpush1.msra.mxu0 0.0
        %2002 = vmatprep.subr.mxu0 0.0
        %2003 = vmatpush1.msra.mxu0 0.0
        %2004 = vmatprep.subr.mxu0 0.0
        %2005 = vmatpush1.msra.mxu0 0.0
        %2006 = vmatprep.subr.mxu0 0.0
        %2007 = vmatpush1.msra.mxu0 0.0
        %2008 = vmatprep.subr.mxu0 0.0
        %2009 = vmatpush1.msra.mxu0 0.0
        %2010 = vmatprep.subr.mxu0 0.0
        %2011 = vmatpush1.msra.mxu0 0.0
        %2012 = vmatprep.subr.mxu0 0.0
        %2013 = vmatpush1.msra.mxu0 0.0
        %2014 = vmatprep.subr.mxu0 0.0
        %2015 = vmatpush1.msra.mxu0 0.0
        %2016 = vmatprep.subr.mxu0 0.0
        %2017 = vmatpush1.msra.mxu0 0.0
        %2018 = vmatprep.subr.mxu0 0.0
        %2019 = vmatpush1.msra.mxu0 0.0
        %2020 = vmatprep.subr.mxu0 0.0
        %2021 = vmatpush1.msra.mxu0 0.0
        %2022 = vmatprep.subr.mxu0 0.0
        %2023 = vmatpush1.msra.mxu0 0.0
        %2024 = vmatprep.subr.mxu0 0.0
        %2025 = vmatpush1.msra.mxu0 0.0
        %2026 = vmatprep.subr.mxu0 0.0
        %2027 = vmatpush1.msra.mxu0 0.0
        %2028 = vmatprep.mubr.f32.mxu0 0.0
        %2029 = vmatmul.mubr.f32.gmra.mrb[0].mxu0 %v1480
        %v2030 = vpop.f32.mrb[0].mxu0
        %v2031 = vadd.f32 0.0, %v2030
        %v2032 = vpop.f32.mrb[0].mxu0
        %2033 = vmatprep.mubr.f32.mxu0 0.0
        %2034 = vmatmul.mubr.f32.gmra.mrb[0].mxu0 %v1483
        %v2035 = vpop.f32.mrb[0].mxu0
        %v2036 = vadd.f32 0.0, %v2035
        %v2037 = vpop.f32.mrb[0].mxu0
        %2038 = vdwg.mxu0
        %v2039 = vadd.f32 %v1962, %v2031
        %v2040 = vadd.f32 %v1963, %v2036
        %2041 = vmatprep.subr.mxu0 0.0
        %2042 = vmatpush1.msra.mxu0 %v557
        %2043 = vmatprep.subr.mxu0 0.0
        %2044 = vmatpush1.msra.mxu0 %v558
        %2045 = vmatprep.subr.mxu0 0.0
        %2046 = vmatpush1.msra.mxu0 %v559
        %2047 = vmatprep.subr.mxu0 0.0
        %2048 = vmatpush1.msra.mxu0 %v560
        %2049 = vmatprep.subr.mxu0 0.0
        %2050 = vmatpush1.msra.mxu0 %v561
        %2051 = vmatprep.subr.mxu0 0.0
        %2052 = vmatpush1.msra.mxu0 %v562
        %2053 = vmatprep.subr.mxu0 0.0
        %2054 = vmatpush1.msra.mxu0 %v563
        %2055 = vmatprep.subr.mxu0 0.0
        %2056 = vmatpush1.msra.mxu0 %v564
        %2057 = vmatprep.subr.mxu0 0.0
        %2058 = vmatpush1.msra.mxu0 0.0
        %2059 = vmatprep.subr.mxu0 0.0
        %2060 = vmatpush1.msra.mxu0 0.0
        %2061 = vmatprep.subr.mxu0 0.0
        %2062 = vmatpush1.msra.mxu0 0.0
        %2063 = vmatprep.subr.mxu0 0.0
        %2064 = vmatpush1.msra.mxu0 0.0
        %2065 = vmatprep.subr.mxu0 0.0
        %2066 = vmatpush1.msra.mxu0 0.0
        %2067 = vmatprep.subr.mxu0 0.0
        %2068 = vmatpush1.msra.mxu0 0.0
        %2069 = vmatprep.subr.mxu0 0.0
        %2070 = vmatpush1.msra.mxu0 0.0
        %2071 = vmatprep.subr.mxu0 0.0
        %2072 = vmatpush1.msra.mxu0 0.0
        %2073 = vmatprep.subr.mxu0 0.0
        %2074 = vmatpush1.msra.mxu0 0.0
        %2075 = vmatprep.subr.mxu0 0.0
        %2076 = vmatpush1.msra.mxu0 0.0
        %2077 = vmatprep.subr.mxu0 0.0
        %2078 = vmatpush1.msra.mxu0 0.0
        %2079 = vmatprep.subr.mxu0 0.0
        %2080 = vmatpush1.msra.mxu0 0.0
        %2081 = vmatprep.subr.mxu0 0.0
        %2082 = vmatpush1.msra.mxu0 0.0
        %2083 = vmatprep.subr.mxu0 0.0
        %2084 = vmatpush1.msra.mxu0 0.0
        %2085 = vmatprep.subr.mxu0 0.0
        %2086 = vmatpush1.msra.mxu0 0.0
        %2087 = vmatprep.subr.mxu0 0.0
        %2088 = vmatpush1.msra.mxu0 0.0
        %2089 = vmatprep.subr.mxu0 0.0
        %2090 = vmatpush1.msra.mxu0 0.0
        %2091 = vmatprep.subr.mxu0 0.0
        %2092 = vmatpush1.msra.mxu0 0.0
        %2093 = vmatprep.subr.mxu0 0.0
        %2094 = vmatpush1.msra.mxu0 0.0
        %2095 = vmatprep.subr.mxu0 0.0
        %2096 = vmatpush1.msra.mxu0 0.0
        %2097 = vmatprep.subr.mxu0 0.0
        %2098 = vmatpush1.msra.mxu0 0.0
        %2099 = vmatprep.subr.mxu0 0.0
        %2100 = vmatpush1.msra.mxu0 0.0
        %2101 = vmatprep.subr.mxu0 0.0
        %2102 = vmatpush1.msra.mxu0 0.0
        %2103 = vmatprep.subr.mxu0 0.0
        %2104 = vmatpush1.msra.mxu0 0.0
        %2105 = vmatprep.mubr.f32.mxu0 0.0
        %2106 = vmatmul.mubr.f32.gmra.mrb[0].mxu0 %v1565
        %v2107 = vpop.f32.mrb[0].mxu0
        %v2108 = vadd.f32 0.0, %v2107
        %v2109 = vpop.f32.mrb[0].mxu0
        %2110 = vmatprep.mubr.f32.mxu0 0.0
        %2111 = vmatmul.mubr.f32.gmra.mrb[0].mxu0 %v1567
        %v2112 = vpop.f32.mrb[0].mxu0
        %v2113 = vadd.f32 0.0, %v2112
        %v2114 = vpop.f32.mrb[0].mxu0
        %2115 = vdwg.mxu0
        %v2116 = vadd.f32 %v2039, %v2108
        %v2117 = vadd.f32 %v2040, %v2113
        %2118 = vmatprep.subr.mxu0 0.0
        %2119 = vmatpush1.msra.mxu0 %v649
        %2120 = vmatprep.subr.mxu0 0.0
        %2121 = vmatpush1.msra.mxu0 %v650
        %2122 = vmatprep.subr.mxu0 0.0
        %2123 = vmatpush1.msra.mxu0 %v651
        %2124 = vmatprep.subr.mxu0 0.0
        %2125 = vmatpush1.msra.mxu0 %v652
        %2126 = vmatprep.subr.mxu0 0.0
        %2127 = vmatpush1.msra.mxu0 %v653
        %2128 = vmatprep.subr.mxu0 0.0
        %2129 = vmatpush1.msra.mxu0 %v654
        %2130 = vmatprep.subr.mxu0 0.0
        %2131 = vmatpush1.msra.mxu0 %v655
        %2132 = vmatprep.subr.mxu0 0.0
        %2133 = vmatpush1.msra.mxu0 %v656
        %2134 = vmatprep.subr.mxu0 0.0
        %2135 = vmatpush1.msra.mxu0 0.0
        %2136 = vmatprep.subr.mxu0 0.0
        %2137 = vmatpush1.msra.mxu0 0.0
        %2138 = vmatprep.subr.mxu0 0.0
        %2139 = vmatpush1.msra.mxu0 0.0
        %2140 = vmatprep.subr.mxu0 0.0
        %2141 = vmatpush1.msra.mxu0 0.0
        %2142 = vmatprep.subr.mxu0 0.0
        %2143 = vmatpush1.msra.mxu0 0.0
        %2144 = vmatprep.subr.mxu0 0.0
        %2145 = vmatpush1.msra.mxu0 0.0
        %2146 = vmatprep.subr.mxu0 0.0
        %2147 = vmatpush1.msra.mxu0 0.0
        %2148 = vmatprep.subr.mxu0 0.0
        %2149 = vmatpush1.msra.mxu0 0.0
        %2150 = vmatprep.subr.mxu0 0.0
        %2151 = vmatpush1.msra.mxu0 0.0
        %2152 = vmatprep.subr.mxu0 0.0
        %2153 = vmatpush1.msra.mxu0 0.0
        %2154 = vmatprep.subr.mxu0 0.0
        %2155 = vmatpush1.msra.mxu0 0.0
        %2156 = vmatprep.subr.mxu0 0.0
        %2157 = vmatpush1.msra.mxu0 0.0
        %2158 = vmatprep.subr.mxu0 0.0
        %2159 = vmatpush1.msra.mxu0 0.0
        %2160 = vmatprep.subr.mxu0 0.0
        %2161 = vmatpush1.msra.mxu0 0.0
        %2162 = vmatprep.subr.mxu0 0.0
        %2163 = vmatpush1.msra.mxu0 0.0
        %2164 = vmatprep.subr.mxu0 0.0
        %2165 = vmatpush1.msra.mxu0 0.0
        %2166 = vmatprep.subr.mxu0 0.0
        %2167 = vmatpush1.msra.mxu0 0.0
        %2168 = vmatprep.subr.mxu0 0.0
        %2169 = vmatpush1.msra.mxu0 0.0
        %2170 = vmatprep.subr.mxu0 0.0
        %2171 = vmatpush1.msra.mxu0 0.0
        %2172 = vmatprep.subr.mxu0 0.0
        %2173 = vmatpush1.msra.mxu0 0.0
        %2174 = vmatprep.subr.mxu0 0.0
        %2175 = vmatpush1.msra.mxu0 0.0
        %2176 = vmatprep.subr.mxu0 0.0
        %2177 = vmatpush1.msra.mxu0 0.0
        %2178 = vmatprep.subr.mxu0 0.0
        %2179 = vmatpush1.msra.mxu0 0.0
        %2180 = vmatprep.subr.mxu0 0.0
        %2181 = vmatpush1.msra.mxu0 0.0
        %2182 = vmatprep.mubr.f32.mxu0 0.0
        %2183 = vmatmul.mubr.f32.gmra.mrb[0].mxu0 %v1649
        %v2184 = vpop.f32.mrb[0].mxu0
        %v2185 = vadd.f32 0.0, %v2184
        %v2186 = vpop.f32.mrb[0].mxu0
        %2187 = vmatprep.mubr.f32.mxu0 0.0
        %2188 = vmatmul.mubr.f32.gmra.mrb[0].mxu0 %v1651
        %v2189 = vpop.f32.mrb[0].mxu0
        %v2190 = vadd.f32 0.0, %v2189
        %v2191 = vpop.f32.mrb[0].mxu0
        %2192 = vdwg.mxu0
        %v2193 = vadd.f32 %v2116, %v2185
        %v2194 = vadd.f32 %v2117, %v2190
        %v2196 = vsel %vm214, %v1735, 0
        %v2199 = vsel %vm214, %v1736, 0
        %2201 = vmatprep.subr.mxu0 0.0
        %2202 = vmatpush1.msra.mxu0 %v741
        %2203 = vmatprep.subr.mxu0 0.0
        %2204 = vmatpush1.msra.mxu0 %v742
        %2205 = vmatprep.subr.mxu0 0.0
        %2206 = vmatpush1.msra.mxu0 %v743
        %2207 = vmatprep.subr.mxu0 0.0
        %2208 = vmatpush1.msra.mxu0 %v744
        %2209 = vmatprep.subr.mxu0 0.0
        %2210 = vmatpush1.msra.mxu0 %v745
        %2211 = vmatprep.subr.mxu0 0.0
        %2212 = vmatpush1.msra.mxu0 %v746
        %2213 = vmatprep.subr.mxu0 0.0
        %2214 = vmatpush1.msra.mxu0 %v747
        %2215 = vmatprep.subr.mxu0 0.0
        %2216 = vmatpush1.msra.mxu0 %v748
        %2217 = vmatprep.subr.mxu0 0.0
        %2218 = vmatpush1.msra.mxu0 0.0
        %2219 = vmatprep.subr.mxu0 0.0
        %2220 = vmatpush1.msra.mxu0 0.0
        %2221 = vmatprep.subr.mxu0 0.0
        %2222 = vmatpush1.msra.mxu0 0.0
        %2223 = vmatprep.subr.mxu0 0.0
        %2224 = vmatpush1.msra.mxu0 0.0
        %2225 = vmatprep.subr.mxu0 0.0
        %2226 = vmatpush1.msra.mxu0 0.0
        %2227 = vmatprep.subr.mxu0 0.0
        %2228 = vmatpush1.msra.mxu0 0.0
        %2229 = vmatprep.subr.mxu0 0.0
        %2230 = vmatpush1.msra.mxu0 0.0
        %2231 = vmatprep.subr.mxu0 0.0
        %2232 = vmatpush1.msra.mxu0 0.0
        %2233 = vmatprep.subr.mxu0 0.0
        %2234 = vmatpush1.msra.mxu0 0.0
        %2235 = vmatprep.subr.mxu0 0.0
        %2236 = vmatpush1.msra.mxu0 0.0
        %2237 = vmatprep.subr.mxu0 0.0
        %2238 = vmatpush1.msra.mxu0 0.0
        %2239 = vmatprep.subr.mxu0 0.0
        %2240 = vmatpush1.msra.mxu0 0.0
        %2241 = vmatprep.subr.mxu0 0.0
        %2242 = vmatpush1.msra.mxu0 0.0
        %2243 = vmatprep.subr.mxu0 0.0
        %2244 = vmatpush1.msra.mxu0 0.0
        %2245 = vmatprep.subr.mxu0 0.0
        %2246 = vmatpush1.msra.mxu0 0.0
        %2247 = vmatprep.subr.mxu0 0.0
        %2248 = vmatpush1.msra.mxu0 0.0
        %2249 = vmatprep.subr.mxu0 0.0
        %2250 = vmatpush1.msra.mxu0 0.0
        %2251 = vmatprep.subr.mxu0 0.0
        %2252 = vmatpush1.msra.mxu0 0.0
        %2253 = vmatprep.subr.mxu0 0.0
        %2254 = vmatpush1.msra.mxu0 0.0
        %2255 = vmatprep.subr.mxu0 0.0
        %2256 = vmatpush1.msra.mxu0 0.0
        %2257 = vmatprep.subr.mxu0 0.0
        %2258 = vmatpush1.msra.mxu0 0.0
        %2259 = vmatprep.subr.mxu0 0.0
        %2260 = vmatpush1.msra.mxu0 0.0
        %2261 = vmatprep.subr.mxu0 0.0
        %2262 = vmatpush1.msra.mxu0 0.0
        %2263 = vmatprep.subr.mxu0 0.0
        %2264 = vmatpush1.msra.mxu0 0.0
        %2265 = vmatprep.mubr.f32.mxu0 0.0
        %2266 = vmatmul.mubr.f32.gmra.mrb[0].mxu0 %v2196
        %v2267 = vpop.f32.mrb[0].mxu0
        %v2268 = vadd.f32 0.0, %v2267
        %v2269 = vpop.f32.mrb[0].mxu0
        %2270 = vmatprep.mubr.f32.mxu0 0.0
        %2271 = vmatmul.mubr.f32.gmra.mrb[0].mxu0 %v2199
        %v2272 = vpop.f32.mrb[0].mxu0
        %v2273 = vadd.f32 0.0, %v2272
        %v2274 = vpop.f32.mrb[0].mxu0
        %2275 = vdwg.mxu0
        %v2276 = vadd.f32 %v2193, %v2268
        %v2277 = vadd.f32 %v2194, %v2273
        %v2278 = vrot.slane %v1735, 1
        %v2279 = vrot.slane %v1736, 1
        %v2280 = vsel %vm210, %v2278, %v2279
        %v2281 = vsel %vm214, %v2280, 0
        %v2283 = vsel %vm214, %v2279, 0
        %2285 = vmatprep.subr.mxu0 0.0
        %2286 = vmatpush1.msra.mxu0 %v832
        %2287 = vmatprep.subr.mxu0 0.0
        %2288 = vmatpush1.msra.mxu0 %v833
        %2289 = vmatprep.subr.mxu0 0.0
        %2290 = vmatpush1.msra.mxu0 %v834
        %2291 = vmatprep.subr.mxu0 0.0
        %2292 = vmatpush1.msra.mxu0 %v835
        %2293 = vmatprep.subr.mxu0 0.0
        %2294 = vmatpush1.msra.mxu0 %v836
        %2295 = vmatprep.subr.mxu0 0.0
        %2296 = vmatpush1.msra.mxu0 %v837
        %2297 = vmatprep.subr.mxu0 0.0
        %2298 = vmatpush1.msra.mxu0 %v838
        %2299 = vmatprep.subr.mxu0 0.0
        %2300 = vmatpush1.msra.mxu0 %v839
        %2301 = vmatprep.subr.mxu0 0.0
        %2302 = vmatpush1.msra.mxu0 0.0
        %2303 = vmatprep.subr.mxu0 0.0
        %2304 = vmatpush1.msra.mxu0 0.0
        %2305 = vmatprep.subr.mxu0 0.0
        %2306 = vmatpush1.msra.mxu0 0.0
        %2307 = vmatprep.subr.mxu0 0.0
        %2308 = vmatpush1.msra.mxu0 0.0
        %2309 = vmatprep.subr.mxu0 0.0
        %2310 = vmatpush1.msra.mxu0 0.0
        %2311 = vmatprep.subr.mxu0 0.0
        %2312 = vmatpush1.msra.mxu0 0.0
        %2313 = vmatprep.subr.mxu0 0.0
        %2314 = vmatpush1.msra.mxu0 0.0
        %2315 = vmatprep.subr.mxu0 0.0
        %2316 = vmatpush1.msra.mxu0 0.0
        %2317 = vmatprep.subr.mxu0 0.0
        %2318 = vmatpush1.msra.mxu0 0.0
        %2319 = vmatprep.subr.mxu0 0.0
        %2320 = vmatpush1.msra.mxu0 0.0
        %2321 = vmatprep.subr.mxu0 0.0
        %2322 = vmatpush1.msra.mxu0 0.0
        %2323 = vmatprep.subr.mxu0 0.0
        %2324 = vmatpush1.msra.mxu0 0.0
        %2325 = vmatprep.subr.mxu0 0.0
        %2326 = vmatpush1.msra.mxu0 0.0
        %2327 = vmatprep.subr.mxu0 0.0
        %2328 = vmatpush1.msra.mxu0 0.0
        %2329 = vmatprep.subr.mxu0 0.0
        %2330 = vmatpush1.msra.mxu0 0.0
        %2331 = vmatprep.subr.mxu0 0.0
        %2332 = vmatpush1.msra.mxu0 0.0
        %2333 = vmatprep.subr.mxu0 0.0
        %2334 = vmatpush1.msra.mxu0 0.0
        %2335 = vmatprep.subr.mxu0 0.0
        %2336 = vmatpush1.msra.mxu0 0.0
        %2337 = vmatprep.subr.mxu0 0.0
        %2338 = vmatpush1.msra.mxu0 0.0
        %2339 = vmatprep.subr.mxu0 0.0
        %2340 = vmatpush1.msra.mxu0 0.0
        %2341 = vmatprep.subr.mxu0 0.0
        %2342 = vmatpush1.msra.mxu0 0.0
        %2343 = vmatprep.subr.mxu0 0.0
        %2344 = vmatpush1.msra.mxu0 0.0
        %2345 = vmatprep.subr.mxu0 0.0
        %2346 = vmatpush1.msra.mxu0 0.0
        %2347 = vmatprep.subr.mxu0 0.0
        %2348 = vmatpush1.msra.mxu0 0.0
        %2349 = vmatprep.mubr.f32.mxu0 0.0
        %2350 = vmatmul.mubr.f32.gmra.mrb[0].mxu0 %v2281
        %v2351 = vpop.f32.mrb[0].mxu0
        %v2352 = vadd.f32 0.0, %v2351
        %v2353 = vpop.f32.mrb[0].mxu0
        %2354 = vmatprep.mubr.f32.mxu0 0.0
        %2355 = vmatmul.mubr.f32.gmra.mrb[0].mxu0 %v2283
        %v2356 = vpop.f32.mrb[0].mxu0
        %v2357 = vadd.f32 0.0, %v2356
        %v2358 = vpop.f32.mrb[0].mxu0
        %2359 = vdwg.mxu0
        %v2360 = vadd.f32 %v2276, %v2352
        %v2361 = vadd.f32 %v2277, %v2357
        %v2362 = vrot.slane %v1735, 2
        %v2363 = vrot.slane %v1736, 2
        %v2364 = vsel %vm381, %v2362, %v2363
        %v2365 = vsel %vm214, %v2364, 0
        %v2367 = vsel %vm214, %v2363, 0
        %2369 = vmatprep.subr.mxu0 0.0
        %2370 = vmatpush1.msra.mxu0 %v924
        %2371 = vmatprep.subr.mxu0 0.0
        %2372 = vmatpush1.msra.mxu0 %v925
        %2373 = vmatprep.subr.mxu0 0.0
        %2374 = vmatpush1.msra.mxu0 %v926
        %2375 = vmatprep.subr.mxu0 0.0
        %2376 = vmatpush1.msra.mxu0 %v927
        %2377 = vmatprep.subr.mxu0 0.0
        %2378 = vmatpush1.msra.mxu0 %v928
        %2379 = vmatprep.subr.mxu0 0.0
        %2380 = vmatpush1.msra.mxu0 %v929
        %2381 = vmatprep.subr.mxu0 0.0
        %2382 = vmatpush1.msra.mxu0 %v930
        %2383 = vmatprep.subr.mxu0 0.0
        %2384 = vmatpush1.msra.mxu0 %v931
        %2385 = vmatprep.subr.mxu0 0.0
        %2386 = vmatpush1.msra.mxu0 0.0
        %2387 = vmatprep.subr.mxu0 0.0
        %2388 = vmatpush1.msra.mxu0 0.0
        %2389 = vmatprep.subr.mxu0 0.0
        %2390 = vmatpush1.msra.mxu0 0.0
        %2391 = vmatprep.subr.mxu0 0.0
        %2392 = vmatpush1.msra.mxu0 0.0
        %2393 = vmatprep.subr.mxu0 0.0
        %2394 = vmatpush1.msra.mxu0 0.0
        %2395 = vmatprep.subr.mxu0 0.0
        %2396 = vmatpush1.msra.mxu0 0.0
        %2397 = vmatprep.subr.mxu0 0.0
        %2398 = vmatpush1.msra.mxu0 0.0
        %2399 = vmatprep.subr.mxu0 0.0
        %2400 = vmatpush1.msra.mxu0 0.0
        %2401 = vmatprep.subr.mxu0 0.0
        %2402 = vmatpush1.msra.mxu0 0.0
        %2403 = vmatprep.subr.mxu0 0.0
        %2404 = vmatpush1.msra.mxu0 0.0
        %2405 = vmatprep.subr.mxu0 0.0
        %2406 = vmatpush1.msra.mxu0 0.0
        %2407 = vmatprep.subr.mxu0 0.0
        %2408 = vmatpush1.msra.mxu0 0.0
        %2409 = vmatprep.subr.mxu0 0.0
        %2410 = vmatpush1.msra.mxu0 0.0
        %2411 = vmatprep.subr.mxu0 0.0
        %2412 = vmatpush1.msra.mxu0 0.0
        %2413 = vmatprep.subr.mxu0 0.0
        %2414 = vmatpush1.msra.mxu0 0.0
        %2415 = vmatprep.subr.mxu0 0.0
        %2416 = vmatpush1.msra.mxu0 0.0
        %2417 = vmatprep.subr.mxu0 0.0
        %2418 = vmatpush1.msra.mxu0 0.0
        %2419 = vmatprep.subr.mxu0 0.0
        %2420 = vmatpush1.msra.mxu0 0.0
        %2421 = vmatprep.subr.mxu0 0.0
        %2422 = vmatpush1.msra.mxu0 0.0
        %2423 = vmatprep.subr.mxu0 0.0
        %2424 = vmatpush1.msra.mxu0 0.0
        %2425 = vmatprep.subr.mxu0 0.0
        %2426 = vmatpush1.msra.mxu0 0.0
        %2427 = vmatprep.subr.mxu0 0.0
        %2428 = vmatpush1.msra.mxu0 0.0
        %2429 = vmatprep.subr.mxu0 0.0
        %2430 = vmatpush1.msra.mxu0 0.0
        %2431 = vmatprep.subr.mxu0 0.0
        %2432 = vmatpush1.msra.mxu0 0.0
        %2433 = vmatprep.mubr.f32.mxu0 0.0
        %2434 = vmatmul.mubr.f32.gmra.mrb[0].mxu0 %v2365
        %v2435 = vpop.f32.mrb[0].mxu0
        %v2436 = vadd.f32 0.0, %v2435
        %v2437 = vpop.f32.mrb[0].mxu0
        %2438 = vmatprep.mubr.f32.mxu0 0.0
        %2439 = vmatmul.mubr.f32.gmra.mrb[0].mxu0 %v2367
        %v2440 = vpop.f32.mrb[0].mxu0
        %v2441 = vadd.f32 0.0, %v2440
        %v2442 = vpop.f32.mrb[0].mxu0
        %2443 = vdwg.mxu0
        %v2444 = vadd.f32 %v2360, %v2436
        %v2445 = vadd.f32 %v2361, %v2441
        %v2446 = vmax.f32 %v1730, %v2444
        %v2447 = vmax.f32 %v1731, %v2445
        %vm2448 = vcmask 261120
        %2449 = vst.msk [vmem:[#allocation2] sm:$0xff] %vm2448, %v2446
        %vm2450 = vcmask 253952
        %2451 = vst.msk [vmem:[#allocation2 + $0x8] sm:$0x1] %vm2450, %v2447
        %v2452 = vld [vmem:[#allocation2] ss:$3 sm:$0x7]
        %s2453 = scalar_lea.vmem [#allocation2], 1
        %v2454 = vld [vmem:[%s2453] ss:$3 sm:$0x7]
        %v2455 = vmax.f32 %v2452, %v2454
        %s2456 = scalar_lea.vmem [#allocation2], 2
        %v2457 = vld [vmem:[%s2456] ss:$3 sm:$0x7]
        %v2458 = vmax.f32 %v2455, %v2457
        %v2459 = vld [vmem:[%s2] sm:$0x1]
        %v2461 = vlaneseq
        %v2462 = vshrl.u32 %v2461, 7
        %v2463 = vsub.s32 0, %v2462
        %v2464 = vrot.slane %v2459, %v2463
        %v2466 = vadd.f32 %v2458, %v2464
        %v2467 = vmax.f32 %v2466, 0.0
        %s2468 = smul.u32 %s172, 4
        %s2469 = scalar_lea.vmem %s170, %s2468
        %vm2470 = vcmask 256000
        %2471 = vst.msk [vmem:[%s2469] sm:$0x7] %vm2470, %v2467
      $region37: #{net_forward.6} parent=31 // loop_footer
        %s176 = sadd.s32 1, %s172
      $region38: #{net_forward.6} parent=31 // loop_footer_branch
        %171 = sbr.rel target = $region34
      $region39: #{net_forward.6} parent=31 // loop_exit
        _
      %p2472 = scmp.lt.s32.totalorder %s14, 1
      %s2473 = scalar_select %p2472, %s14, 1
      %s2474 = smul.addr %s2473, 3
      %s2475 = smul.addr %s2474, 4
      %s2476 = scalar_lea.vmem %s3, %s2475
      // Predicated region
      $region40: #{net_forward.6} parent=31 // pred_check
        %p2477 = pneg %p100
      $region41: #{net_forward.6} parent=31 // pred_check_branch
        %2479 = sbr.rel (%p2477) target = $region43
      $region42: #{net_forward.6} parent=31 // pred_region
        _
      $region43: #{net_forward.6} parent=31 // pred_fallthru
        _
    $region32: #{net_forward.6} parent=5 // pred_fallthru
      _
    %p2480 = scmp.le.s32.totalorder 2, %s9
    // Predicated region
    $region44: #{net_forward.6} parent=5 // pred_check
      %p2481 = pneg %p2480
    $region45: #{net_forward.6} parent=5 // pred_check_branch
      %2483 = sbr.rel (%p2481) target = $region47
    $region46: #{net_forward.6} parent=5 // pred_region
      %s2484 = ssub.s32 %s9, 2
      // Predicated region
      $region48: #{net_forward.6} parent=46 // pred_check
        %p2485 = pneg %p106
      $region49: #{net_forward.6} parent=46 // pred_check_branch
        %2487 = sbr.rel (%p2485) target = $region51
      $region50: #{net_forward.6} parent=46 // pred_region
        %p2488 = scmp.lt.s32.totalorder %s15, 1
        %s2489 = scalar_select %p2488, %s15, 1
        %s2490 = smul.addr %s2489, 3
        %s2491 = smul.addr %s2490, 4
        %s2492 = scalar_lea.vmem %s3, %s2491
      $region51: #{net_forward.6} parent=46 // pred_fallthru
        _
    $region47: #{net_forward.6} parent=5 // pred_fallthru
      _
  $region6: #{net_forward.6} parent=0 // loop_footer
    %s13 = sadd.s32 1, %s9
  $region7: #{net_forward.6} parent=0 // loop_footer_branch
    %8 = sbr.rel target = $region3
  $region8: #{net_forward.6} parent=0 // loop_exit
    _

// kernel: net_forward.7
$region0: #{net_forward.7}
  #allocation0 [shape = 'u32[]', space=smem, size = 0x4, offset = 0x4, fixed_abs, tag = 'smem constant byte address 0x4 - core index']
  #allocation1 [shape = 'u32[144,128]{1,0:T(1,128)}', space=vmem, size = 0x12000, scoped, tag = 'internal scratch']
  %s0 = inlined_call_operand.vmem [shape: f32[2,288], index: 0, kind: input, shape index: {}]
  %s1 = inlined_call_operand.vmem [shape: f32[288,64], index: 1, kind: input, shape index: {}]
  %s2 = inlined_call_operand.vmem [shape: f32[1,64], index: 2, kind: input, shape index: {}]
  %s3 = inlined_call_operand.vmem [shape: f32[64,2], index: 3, kind: input, shape index: {}]
  %s4 = inlined_call_operand.vmem [shape: f32[1,2], index: 4, kind: input, shape index: {}]
  %s5 = inlined_call_operand.hbm [shape: f32[2,2], index: 5, kind: output, shape index: {}]
  %s6 = sld [smem:[#allocation0]]
  $region30: #{net_forward.7} parent=0
    _
  %s8 = ssub.s32 1, %s6
  %s9 = scalar_select 0, %s8, %s6
  $region1: #{net_forward.7} parent=0
    #allocation2 [shape = 'u8[1024]{0}', space=vmem, size = 0x400, scoped, tag = 'output window, operand 0, single buffered']
    #allocation3 [shape = 's32[1]{0}', space=sflag, size = 0x4, scoped, tag = 'scoped memory for net_forward.7']
    %10 = vsyncpa [#allocation3], 0
    // Predicated region
    $region2: #{net_forward.7} parent=1 // pred_check
      _
    $region3: #{net_forward.7} parent=1 // pred_check_branch
      %12 = sbr.rel (0) target = $region5
    $region4: #{net_forward.7} parent=1 // pred_region
      _
    $region5: #{net_forward.7} parent=1 // pred_fallthru
      _
    // Predicated region
    $region6: #{net_forward.7} parent=1 // pred_check
      _
    $region7: #{net_forward.7} parent=1 // pred_check_branch
      %14 = sbr.rel (0) target = $region9
    $region8: #{net_forward.7} parent=1 // pred_region
      _
    $region9: #{net_forward.7} parent=1 // pred_fallthru
      _
    // Predicated region
    $region10: #{net_forward.7} parent=1 // pred_check
      _
    $region11: #{net_forward.7} parent=1 // pred_check_branch
      %16 = sbr.rel (0) target = $region13
    $region12: #{net_forward.7} parent=1 // pred_region
      _
    $region13: #{net_forward.7} parent=1 // pred_fallthru
      _
    // Predicated region
    $region14: #{net_forward.7} parent=1 // pred_check
      _
    $region15: #{net_forward.7} parent=1 // pred_check_branch
      %18 = sbr.rel (0) target = $region17
    $region16: #{net_forward.7} parent=1 // pred_region
      _
    $region17: #{net_forward.7} parent=1 // pred_fallthru
      _
    // Predicated region
    $region18: #{net_forward.7} parent=1 // pred_check
      _
    $region19: #{net_forward.7} parent=1 // pred_check_branch
      %20 = sbr.rel (0) target = $region21
    $region20: #{net_forward.7} parent=1 // pred_region
      _
    $region21: #{net_forward.7} parent=1 // pred_fallthru
      _
    %v21 = vld [vmem:[%s0] sm:$0x3f]
    %v22 = vld [vmem:[%s1] sm:$0xff]
    %v23 = vld [vmem:[%s1 + $0x8] sm:$0xff]
    %v24 = vld [vmem:[%s1 + $0x10] sm:$0xff]
    %v25 = vld [vmem:[%s1 + $0x18] sm:$0xff]
    %v26 = vld [vmem:[%s1 + $0x20] sm:$0xff]
    %v27 = vld [vmem:[%s1 + $0x28] sm:$0xff]
    %v28 = vld [vmem:[%s1 + $0x30] sm:$0xff]
    %v29 = vld [vmem:[%s1 + $0x38] sm:$0xff]
    %v30 = vld [vmem:[%s1 + $0x40] sm:$0xff]
    %v31 = vld [vmem:[%s1 + $0x48] sm:$0xff]
    %v32 = vld [vmem:[%s1 + $0x50] sm:$0xff]
    %v33 = vld [vmem:[%s1 + $0x58] sm:$0xff]
    %v34 = vld [vmem:[%s1 + $0x60] sm:$0xff]
    %v35 = vld [vmem:[%s1 + $0x68] sm:$0xff]
    %v36 = vld [vmem:[%s1 + $0x70] sm:$0xff]
    %v37 = vld [vmem:[%s1 + $0x78] sm:$0xff]
    %v38 = vld [vmem:[%s1 + $0x80] sm:$0xff]
    %v39 = vld [vmem:[%s1 + $0x88] sm:$0xff]
    %v40 = vld [vmem:[%s1 + $0x90] sm:$0xff]
    %v41 = vld [vmem:[%s1 + $0x98] sm:$0xff]
    %v42 = vld [vmem:[%s1 + $0xa0] sm:$0xff]
    %v43 = vld [vmem:[%s1 + $0xa8] sm:$0xff]
    %v44 = vld [vmem:[%s1 + $0xb0] sm:$0xff]
    %v45 = vld [vmem:[%s1 + $0xb8] sm:$0xff]
    %v46 = vld [vmem:[%s1 + $0xc0] sm:$0xff]
    %v47 = vld [vmem:[%s1 + $0xc8] sm:$0xff]
    %v48 = vld [vmem:[%s1 + $0xd0] sm:$0xff]
    %v49 = vld [vmem:[%s1 + $0xd8] sm:$0xff]
    %v50 = vld [vmem:[%s1 + $0xe0] sm:$0xff]
    %v51 = vld [vmem:[%s1 + $0xe8] sm:$0xff]
    %v52 = vld [vmem:[%s1 + $0xf0] sm:$0xff]
    %v53 = vld [vmem:[%s1 + $0xf8] sm:$0xff]
    %v54 = vld [vmem:[%s1 + $0x100] sm:$0xff]
    %v55 = vld [vmem:[%s1 + $0x108] sm:$0xff]
    %v56 = vld [vmem:[%s1 + $0x110] sm:$0xff]
    %v57 = vld [vmem:[%s1 + $0x118] sm:$0xff]
    %v58 = vld [vmem:[%s2] sm:$0x1]
    %v60 = vlaneseq
    %v61 = vshrl.u32 %v60, 7
    %v62 = vsub.s32 0, %v61
    %v63 = vrot.slane %v58, %v62
    %v66 = vcombine.high %v21, %v21
    %v68 = vunpack.c.l.s4 1983009808
    %v69 = vunpack.c.0.s8 %v68
    %v70 = vlaneseq
    %v71 = vshrl.u32 %v70, 7
    %v72 = vsub.s32 %v69, %v71
    %v73 = vrot.slane %v21, %v72
    %v75 = vunpack.c.l.s4 1983009808
    %v76 = vunpack.c.0.s8 %v75
    %v77 = vlaneseq
    %v78 = vshrl.u32 %v77, 7
    %v79 = vsub.s32 %v76, %v78
    %v80 = vrot.slane %v66, %v79
    %v81 = vcombine.high %v73, %v73
    %vm84 = vcmask 261120
    %v85 = vsel %vm84, %v80, 0
    %87 = vmatprep.subr.mxu0 0.0
    %88 = vmatpush1.msra.mxu0 %v22
    %89 = vmatprep.subr.mxu0 0.0
    %90 = vmatpush1.msra.mxu0 %v23
    %91 = vmatprep.subr.mxu0 0.0
    %92 = vmatpush1.msra.mxu0 %v24
    %93 = vmatprep.subr.mxu0 0.0
    %94 = vmatpush1.msra.mxu0 %v25
    %95 = vmatprep.subr.mxu0 0.0
    %96 = vmatpush1.msra.mxu0 %v26
    %97 = vmatprep.subr.mxu0 0.0
    %98 = vmatpush1.msra.mxu0 %v27
    %99 = vmatprep.subr.mxu0 0.0
    %100 = vmatpush1.msra.mxu0 %v28
    %101 = vmatprep.subr.mxu0 0.0
    %102 = vmatpush1.msra.mxu0 %v29
    %103 = vmatprep.subr.mxu0 0.0
    %104 = vmatpush1.msra.mxu0 %v30
    %105 = vmatprep.subr.mxu0 0.0
    %106 = vmatpush1.msra.mxu0 %v31
    %107 = vmatprep.subr.mxu0 0.0
    %108 = vmatpush1.msra.mxu0 %v32
    %109 = vmatprep.subr.mxu0 0.0
    %110 = vmatpush1.msra.mxu0 %v33
    %111 = vmatprep.subr.mxu0 0.0
    %112 = vmatpush1.msra.mxu0 %v34
    %113 = vmatprep.subr.mxu0 0.0
    %114 = vmatpush1.msra.mxu0 %v35
    %115 = vmatprep.subr.mxu0 0.0
    %116 = vmatpush1.msra.mxu0 %v36
    %117 = vmatprep.subr.mxu0 0.0
    %118 = vmatpush1.msra.mxu0 %v37
    %119 = vmatprep.subr.mxu0 0.0
    %120 = vmatpush1.msra.mxu0 %v38
    %121 = vmatprep.subr.mxu0 0.0
    %122 = vmatpush1.msra.mxu0 %v39
    %123 = vmatprep.subr.mxu0 0.0
    %124 = vmatpush1.msra.mxu0 %v40
    %125 = vmatprep.subr.mxu0 0.0
    %126 = vmatpush1.msra.mxu0 %v41
    %127 = vmatprep.subr.mxu0 0.0
    %128 = vmatpush1.msra.mxu0 %v42
    %129 = vmatprep.subr.mxu0 0.0
    %130 = vmatpush1.msra.mxu0 %v43
    %131 = vmatprep.subr.mxu0 0.0
    %132 = vmatpush1.msra.mxu0 %v44
    %133 = vmatprep.subr.mxu0 0.0
    %134 = vmatpush1.msra.mxu0 %v45
    %135 = vmatprep.subr.mxu0 0.0
    %136 = vmatpush1.msra.mxu0 %v46
    %137 = vmatprep.subr.mxu0 0.0
    %138 = vmatpush1.msra.mxu0 %v47
    %139 = vmatprep.subr.mxu0 0.0
    %140 = vmatpush1.msra.mxu0 %v48
    %141 = vmatprep.subr.mxu0 0.0
    %142 = vmatpush1.msra.mxu0 %v49
    %143 = vmatprep.subr.mxu0 0.0
    %144 = vmatpush1.msra.mxu0 %v50
    %145 = vmatprep.subr.mxu0 0.0
    %146 = vmatpush1.msra.mxu0 %v51
    %147 = vmatprep.subr.mxu0 0.0
    %148 = vmatpush1.msra.mxu0 %v52
    %149 = vmatprep.subr.mxu0 0.0
    %150 = vmatpush1.msra.mxu0 %v53
    %151 = vmatprep.mubr.f32.mxu0 %v81
    %152 = vmatmul.mubr.f32.gmra.mrb[0].mxu0 %v73
    %v153 = vpop.f32.mrb[0].mxu0
    %v154 = vadd.f32 %v63, %v153
    %v155 = vpop.f32.mrb[0].mxu0
    %156 = vdwg.mxu0
    %157 = vmatprep.subr.mxu0 0.0
    %158 = vmatpush1.msra.mxu0 %v54
    %159 = vmatprep.subr.mxu0 0.0
    %160 = vmatpush1.msra.mxu0 %v55
    %161 = vmatprep.subr.mxu0 0.0
    %162 = vmatpush1.msra.mxu0 %v56
    %163 = vmatprep.subr.mxu0 0.0
    %164 = vmatpush1.msra.mxu0 %v57
    %165 = vmatprep.subr.mxu0 0.0
    %166 = vmatpush1.msra.mxu0 0.0
    %167 = vmatprep.subr.mxu0 0.0
    %168 = vmatpush1.msra.mxu0 0.0
    %169 = vmatprep.subr.mxu0 0.0
    %170 = vmatpush1.msra.mxu0 0.0
    %171 = vmatprep.subr.mxu0 0.0
    %172 = vmatpush1.msra.mxu0 0.0
    %173 = vmatprep.subr.mxu0 0.0
    %174 = vmatpush1.msra.mxu0 0.0
    %175 = vmatprep.subr.mxu0 0.0
    %176 = vmatpush1.msra.mxu0 0.0
    %177 = vmatprep.subr.mxu0 0.0
    %178 = vmatpush1.msra.mxu0 0.0
    %179 = vmatprep.subr.mxu0 0.0
    %180 = vmatpush1.msra.mxu0 0.0
    %181 = vmatprep.subr.mxu0 0.0
    %182 = vmatpush1.msra.mxu0 0.0
    %183 = vmatprep.subr.mxu0 0.0
    %184 = vmatpush1.msra.mxu0 0.0
    %185 = vmatprep.subr.mxu0 0.0
    %186 = vmatpush1.msra.mxu0 0.0
    %187 = vmatprep.subr.mxu0 0.0
    %188 = vmatpush1.msra.mxu0 0.0
    %189 = vmatprep.subr.mxu0 0.0
    %190 = vmatpush1.msra.mxu0 0.0
    %191 = vmatprep.subr.mxu0 0.0
    %192 = vmatpush1.msra.mxu0 0.0
    %193 = vmatprep.subr.mxu0 0.0
    %194 = vmatpush1.msra.mxu0 0.0
    %195 = vmatprep.subr.mxu0 0.0
    %196 = vmatpush1.msra.mxu0 0.0
    %197 = vmatprep.subr.mxu0 0.0
    %198 = vmatpush1.msra.mxu0 0.0
    %199 = vmatprep.subr.mxu0 0.0
    %200 = vmatpush1.msra.mxu0 0.0
    %201 = vmatprep.subr.mxu0 0.0
    %202 = vmatpush1.msra.mxu0 0.0
    %203 = vmatprep.subr.mxu0 0.0
    %204 = vmatpush1.msra.mxu0 0.0
    %205 = vmatprep.subr.mxu0 0.0
    %206 = vmatpush1.msra.mxu0 0.0
    %207 = vmatprep.subr.mxu0 0.0
    %208 = vmatpush1.msra.mxu0 0.0
    %209 = vmatprep.subr.mxu0 0.0
    %210 = vmatpush1.msra.mxu0 0.0
    %211 = vmatprep.subr.mxu0 0.0
    %212 = vmatpush1.msra.mxu0 0.0
    %213 = vmatprep.subr.mxu0 0.0
    %214 = vmatpush1.msra.mxu0 0.0
    %215 = vmatprep.subr.mxu0 0.0
    %216 = vmatpush1.msra.mxu0 0.0
    %217 = vmatprep.subr.mxu0 0.0
    %218 = vmatpush1.msra.mxu0 0.0
    %219 = vmatprep.subr.mxu0 0.0
    %220 = vmatpush1.msra.mxu0 0.0
    %221 = vmatprep.mubr.f32.mxu0 0.0
    %222 = vmatmul.mubr.f32.gmra.mrb[0].mxu0 %v85
    %v223 = vpop.f32.mrb[0].mxu0
    %v224 = vadd.f32 %v154, %v223
    %v225 = vpop.f32.mrb[0].mxu0
    %226 = vdwg.mxu0
    %v227 = vmax.f32 %v224, 0.0
    %v228 = vld [vmem:[%s3] sm:$0xff]
    %v229 = vld [vmem:[%s3 + $0x8] sm:$0xff]
    %v230 = vld [vmem:[%s3 + $0x10] sm:$0xff]
    %v231 = vld [vmem:[%s3 + $0x18] sm:$0xff]
    %v232 = vld [vmem:[%s3 + $0x20] sm:$0xff]
    %v233 = vld [vmem:[%s3 + $0x28] sm:$0xff]
    %v234 = vld [vmem:[%s3 + $0x30] sm:$0xff]
    %v235 = vld [vmem:[%s3 + $0x38] sm:$0xff]
    %v236 = vld [vmem:[%s4] sm:$0x1]
    %v238 = vlaneseq
    %v239 = vshrl.u32 %v238, 7
    %v240 = vsub.s32 0, %v239
    %v241 = vrot.slane %v236, %v240
    %vm243 = vcmask 523264
    %v245 = vsel %vm243, %v227, 0
    %247 = vmatprep.subr.mxu0 0.0
    %248 = vmatpush1.msra.mxu0 %v228
    %249 = vmatprep.subr.mxu0 0.0
    %250 = vmatpush1.msra.mxu0 %v229
    %251 = vmatprep.subr.mxu0 0.0
    %252 = vmatpush1.msra.mxu0 %v230
    %253 = vmatprep.subr.mxu0 0.0
    %254 = vmatpush1.msra.mxu0 %v231
    %255 = vmatprep.subr.mxu0 0.0
    %256 = vmatpush1.msra.mxu0 %v232
    %257 = vmatprep.subr.mxu0 0.0
    %258 = vmatpush1.msra.mxu0 %v233
    %259 = vmatprep.subr.mxu0 0.0
    %260 = vmatpush1.msra.mxu0 %v234
    %261 = vmatprep.subr.mxu0 0.0
    %262 = vmatpush1.msra.mxu0 %v235
    %263 = vmatprep.subr.mxu0 0.0
    %264 = vmatpush1.msra.mxu0 0.0
    %265 = vmatprep.subr.mxu0 0.0
    %266 = vmatpush1.msra.mxu0 0.0
    %267 = vmatprep.subr.mxu0 0.0
    %268 = vmatpush1.msra.mxu0 0.0
    %269 = vmatprep.subr.mxu0 0.0
    %270 = vmatpush1.msra.mxu0 0.0
    %271 = vmatprep.subr.mxu0 0.0
    %272 = vmatpush1.msra.mxu0 0.0
    %273 = vmatprep.subr.mxu0 0.0
    %274 = vmatpush1.msra.mxu0 0.0
    %275 = vmatprep.subr.mxu0 0.0
    %276 = vmatpush1.msra.mxu0 0.0
    %277 = vmatprep.subr.mxu0 0.0
    %278 = vmatpush1.msra.mxu0 0.0
    %279 = vmatprep.subr.mxu0 0.0
    %280 = vmatpush1.msra.mxu0 0.0
    %281 = vmatprep.subr.mxu0 0.0
    %282 = vmatpush1.msra.mxu0 0.0
    %283 = vmatprep.subr.mxu0 0.0
    %284 = vmatpush1.msra.mxu0 0.0
    %285 = vmatprep.subr.mxu0 0.0
    %286 = vmatpush1.msra.mxu0 0.0
    %287 = vmatprep.subr.mxu0 0.0
    %288 = vmatpush1.msra.mxu0 0.0
    %289 = vmatprep.subr.mxu0 0.0
    %290 = vmatpush1.msra.mxu0 0.0
    %291 = vmatprep.subr.mxu0 0.0
    %292 = vmatpush1.msra.mxu0 0.0
    %293 = vmatprep.subr.mxu0 0.0
    %294 = vmatpush1.msra.mxu0 0.0
    %295 = vmatprep.subr.mxu0 0.0
    %296 = vmatpush1.msra.mxu0 0.0
    %297 = vmatprep.subr.mxu0 0.0
    %298 = vmatpush1.msra.mxu0 0.0
    %299 = vmatprep.subr.mxu0 0.0
    %300 = vmatpush1.msra.mxu0 0.0
    %301 = vmatprep.subr.mxu0 0.0
    %302 = vmatpush1.msra.mxu0 0.0
    %303 = vmatprep.subr.mxu0 0.0
    %304 = vmatpush1.msra.mxu0 0.0
    %305 = vmatprep.subr.mxu0 0.0
    %306 = vmatpush1.msra.mxu0 0.0
    %307 = vmatprep.subr.mxu0 0.0
    %308 = vmatpush1.msra.mxu0 0.0
    %309 = vmatprep.subr.mxu0 0.0
    %310 = vmatpush1.msra.mxu0 0.0
    %311 = vmatprep.mubr.f32.mxu0 0.0
    %312 = vmatmul.mubr.f32.gmra.mrb[0].mxu0 %v245
    %v313 = vpop.f32.mrb[0].mxu0
    %v314 = vadd.f32 %v241, %v313
    %v315 = vpop.f32.mrb[0].mxu0
    %316 = vdwg.mxu0
    %vm317 = vcmask 9216
    %318 = vst.msk [vmem:[#allocation2] sm:$0x3] %vm317, %v314
    // Predicated region
    $region22: #{net_forward.7} parent=1 // pred_check
      _
    $region23: #{net_forward.7} parent=1 // pred_check_branch
      %320 = sbr.rel (0) target = $region25
    $region24: #{net_forward.7} parent=1 // pred_region
      %s322 = ssub.s32 32, 32
      %323 = vsyncadd [#allocation3], %s322
      %s325 = sshll.u32 [#allocation2], 4
      %s326 = int_to_ptr.vmem [resolvable:$true] %s325
      %328 = dma.vmem_to_hbm [thread:$0]  %s326, 32, %s5, [#allocation3]
    $region25: #{net_forward.7} parent=1 // pred_fallthru
      _
    // Predicated region
    $region26: #{net_forward.7} parent=1 // pred_check
      _
    $region27: #{net_forward.7} parent=1 // pred_check_branch
      %330 = sbr.rel (0) target = $region29
    $region28: #{net_forward.7} parent=1 // pred_region
      %331 = dma.done [#allocation3], 32
    $region29: #{net_forward.7} parent=1 // pred_fallthru
      _
    %332 = vsyncpa [#allocation3], 1

</llo_original>
